<compile_context>
chip_gen: v7x
topology: tpu7x:2x2x1
jax: 0.10.0
libtpu: 0.0.40
codegen_flags: <defaults>
</compile_context>

<pallas_src>
import jax
import jax.numpy as jnp
from jax import lax
from jax.experimental import pallas as pl
from jax.experimental.pallas import tpu as pltpu


# ---------------------------------------------------------------------------
# Fused kernel: one grid step == one batch image, all 5 conv layers.
#   x_ref    : (1, H, W, C)        channel-padded input (C == Cout), f32
#   w_ref    : (5, 3, 3*C, Cout)   per-layer, per-kh weights, kw folded into K, bf16
#   b_ref    : (5, 1, Cout)        per-layer biases, f32
#   o_ref    : (1, H, W, Cout)
#   xcat_ref : VMEM (H+2, W, 3*C)  persistent kw-folded, zero-haloed activation, f32
# ---------------------------------------------------------------------------
def _fused_kernel(x_ref, w_ref, b_ref, o_ref, xcat_ref):
    _, H, W, Cout = o_ref.shape
    C = x_ref.shape[3]          # working channel count (== Cout after host-side pad)
    K = 3 * C
    HW = H * W

    # Zero ONLY the never-written halo regions; the interior is fully
    # overwritten by every stash(), so this runs once per grid step.
    zrow = jnp.zeros((1, W, K), jnp.float32)
    xcat_ref[0:1, :, :] = zrow                                   # kh halo, top
    xcat_ref[H + 1:H + 2, :, :] = zrow                           # kh halo, bottom
    zcol = jnp.zeros((H + 2, 1, C), jnp.float32)
    xcat_ref[:, 0:1, 0:C] = zcol                                 # kw=0 left halo
    xcat_ref[:, W - 1:W, 2 * C:3 * C] = zcol                     # kw=2 right halo

    def stash(y):
        # Write activation (H, W, C) directly into the three kw-shifted lane
        # thirds of the persistent scratch (replaces the per-layer concat).
        xcat_ref[1:H + 1, 0:W, C:2 * C] = y                      # kw = 1 (centered)
        xcat_ref[1:H + 1, 1:W, 0:C] = y[:, 0:W - 1, :]           # kw = 0 (shift right)
        xcat_ref[1:H + 1, 0:W - 1, 2 * C:3 * C] = y[:, 1:W, :]   # kw = 2 (shift left)

    def conv_layer(layer, acc):
        # acc: f32 accumulator init -- (1, Cout) bias, or (HW, Cout) bias+residual.
        xb = xcat_ref[...].astype(jnp.bfloat16)                  # one read+cast per layer
        for kh in range(3):                                      # 3 MXU matmuls, K = 3*C
            lhs = xb[kh:kh + H].reshape(HW, K)                   # layout-preserving (W % 16 == 0)
            acc = acc + jnp.dot(lhs, w_ref[layer, kh],
                                preferred_element_type=jnp.float32)
        return acc                                               # (HW, Cout) f32

    # conv + ReLU
    stash(x_ref[0].astype(jnp.float32))
    h = jnp.maximum(conv_layer(0, b_ref[0]), 0.0)                # (HW, Cout) f32

    # resblock1, resblock2: x + conv2(relu(conv1(x)))
    for rb in range(2):
        stash(h.reshape(H, W, Cout))
        t = jnp.maximum(conv_layer(1 + 2 * rb, b_ref[1 + 2 * rb]), 0.0)
        stash(t.reshape(H, W, Cout))
        # residual + bias folded into the accumulator init (saves 2 VPU add passes)
        h = conv_layer(2 + 2 * rb, h + b_ref[2 + 2 * rb])

    o_ref[0] = h.reshape(H, W, Cout).astype(o_ref.dtype)


# ---------------------------------------------------------------------------
# Wrapper: host-side weight folding / channel padding / bf16 cast, one pallas_call.
# ---------------------------------------------------------------------------
def feature_encoder(x, p):
    N, H, W, Cin = x.shape
    Cout = p["conv_b"].shape[0]
    assert Cin <= Cout, "working scratch assumes Cin <= Cout"
    C = Cout  # working channel count for the VMEM-resident activation
    K = 3 * C

    # One-time channel zero-pad of the input (Cin -> C) so all tiles share layout.
    xc = jnp.pad(x, ((0, 0), (0, 0), (0, 0), (0, C - Cin))) if Cin < C else x

    def fold(w):
        # (3, 3, cin, Cout) -> zero-pad cin to C -> (3, 3*C, Cout)  (kw folded into K)
        cin = w.shape[2]
        if cin < C:
            w = jnp.pad(w, ((0, 0), (0, 0), (0, C - cin), (0, 0)))
        return w.reshape(3, K, Cout)

    ws = jnp.stack([fold(p["conv_w"]),
                    fold(p["rb1_w1"]), fold(p["rb1_w2"]),
                    fold(p["rb2_w1"]), fold(p["rb2_w2"])]).astype(jnp.bfloat16)
    bs = jnp.stack([p["conv_b"], p["rb1_b1"], p["rb1_b2"],
                    p["rb2_b1"], p["rb2_b2"]]).reshape(5, 1, Cout).astype(jnp.float32)

    return pl.pallas_call(
        _fused_kernel,
        out_shape=jax.ShapeDtypeStruct((N, H, W, Cout), x.dtype),
        grid=(N,),
        in_specs=[
            pl.BlockSpec((1, H, W, C), lambda n: (n, 0, 0, 0)),
            # constant index_map -> weights/biases not re-DMA'd across grid steps
            pl.BlockSpec((5, 3, K, Cout), lambda n: (0, 0, 0, 0)),
            pl.BlockSpec((5, 1, Cout), lambda n: (0, 0, 0)),
        ],
        out_specs=pl.BlockSpec((1, H, W, Cout), lambda n: (n, 0, 0, 0)),
        scratch_shapes=[pltpu.VMEM((H + 2, W, K), jnp.float32)],
        compiler_params=pltpu.CompilerParams(
            dimension_semantics=("parallel",),
            vmem_limit_bytes=48 * 1024 * 1024),
    )(xc, ws, bs)


feature_encoder_jit = jax.jit(feature_encoder)


# ---------------------------------------------------------------------------
# Pure-JAX reference (f32 end-to-end).
# ---------------------------------------------------------------------------
def _conv_ref(x, w, b):
    y = lax.conv_general_dilated(
        x, w, window_strides=(1, 1), padding="SAME",
        dimension_numbers=("NHWC", "HWIO", "NHWC"))
    return y + b[None, None, None, :]


def feature_encoder_ref(x, p):
    h = jnp.maximum(_conv_ref(x, p["conv_w"], p["conv_b"]), 0.0)
    for rb in ("rb1", "rb2"):
        t = jnp.maximum(_conv_ref(h, p[f"{rb}_w1"], p[f"{rb}_b1"]), 0.0)
        h = h + _conv_ref(t, p[f"{rb}_w2"], p[f"{rb}_b2"])
    return h


# ---------------------------------------------------------------------------
# Deterministic parameter init (PyTorch Conv2d default: U(-1/sqrt(fan_in), ...)).
# ---------------------------------------------------------------------------
def init_params(key, in_channel=34, out_channel=64):
    def conv_init(k, cin, cout):
        kw, kb = jax.random.split(k)
        bound = 1.0 / float(jnp.sqrt(cin * 9.0))
        w = jax.random.uniform(kw, (3, 3, cin, cout), jnp.float32, -bound, bound)
        b = jax.random.uniform(kb, (cout,), jnp.float32, -bound, bound)
        return w, b

    keys = jax.random.split(key, 5)
    p = {}
    p["conv_w"], p["conv_b"] = conv_init(keys[0], in_channel, out_channel)
    p["rb1_w1"], p["rb1_b1"] = conv_init(keys[1], out_channel, out_channel)
    p["rb1_w2"], p["rb1_b2"] = conv_init(keys[2], out_channel, out_channel)
    p["rb2_w1"], p["rb2_b1"] = conv_init(keys[3], out_channel, out_channel)
    p["rb2_w2"], p["rb2_b2"] = conv_init(keys[4], out_channel, out_channel)
    return p


if __name__ == "__main__":
    key = jax.random.PRNGKey(0)
    kx, kp = jax.random.split(key)

    # NHWC input == PyTorch NCHW (2, 34, 16, 16)
    x = jax.random.normal(kx, (2, 16, 16, 34), jnp.float32)
    params = init_params(kp, in_channel=34, out_channel=64)

    out = jax.block_until_ready(feature_encoder_jit(x, params))

    ref = feature_encoder_ref(x, params)
    assert out.shape == (2, 16, 16, 64), out.shape
    max_err = float(jnp.max(jnp.abs(out - ref)))
    # Tolerance relaxed vs the pure-f32 version: matmul operands are bf16
    # (accumulation, bias and residual adds remain f32).
    assert jnp.allclose(out, ref, atol=2e-2, rtol=2e-2), max_err

    print("KERNEL_OK")
</pallas_src>

<mosaic_0001>
module attributes {stable_mosaic.version = 11 : i64} {
  func.func @_fused_kernel(%arg0: i32, %arg1: memref<1x16x16x64xf32, #tpu.memory_space<vmem>>, %arg2: memref<5x3x192x64xbf16, #tpu.memory_space<vmem>>, %arg3: memref<5x1x64xf32, #tpu.memory_space<vmem>>, %arg4: memref<1x16x16x64xf32, #tpu.memory_space<vmem>>, %arg5: memref<18x16x192xf32, #tpu.memory_space<vmem>>) attributes {dimension_semantics = [#tpu.dimension_semantics<parallel>], iteration_bounds = array<i64: 2>, scalar_prefetch = 0 : i64, scratch_operands = 1 : i64, tpu.core_type = #tpu.core_type<tc>, window_params = [{transform_indices = @transform_0, window_bounds = array<i64: 1, 16, 16, 64>}, {pipeline_mode = #tpu.pipeline_mode<synchronous>, transform_indices = @transform_1, window_bounds = array<i64: 5, 3, 192, 64>}, {pipeline_mode = #tpu.pipeline_mode<synchronous>, transform_indices = @transform_2, window_bounds = array<i64: 5, 1, 64>}, {transform_indices = @transform_3, window_bounds = array<i64: 1, 16, 16, 64>}]} {
    %cst = arith.constant 0.000000e+00 : f32
    %0 = vector.broadcast %cst : f32 to vector<1x16x192xf32>
    %c0 = arith.constant 0 : index
    %c0_0 = arith.constant 0 : index
    %c0_1 = arith.constant 0 : index
    %1 = vector.load %arg5[%c0, %c0_0, %c0_1] : memref<18x16x192xf32, #tpu.memory_space<vmem>>, vector<1x16x192xf32>
    tpu.vector_store %arg5[%c0, %c0_0, %c0_1], %0 {strides = array<i32>} : memref<18x16x192xf32, #tpu.memory_space<vmem>>, vector<1x16x192xf32>,
    %c17 = arith.constant 17 : index
    %c0_2 = arith.constant 0 : index
    %c0_3 = arith.constant 0 : index
    %2 = vector.load %arg5[%c17, %c0_2, %c0_3] : memref<18x16x192xf32, #tpu.memory_space<vmem>>, vector<1x16x192xf32>
    tpu.vector_store %arg5[%c17, %c0_2, %c0_3], %0 {strides = array<i32>} : memref<18x16x192xf32, #tpu.memory_space<vmem>>, vector<1x16x192xf32>,
    %cst_4 = arith.constant 0.000000e+00 : f32
    %3 = vector.broadcast %cst_4 : f32 to vector<18x1x64xf32>
    %c0_5 = arith.constant 0 : index
    %c0_6 = arith.constant 0 : index
    %c0_7 = arith.constant 0 : index
    %4 = vector.load %arg5[%c0_5, %c0_6, %c0_7] : memref<18x16x192xf32, #tpu.memory_space<vmem>>, vector<18x1x64xf32>
    tpu.vector_store %arg5[%c0_5, %c0_6, %c0_7], %3 {strides = array<i32>} : memref<18x16x192xf32, #tpu.memory_space<vmem>>, vector<18x1x64xf32>,
    %c0_8 = arith.constant 0 : index
    %c15 = arith.constant 15 : index
    %c128 = arith.constant 128 : index
    %5 = vector.load %arg5[%c0_8, %c15, %c128] : memref<18x16x192xf32, #tpu.memory_space<vmem>>, vector<18x1x64xf32>
    tpu.vector_store %arg5[%c0_8, %c15, %c128], %3 {strides = array<i32>} : memref<18x16x192xf32, #tpu.memory_space<vmem>>, vector<18x1x64xf32>,
    %c0_9 = arith.constant 0 : index
    %c0_10 = arith.constant 0 : index
    %c0_11 = arith.constant 0 : index
    %c0_12 = arith.constant 0 : index
    %6 = vector.load %arg1[%c0_9, %c0_10, %c0_11, %c0_12] : memref<1x16x16x64xf32, #tpu.memory_space<vmem>>, vector<1x16x16x64xf32>
    %7 = vector.shape_cast %6 : vector<1x16x16x64xf32> to vector<16x16x64xf32>
    %c1 = arith.constant 1 : index
    %c0_13 = arith.constant 0 : index
    %c64 = arith.constant 64 : index
    %8 = vector.load %arg5[%c1, %c0_13, %c64] : memref<18x16x192xf32, #tpu.memory_space<vmem>>, vector<16x16x64xf32>
    tpu.vector_store %arg5[%c1, %c0_13, %c64], %7 {strides = array<i32>} : memref<18x16x192xf32, #tpu.memory_space<vmem>>, vector<16x16x64xf32>,
    %9 = vector.extract_strided_slice %7 {offsets = [0, 0, 0], sizes = [16, 15, 64], strides = [1, 1, 1]} : vector<16x16x64xf32> to vector<16x15x64xf32>
    %c1_14 = arith.constant 1 : index
    %c1_15 = arith.constant 1 : index
    %c0_16 = arith.constant 0 : index
    %10 = vector.load %arg5[%c1_14, %c1_15, %c0_16] : memref<18x16x192xf32, #tpu.memory_space<vmem>>, vector<16x15x64xf32>
    tpu.vector_store %arg5[%c1_14, %c1_15, %c0_16], %9 {strides = array<i32>} : memref<18x16x192xf32, #tpu.memory_space<vmem>>, vector<16x15x64xf32>,
    %11 = vector.extract_strided_slice %7 {offsets = [0, 1, 0], sizes = [16, 15, 64], strides = [1, 1, 1]} : vector<16x16x64xf32> to vector<16x15x64xf32>
    %c1_17 = arith.constant 1 : index
    %c0_18 = arith.constant 0 : index
    %c128_19 = arith.constant 128 : index
    %12 = vector.load %arg5[%c1_17, %c0_18, %c128_19] : memref<18x16x192xf32, #tpu.memory_space<vmem>>, vector<16x15x64xf32>
    tpu.vector_store %arg5[%c1_17, %c0_18, %c128_19], %11 {strides = array<i32>} : memref<18x16x192xf32, #tpu.memory_space<vmem>>, vector<16x15x64xf32>,
    %c0_20 = arith.constant 0 : index
    %c0_21 = arith.constant 0 : index
    %c0_22 = arith.constant 0 : index
    %13 = vector.load %arg3[%c0_20, %c0_21, %c0_22] : memref<5x1x64xf32, #tpu.memory_space<vmem>>, vector<1x1x64xf32>
    %14 = vector.shape_cast %13 : vector<1x1x64xf32> to vector<1x64xf32>
    %c0_23 = arith.constant 0 : index
    %c0_24 = arith.constant 0 : index
    %c0_25 = arith.constant 0 : index
    %15 = vector.load %arg5[%c0_23, %c0_24, %c0_25] : memref<18x16x192xf32, #tpu.memory_space<vmem>>, vector<18x16x192xf32>
    %16 = arith.truncf %15 : vector<18x16x192xf32> to vector<18x16x192xbf16>
    %17 = vector.extract_strided_slice %16 {offsets = [0, 0, 0], sizes = [16, 16, 192], strides = [1, 1, 1]} : vector<18x16x192xbf16> to vector<16x16x192xbf16>
    %18 = vector.shape_cast %17 : vector<16x16x192xbf16> to vector<256x192xbf16>
    %c0_26 = arith.constant 0 : index
    %c0_27 = arith.constant 0 : index
    %c0_28 = arith.constant 0 : index
    %c0_29 = arith.constant 0 : index
    %19 = vector.load %arg2[%c0_26, %c0_27, %c0_28, %c0_29] : memref<5x3x192x64xbf16, #tpu.memory_space<vmem>>, vector<1x1x192x64xbf16>
    %20 = vector.shape_cast %19 : vector<1x1x192x64xbf16> to vector<192x64xbf16>
    %cst_30 = arith.constant dense<0.000000e+00> : vector<256x64xf32>
    %21 = tpu.matmul %18, %20, %cst_30 {dimension_numbers = #tpu.dot_dimension_numbers<[1], [0], [0], [1], [0, 0, 1, 1], [], []>} : vector<256x192xbf16>, vector<192x64xbf16>, vector<256x64xf32> -> vector<256x64xf32>
    %22 = vector.broadcast %14 : vector<1x64xf32> to vector<256x64xf32>
    %23 = arith.addf %22, %21 : vector<256x64xf32>
    %24 = vector.extract_strided_slice %16 {offsets = [1, 0, 0], sizes = [16, 16, 192], strides = [1, 1, 1]} : vector<18x16x192xbf16> to vector<16x16x192xbf16>
    %25 = vector.shape_cast %24 : vector<16x16x192xbf16> to vector<256x192xbf16>
    %c0_31 = arith.constant 0 : index
    %c1_32 = arith.constant 1 : index
    %c0_33 = arith.constant 0 : index
    %c0_34 = arith.constant 0 : index
    %26 = vector.load %arg2[%c0_31, %c1_32, %c0_33, %c0_34] : memref<5x3x192x64xbf16, #tpu.memory_space<vmem>>, vector<1x1x192x64xbf16>
    %27 = vector.shape_cast %26 : vector<1x1x192x64xbf16> to vector<192x64xbf16>
    %cst_35 = arith.constant dense<0.000000e+00> : vector<256x64xf32>
    %28 = tpu.matmul %25, %27, %cst_35 {dimension_numbers = #tpu.dot_dimension_numbers<[1], [0], [0], [1], [0, 0, 1, 1], [], []>} : vector<256x192xbf16>, vector<192x64xbf16>, vector<256x64xf32> -> vector<256x64xf32>
    %29 = arith.addf %23, %28 : vector<256x64xf32>
    %30 = vector.extract_strided_slice %16 {offsets = [2, 0, 0], sizes = [16, 16, 192], strides = [1, 1, 1]} : vector<18x16x192xbf16> to vector<16x16x192xbf16>
    %31 = vector.shape_cast %30 : vector<16x16x192xbf16> to vector<256x192xbf16>
    %c0_36 = arith.constant 0 : index
    %c2 = arith.constant 2 : index
    %c0_37 = arith.constant 0 : index
    %c0_38 = arith.constant 0 : index
    %32 = vector.load %arg2[%c0_36, %c2, %c0_37, %c0_38] : memref<5x3x192x64xbf16, #tpu.memory_space<vmem>>, vector<1x1x192x64xbf16>
    %33 = vector.shape_cast %32 : vector<1x1x192x64xbf16> to vector<192x64xbf16>
    %cst_39 = arith.constant dense<0.000000e+00> : vector<256x64xf32>
    %34 = tpu.matmul %31, %33, %cst_39 {dimension_numbers = #tpu.dot_dimension_numbers<[1], [0], [0], [1], [0, 0, 1, 1], [], []>} : vector<256x192xbf16>, vector<192x64xbf16>, vector<256x64xf32> -> vector<256x64xf32>
    %35 = arith.addf %29, %34 : vector<256x64xf32>
    %cst_40 = arith.constant 0.000000e+00 : f32
    %36 = vector.broadcast %cst_40 : f32 to vector<256x64xf32>
    %37 = arith.maximumf %35, %36 : vector<256x64xf32>
    %38 = vector.shape_cast %37 : vector<256x64xf32> to vector<16x16x64xf32>
    %c1_41 = arith.constant 1 : index
    %c0_42 = arith.constant 0 : index
    %c64_43 = arith.constant 64 : index
    %39 = vector.load %arg5[%c1_41, %c0_42, %c64_43] : memref<18x16x192xf32, #tpu.memory_space<vmem>>, vector<16x16x64xf32>
    tpu.vector_store %arg5[%c1_41, %c0_42, %c64_43], %38 {strides = array<i32>} : memref<18x16x192xf32, #tpu.memory_space<vmem>>, vector<16x16x64xf32>,
    %40 = vector.extract_strided_slice %38 {offsets = [0, 0, 0], sizes = [16, 15, 64], strides = [1, 1, 1]} : vector<16x16x64xf32> to vector<16x15x64xf32>
    %c1_44 = arith.constant 1 : index
    %c1_45 = arith.constant 1 : index
    %c0_46 = arith.constant 0 : index
    %41 = vector.load %arg5[%c1_44, %c1_45, %c0_46] : memref<18x16x192xf32, #tpu.memory_space<vmem>>, vector<16x15x64xf32>
    tpu.vector_store %arg5[%c1_44, %c1_45, %c0_46], %40 {strides = array<i32>} : memref<18x16x192xf32, #tpu.memory_space<vmem>>, vector<16x15x64xf32>,
    %42 = vector.extract_strided_slice %38 {offsets = [0, 1, 0], sizes = [16, 15, 64], strides = [1, 1, 1]} : vector<16x16x64xf32> to vector<16x15x64xf32>
    %c1_47 = arith.constant 1 : index
    %c0_48 = arith.constant 0 : index
    %c128_49 = arith.constant 128 : index
    %43 = vector.load %arg5[%c1_47, %c0_48, %c128_49] : memref<18x16x192xf32, #tpu.memory_space<vmem>>, vector<16x15x64xf32>
    tpu.vector_store %arg5[%c1_47, %c0_48, %c128_49], %42 {strides = array<i32>} : memref<18x16x192xf32, #tpu.memory_space<vmem>>, vector<16x15x64xf32>,
    %c1_50 = arith.constant 1 : index
    %c0_51 = arith.constant 0 : index
    %c0_52 = arith.constant 0 : index
    %44 = vector.load %arg3[%c1_50, %c0_51, %c0_52] : memref<5x1x64xf32, #tpu.memory_space<vmem>>, vector<1x1x64xf32>
    %45 = vector.shape_cast %44 : vector<1x1x64xf32> to vector<1x64xf32>
    %c0_53 = arith.constant 0 : index
    %c0_54 = arith.constant 0 : index
    %c0_55 = arith.constant 0 : index
    %46 = vector.load %arg5[%c0_53, %c0_54, %c0_55] : memref<18x16x192xf32, #tpu.memory_space<vmem>>, vector<18x16x192xf32>
    %47 = arith.truncf %46 : vector<18x16x192xf32> to vector<18x16x192xbf16>
    %48 = vector.extract_strided_slice %47 {offsets = [0, 0, 0], sizes = [16, 16, 192], strides = [1, 1, 1]} : vector<18x16x192xbf16> to vector<16x16x192xbf16>
    %49 = vector.shape_cast %48 : vector<16x16x192xbf16> to vector<256x192xbf16>
    %c1_56 = arith.constant 1 : index
    %c0_57 = arith.constant 0 : index
    %c0_58 = arith.constant 0 : index
    %c0_59 = arith.constant 0 : index
    %50 = vector.load %arg2[%c1_56, %c0_57, %c0_58, %c0_59] : memref<5x3x192x64xbf16, #tpu.memory_space<vmem>>, vector<1x1x192x64xbf16>
    %51 = vector.shape_cast %50 : vector<1x1x192x64xbf16> to vector<192x64xbf16>
    %cst_60 = arith.constant dense<0.000000e+00> : vector<256x64xf32>
    %52 = tpu.matmul %49, %51, %cst_60 {dimension_numbers = #tpu.dot_dimension_numbers<[1], [0], [0], [1], [0, 0, 1, 1], [], []>} : vector<256x192xbf16>, vector<192x64xbf16>, vector<256x64xf32> -> vector<256x64xf32>
    %53 = vector.broadcast %45 : vector<1x64xf32> to vector<256x64xf32>
    %54 = arith.addf %53, %52 : vector<256x64xf32>
    %55 = vector.extract_strided_slice %47 {offsets = [1, 0, 0], sizes = [16, 16, 192], strides = [1, 1, 1]} : vector<18x16x192xbf16> to vector<16x16x192xbf16>
    %56 = vector.shape_cast %55 : vector<16x16x192xbf16> to vector<256x192xbf16>
    %c1_61 = arith.constant 1 : index
    %c1_62 = arith.constant 1 : index
    %c0_63 = arith.constant 0 : index
    %c0_64 = arith.constant 0 : index
    %57 = vector.load %arg2[%c1_61, %c1_62, %c0_63, %c0_64] : memref<5x3x192x64xbf16, #tpu.memory_space<vmem>>, vector<1x1x192x64xbf16>
    %58 = vector.shape_cast %57 : vector<1x1x192x64xbf16> to vector<192x64xbf16>
    %cst_65 = arith.constant dense<0.000000e+00> : vector<256x64xf32>
    %59 = tpu.matmul %56, %58, %cst_65 {dimension_numbers = #tpu.dot_dimension_numbers<[1], [0], [0], [1], [0, 0, 1, 1], [], []>} : vector<256x192xbf16>, vector<192x64xbf16>, vector<256x64xf32> -> vector<256x64xf32>
    %60 = arith.addf %54, %59 : vector<256x64xf32>
    %61 = vector.extract_strided_slice %47 {offsets = [2, 0, 0], sizes = [16, 16, 192], strides = [1, 1, 1]} : vector<18x16x192xbf16> to vector<16x16x192xbf16>
    %62 = vector.shape_cast %61 : vector<16x16x192xbf16> to vector<256x192xbf16>
    %c1_66 = arith.constant 1 : index
    %c2_67 = arith.constant 2 : index
    %c0_68 = arith.constant 0 : index
    %c0_69 = arith.constant 0 : index
    %63 = vector.load %arg2[%c1_66, %c2_67, %c0_68, %c0_69] : memref<5x3x192x64xbf16, #tpu.memory_space<vmem>>, vector<1x1x192x64xbf16>
    %64 = vector.shape_cast %63 : vector<1x1x192x64xbf16> to vector<192x64xbf16>
    %cst_70 = arith.constant dense<0.000000e+00> : vector<256x64xf32>
    %65 = tpu.matmul %62, %64, %cst_70 {dimension_numbers = #tpu.dot_dimension_numbers<[1], [0], [0], [1], [0, 0, 1, 1], [], []>} : vector<256x192xbf16>, vector<192x64xbf16>, vector<256x64xf32> -> vector<256x64xf32>
    %66 = arith.addf %60, %65 : vector<256x64xf32>
    %cst_71 = arith.constant 0.000000e+00 : f32
    %67 = vector.broadcast %cst_71 : f32 to vector<256x64xf32>
    %68 = arith.maximumf %66, %67 : vector<256x64xf32>
    %69 = vector.shape_cast %68 : vector<256x64xf32> to vector<16x16x64xf32>
    %c1_72 = arith.constant 1 : index
    %c0_73 = arith.constant 0 : index
    %c64_74 = arith.constant 64 : index
    %70 = vector.load %arg5[%c1_72, %c0_73, %c64_74] : memref<18x16x192xf32, #tpu.memory_space<vmem>>, vector<16x16x64xf32>
    tpu.vector_store %arg5[%c1_72, %c0_73, %c64_74], %69 {strides = array<i32>} : memref<18x16x192xf32, #tpu.memory_space<vmem>>, vector<16x16x64xf32>,
    %71 = vector.extract_strided_slice %69 {offsets = [0, 0, 0], sizes = [16, 15, 64], strides = [1, 1, 1]} : vector<16x16x64xf32> to vector<16x15x64xf32>
    %c1_75 = arith.constant 1 : index
    %c1_76 = arith.constant 1 : index
    %c0_77 = arith.constant 0 : index
    %72 = vector.load %arg5[%c1_75, %c1_76, %c0_77] : memref<18x16x192xf32, #tpu.memory_space<vmem>>, vector<16x15x64xf32>
    tpu.vector_store %arg5[%c1_75, %c1_76, %c0_77], %71 {strides = array<i32>} : memref<18x16x192xf32, #tpu.memory_space<vmem>>, vector<16x15x64xf32>,
    %73 = vector.extract_strided_slice %69 {offsets = [0, 1, 0], sizes = [16, 15, 64], strides = [1, 1, 1]} : vector<16x16x64xf32> to vector<16x15x64xf32>
    %c1_78 = arith.constant 1 : index
    %c0_79 = arith.constant 0 : index
    %c128_80 = arith.constant 128 : index
    %74 = vector.load %arg5[%c1_78, %c0_79, %c128_80] : memref<18x16x192xf32, #tpu.memory_space<vmem>>, vector<16x15x64xf32>
    tpu.vector_store %arg5[%c1_78, %c0_79, %c128_80], %73 {strides = array<i32>} : memref<18x16x192xf32, #tpu.memory_space<vmem>>, vector<16x15x64xf32>,
    %c2_81 = arith.constant 2 : index
    %c0_82 = arith.constant 0 : index
    %c0_83 = arith.constant 0 : index
    %75 = vector.load %arg3[%c2_81, %c0_82, %c0_83] : memref<5x1x64xf32, #tpu.memory_space<vmem>>, vector<1x1x64xf32>
    %76 = vector.shape_cast %75 : vector<1x1x64xf32> to vector<1x64xf32>
    %77 = vector.broadcast %76 : vector<1x64xf32> to vector<256x64xf32>
    %78 = arith.addf %37, %77 : vector<256x64xf32>
    %c0_84 = arith.constant 0 : index
    %c0_85 = arith.constant 0 : index
    %c0_86 = arith.constant 0 : index
    %79 = vector.load %arg5[%c0_84, %c0_85, %c0_86] : memref<18x16x192xf32, #tpu.memory_space<vmem>>, vector<18x16x192xf32>
    %80 = arith.truncf %79 : vector<18x16x192xf32> to vector<18x16x192xbf16>
    %81 = vector.extract_strided_slice %80 {offsets = [0, 0, 0], sizes = [16, 16, 192], strides = [1, 1, 1]} : vector<18x16x192xbf16> to vector<16x16x192xbf16>
    %82 = vector.shape_cast %81 : vector<16x16x192xbf16> to vector<256x192xbf16>
    %c2_87 = arith.constant 2 : index
    %c0_88 = arith.constant 0 : index
    %c0_89 = arith.constant 0 : index
    %c0_90 = arith.constant 0 : index
    %83 = vector.load %arg2[%c2_87, %c0_88, %c0_89, %c0_90] : memref<5x3x192x64xbf16, #tpu.memory_space<vmem>>, vector<1x1x192x64xbf16>
    %84 = vector.shape_cast %83 : vector<1x1x192x64xbf16> to vector<192x64xbf16>
    %cst_91 = arith.constant dense<0.000000e+00> : vector<256x64xf32>
    %85 = tpu.matmul %82, %84, %cst_91 {dimension_numbers = #tpu.dot_dimension_numbers<[1], [0], [0], [1], [0, 0, 1, 1], [], []>} : vector<256x192xbf16>, vector<192x64xbf16>, vector<256x64xf32> -> vector<256x64xf32>
    %86 = arith.addf %78, %85 : vector<256x64xf32>
    %87 = vector.extract_strided_slice %80 {offsets = [1, 0, 0], sizes = [16, 16, 192], strides = [1, 1, 1]} : vector<18x16x192xbf16> to vector<16x16x192xbf16>
    %88 = vector.shape_cast %87 : vector<16x16x192xbf16> to vector<256x192xbf16>
    %c2_92 = arith.constant 2 : index
    %c1_93 = arith.constant 1 : index
    %c0_94 = arith.constant 0 : index
    %c0_95 = arith.constant 0 : index
    %89 = vector.load %arg2[%c2_92, %c1_93, %c0_94, %c0_95] : memref<5x3x192x64xbf16, #tpu.memory_space<vmem>>, vector<1x1x192x64xbf16>
    %90 = vector.shape_cast %89 : vector<1x1x192x64xbf16> to vector<192x64xbf16>
    %cst_96 = arith.constant dense<0.000000e+00> : vector<256x64xf32>
    %91 = tpu.matmul %88, %90, %cst_96 {dimension_numbers = #tpu.dot_dimension_numbers<[1], [0], [0], [1], [0, 0, 1, 1], [], []>} : vector<256x192xbf16>, vector<192x64xbf16>, vector<256x64xf32> -> vector<256x64xf32>
    %92 = arith.addf %86, %91 : vector<256x64xf32>
    %93 = vector.extract_strided_slice %80 {offsets = [2, 0, 0], sizes = [16, 16, 192], strides = [1, 1, 1]} : vector<18x16x192xbf16> to vector<16x16x192xbf16>
    %94 = vector.shape_cast %93 : vector<16x16x192xbf16> to vector<256x192xbf16>
    %c2_97 = arith.constant 2 : index
    %c2_98 = arith.constant 2 : index
    %c0_99 = arith.constant 0 : index
    %c0_100 = arith.constant 0 : index
    %95 = vector.load %arg2[%c2_97, %c2_98, %c0_99, %c0_100] : memref<5x3x192x64xbf16, #tpu.memory_space<vmem>>, vector<1x1x192x64xbf16>
    %96 = vector.shape_cast %95 : vector<1x1x192x64xbf16> to vector<192x64xbf16>
    %cst_101 = arith.constant dense<0.000000e+00> : vector<256x64xf32>
    %97 = tpu.matmul %94, %96, %cst_101 {dimension_numbers = #tpu.dot_dimension_numbers<[1], [0], [0], [1], [0, 0, 1, 1], [], []>} : vector<256x192xbf16>, vector<192x64xbf16>, vector<256x64xf32> -> vector<256x64xf32>
    %98 = arith.addf %92, %97 : vector<256x64xf32>
    %99 = vector.shape_cast %98 : vector<256x64xf32> to vector<16x16x64xf32>
    %c1_102 = arith.constant 1 : index
    %c0_103 = arith.constant 0 : index
    %c64_104 = arith.constant 64 : index
    %100 = vector.load %arg5[%c1_102, %c0_103, %c64_104] : memref<18x16x192xf32, #tpu.memory_space<vmem>>, vector<16x16x64xf32>
    tpu.vector_store %arg5[%c1_102, %c0_103, %c64_104], %99 {strides = array<i32>} : memref<18x16x192xf32, #tpu.memory_space<vmem>>, vector<16x16x64xf32>,
    %101 = vector.extract_strided_slice %99 {offsets = [0, 0, 0], sizes = [16, 15, 64], strides = [1, 1, 1]} : vector<16x16x64xf32> to vector<16x15x64xf32>
    %c1_105 = arith.constant 1 : index
    %c1_106 = arith.constant 1 : index
    %c0_107 = arith.constant 0 : index
    %102 = vector.load %arg5[%c1_105, %c1_106, %c0_107] : memref<18x16x192xf32, #tpu.memory_space<vmem>>, vector<16x15x64xf32>
    tpu.vector_store %arg5[%c1_105, %c1_106, %c0_107], %101 {strides = array<i32>} : memref<18x16x192xf32, #tpu.memory_space<vmem>>, vector<16x15x64xf32>,
    %103 = vector.extract_strided_slice %99 {offsets = [0, 1, 0], sizes = [16, 15, 64], strides = [1, 1, 1]} : vector<16x16x64xf32> to vector<16x15x64xf32>
    %c1_108 = arith.constant 1 : index
    %c0_109 = arith.constant 0 : index
    %c128_110 = arith.constant 128 : index
    %104 = vector.load %arg5[%c1_108, %c0_109, %c128_110] : memref<18x16x192xf32, #tpu.memory_space<vmem>>, vector<16x15x64xf32>
    tpu.vector_store %arg5[%c1_108, %c0_109, %c128_110], %103 {strides = array<i32>} : memref<18x16x192xf32, #tpu.memory_space<vmem>>, vector<16x15x64xf32>,
    %c3 = arith.constant 3 : index
    %c0_111 = arith.constant 0 : index
    %c0_112 = arith.constant 0 : index
    %105 = vector.load %arg3[%c3, %c0_111, %c0_112] : memref<5x1x64xf32, #tpu.memory_space<vmem>>, vector<1x1x64xf32>
    %106 = vector.shape_cast %105 : vector<1x1x64xf32> to vector<1x64xf32>
    %c0_113 = arith.constant 0 : index
    %c0_114 = arith.constant 0 : index
    %c0_115 = arith.constant 0 : index
    %107 = vector.load %arg5[%c0_113, %c0_114, %c0_115] : memref<18x16x192xf32, #tpu.memory_space<vmem>>, vector<18x16x192xf32>
    %108 = arith.truncf %107 : vector<18x16x192xf32> to vector<18x16x192xbf16>
    %109 = vector.extract_strided_slice %108 {offsets = [0, 0, 0], sizes = [16, 16, 192], strides = [1, 1, 1]} : vector<18x16x192xbf16> to vector<16x16x192xbf16>
    %110 = vector.shape_cast %109 : vector<16x16x192xbf16> to vector<256x192xbf16>
    %c3_116 = arith.constant 3 : index
    %c0_117 = arith.constant 0 : index
    %c0_118 = arith.constant 0 : index
    %c0_119 = arith.constant 0 : index
    %111 = vector.load %arg2[%c3_116, %c0_117, %c0_118, %c0_119] : memref<5x3x192x64xbf16, #tpu.memory_space<vmem>>, vector<1x1x192x64xbf16>
    %112 = vector.shape_cast %111 : vector<1x1x192x64xbf16> to vector<192x64xbf16>
    %cst_120 = arith.constant dense<0.000000e+00> : vector<256x64xf32>
    %113 = tpu.matmul %110, %112, %cst_120 {dimension_numbers = #tpu.dot_dimension_numbers<[1], [0], [0], [1], [0, 0, 1, 1], [], []>} : vector<256x192xbf16>, vector<192x64xbf16>, vector<256x64xf32> -> vector<256x64xf32>
    %114 = vector.broadcast %106 : vector<1x64xf32> to vector<256x64xf32>
    %115 = arith.addf %114, %113 : vector<256x64xf32>
    %116 = vector.extract_strided_slice %108 {offsets = [1, 0, 0], sizes = [16, 16, 192], strides = [1, 1, 1]} : vector<18x16x192xbf16> to vector<16x16x192xbf16>
    %117 = vector.shape_cast %116 : vector<16x16x192xbf16> to vector<256x192xbf16>
    %c3_121 = arith.constant 3 : index
    %c1_122 = arith.constant 1 : index
    %c0_123 = arith.constant 0 : index
    %c0_124 = arith.constant 0 : index
    %118 = vector.load %arg2[%c3_121, %c1_122, %c0_123, %c0_124] : memref<5x3x192x64xbf16, #tpu.memory_space<vmem>>, vector<1x1x192x64xbf16>
    %119 = vector.shape_cast %118 : vector<1x1x192x64xbf16> to vector<192x64xbf16>
    %cst_125 = arith.constant dense<0.000000e+00> : vector<256x64xf32>
    %120 = tpu.matmul %117, %119, %cst_125 {dimension_numbers = #tpu.dot_dimension_numbers<[1], [0], [0], [1], [0, 0, 1, 1], [], []>} : vector<256x192xbf16>, vector<192x64xbf16>, vector<256x64xf32> -> vector<256x64xf32>
    %121 = arith.addf %115, %120 : vector<256x64xf32>
    %122 = vector.extract_strided_slice %108 {offsets = [2, 0, 0], sizes = [16, 16, 192], strides = [1, 1, 1]} : vector<18x16x192xbf16> to vector<16x16x192xbf16>
    %123 = vector.shape_cast %122 : vector<16x16x192xbf16> to vector<256x192xbf16>
    %c3_126 = arith.constant 3 : index
    %c2_127 = arith.constant 2 : index
    %c0_128 = arith.constant 0 : index
    %c0_129 = arith.constant 0 : index
    %124 = vector.load %arg2[%c3_126, %c2_127, %c0_128, %c0_129] : memref<5x3x192x64xbf16, #tpu.memory_space<vmem>>, vector<1x1x192x64xbf16>
    %125 = vector.shape_cast %124 : vector<1x1x192x64xbf16> to vector<192x64xbf16>
    %cst_130 = arith.constant dense<0.000000e+00> : vector<256x64xf32>
    %126 = tpu.matmul %123, %125, %cst_130 {dimension_numbers = #tpu.dot_dimension_numbers<[1], [0], [0], [1], [0, 0, 1, 1], [], []>} : vector<256x192xbf16>, vector<192x64xbf16>, vector<256x64xf32> -> vector<256x64xf32>
    %127 = arith.addf %121, %126 : vector<256x64xf32>
    %cst_131 = arith.constant 0.000000e+00 : f32
    %128 = vector.broadcast %cst_131 : f32 to vector<256x64xf32>
    %129 = arith.maximumf %127, %128 : vector<256x64xf32>
    %130 = vector.shape_cast %129 : vector<256x64xf32> to vector<16x16x64xf32>
    %c1_132 = arith.constant 1 : index
    %c0_133 = arith.constant 0 : index
    %c64_134 = arith.constant 64 : index
    %131 = vector.load %arg5[%c1_132, %c0_133, %c64_134] : memref<18x16x192xf32, #tpu.memory_space<vmem>>, vector<16x16x64xf32>
    tpu.vector_store %arg5[%c1_132, %c0_133, %c64_134], %130 {strides = array<i32>} : memref<18x16x192xf32, #tpu.memory_space<vmem>>, vector<16x16x64xf32>,
    %132 = vector.extract_strided_slice %130 {offsets = [0, 0, 0], sizes = [16, 15, 64], strides = [1, 1, 1]} : vector<16x16x64xf32> to vector<16x15x64xf32>
    %c1_135 = arith.constant 1 : index
    %c1_136 = arith.constant 1 : index
    %c0_137 = arith.constant 0 : index
    %133 = vector.load %arg5[%c1_135, %c1_136, %c0_137] : memref<18x16x192xf32, #tpu.memory_space<vmem>>, vector<16x15x64xf32>
    tpu.vector_store %arg5[%c1_135, %c1_136, %c0_137], %132 {strides = array<i32>} : memref<18x16x192xf32, #tpu.memory_space<vmem>>, vector<16x15x64xf32>,
    %134 = vector.extract_strided_slice %130 {offsets = [0, 1, 0], sizes = [16, 15, 64], strides = [1, 1, 1]} : vector<16x16x64xf32> to vector<16x15x64xf32>
    %c1_138 = arith.constant 1 : index
    %c0_139 = arith.constant 0 : index
    %c128_140 = arith.constant 128 : index
    %135 = vector.load %arg5[%c1_138, %c0_139, %c128_140] : memref<18x16x192xf32, #tpu.memory_space<vmem>>, vector<16x15x64xf32>
    tpu.vector_store %arg5[%c1_138, %c0_139, %c128_140], %134 {strides = array<i32>} : memref<18x16x192xf32, #tpu.memory_space<vmem>>, vector<16x15x64xf32>,
    %c4 = arith.constant 4 : index
    %c0_141 = arith.constant 0 : index
    %c0_142 = arith.constant 0 : index
    %136 = vector.load %arg3[%c4, %c0_141, %c0_142] : memref<5x1x64xf32, #tpu.memory_space<vmem>>, vector<1x1x64xf32>
    %137 = vector.shape_cast %136 : vector<1x1x64xf32> to vector<1x64xf32>
    %138 = vector.broadcast %137 : vector<1x64xf32> to vector<256x64xf32>
    %139 = arith.addf %98, %138 : vector<256x64xf32>
    %c0_143 = arith.constant 0 : index
    %c0_144 = arith.constant 0 : index
    %c0_145 = arith.constant 0 : index
    %140 = vector.load %arg5[%c0_143, %c0_144, %c0_145] : memref<18x16x192xf32, #tpu.memory_space<vmem>>, vector<18x16x192xf32>
    %141 = arith.truncf %140 : vector<18x16x192xf32> to vector<18x16x192xbf16>
    %142 = vector.extract_strided_slice %141 {offsets = [0, 0, 0], sizes = [16, 16, 192], strides = [1, 1, 1]} : vector<18x16x192xbf16> to vector<16x16x192xbf16>
    %143 = vector.shape_cast %142 : vector<16x16x192xbf16> to vector<256x192xbf16>
    %c4_146 = arith.constant 4 : index
    %c0_147 = arith.constant 0 : index
    %c0_148 = arith.constant 0 : index
    %c0_149 = arith.constant 0 : index
    %144 = vector.load %arg2[%c4_146, %c0_147, %c0_148, %c0_149] : memref<5x3x192x64xbf16, #tpu.memory_space<vmem>>, vector<1x1x192x64xbf16>
    %145 = vector.shape_cast %144 : vector<1x1x192x64xbf16> to vector<192x64xbf16>
    %cst_150 = arith.constant dense<0.000000e+00> : vector<256x64xf32>
    %146 = tpu.matmul %143, %145, %cst_150 {dimension_numbers = #tpu.dot_dimension_numbers<[1], [0], [0], [1], [0, 0, 1, 1], [], []>} : vector<256x192xbf16>, vector<192x64xbf16>, vector<256x64xf32> -> vector<256x64xf32>
    %147 = arith.addf %139, %146 : vector<256x64xf32>
    %148 = vector.extract_strided_slice %141 {offsets = [1, 0, 0], sizes = [16, 16, 192], strides = [1, 1, 1]} : vector<18x16x192xbf16> to vector<16x16x192xbf16>
    %149 = vector.shape_cast %148 : vector<16x16x192xbf16> to vector<256x192xbf16>
    %c4_151 = arith.constant 4 : index
    %c1_152 = arith.constant 1 : index
    %c0_153 = arith.constant 0 : index
    %c0_154 = arith.constant 0 : index
    %150 = vector.load %arg2[%c4_151, %c1_152, %c0_153, %c0_154] : memref<5x3x192x64xbf16, #tpu.memory_space<vmem>>, vector<1x1x192x64xbf16>
    %151 = vector.shape_cast %150 : vector<1x1x192x64xbf16> to vector<192x64xbf16>
    %cst_155 = arith.constant dense<0.000000e+00> : vector<256x64xf32>
    %152 = tpu.matmul %149, %151, %cst_155 {dimension_numbers = #tpu.dot_dimension_numbers<[1], [0], [0], [1], [0, 0, 1, 1], [], []>} : vector<256x192xbf16>, vector<192x64xbf16>, vector<256x64xf32> -> vector<256x64xf32>
    %153 = arith.addf %147, %152 : vector<256x64xf32>
    %154 = vector.extract_strided_slice %141 {offsets = [2, 0, 0], sizes = [16, 16, 192], strides = [1, 1, 1]} : vector<18x16x192xbf16> to vector<16x16x192xbf16>
    %155 = vector.shape_cast %154 : vector<16x16x192xbf16> to vector<256x192xbf16>
    %c4_156 = arith.constant 4 : index
    %c2_157 = arith.constant 2 : index
    %c0_158 = arith.constant 0 : index
    %c0_159 = arith.constant 0 : index
    %156 = vector.load %arg2[%c4_156, %c2_157, %c0_158, %c0_159] : memref<5x3x192x64xbf16, #tpu.memory_space<vmem>>, vector<1x1x192x64xbf16>
    %157 = vector.shape_cast %156 : vector<1x1x192x64xbf16> to vector<192x64xbf16>
    %cst_160 = arith.constant dense<0.000000e+00> : vector<256x64xf32>
    %158 = tpu.matmul %155, %157, %cst_160 {dimension_numbers = #tpu.dot_dimension_numbers<[1], [0], [0], [1], [0, 0, 1, 1], [], []>} : vector<256x192xbf16>, vector<192x64xbf16>, vector<256x64xf32> -> vector<256x64xf32>
    %159 = arith.addf %153, %158 : vector<256x64xf32>
    %160 = vector.shape_cast %159 : vector<256x64xf32> to vector<16x16x64xf32>
    %c0_161 = arith.constant 0 : index
    %c0_162 = arith.constant 0 : index
    %c0_163 = arith.constant 0 : index
    %c0_164 = arith.constant 0 : index
    %161 = vector.load %arg4[%c0_161, %c0_162, %c0_163, %c0_164] : memref<1x16x16x64xf32, #tpu.memory_space<vmem>>, vector<1x16x16x64xf32>
    %162 = vector.shape_cast %161 : vector<1x16x16x64xf32> to vector<16x16x64xf32>
    %163 = vector.shape_cast %160 : vector<16x16x64xf32> to vector<1x16x16x64xf32>
    tpu.vector_store %arg4[%c0_161, %c0_162, %c0_163, %c0_164], %163 {strides = array<i32>} : memref<1x16x16x64xf32, #tpu.memory_space<vmem>>, vector<1x16x16x64xf32>,
    return
  }
  func.func @transform_0(%arg0: i32) -> (i32, i32, i32, i32) {
    %c0_i32 = arith.constant 0 : i32
    %c0_i32_0 = arith.constant 0 : i32
    %c0_i32_1 = arith.constant 0 : i32
    %c0_i32_2 = arith.constant 0 : i32
    return %arg0, %c0_i32, %c0_i32_0, %c0_i32_1 : i32, i32, i32, i32
  }
  func.func @transform_1(%arg0: i32) -> (i32, i32, i32, i32) {
    %c0_i32 = arith.constant 0 : i32
    %c0_i32_0 = arith.constant 0 : i32
    %c0_i32_1 = arith.constant 0 : i32
    %c0_i32_2 = arith.constant 0 : i32
    %c0_i32_3 = arith.constant 0 : i32
    return %c0_i32, %c0_i32_0, %c0_i32_1, %c0_i32_2 : i32, i32, i32, i32
  }
  func.func @transform_2(%arg0: i32) -> (i32, i32, i32) {
    %c0_i32 = arith.constant 0 : i32
    %c0_i32_0 = arith.constant 0 : i32
    %c0_i32_1 = arith.constant 0 : i32
    %c0_i32_2 = arith.constant 0 : i32
    return %c0_i32, %c0_i32_0, %c0_i32_1 : i32, i32, i32
  }
  func.func @transform_3(%arg0: i32) -> (i32, i32, i32, i32) {
    %c0_i32 = arith.constant 0 : i32
    %c0_i32_0 = arith.constant 0 : i32
    %c0_i32_1 = arith.constant 0 : i32
    %c0_i32_2 = arith.constant 0 : i32
    return %arg0, %c0_i32, %c0_i32_0, %c0_i32_1 : i32, i32, i32, i32
  }
}

</mosaic_0001>

<llo_original>
// kernel: feature_encoder.1
$region0: #{feature_encoder.1}
  #allocation0 [shape = 'u32[]', space=smem, size = 0x4, offset = 0x4, fixed_abs, tag = 'smem constant byte address 0x4 - core index']
  #allocation1 [shape = 'u32[144,128]{1,0:T(1,128)}', space=vmem, size = 0x12000, scoped, tag = 'internal scratch']
  #allocation2 [shape = 'f32[18,16,192]{2,1,0:T(8,128)}', space=vmem, size = 0x48000, scoped, tag = 'scratch operand']
  %s0 = inlined_call_operand.vmem [shape: f32[2,16,16,64], index: 0, kind: input, shape index: {}]
  %s1 = inlined_call_operand.vmem [shape: bf16[5,3,192,64], index: 1, kind: input, shape index: {}]
  %s2 = inlined_call_operand.vmem [shape: f32[5,1,64], index: 2, kind: input, shape index: {}]
  %s3 = inlined_call_operand.hbm [shape: f32[2,16,16,64], index: 3, kind: output, shape index: {}]
  %s4 = sld [smem:[#allocation0]]
  $region45: #{feature_encoder.1} parent=0
    _
  %s6 = ssub.s32 1, %s4
  %s7 = scalar_select 0, %s6, %s4
  $region1: #{feature_encoder.1} parent=0
    #allocation3 [shape = 'u8[262144]{0}', space=vmem, size = 0x40000, scoped, tag = 'output window, operand 0']
    #allocation4 [shape = 's32[2]{0}', space=sflag, size = 0x8, scoped, tag = 'scoped memory for feature_encoder.1']
    %8 = vsyncpa [#allocation4], 0
    %s9 = scalar_lea.sflag [#allocation4], 1
    %10 = vsyncpa %s9, 0
    loop: start=0, step=1, limit=4
    $region2: #{feature_encoder.1} parent=1 // loop_pre_header
      _
    $region3: #{feature_encoder.1} parent=1 // loop_header
      %s12 = sphi 0, %s16
      %p13 = scmp.ge.s32.totalorder %s12, 4
      %s22 = sphi 0, %s24
      %s25 = sphi 0, %s22
      %s26 = sphi 0, %s25
      %s42 = sphi 0, %s26
      %s46 = sphi 0, %s46
      %s48 = sphi 0, %s46
      %s49 = sphi 0, %s48
      %s63 = sphi 0, %s49
      %s67 = sphi 0, %s67
      %s69 = sphi 0, %s67
      %s70 = sphi 0, %s69
      %s84 = sphi 0, %s70
      %s90 = sphi 0, %s92
      %s93 = sphi 0, %s90
      %s94 = sphi 0, %s93
      %s110 = sphi 0, %s94
    $region4: #{feature_encoder.1} parent=1 // loop_header_branch
      %15 = sbr.rel (%p13) target = $region8
    $region5: #{feature_encoder.1} parent=1 // loop_body
      %s17 = ssub.s32 %s12, 1
      %s18 = ssub.s32 %s12, 2
      %s19 = sadd.s32 %s12, 1
      %s20 = ssub.s32 %s12, %s19
      %p21 = scmp.eq.s32.totalorder %s20, 0
      %s23 = sadd.s32 %s22, 1
      %s24 = scalar_select %p21, %s22, %s23
      %p27 = pneg %p21
      %p28 = scmp.eq.s32.totalorder %s12, 1
      %p29 = por %p27, %p28
      %p30 = scmp.ne.s32.totalorder %s22, %s25
      %p31 = scmp.eq.s32.totalorder %s12, 0
      %p32 = por %p30, %p31
      %p33 = scmp.ne.s32.totalorder %s22, %s25
      %p34 = scmp.eq.s32.totalorder %s17, 1
      %p35 = por %p33, %p34
      %p36 = scmp.ne.s32.totalorder %s25, %s26
      %p37 = scmp.eq.s32.totalorder %s17, 0
      %p38 = por %p36, %p37
      %p39 = scmp.ne.s32.totalorder %s25, %s26
      %p40 = scmp.eq.s32.totalorder %s18, 1
      %p41 = por %p39, %p40
      %p43 = scmp.ne.s32.totalorder %s26, %s42
      %p44 = scmp.eq.s32.totalorder %s18, 0
      %p45 = por %p43, %p44
      %s47 = sadd.s32 %s46, 1
      %p50 = scmp.eq.s32.totalorder %s12, 1
      %p51 = scmp.ne.s32.totalorder %s46, %s48
      %p52 = scmp.eq.s32.totalorder %s12, 0
      %p53 = por %p51, %p52
      %p54 = scmp.ne.s32.totalorder %s46, %s48
      %p55 = scmp.eq.s32.totalorder %s17, 1
      %p56 = por %p54, %p55
      %p57 = scmp.ne.s32.totalorder %s48, %s49
      %p58 = scmp.eq.s32.totalorder %s17, 0
      %p59 = por %p57, %p58
      %p60 = scmp.ne.s32.totalorder %s48, %s49
      %p61 = scmp.eq.s32.totalorder %s18, 1
      %p62 = por %p60, %p61
      %p64 = scmp.ne.s32.totalorder %s49, %s63
      %p65 = scmp.eq.s32.totalorder %s18, 0
      %p66 = por %p64, %p65
      %s68 = sadd.s32 %s67, 1
      %p71 = scmp.eq.s32.totalorder %s12, 1
      %p72 = scmp.ne.s32.totalorder %s67, %s69
      %p73 = scmp.eq.s32.totalorder %s12, 0
      %p74 = por %p72, %p73
      %p75 = scmp.ne.s32.totalorder %s67, %s69
      %p76 = scmp.eq.s32.totalorder %s17, 1
      %p77 = por %p75, %p76
      %p78 = scmp.ne.s32.totalorder %s69, %s70
      %p79 = scmp.eq.s32.totalorder %s17, 0
      %p80 = por %p78, %p79
      %p81 = scmp.ne.s32.totalorder %s69, %s70
      %p82 = scmp.eq.s32.totalorder %s18, 1
      %p83 = por %p81, %p82
      %p85 = scmp.ne.s32.totalorder %s70, %s84
      %p86 = scmp.eq.s32.totalorder %s18, 0
      %p87 = por %p85, %p86
      %s88 = ssub.s32 %s12, %s19
      %p89 = scmp.eq.s32.totalorder %s88, 0
      %s91 = sadd.s32 %s90, 1
      %s92 = scalar_select %p89, %s90, %s91
      %p95 = pneg %p89
      %p96 = scmp.eq.s32.totalorder %s12, 1
      %p97 = por %p95, %p96
      %p98 = scmp.ne.s32.totalorder %s90, %s93
      %p99 = scmp.eq.s32.totalorder %s12, 0
      %p100 = por %p98, %p99
      %p101 = scmp.ne.s32.totalorder %s90, %s93
      %p102 = scmp.eq.s32.totalorder %s17, 1
      %p103 = por %p101, %p102
      %p104 = scmp.ne.s32.totalorder %s93, %s94
      %p105 = scmp.eq.s32.totalorder %s17, 0
      %p106 = por %p104, %p105
      %p107 = scmp.ne.s32.totalorder %s93, %s94
      %p108 = scmp.eq.s32.totalorder %s18, 1
      %p109 = por %p107, %p108
      %p111 = scmp.ne.s32.totalorder %s94, %s110
      %p112 = scmp.eq.s32.totalorder %s18, 0
      %p113 = por %p111, %p112
      %p114 = scmp.le.s32.totalorder 1, %s12
      %p115 = scmp.lt.s32.totalorder %s12, 3
      %p116 = pnand %p114, %p115
      %p117 = pneg %p116
      // Predicated region
      $region9: #{feature_encoder.1} parent=5 // pred_check
        _
      $region10: #{feature_encoder.1} parent=5 // pred_check_branch
        %119 = sbr.rel (%p116) target = $region12
      $region11: #{feature_encoder.1} parent=5 // pred_region
        %s120 = ssub.s32 %s12, 1
        // Predicated region
        $region13: #{feature_encoder.1} parent=11 // pred_check
          %p121 = pneg %p59
        $region14: #{feature_encoder.1} parent=11 // pred_check_branch
          %123 = sbr.rel (%p121) target = $region16
        $region15: #{feature_encoder.1} parent=11 // pred_region
          _
        $region16: #{feature_encoder.1} parent=11 // pred_fallthru
          _
        // Predicated region
        $region17: #{feature_encoder.1} parent=11 // pred_check
          %p124 = pneg %p80
        $region18: #{feature_encoder.1} parent=11 // pred_check_branch
          %126 = sbr.rel (%p124) target = $region20
        $region19: #{feature_encoder.1} parent=11 // pred_region
          _
        $region20: #{feature_encoder.1} parent=11 // pred_fallthru
          _
      $region12: #{feature_encoder.1} parent=5 // pred_fallthru
        _
      %p127 = scmp.lt.s32.totalorder %s12, 2
      // Predicated region
      $region21: #{feature_encoder.1} parent=5 // pred_check
        %p128 = pneg %p127
      $region22: #{feature_encoder.1} parent=5 // pred_check_branch
        %130 = sbr.rel (%p128) target = $region24
      $region23: #{feature_encoder.1} parent=5 // pred_region
        // Predicated region
        $region25: #{feature_encoder.1} parent=23 // pred_check
          %p131 = pneg %p32
        $region26: #{feature_encoder.1} parent=23 // pred_check_branch
          %133 = sbr.rel (%p131) target = $region28
        $region27: #{feature_encoder.1} parent=23 // pred_region
          %p134 = scmp.lt.s32.totalorder %s12, 1
          %s135 = scalar_select %p134, %s12, 1
          %s136 = smul.addr %s135, 32
          %s137 = smul.addr %s136, 8
          %s138 = scalar_lea.vmem %s0, %s137
        $region28: #{feature_encoder.1} parent=23 // pred_fallthru
          _
      $region24: #{feature_encoder.1} parent=5 // pred_fallthru
        _
      %p139 = scmp.le.s32.totalorder 1, %s12
      %p140 = scmp.lt.s32.totalorder %s12, 3
      %p141 = pnand %p139, %p140
      %p142 = pneg %p141
      // Predicated region
      $region29: #{feature_encoder.1} parent=5 // pred_check
        _
      $region30: #{feature_encoder.1} parent=5 // pred_check_branch
        %144 = sbr.rel (%p141) target = $region32
      $region31: #{feature_encoder.1} parent=5 // pred_region
        %s145 = ssub.s32 %s12, 1
        %p146 = scmp.lt.s32.totalorder %s17, 1
        %s147 = scalar_select %p146, %s17, 1
        %s148 = smul.addr %s147, 32
        %s149 = smul.addr %s148, 8
        %s150 = scalar_lea.vmem %s0, %s149
        %p151 = pneg %p38
        %p152 = pneg %p35
        %p153 = pneg %p59
        %p154 = pneg %p56
        %p155 = pneg %p80
        %p156 = pneg %p77
        %p157 = pneg %p106
        %p158 = pneg %p103
        %s159 = sand.u32 %s93, 1
        %s160 = scalar_lea.sflag [#allocation4], %s159
        %s161 = sand.u32 %s93, 1
        %s162 = smul.addr %s161, 256
        %s163 = scalar_lea.vmem [#allocation3], %s162
        %p164 = scmp.lt.s32.totalorder %s17, 1
        %s165 = scalar_select %p164, %s17, 1
        %s166 = smul.addr %s165, 32
        %s167 = smul.addr %s166, 8
        %s168 = scalar_lea.vmem %s0, %s167
        %170 = vst [vmem:[#allocation2] sm:$0xff] 0.0
        %vm171 = vcmask 523264
        %172 = vst.msk [vmem:[#allocation2 + $0x8] sm:$0xff] %vm171, 0.0
        %173 = vst [vmem:[#allocation2 + $0x10] sm:$0xff] 0.0
        %174 = vst.msk [vmem:[#allocation2 + $0x18] sm:$0xff] %vm171, 0.0
        %s175 = scalar_lea.vmem [#allocation2], 544
        %176 = vst [vmem:[%s175] sm:$0xff] 0.0
        %177 = vst.msk [vmem:[%s175 + $0x8] sm:$0xff] %vm171, 0.0
        %178 = vst [vmem:[%s175 + $0x10] sm:$0xff] 0.0
        %179 = vst.msk [vmem:[%s175 + $0x18] sm:$0xff] %vm171, 0.0
        %vm180 = vcmask 516096
        %181 = vst.msk [vmem:[#allocation2] sm:$0x1] %vm180, 0.0
        %182 = vst.msk [vmem:[#allocation2 + $0x20] sm:$0x1] %vm180, 0.0
        %183 = vst.msk [vmem:[#allocation2 + $0x40] sm:$0x1] %vm180, 0.0
        %184 = vst.msk [vmem:[#allocation2 + $0x60] sm:$0x1] %vm180, 0.0
        %185 = vst.msk [vmem:[#allocation2 + $0x80] sm:$0x1] %vm180, 0.0
        %186 = vst.msk [vmem:[#allocation2 + $0xa0] sm:$0x1] %vm180, 0.0
        %187 = vst.msk [vmem:[#allocation2 + $0xc0] sm:$0x1] %vm180, 0.0
        %188 = vst.msk [vmem:[#allocation2 + $0xe0] sm:$0x1] %vm180, 0.0
        %189 = vst.msk [vmem:[#allocation2 + $0x100] sm:$0x1] %vm180, 0.0
        %190 = vst.msk [vmem:[#allocation2 + $0x120] sm:$0x1] %vm180, 0.0
        %191 = vst.msk [vmem:[#allocation2 + $0x140] sm:$0x1] %vm180, 0.0
        %192 = vst.msk [vmem:[#allocation2 + $0x160] sm:$0x1] %vm180, 0.0
        %193 = vst.msk [vmem:[#allocation2 + $0x180] sm:$0x1] %vm180, 0.0
        %194 = vst.msk [vmem:[#allocation2 + $0x1a0] sm:$0x1] %vm180, 0.0
        %195 = vst.msk [vmem:[#allocation2 + $0x1c0] sm:$0x1] %vm180, 0.0
        %196 = vst.msk [vmem:[#allocation2 + $0x1e0] sm:$0x1] %vm180, 0.0
        %197 = vst.msk [vmem:[#allocation2 + $0x200] sm:$0x1] %vm180, 0.0
        %198 = vst.msk [vmem:[#allocation2 + $0x220] sm:$0x1] %vm180, 0.0
        %199 = vst.msk [vmem:[#allocation2 + $0x1f] sm:$0x1] %vm180, 0.0
        %200 = vst.msk [vmem:[#allocation2 + $0x3f] sm:$0x1] %vm180, 0.0
        %201 = vst.msk [vmem:[#allocation2 + $0x5f] sm:$0x1] %vm180, 0.0
        %202 = vst.msk [vmem:[#allocation2 + $0x7f] sm:$0x1] %vm180, 0.0
        %203 = vst.msk [vmem:[#allocation2 + $0x9f] sm:$0x1] %vm180, 0.0
        %204 = vst.msk [vmem:[#allocation2 + $0xbf] sm:$0x1] %vm180, 0.0
        %205 = vst.msk [vmem:[#allocation2 + $0xdf] sm:$0x1] %vm180, 0.0
        %206 = vst.msk [vmem:[#allocation2 + $0xff] sm:$0x1] %vm180, 0.0
        %207 = vst.msk [vmem:[#allocation2 + $0x11f] sm:$0x1] %vm180, 0.0
        %208 = vst.msk [vmem:[#allocation2 + $0x13f] sm:$0x1] %vm180, 0.0
        %209 = vst.msk [vmem:[#allocation2 + $0x15f] sm:$0x1] %vm180, 0.0
        %210 = vst.msk [vmem:[#allocation2 + $0x17f] sm:$0x1] %vm180, 0.0
        %211 = vst.msk [vmem:[#allocation2 + $0x19f] sm:$0x1] %vm180, 0.0
        %212 = vst.msk [vmem:[#allocation2 + $0x1bf] sm:$0x1] %vm180, 0.0
        %213 = vst.msk [vmem:[#allocation2 + $0x1df] sm:$0x1] %vm180, 0.0
        %214 = vst.msk [vmem:[#allocation2 + $0x1ff] sm:$0x1] %vm180, 0.0
        %215 = vst.msk [vmem:[#allocation2 + $0x21f] sm:$0x1] %vm180, 0.0
        %216 = vst.msk [vmem:[#allocation2 + $0x23f] sm:$0x1] %vm180, 0.0
        %v217 = vld [vmem:[%s168] sm:$0xff]
        %v218 = vld [vmem:[%s168 + $0x8] sm:$0xff]
        %v219 = vld [vmem:[%s168 + $0x10] sm:$0xff]
        %v220 = vld [vmem:[%s168 + $0x18] sm:$0xff]
        %v221 = vld [vmem:[%s168 + $0x20] sm:$0xff]
        %v222 = vld [vmem:[%s168 + $0x28] sm:$0xff]
        %v223 = vld [vmem:[%s168 + $0x30] sm:$0xff]
        %v224 = vld [vmem:[%s168 + $0x38] sm:$0xff]
        %v225 = vld [vmem:[%s168 + $0x40] sm:$0xff]
        %v226 = vld [vmem:[%s168 + $0x48] sm:$0xff]
        %v227 = vld [vmem:[%s168 + $0x50] sm:$0xff]
        %v228 = vld [vmem:[%s168 + $0x58] sm:$0xff]
        %v229 = vld [vmem:[%s168 + $0x60] sm:$0xff]
        %v230 = vld [vmem:[%s168 + $0x68] sm:$0xff]
        %v231 = vld [vmem:[%s168 + $0x70] sm:$0xff]
        %v232 = vld [vmem:[%s168 + $0x78] sm:$0xff]
        %v233 = vld [vmem:[%s168 + $0x80] sm:$0xff]
        %v234 = vld [vmem:[%s168 + $0x88] sm:$0xff]
        %v235 = vld [vmem:[%s168 + $0x90] sm:$0xff]
        %v236 = vld [vmem:[%s168 + $0x98] sm:$0xff]
        %v237 = vld [vmem:[%s168 + $0xa0] sm:$0xff]
        %v238 = vld [vmem:[%s168 + $0xa8] sm:$0xff]
        %v239 = vld [vmem:[%s168 + $0xb0] sm:$0xff]
        %v240 = vld [vmem:[%s168 + $0xb8] sm:$0xff]
        %v241 = vld [vmem:[%s168 + $0xc0] sm:$0xff]
        %v242 = vld [vmem:[%s168 + $0xc8] sm:$0xff]
        %v243 = vld [vmem:[%s168 + $0xd0] sm:$0xff]
        %v244 = vld [vmem:[%s168 + $0xd8] sm:$0xff]
        %v245 = vld [vmem:[%s168 + $0xe0] sm:$0xff]
        %v246 = vld [vmem:[%s168 + $0xe8] sm:$0xff]
        %v247 = vld [vmem:[%s168 + $0xf0] sm:$0xff]
        %v248 = vld [vmem:[%s168 + $0xf8] sm:$0xff]
        %281 = vrot.lane.b32.xlu0 %v217, 64
        %v282 = vpop.permute.xlu0 %281
        %283 = vrot.lane.b32.xlu0 %v218, 64
        %v284 = vpop.permute.xlu0 %283
        %285 = vrot.lane.b32.xlu0 %v219, 64
        %v286 = vpop.permute.xlu0 %285
        %287 = vrot.lane.b32.xlu0 %v220, 64
        %v288 = vpop.permute.xlu0 %287
        %289 = vrot.lane.b32.xlu0 %v221, 64
        %v290 = vpop.permute.xlu0 %289
        %291 = vrot.lane.b32.xlu0 %v222, 64
        %v292 = vpop.permute.xlu0 %291
        %293 = vrot.lane.b32.xlu0 %v223, 64
        %v294 = vpop.permute.xlu0 %293
        %295 = vrot.lane.b32.xlu0 %v224, 64
        %v296 = vpop.permute.xlu0 %295
        %297 = vrot.lane.b32.xlu0 %v225, 64
        %v298 = vpop.permute.xlu0 %297
        %299 = vrot.lane.b32.xlu0 %v226, 64
        %v300 = vpop.permute.xlu0 %299
        %301 = vrot.lane.b32.xlu0 %v227, 64
        %v302 = vpop.permute.xlu0 %301
        %303 = vrot.lane.b32.xlu0 %v228, 64
        %v304 = vpop.permute.xlu0 %303
        %305 = vrot.lane.b32.xlu0 %v229, 64
        %v306 = vpop.permute.xlu0 %305
        %307 = vrot.lane.b32.xlu0 %v230, 64
        %v308 = vpop.permute.xlu0 %307
        %309 = vrot.lane.b32.xlu0 %v231, 64
        %v310 = vpop.permute.xlu0 %309
        %311 = vrot.lane.b32.xlu0 %v232, 64
        %v312 = vpop.permute.xlu0 %311
        %313 = vrot.lane.b32.xlu0 %v233, 64
        %v314 = vpop.permute.xlu0 %313
        %315 = vrot.lane.b32.xlu0 %v234, 64
        %v316 = vpop.permute.xlu0 %315
        %317 = vrot.lane.b32.xlu0 %v235, 64
        %v318 = vpop.permute.xlu0 %317
        %319 = vrot.lane.b32.xlu0 %v236, 64
        %v320 = vpop.permute.xlu0 %319
        %321 = vrot.lane.b32.xlu0 %v237, 64
        %v322 = vpop.permute.xlu0 %321
        %323 = vrot.lane.b32.xlu0 %v238, 64
        %v324 = vpop.permute.xlu0 %323
        %325 = vrot.lane.b32.xlu0 %v239, 64
        %v326 = vpop.permute.xlu0 %325
        %327 = vrot.lane.b32.xlu0 %v240, 64
        %v328 = vpop.permute.xlu0 %327
        %329 = vrot.lane.b32.xlu0 %v241, 64
        %v330 = vpop.permute.xlu0 %329
        %331 = vrot.lane.b32.xlu0 %v242, 64
        %v332 = vpop.permute.xlu0 %331
        %333 = vrot.lane.b32.xlu0 %v243, 64
        %v334 = vpop.permute.xlu0 %333
        %335 = vrot.lane.b32.xlu0 %v244, 64
        %v336 = vpop.permute.xlu0 %335
        %337 = vrot.lane.b32.xlu0 %v245, 64
        %v338 = vpop.permute.xlu0 %337
        %339 = vrot.lane.b32.xlu0 %v246, 64
        %v340 = vpop.permute.xlu0 %339
        %341 = vrot.lane.b32.xlu0 %v247, 64
        %v342 = vpop.permute.xlu0 %341
        %343 = vrot.lane.b32.xlu0 %v248, 64
        %v344 = vpop.permute.xlu0 %343
        %s377 = scalar_lea.vmem [#allocation2], 32
        %vm378 = vcmask 1048064
        %379 = vst.msk [vmem:[%s377] sm:$0xff] %vm378, %v282
        %380 = vst.msk [vmem:[%s377 + $0x10] sm:$0xff] %vm378, %v284
        %381 = vst.msk [vmem:[%s377 + $0x20] sm:$0xff] %vm378, %v286
        %382 = vst.msk [vmem:[%s377 + $0x30] sm:$0xff] %vm378, %v288
        %383 = vst.msk [vmem:[%s377 + $0x40] sm:$0xff] %vm378, %v290
        %384 = vst.msk [vmem:[%s377 + $0x50] sm:$0xff] %vm378, %v292
        %385 = vst.msk [vmem:[%s377 + $0x60] sm:$0xff] %vm378, %v294
        %386 = vst.msk [vmem:[%s377 + $0x70] sm:$0xff] %vm378, %v296
        %387 = vst.msk [vmem:[%s377 + $0x80] sm:$0xff] %vm378, %v298
        %388 = vst.msk [vmem:[%s377 + $0x90] sm:$0xff] %vm378, %v300
        %389 = vst.msk [vmem:[%s377 + $0xa0] sm:$0xff] %vm378, %v302
        %390 = vst.msk [vmem:[%s377 + $0xb0] sm:$0xff] %vm378, %v304
        %391 = vst.msk [vmem:[%s377 + $0xc0] sm:$0xff] %vm378, %v306
        %392 = vst.msk [vmem:[%s377 + $0xd0] sm:$0xff] %vm378, %v308
        %393 = vst.msk [vmem:[%s377 + $0xe0] sm:$0xff] %vm378, %v310
        %394 = vst.msk [vmem:[%s377 + $0xf0] sm:$0xff] %vm378, %v312
        %395 = vst.msk [vmem:[%s377 + $0x100] sm:$0xff] %vm378, %v314
        %396 = vst.msk [vmem:[%s377 + $0x110] sm:$0xff] %vm378, %v316
        %397 = vst.msk [vmem:[%s377 + $0x120] sm:$0xff] %vm378, %v318
        %398 = vst.msk [vmem:[%s377 + $0x130] sm:$0xff] %vm378, %v320
        %399 = vst.msk [vmem:[%s377 + $0x140] sm:$0xff] %vm378, %v322
        %400 = vst.msk [vmem:[%s377 + $0x150] sm:$0xff] %vm378, %v324
        %401 = vst.msk [vmem:[%s377 + $0x160] sm:$0xff] %vm378, %v326
        %402 = vst.msk [vmem:[%s377 + $0x170] sm:$0xff] %vm378, %v328
        %403 = vst.msk [vmem:[%s377 + $0x180] sm:$0xff] %vm378, %v330
        %404 = vst.msk [vmem:[%s377 + $0x190] sm:$0xff] %vm378, %v332
        %405 = vst.msk [vmem:[%s377 + $0x1a0] sm:$0xff] %vm378, %v334
        %406 = vst.msk [vmem:[%s377 + $0x1b0] sm:$0xff] %vm378, %v336
        %407 = vst.msk [vmem:[%s377 + $0x1c0] sm:$0xff] %vm378, %v338
        %408 = vst.msk [vmem:[%s377 + $0x1d0] sm:$0xff] %vm378, %v340
        %409 = vst.msk [vmem:[%s377 + $0x1e0] sm:$0xff] %vm378, %v342
        %410 = vst.msk [vmem:[%s377 + $0x1f0] sm:$0xff] %vm378, %v344
        %vm411 = vcmask 1040384
        %v412 = vrot.slane %v217, 7
        %v413 = vrot.slane %v218, 7
        %v414 = vsel %vm411, %v412, %v413
        %v415 = vrot.slane %v219, 7
        %v416 = vrot.slane %v220, 7
        %v417 = vsel %vm411, %v415, %v416
        %v418 = vrot.slane %v221, 7
        %v419 = vrot.slane %v222, 7
        %v420 = vsel %vm411, %v418, %v419
        %v421 = vrot.slane %v223, 7
        %v422 = vrot.slane %v224, 7
        %v423 = vsel %vm411, %v421, %v422
        %v424 = vrot.slane %v225, 7
        %v425 = vrot.slane %v226, 7
        %v426 = vsel %vm411, %v424, %v425
        %v427 = vrot.slane %v227, 7
        %v428 = vrot.slane %v228, 7
        %v429 = vsel %vm411, %v427, %v428
        %v430 = vrot.slane %v229, 7
        %v431 = vrot.slane %v230, 7
        %v432 = vsel %vm411, %v430, %v431
        %v433 = vrot.slane %v231, 7
        %v434 = vrot.slane %v232, 7
        %v435 = vsel %vm411, %v433, %v434
        %v436 = vrot.slane %v233, 7
        %v437 = vrot.slane %v234, 7
        %v438 = vsel %vm411, %v436, %v437
        %v439 = vrot.slane %v235, 7
        %v440 = vrot.slane %v236, 7
        %v441 = vsel %vm411, %v439, %v440
        %v442 = vrot.slane %v237, 7
        %v443 = vrot.slane %v238, 7
        %v444 = vsel %vm411, %v442, %v443
        %v445 = vrot.slane %v239, 7
        %v446 = vrot.slane %v240, 7
        %v447 = vsel %vm411, %v445, %v446
        %v448 = vrot.slane %v241, 7
        %v449 = vrot.slane %v242, 7
        %v450 = vsel %vm411, %v448, %v449
        %v451 = vrot.slane %v243, 7
        %v452 = vrot.slane %v244, 7
        %v453 = vsel %vm411, %v451, %v452
        %v454 = vrot.slane %v245, 7
        %v455 = vrot.slane %v246, 7
        %v456 = vsel %vm411, %v454, %v455
        %v457 = vrot.slane %v247, 7
        %v458 = vrot.slane %v248, 7
        %v459 = vsel %vm411, %v457, %v458
        %vm492 = vcmask 523265
        %493 = vst.msk [vmem:[%s377] sm:$0xfe] %vm492, %v412
        %494 = vst.msk [vmem:[%s377 + $0x10] sm:$0xff] %vm171, %v414
        %495 = vst.msk [vmem:[%s377 + $0x20] sm:$0xfe] %vm492, %v415
        %496 = vst.msk [vmem:[%s377 + $0x30] sm:$0xff] %vm171, %v417
        %497 = vst.msk [vmem:[%s377 + $0x40] sm:$0xfe] %vm492, %v418
        %498 = vst.msk [vmem:[%s377 + $0x50] sm:$0xff] %vm171, %v420
        %499 = vst.msk [vmem:[%s377 + $0x60] sm:$0xfe] %vm492, %v421
        %500 = vst.msk [vmem:[%s377 + $0x70] sm:$0xff] %vm171, %v423
        %501 = vst.msk [vmem:[%s377 + $0x80] sm:$0xfe] %vm492, %v424
        %502 = vst.msk [vmem:[%s377 + $0x90] sm:$0xff] %vm171, %v426
        %503 = vst.msk [vmem:[%s377 + $0xa0] sm:$0xfe] %vm492, %v427
        %504 = vst.msk [vmem:[%s377 + $0xb0] sm:$0xff] %vm171, %v429
        %505 = vst.msk [vmem:[%s377 + $0xc0] sm:$0xfe] %vm492, %v430
        %506 = vst.msk [vmem:[%s377 + $0xd0] sm:$0xff] %vm171, %v432
        %507 = vst.msk [vmem:[%s377 + $0xe0] sm:$0xfe] %vm492, %v433
        %508 = vst.msk [vmem:[%s377 + $0xf0] sm:$0xff] %vm171, %v435
        %509 = vst.msk [vmem:[%s377 + $0x100] sm:$0xfe] %vm492, %v436
        %510 = vst.msk [vmem:[%s377 + $0x110] sm:$0xff] %vm171, %v438
        %511 = vst.msk [vmem:[%s377 + $0x120] sm:$0xfe] %vm492, %v439
        %512 = vst.msk [vmem:[%s377 + $0x130] sm:$0xff] %vm171, %v441
        %513 = vst.msk [vmem:[%s377 + $0x140] sm:$0xfe] %vm492, %v442
        %514 = vst.msk [vmem:[%s377 + $0x150] sm:$0xff] %vm171, %v444
        %515 = vst.msk [vmem:[%s377 + $0x160] sm:$0xfe] %vm492, %v445
        %516 = vst.msk [vmem:[%s377 + $0x170] sm:$0xff] %vm171, %v447
        %517 = vst.msk [vmem:[%s377 + $0x180] sm:$0xfe] %vm492, %v448
        %518 = vst.msk [vmem:[%s377 + $0x190] sm:$0xff] %vm171, %v450
        %519 = vst.msk [vmem:[%s377 + $0x1a0] sm:$0xfe] %vm492, %v451
        %520 = vst.msk [vmem:[%s377 + $0x1b0] sm:$0xff] %vm171, %v453
        %521 = vst.msk [vmem:[%s377 + $0x1c0] sm:$0xfe] %vm492, %v454
        %522 = vst.msk [vmem:[%s377 + $0x1d0] sm:$0xff] %vm171, %v456
        %523 = vst.msk [vmem:[%s377 + $0x1e0] sm:$0xfe] %vm492, %v457
        %524 = vst.msk [vmem:[%s377 + $0x1f0] sm:$0xff] %vm171, %v459
        %vm525 = vcmask 1046528
        %v526 = vrot.slane %v217, 1
        %v527 = vrot.slane %v218, 1
        %v528 = vsel %vm525, %v526, %v527
        %v529 = vrot.slane %v219, 1
        %v530 = vrot.slane %v220, 1
        %v531 = vsel %vm525, %v529, %v530
        %v532 = vrot.slane %v221, 1
        %v533 = vrot.slane %v222, 1
        %v534 = vsel %vm525, %v532, %v533
        %v535 = vrot.slane %v223, 1
        %v536 = vrot.slane %v224, 1
        %v537 = vsel %vm525, %v535, %v536
        %v538 = vrot.slane %v225, 1
        %v539 = vrot.slane %v226, 1
        %v540 = vsel %vm525, %v538, %v539
        %v541 = vrot.slane %v227, 1
        %v542 = vrot.slane %v228, 1
        %v543 = vsel %vm525, %v541, %v542
        %v544 = vrot.slane %v229, 1
        %v545 = vrot.slane %v230, 1
        %v546 = vsel %vm525, %v544, %v545
        %v547 = vrot.slane %v231, 1
        %v548 = vrot.slane %v232, 1
        %v549 = vsel %vm525, %v547, %v548
        %v550 = vrot.slane %v233, 1
        %v551 = vrot.slane %v234, 1
        %v552 = vsel %vm525, %v550, %v551
        %v553 = vrot.slane %v235, 1
        %v554 = vrot.slane %v236, 1
        %v555 = vsel %vm525, %v553, %v554
        %v556 = vrot.slane %v237, 1
        %v557 = vrot.slane %v238, 1
        %v558 = vsel %vm525, %v556, %v557
        %v559 = vrot.slane %v239, 1
        %v560 = vrot.slane %v240, 1
        %v561 = vsel %vm525, %v559, %v560
        %v562 = vrot.slane %v241, 1
        %v563 = vrot.slane %v242, 1
        %v564 = vsel %vm525, %v562, %v563
        %v565 = vrot.slane %v243, 1
        %v566 = vrot.slane %v244, 1
        %v567 = vsel %vm525, %v565, %v566
        %v568 = vrot.slane %v245, 1
        %v569 = vrot.slane %v246, 1
        %v570 = vsel %vm525, %v568, %v569
        %v571 = vrot.slane %v247, 1
        %v572 = vrot.slane %v248, 1
        %v573 = vsel %vm525, %v571, %v572
        %606 = vst.msk [vmem:[%s377 + $0x8] sm:$0xff] %vm171, %v528
        %vm607 = vcmask 522240
        %608 = vst.msk [vmem:[%s377 + $0x18] sm:$0x7f] %vm607, %v527
        %609 = vst.msk [vmem:[%s377 + $0x28] sm:$0xff] %vm171, %v531
        %610 = vst.msk [vmem:[%s377 + $0x38] sm:$0x7f] %vm607, %v530
        %611 = vst.msk [vmem:[%s377 + $0x48] sm:$0xff] %vm171, %v534
        %612 = vst.msk [vmem:[%s377 + $0x58] sm:$0x7f] %vm607, %v533
        %613 = vst.msk [vmem:[%s377 + $0x68] sm:$0xff] %vm171, %v537
        %614 = vst.msk [vmem:[%s377 + $0x78] sm:$0x7f] %vm607, %v536
        %615 = vst.msk [vmem:[%s377 + $0x88] sm:$0xff] %vm171, %v540
        %616 = vst.msk [vmem:[%s377 + $0x98] sm:$0x7f] %vm607, %v539
        %617 = vst.msk [vmem:[%s377 + $0xa8] sm:$0xff] %vm171, %v543
        %618 = vst.msk [vmem:[%s377 + $0xb8] sm:$0x7f] %vm607, %v542
        %619 = vst.msk [vmem:[%s377 + $0xc8] sm:$0xff] %vm171, %v546
        %620 = vst.msk [vmem:[%s377 + $0xd8] sm:$0x7f] %vm607, %v545
        %621 = vst.msk [vmem:[%s377 + $0xe8] sm:$0xff] %vm171, %v549
        %622 = vst.msk [vmem:[%s377 + $0xf8] sm:$0x7f] %vm607, %v548
        %623 = vst.msk [vmem:[%s377 + $0x108] sm:$0xff] %vm171, %v552
        %624 = vst.msk [vmem:[%s377 + $0x118] sm:$0x7f] %vm607, %v551
        %625 = vst.msk [vmem:[%s377 + $0x128] sm:$0xff] %vm171, %v555
        %626 = vst.msk [vmem:[%s377 + $0x138] sm:$0x7f] %vm607, %v554
        %627 = vst.msk [vmem:[%s377 + $0x148] sm:$0xff] %vm171, %v558
        %628 = vst.msk [vmem:[%s377 + $0x158] sm:$0x7f] %vm607, %v557
        %629 = vst.msk [vmem:[%s377 + $0x168] sm:$0xff] %vm171, %v561
        %630 = vst.msk [vmem:[%s377 + $0x178] sm:$0x7f] %vm607, %v560
        %631 = vst.msk [vmem:[%s377 + $0x188] sm:$0xff] %vm171, %v564
        %632 = vst.msk [vmem:[%s377 + $0x198] sm:$0x7f] %vm607, %v563
        %633 = vst.msk [vmem:[%s377 + $0x1a8] sm:$0xff] %vm171, %v567
        %634 = vst.msk [vmem:[%s377 + $0x1b8] sm:$0x7f] %vm607, %v566
        %635 = vst.msk [vmem:[%s377 + $0x1c8] sm:$0xff] %vm171, %v570
        %636 = vst.msk [vmem:[%s377 + $0x1d8] sm:$0x7f] %vm607, %v569
        %637 = vst.msk [vmem:[%s377 + $0x1e8] sm:$0xff] %vm171, %v573
        %638 = vst.msk [vmem:[%s377 + $0x1f8] sm:$0x7f] %vm607, %v572
        %v639 = vld [vmem:[%s2] sm:$0x1]
        %v640 = vld [vmem:[#allocation2] sm:$0xff]
        %v641 = vld [vmem:[#allocation2 + $0x8] sm:$0xff]
        %v642 = vld [vmem:[#allocation2 + $0x10] sm:$0xff]
        %v643 = vld [vmem:[#allocation2 + $0x18] sm:$0xff]
        %v644 = vld [vmem:[#allocation2 + $0x20] sm:$0xff]
        %v645 = vld [vmem:[#allocation2 + $0x28] sm:$0xff]
        %v646 = vld [vmem:[#allocation2 + $0x30] sm:$0xff]
        %v647 = vld [vmem:[#allocation2 + $0x38] sm:$0xff]
        %v648 = vld [vmem:[#allocation2 + $0x40] sm:$0xff]
        %v649 = vld [vmem:[#allocation2 + $0x48] sm:$0xff]
        %v650 = vld [vmem:[#allocation2 + $0x50] sm:$0xff]
        %v651 = vld [vmem:[#allocation2 + $0x58] sm:$0xff]
        %v652 = vld [vmem:[#allocation2 + $0x60] sm:$0xff]
        %v653 = vld [vmem:[#allocation2 + $0x68] sm:$0xff]
        %v654 = vld [vmem:[#allocation2 + $0x70] sm:$0xff]
        %v655 = vld [vmem:[#allocation2 + $0x78] sm:$0xff]
        %v656 = vld [vmem:[#allocation2 + $0x80] sm:$0xff]
        %v657 = vld [vmem:[#allocation2 + $0x88] sm:$0xff]
        %v658 = vld [vmem:[#allocation2 + $0x90] sm:$0xff]
        %v659 = vld [vmem:[#allocation2 + $0x98] sm:$0xff]
        %v660 = vld [vmem:[#allocation2 + $0xa0] sm:$0xff]
        %v661 = vld [vmem:[#allocation2 + $0xa8] sm:$0xff]
        %v662 = vld [vmem:[#allocation2 + $0xb0] sm:$0xff]
        %v663 = vld [vmem:[#allocation2 + $0xb8] sm:$0xff]
        %v664 = vld [vmem:[#allocation2 + $0xc0] sm:$0xff]
        %v665 = vld [vmem:[#allocation2 + $0xc8] sm:$0xff]
        %v666 = vld [vmem:[#allocation2 + $0xd0] sm:$0xff]
        %v667 = vld [vmem:[#allocation2 + $0xd8] sm:$0xff]
        %v668 = vld [vmem:[#allocation2 + $0xe0] sm:$0xff]
        %v669 = vld [vmem:[#allocation2 + $0xe8] sm:$0xff]
        %v670 = vld [vmem:[#allocation2 + $0xf0] sm:$0xff]
        %v671 = vld [vmem:[#allocation2 + $0xf8] sm:$0xff]
        %v672 = vld [vmem:[#allocation2 + $0x100] sm:$0xff]
        %v673 = vld [vmem:[#allocation2 + $0x108] sm:$0xff]
        %v674 = vld [vmem:[#allocation2 + $0x110] sm:$0xff]
        %v675 = vld [vmem:[#allocation2 + $0x118] sm:$0xff]
        %v676 = vld [vmem:[#allocation2 + $0x120] sm:$0xff]
        %v677 = vld [vmem:[#allocation2 + $0x128] sm:$0xff]
        %v678 = vld [vmem:[#allocation2 + $0x130] sm:$0xff]
        %v679 = vld [vmem:[#allocation2 + $0x138] sm:$0xff]
        %v680 = vld [vmem:[#allocation2 + $0x140] sm:$0xff]
        %v681 = vld [vmem:[#allocation2 + $0x148] sm:$0xff]
        %v682 = vld [vmem:[#allocation2 + $0x150] sm:$0xff]
        %v683 = vld [vmem:[#allocation2 + $0x158] sm:$0xff]
        %v684 = vld [vmem:[#allocation2 + $0x160] sm:$0xff]
        %v685 = vld [vmem:[#allocation2 + $0x168] sm:$0xff]
        %v686 = vld [vmem:[#allocation2 + $0x170] sm:$0xff]
        %v687 = vld [vmem:[#allocation2 + $0x178] sm:$0xff]
        %v688 = vld [vmem:[#allocation2 + $0x180] sm:$0xff]
        %v689 = vld [vmem:[#allocation2 + $0x188] sm:$0xff]
        %v690 = vld [vmem:[#allocation2 + $0x190] sm:$0xff]
        %v691 = vld [vmem:[#allocation2 + $0x198] sm:$0xff]
        %v692 = vld [vmem:[#allocation2 + $0x1a0] sm:$0xff]
        %v693 = vld [vmem:[#allocation2 + $0x1a8] sm:$0xff]
        %v694 = vld [vmem:[#allocation2 + $0x1b0] sm:$0xff]
        %v695 = vld [vmem:[#allocation2 + $0x1b8] sm:$0xff]
        %v696 = vld [vmem:[#allocation2 + $0x1c0] sm:$0xff]
        %v697 = vld [vmem:[#allocation2 + $0x1c8] sm:$0xff]
        %v698 = vld [vmem:[#allocation2 + $0x1d0] sm:$0xff]
        %v699 = vld [vmem:[#allocation2 + $0x1d8] sm:$0xff]
        %v700 = vld [vmem:[#allocation2 + $0x1e0] sm:$0xff]
        %v701 = vld [vmem:[#allocation2 + $0x1e8] sm:$0xff]
        %v702 = vld [vmem:[#allocation2 + $0x1f0] sm:$0xff]
        %v703 = vld [vmem:[#allocation2 + $0x1f8] sm:$0xff]
        %v704 = vld [vmem:[#allocation2 + $0x200] sm:$0xff]
        %v705 = vld [vmem:[#allocation2 + $0x208] sm:$0xff]
        %v706 = vld [vmem:[#allocation2 + $0x210] sm:$0xff]
        %v707 = vld [vmem:[#allocation2 + $0x218] sm:$0xff]
        %v708 = vld [vmem:[#allocation2 + $0x220] sm:$0xff]
        %v709 = vld [vmem:[#allocation2 + $0x228] sm:$0xff]
        %v710 = vld [vmem:[#allocation2 + $0x230] sm:$0xff]
        %v711 = vld [vmem:[#allocation2 + $0x238] sm:$0xff]
        %v712 = vpack.c.bf16 %v642, %v640
        %v713 = vpack.c.bf16 %v643, %v641
        %v714 = vpack.c.bf16 %v646, %v644
        %v715 = vpack.c.bf16 %v647, %v645
        %v716 = vpack.c.bf16 %v650, %v648
        %v717 = vpack.c.bf16 %v651, %v649
        %v718 = vpack.c.bf16 %v654, %v652
        %v719 = vpack.c.bf16 %v655, %v653
        %v720 = vpack.c.bf16 %v658, %v656
        %v721 = vpack.c.bf16 %v659, %v657
        %v722 = vpack.c.bf16 %v662, %v660
        %v723 = vpack.c.bf16 %v663, %v661
        %v724 = vpack.c.bf16 %v666, %v664
        %v725 = vpack.c.bf16 %v667, %v665
        %v726 = vpack.c.bf16 %v670, %v668
        %v727 = vpack.c.bf16 %v671, %v669
        %v728 = vpack.c.bf16 %v674, %v672
        %v729 = vpack.c.bf16 %v675, %v673
        %v730 = vpack.c.bf16 %v678, %v676
        %v731 = vpack.c.bf16 %v679, %v677
        %v732 = vpack.c.bf16 %v682, %v680
        %v733 = vpack.c.bf16 %v683, %v681
        %v734 = vpack.c.bf16 %v686, %v684
        %v735 = vpack.c.bf16 %v687, %v685
        %v736 = vpack.c.bf16 %v690, %v688
        %v737 = vpack.c.bf16 %v691, %v689
        %v738 = vpack.c.bf16 %v694, %v692
        %v739 = vpack.c.bf16 %v695, %v693
        %v740 = vpack.c.bf16 %v698, %v696
        %v741 = vpack.c.bf16 %v699, %v697
        %v742 = vpack.c.bf16 %v702, %v700
        %v743 = vpack.c.bf16 %v703, %v701
        %v744 = vpack.c.bf16 %v706, %v704
        %v745 = vpack.c.bf16 %v707, %v705
        %v746 = vpack.c.bf16 %v710, %v708
        %v747 = vpack.c.bf16 %v711, %v709
        %v748 = vld [vmem:[%s1] sm:$0xf]
        %v749 = vld [vmem:[%s1 + $0x4] sm:$0xf]
        %v750 = vld [vmem:[%s1 + $0x8] sm:$0xf]
        %v751 = vld [vmem:[%s1 + $0xc] sm:$0xf]
        %v752 = vld [vmem:[%s1 + $0x10] sm:$0xf]
        %v753 = vld [vmem:[%s1 + $0x14] sm:$0xf]
        %v754 = vld [vmem:[%s1 + $0x18] sm:$0xf]
        %v755 = vld [vmem:[%s1 + $0x1c] sm:$0xf]
        %v756 = vld [vmem:[%s1 + $0x20] sm:$0xf]
        %v757 = vld [vmem:[%s1 + $0x24] sm:$0xf]
        %v758 = vld [vmem:[%s1 + $0x28] sm:$0xf]
        %v759 = vld [vmem:[%s1 + $0x2c] sm:$0xf]
        %v760 = vld [vmem:[%s1 + $0x30] sm:$0xf]
        %v761 = vld [vmem:[%s1 + $0x34] sm:$0xf]
        %v762 = vld [vmem:[%s1 + $0x38] sm:$0xf]
        %v763 = vld [vmem:[%s1 + $0x3c] sm:$0xf]
        %v764 = vld [vmem:[%s1 + $0x40] sm:$0xf]
        %v765 = vld [vmem:[%s1 + $0x44] sm:$0xf]
        %v766 = vld [vmem:[%s1 + $0x48] sm:$0xf]
        %v767 = vld [vmem:[%s1 + $0x4c] sm:$0xf]
        %v768 = vld [vmem:[%s1 + $0x50] sm:$0xf]
        %v769 = vld [vmem:[%s1 + $0x54] sm:$0xf]
        %v770 = vld [vmem:[%s1 + $0x58] sm:$0xf]
        %v771 = vld [vmem:[%s1 + $0x5c] sm:$0xf]
        %v796 = vunpack.c.l.b16 %v748
        %v797 = vunpack.c.l.b16 %v749
        %v798 = vunpack.c.l.b16 %v750
        %v799 = vunpack.c.l.b16 %v751
        %v800 = vunpack.c.l.b16 %v752
        %v801 = vunpack.c.l.b16 %v753
        %v802 = vunpack.c.l.b16 %v754
        %v803 = vunpack.c.l.b16 %v755
        %v804 = vunpack.c.l.b16 %v756
        %v805 = vunpack.c.l.b16 %v757
        %v806 = vunpack.c.l.b16 %v758
        %v807 = vunpack.c.l.b16 %v759
        %v808 = vunpack.c.l.b16 %v760
        %v809 = vunpack.c.l.b16 %v761
        %v810 = vunpack.c.l.b16 %v762
        %v811 = vunpack.c.l.b16 %v763
        %v812 = vunpack.c.l.b16 %v764
        %v813 = vunpack.c.l.b16 %v765
        %v814 = vunpack.c.l.b16 %v766
        %v815 = vunpack.c.l.b16 %v767
        %v816 = vunpack.c.l.b16 %v768
        %v817 = vunpack.c.l.b16 %v769
        %v818 = vunpack.c.l.b16 %v770
        %v819 = vunpack.c.l.b16 %v771
        %v820 = vpack.c.b16 %v797, %v796
        %v821 = vpack.c.b16 %v799, %v798
        %v822 = vpack.c.b16 %v801, %v800
        %v823 = vpack.c.b16 %v803, %v802
        %v824 = vpack.c.b16 %v805, %v804
        %v825 = vpack.c.b16 %v807, %v806
        %v826 = vpack.c.b16 %v809, %v808
        %v827 = vpack.c.b16 %v811, %v810
        %v828 = vpack.c.b16 %v813, %v812
        %v829 = vpack.c.b16 %v815, %v814
        %v830 = vpack.c.b16 %v817, %v816
        %v831 = vpack.c.b16 %v819, %v818
        %v845 = vsel %vm171, %v713, 0
        %v848 = vsel %vm171, %v715, 0
        %v851 = vsel %vm171, %v717, 0
        %v854 = vsel %vm171, %v719, 0
        %v857 = vsel %vm171, %v721, 0
        %v860 = vsel %vm171, %v723, 0
        %v863 = vsel %vm171, %v725, 0
        %v866 = vsel %vm171, %v727, 0
        %v869 = vsel %vm171, %v729, 0
        %v872 = vsel %vm171, %v731, 0
        %v875 = vsel %vm171, %v733, 0
        %v878 = vsel %vm171, %v735, 0
        %v881 = vsel %vm171, %v737, 0
        %v884 = vsel %vm171, %v739, 0
        %v887 = vsel %vm171, %v741, 0
        %v890 = vsel %vm171, %v743, 0
        %892 = vmatprep.subr.bf16.mxu0 0
        %893 = vmatpush1.bf16.msra.mxu0 %v820
        %894 = vmatprep.subr.bf16.mxu0 0
        %895 = vmatpush1.bf16.msra.mxu0 %v821
        %896 = vmatprep.subr.bf16.mxu0 0
        %897 = vmatpush1.bf16.msra.mxu0 %v822
        %898 = vmatprep.subr.bf16.mxu0 0
        %899 = vmatpush1.bf16.msra.mxu0 %v823
        %900 = vmatprep.subr.bf16.mxu0 0
        %901 = vmatpush1.bf16.msra.mxu0 %v824
        %902 = vmatprep.subr.bf16.mxu0 0
        %903 = vmatpush1.bf16.msra.mxu0 %v825
        %904 = vmatprep.subr.bf16.mxu0 0
        %905 = vmatpush1.bf16.msra.mxu0 %v826
        %906 = vmatprep.subr.bf16.mxu0 0
        %907 = vmatpush1.bf16.msra.mxu0 %v827
        %908 = vmatprep.subr.bf16.mxu0 0
        %909 = vmatpush1.bf16.msra.mxu0 %v828
        %910 = vmatprep.subr.bf16.mxu0 0
        %911 = vmatpush1.bf16.msra.mxu0 %v829
        %912 = vmatprep.subr.bf16.mxu0 0
        %913 = vmatpush1.bf16.msra.mxu0 %v830
        %914 = vmatprep.subr.bf16.mxu0 0
        %915 = vmatpush1.bf16.msra.mxu0 %v831
        %916 = vmatprep.subr.bf16.mxu0 0
        %917 = vmatpush1.bf16.msra.mxu0 0
        %918 = vmatprep.subr.bf16.mxu0 0
        %919 = vmatpush1.bf16.msra.mxu0 0
        %920 = vmatprep.subr.bf16.mxu0 0
        %921 = vmatpush1.bf16.msra.mxu0 0
        %922 = vmatprep.subr.bf16.mxu0 0
        %923 = vmatpush1.bf16.msra.mxu0 0
        %924 = vmatprep.mubr.bf16.mxu0 %v845
        %925 = vmatmul.mubr.bf16.gmra.mrb[0].mxu0 %v712
        %v926 = vpop.f32.mrb[0].mxu0
        %v927 = vadd.f32 0.0, %v926
        %v928 = vpop.f32.mrb[0].mxu0
        %v929 = vpop.f32.mrb[0].mxu0
        %v930 = vadd.f32 0.0, %v929
        %v931 = vpop.f32.mrb[0].mxu0
        %932 = vmatprep.mubr.bf16.mxu0 %v848
        %933 = vmatmul.mubr.bf16.gmra.mrb[0].mxu0 %v714
        %v934 = vpop.f32.mrb[0].mxu0
        %v935 = vadd.f32 0.0, %v934
        %v936 = vpop.f32.mrb[0].mxu0
        %v937 = vpop.f32.mrb[0].mxu0
        %v938 = vadd.f32 0.0, %v937
        %v939 = vpop.f32.mrb[0].mxu0
        %940 = vmatprep.mubr.bf16.mxu0 %v851
        %941 = vmatmul.mubr.bf16.gmra.mrb[0].mxu0 %v716
        %v942 = vpop.f32.mrb[0].mxu0
        %v943 = vadd.f32 0.0, %v942
        %v944 = vpop.f32.mrb[0].mxu0
        %v945 = vpop.f32.mrb[0].mxu0
        %v946 = vadd.f32 0.0, %v945
        %v947 = vpop.f32.mrb[0].mxu0
        %948 = vmatprep.mubr.bf16.mxu0 %v854
        %949 = vmatmul.mubr.bf16.gmra.mrb[0].mxu0 %v718
        %v950 = vpop.f32.mrb[0].mxu0
        %v951 = vadd.f32 0.0, %v950
        %v952 = vpop.f32.mrb[0].mxu0
        %v953 = vpop.f32.mrb[0].mxu0
        %v954 = vadd.f32 0.0, %v953
        %v955 = vpop.f32.mrb[0].mxu0
        %956 = vmatprep.mubr.bf16.mxu0 %v857
        %957 = vmatmul.mubr.bf16.gmra.mrb[0].mxu0 %v720
        %v958 = vpop.f32.mrb[0].mxu0
        %v959 = vadd.f32 0.0, %v958
        %v960 = vpop.f32.mrb[0].mxu0
        %v961 = vpop.f32.mrb[0].mxu0
        %v962 = vadd.f32 0.0, %v961
        %v963 = vpop.f32.mrb[0].mxu0
        %964 = vmatprep.mubr.bf16.mxu0 %v860
        %965 = vmatmul.mubr.bf16.gmra.mrb[0].mxu0 %v722
        %v966 = vpop.f32.mrb[0].mxu0
        %v967 = vadd.f32 0.0, %v966
        %v968 = vpop.f32.mrb[0].mxu0
        %v969 = vpop.f32.mrb[0].mxu0
        %v970 = vadd.f32 0.0, %v969
        %v971 = vpop.f32.mrb[0].mxu0
        %972 = vmatprep.mubr.bf16.mxu0 %v863
        %973 = vmatmul.mubr.bf16.gmra.mrb[0].mxu0 %v724
        %v974 = vpop.f32.mrb[0].mxu0
        %v975 = vadd.f32 0.0, %v974
        %v976 = vpop.f32.mrb[0].mxu0
        %v977 = vpop.f32.mrb[0].mxu0
        %v978 = vadd.f32 0.0, %v977
        %v979 = vpop.f32.mrb[0].mxu0
        %980 = vmatprep.mubr.bf16.mxu0 %v866
        %981 = vmatmul.mubr.bf16.gmra.mrb[0].mxu0 %v726
        %v982 = vpop.f32.mrb[0].mxu0
        %v983 = vadd.f32 0.0, %v982
        %v984 = vpop.f32.mrb[0].mxu0
        %v985 = vpop.f32.mrb[0].mxu0
        %v986 = vadd.f32 0.0, %v985
        %v987 = vpop.f32.mrb[0].mxu0
        %988 = vmatprep.mubr.bf16.mxu0 %v869
        %989 = vmatmul.mubr.bf16.gmra.mrb[0].mxu0 %v728
        %v990 = vpop.f32.mrb[0].mxu0
        %v991 = vadd.f32 0.0, %v990
        %v992 = vpop.f32.mrb[0].mxu0
        %v993 = vpop.f32.mrb[0].mxu0
        %v994 = vadd.f32 0.0, %v993
        %v995 = vpop.f32.mrb[0].mxu0
        %996 = vmatprep.mubr.bf16.mxu0 %v872
        %997 = vmatmul.mubr.bf16.gmra.mrb[0].mxu0 %v730
        %v998 = vpop.f32.mrb[0].mxu0
        %v999 = vadd.f32 0.0, %v998
        %v1000 = vpop.f32.mrb[0].mxu0
        %v1001 = vpop.f32.mrb[0].mxu0
        %v1002 = vadd.f32 0.0, %v1001
        %v1003 = vpop.f32.mrb[0].mxu0
        %1004 = vmatprep.mubr.bf16.mxu0 %v875
        %1005 = vmatmul.mubr.bf16.gmra.mrb[0].mxu0 %v732
        %v1006 = vpop.f32.mrb[0].mxu0
        %v1007 = vadd.f32 0.0, %v1006
        %v1008 = vpop.f32.mrb[0].mxu0
        %v1009 = vpop.f32.mrb[0].mxu0
        %v1010 = vadd.f32 0.0, %v1009
        %v1011 = vpop.f32.mrb[0].mxu0
        %1012 = vmatprep.mubr.bf16.mxu0 %v878
        %1013 = vmatmul.mubr.bf16.gmra.mrb[0].mxu0 %v734
        %v1014 = vpop.f32.mrb[0].mxu0
        %v1015 = vadd.f32 0.0, %v1014
        %v1016 = vpop.f32.mrb[0].mxu0
        %v1017 = vpop.f32.mrb[0].mxu0
        %v1018 = vadd.f32 0.0, %v1017
        %v1019 = vpop.f32.mrb[0].mxu0
        %1020 = vmatprep.mubr.bf16.mxu0 %v881
        %1021 = vmatmul.mubr.bf16.gmra.mrb[0].mxu0 %v736
        %v1022 = vpop.f32.mrb[0].mxu0
        %v1023 = vadd.f32 0.0, %v1022
        %v1024 = vpop.f32.mrb[0].mxu0
        %v1025 = vpop.f32.mrb[0].mxu0
        %v1026 = vadd.f32 0.0, %v1025
        %v1027 = vpop.f32.mrb[0].mxu0
        %1028 = vmatprep.mubr.bf16.mxu0 %v884
        %1029 = vmatmul.mubr.bf16.gmra.mrb[0].mxu0 %v738
        %v1030 = vpop.f32.mrb[0].mxu0
        %v1031 = vadd.f32 0.0, %v1030
        %v1032 = vpop.f32.mrb[0].mxu0
        %v1033 = vpop.f32.mrb[0].mxu0
        %v1034 = vadd.f32 0.0, %v1033
        %v1035 = vpop.f32.mrb[0].mxu0
        %1036 = vmatprep.mubr.bf16.mxu0 %v887
        %1037 = vmatmul.mubr.bf16.gmra.mrb[0].mxu0 %v740
        %v1038 = vpop.f32.mrb[0].mxu0
        %v1039 = vadd.f32 0.0, %v1038
        %v1040 = vpop.f32.mrb[0].mxu0
        %v1041 = vpop.f32.mrb[0].mxu0
        %v1042 = vadd.f32 0.0, %v1041
        %v1043 = vpop.f32.mrb[0].mxu0
        %1044 = vmatprep.mubr.bf16.mxu0 %v890
        %1045 = vmatmul.mubr.bf16.gmra.mrb[0].mxu0 %v742
        %v1046 = vpop.f32.mrb[0].mxu0
        %v1047 = vadd.f32 0.0, %v1046
        %v1048 = vpop.f32.mrb[0].mxu0
        %v1049 = vpop.f32.mrb[0].mxu0
        %v1050 = vadd.f32 0.0, %v1049
        %v1051 = vpop.f32.mrb[0].mxu0
        %1052 = vdwg.mxu0
        %v1054 = vlaneseq
        %v1055 = vshrl.u32 %v1054, 7
        %v1056 = vsub.s32 0, %v1055
        %v1057 = vrot.slane %v639, %v1056
        %v1059 = vadd.f32 %v1057, %v927
        %v1060 = vadd.f32 %v1057, %v930
        %v1061 = vadd.f32 %v1057, %v935
        %v1062 = vadd.f32 %v1057, %v938
        %v1063 = vadd.f32 %v1057, %v943
        %v1064 = vadd.f32 %v1057, %v946
        %v1065 = vadd.f32 %v1057, %v951
        %v1066 = vadd.f32 %v1057, %v954
        %v1067 = vadd.f32 %v1057, %v959
        %v1068 = vadd.f32 %v1057, %v962
        %v1069 = vadd.f32 %v1057, %v967
        %v1070 = vadd.f32 %v1057, %v970
        %v1071 = vadd.f32 %v1057, %v975
        %v1072 = vadd.f32 %v1057, %v978
        %v1073 = vadd.f32 %v1057, %v983
        %v1074 = vadd.f32 %v1057, %v986
        %v1075 = vadd.f32 %v1057, %v991
        %v1076 = vadd.f32 %v1057, %v994
        %v1077 = vadd.f32 %v1057, %v999
        %v1078 = vadd.f32 %v1057, %v1002
        %v1079 = vadd.f32 %v1057, %v1007
        %v1080 = vadd.f32 %v1057, %v1010
        %v1081 = vadd.f32 %v1057, %v1015
        %v1082 = vadd.f32 %v1057, %v1018
        %v1083 = vadd.f32 %v1057, %v1023
        %v1084 = vadd.f32 %v1057, %v1026
        %v1085 = vadd.f32 %v1057, %v1031
        %v1086 = vadd.f32 %v1057, %v1034
        %v1087 = vadd.f32 %v1057, %v1039
        %v1088 = vadd.f32 %v1057, %v1042
        %v1089 = vadd.f32 %v1057, %v1047
        %v1090 = vadd.f32 %v1057, %v1050
        %s1091 = scalar_lea.vmem %s1, 96
        %v1092 = vld [vmem:[%s1091] sm:$0xf]
        %v1093 = vld [vmem:[%s1091 + $0x4] sm:$0xf]
        %v1094 = vld [vmem:[%s1091 + $0x8] sm:$0xf]
        %v1095 = vld [vmem:[%s1091 + $0xc] sm:$0xf]
        %v1096 = vld [vmem:[%s1091 + $0x10] sm:$0xf]
        %v1097 = vld [vmem:[%s1091 + $0x14] sm:$0xf]
        %v1098 = vld [vmem:[%s1091 + $0x18] sm:$0xf]
        %v1099 = vld [vmem:[%s1091 + $0x1c] sm:$0xf]
        %v1100 = vld [vmem:[%s1091 + $0x20] sm:$0xf]
        %v1101 = vld [vmem:[%s1091 + $0x24] sm:$0xf]
        %v1102 = vld [vmem:[%s1091 + $0x28] sm:$0xf]
        %v1103 = vld [vmem:[%s1091 + $0x2c] sm:$0xf]
        %v1104 = vld [vmem:[%s1091 + $0x30] sm:$0xf]
        %v1105 = vld [vmem:[%s1091 + $0x34] sm:$0xf]
        %v1106 = vld [vmem:[%s1091 + $0x38] sm:$0xf]
        %v1107 = vld [vmem:[%s1091 + $0x3c] sm:$0xf]
        %v1108 = vld [vmem:[%s1091 + $0x40] sm:$0xf]
        %v1109 = vld [vmem:[%s1091 + $0x44] sm:$0xf]
        %v1110 = vld [vmem:[%s1091 + $0x48] sm:$0xf]
        %v1111 = vld [vmem:[%s1091 + $0x4c] sm:$0xf]
        %v1112 = vld [vmem:[%s1091 + $0x50] sm:$0xf]
        %v1113 = vld [vmem:[%s1091 + $0x54] sm:$0xf]
        %v1114 = vld [vmem:[%s1091 + $0x58] sm:$0xf]
        %v1115 = vld [vmem:[%s1091 + $0x5c] sm:$0xf]
        %v1140 = vunpack.c.l.b16 %v1092
        %v1141 = vunpack.c.l.b16 %v1093
        %v1142 = vunpack.c.l.b16 %v1094
        %v1143 = vunpack.c.l.b16 %v1095
        %v1144 = vunpack.c.l.b16 %v1096
        %v1145 = vunpack.c.l.b16 %v1097
        %v1146 = vunpack.c.l.b16 %v1098
        %v1147 = vunpack.c.l.b16 %v1099
        %v1148 = vunpack.c.l.b16 %v1100
        %v1149 = vunpack.c.l.b16 %v1101
        %v1150 = vunpack.c.l.b16 %v1102
        %v1151 = vunpack.c.l.b16 %v1103
        %v1152 = vunpack.c.l.b16 %v1104
        %v1153 = vunpack.c.l.b16 %v1105
        %v1154 = vunpack.c.l.b16 %v1106
        %v1155 = vunpack.c.l.b16 %v1107
        %v1156 = vunpack.c.l.b16 %v1108
        %v1157 = vunpack.c.l.b16 %v1109
        %v1158 = vunpack.c.l.b16 %v1110
        %v1159 = vunpack.c.l.b16 %v1111
        %v1160 = vunpack.c.l.b16 %v1112
        %v1161 = vunpack.c.l.b16 %v1113
        %v1162 = vunpack.c.l.b16 %v1114
        %v1163 = vunpack.c.l.b16 %v1115
        %v1164 = vpack.c.b16 %v1141, %v1140
        %v1165 = vpack.c.b16 %v1143, %v1142
        %v1166 = vpack.c.b16 %v1145, %v1144
        %v1167 = vpack.c.b16 %v1147, %v1146
        %v1168 = vpack.c.b16 %v1149, %v1148
        %v1169 = vpack.c.b16 %v1151, %v1150
        %v1170 = vpack.c.b16 %v1153, %v1152
        %v1171 = vpack.c.b16 %v1155, %v1154
        %v1172 = vpack.c.b16 %v1157, %v1156
        %v1173 = vpack.c.b16 %v1159, %v1158
        %v1174 = vpack.c.b16 %v1161, %v1160
        %v1175 = vpack.c.b16 %v1163, %v1162
        %v1189 = vsel %vm171, %v745, 0
        %1191 = vmatprep.subr.bf16.mxu0 0
        %1192 = vmatpush1.bf16.msra.mxu0 %v1164
        %1193 = vmatprep.subr.bf16.mxu0 0
        %1194 = vmatpush1.bf16.msra.mxu0 %v1165
        %1195 = vmatprep.subr.bf16.mxu0 0
        %1196 = vmatpush1.bf16.msra.mxu0 %v1166
        %1197 = vmatprep.subr.bf16.mxu0 0
        %1198 = vmatpush1.bf16.msra.mxu0 %v1167
        %1199 = vmatprep.subr.bf16.mxu0 0
        %1200 = vmatpush1.bf16.msra.mxu0 %v1168
        %1201 = vmatprep.subr.bf16.mxu0 0
        %1202 = vmatpush1.bf16.msra.mxu0 %v1169
        %1203 = vmatprep.subr.bf16.mxu0 0
        %1204 = vmatpush1.bf16.msra.mxu0 %v1170
        %1205 = vmatprep.subr.bf16.mxu0 0
        %1206 = vmatpush1.bf16.msra.mxu0 %v1171
        %1207 = vmatprep.subr.bf16.mxu0 0
        %1208 = vmatpush1.bf16.msra.mxu0 %v1172
        %1209 = vmatprep.subr.bf16.mxu0 0
        %1210 = vmatpush1.bf16.msra.mxu0 %v1173
        %1211 = vmatprep.subr.bf16.mxu0 0
        %1212 = vmatpush1.bf16.msra.mxu0 %v1174
        %1213 = vmatprep.subr.bf16.mxu0 0
        %1214 = vmatpush1.bf16.msra.mxu0 %v1175
        %1215 = vmatprep.subr.bf16.mxu0 0
        %1216 = vmatpush1.bf16.msra.mxu0 0
        %1217 = vmatprep.subr.bf16.mxu0 0
        %1218 = vmatpush1.bf16.msra.mxu0 0
        %1219 = vmatprep.subr.bf16.mxu0 0
        %1220 = vmatpush1.bf16.msra.mxu0 0
        %1221 = vmatprep.subr.bf16.mxu0 0
        %1222 = vmatpush1.bf16.msra.mxu0 0
        %1223 = vmatprep.mubr.bf16.mxu0 %v848
        %1224 = vmatmul.mubr.bf16.gmra.mrb[0].mxu0 %v714
        %v1225 = vpop.f32.mrb[0].mxu0
        %v1226 = vadd.f32 0.0, %v1225
        %v1227 = vpop.f32.mrb[0].mxu0
        %v1228 = vpop.f32.mrb[0].mxu0
        %v1229 = vadd.f32 0.0, %v1228
        %v1230 = vpop.f32.mrb[0].mxu0
        %1231 = vmatprep.mubr.bf16.mxu0 %v851
        %1232 = vmatmul.mubr.bf16.gmra.mrb[0].mxu0 %v716
        %v1233 = vpop.f32.mrb[0].mxu0
        %v1234 = vadd.f32 0.0, %v1233
        %v1235 = vpop.f32.mrb[0].mxu0
        %v1236 = vpop.f32.mrb[0].mxu0
        %v1237 = vadd.f32 0.0, %v1236
        %v1238 = vpop.f32.mrb[0].mxu0
        %1239 = vmatprep.mubr.bf16.mxu0 %v854
        %1240 = vmatmul.mubr.bf16.gmra.mrb[0].mxu0 %v718
        %v1241 = vpop.f32.mrb[0].mxu0
        %v1242 = vadd.f32 0.0, %v1241
        %v1243 = vpop.f32.mrb[0].mxu0
        %v1244 = vpop.f32.mrb[0].mxu0
        %v1245 = vadd.f32 0.0, %v1244
        %v1246 = vpop.f32.mrb[0].mxu0
        %1247 = vmatprep.mubr.bf16.mxu0 %v857
        %1248 = vmatmul.mubr.bf16.gmra.mrb[0].mxu0 %v720
        %v1249 = vpop.f32.mrb[0].mxu0
        %v1250 = vadd.f32 0.0, %v1249
        %v1251 = vpop.f32.mrb[0].mxu0
        %v1252 = vpop.f32.mrb[0].mxu0
        %v1253 = vadd.f32 0.0, %v1252
        %v1254 = vpop.f32.mrb[0].mxu0
        %1255 = vmatprep.mubr.bf16.mxu0 %v860
        %1256 = vmatmul.mubr.bf16.gmra.mrb[0].mxu0 %v722
        %v1257 = vpop.f32.mrb[0].mxu0
        %v1258 = vadd.f32 0.0, %v1257
        %v1259 = vpop.f32.mrb[0].mxu0
        %v1260 = vpop.f32.mrb[0].mxu0
        %v1261 = vadd.f32 0.0, %v1260
        %v1262 = vpop.f32.mrb[0].mxu0
        %1263 = vmatprep.mubr.bf16.mxu0 %v863
        %1264 = vmatmul.mubr.bf16.gmra.mrb[0].mxu0 %v724
        %v1265 = vpop.f32.mrb[0].mxu0
        %v1266 = vadd.f32 0.0, %v1265
        %v1267 = vpop.f32.mrb[0].mxu0
        %v1268 = vpop.f32.mrb[0].mxu0
        %v1269 = vadd.f32 0.0, %v1268
        %v1270 = vpop.f32.mrb[0].mxu0
        %1271 = vmatprep.mubr.bf16.mxu0 %v866
        %1272 = vmatmul.mubr.bf16.gmra.mrb[0].mxu0 %v726
        %v1273 = vpop.f32.mrb[0].mxu0
        %v1274 = vadd.f32 0.0, %v1273
        %v1275 = vpop.f32.mrb[0].mxu0
        %v1276 = vpop.f32.mrb[0].mxu0
        %v1277 = vadd.f32 0.0, %v1276
        %v1278 = vpop.f32.mrb[0].mxu0
        %1279 = vmatprep.mubr.bf16.mxu0 %v869
        %1280 = vmatmul.mubr.bf16.gmra.mrb[0].mxu0 %v728
        %v1281 = vpop.f32.mrb[0].mxu0
        %v1282 = vadd.f32 0.0, %v1281
        %v1283 = vpop.f32.mrb[0].mxu0
        %v1284 = vpop.f32.mrb[0].mxu0
        %v1285 = vadd.f32 0.0, %v1284
        %v1286 = vpop.f32.mrb[0].mxu0
        %1287 = vmatprep.mubr.bf16.mxu0 %v872
        %1288 = vmatmul.mubr.bf16.gmra.mrb[0].mxu0 %v730
        %v1289 = vpop.f32.mrb[0].mxu0
        %v1290 = vadd.f32 0.0, %v1289
        %v1291 = vpop.f32.mrb[0].mxu0
        %v1292 = vpop.f32.mrb[0].mxu0
        %v1293 = vadd.f32 0.0, %v1292
        %v1294 = vpop.f32.mrb[0].mxu0
        %1295 = vmatprep.mubr.bf16.mxu0 %v875
        %1296 = vmatmul.mubr.bf16.gmra.mrb[0].mxu0 %v732
        %v1297 = vpop.f32.mrb[0].mxu0
        %v1298 = vadd.f32 0.0, %v1297
        %v1299 = vpop.f32.mrb[0].mxu0
        %v1300 = vpop.f32.mrb[0].mxu0
        %v1301 = vadd.f32 0.0, %v1300
        %v1302 = vpop.f32.mrb[0].mxu0
        %1303 = vmatprep.mubr.bf16.mxu0 %v878
        %1304 = vmatmul.mubr.bf16.gmra.mrb[0].mxu0 %v734
        %v1305 = vpop.f32.mrb[0].mxu0
        %v1306 = vadd.f32 0.0, %v1305
        %v1307 = vpop.f32.mrb[0].mxu0
        %v1308 = vpop.f32.mrb[0].mxu0
        %v1309 = vadd.f32 0.0, %v1308
        %v1310 = vpop.f32.mrb[0].mxu0
        %1311 = vmatprep.mubr.bf16.mxu0 %v881
        %1312 = vmatmul.mubr.bf16.gmra.mrb[0].mxu0 %v736
        %v1313 = vpop.f32.mrb[0].mxu0
        %v1314 = vadd.f32 0.0, %v1313
        %v1315 = vpop.f32.mrb[0].mxu0
        %v1316 = vpop.f32.mrb[0].mxu0
        %v1317 = vadd.f32 0.0, %v1316
        %v1318 = vpop.f32.mrb[0].mxu0
        %1319 = vmatprep.mubr.bf16.mxu0 %v884
        %1320 = vmatmul.mubr.bf16.gmra.mrb[0].mxu0 %v738
        %v1321 = vpop.f32.mrb[0].mxu0
        %v1322 = vadd.f32 0.0, %v1321
        %v1323 = vpop.f32.mrb[0].mxu0
        %v1324 = vpop.f32.mrb[0].mxu0
        %v1325 = vadd.f32 0.0, %v1324
        %v1326 = vpop.f32.mrb[0].mxu0
        %1327 = vmatprep.mubr.bf16.mxu0 %v887
        %1328 = vmatmul.mubr.bf16.gmra.mrb[0].mxu0 %v740
        %v1329 = vpop.f32.mrb[0].mxu0
        %v1330 = vadd.f32 0.0, %v1329
        %v1331 = vpop.f32.mrb[0].mxu0
        %v1332 = vpop.f32.mrb[0].mxu0
        %v1333 = vadd.f32 0.0, %v1332
        %v1334 = vpop.f32.mrb[0].mxu0
        %1335 = vmatprep.mubr.bf16.mxu0 %v890
        %1336 = vmatmul.mubr.bf16.gmra.mrb[0].mxu0 %v742
        %v1337 = vpop.f32.mrb[0].mxu0
        %v1338 = vadd.f32 0.0, %v1337
        %v1339 = vpop.f32.mrb[0].mxu0
        %v1340 = vpop.f32.mrb[0].mxu0
        %v1341 = vadd.f32 0.0, %v1340
        %v1342 = vpop.f32.mrb[0].mxu0
        %1343 = vmatprep.mubr.bf16.mxu0 %v1189
        %1344 = vmatmul.mubr.bf16.gmra.mrb[0].mxu0 %v744
        %v1345 = vpop.f32.mrb[0].mxu0
        %v1346 = vadd.f32 0.0, %v1345
        %v1347 = vpop.f32.mrb[0].mxu0
        %v1348 = vpop.f32.mrb[0].mxu0
        %v1349 = vadd.f32 0.0, %v1348
        %v1350 = vpop.f32.mrb[0].mxu0
        %1351 = vdwg.mxu0
        %v1352 = vadd.f32 %v1059, %v1226
        %v1353 = vadd.f32 %v1060, %v1229
        %v1354 = vadd.f32 %v1061, %v1234
        %v1355 = vadd.f32 %v1062, %v1237
        %v1356 = vadd.f32 %v1063, %v1242
        %v1357 = vadd.f32 %v1064, %v1245
        %v1358 = vadd.f32 %v1065, %v1250
        %v1359 = vadd.f32 %v1066, %v1253
        %v1360 = vadd.f32 %v1067, %v1258
        %v1361 = vadd.f32 %v1068, %v1261
        %v1362 = vadd.f32 %v1069, %v1266
        %v1363 = vadd.f32 %v1070, %v1269
        %v1364 = vadd.f32 %v1071, %v1274
        %v1365 = vadd.f32 %v1072, %v1277
        %v1366 = vadd.f32 %v1073, %v1282
        %v1367 = vadd.f32 %v1074, %v1285
        %v1368 = vadd.f32 %v1075, %v1290
        %v1369 = vadd.f32 %v1076, %v1293
        %v1370 = vadd.f32 %v1077, %v1298
        %v1371 = vadd.f32 %v1078, %v1301
        %v1372 = vadd.f32 %v1079, %v1306
        %v1373 = vadd.f32 %v1080, %v1309
        %v1374 = vadd.f32 %v1081, %v1314
        %v1375 = vadd.f32 %v1082, %v1317
        %v1376 = vadd.f32 %v1083, %v1322
        %v1377 = vadd.f32 %v1084, %v1325
        %v1378 = vadd.f32 %v1085, %v1330
        %v1379 = vadd.f32 %v1086, %v1333
        %v1380 = vadd.f32 %v1087, %v1338
        %v1381 = vadd.f32 %v1088, %v1341
        %v1382 = vadd.f32 %v1089, %v1346
        %v1383 = vadd.f32 %v1090, %v1349
        %s1384 = scalar_lea.vmem %s1, 192
        %v1385 = vld [vmem:[%s1384] sm:$0xf]
        %v1386 = vld [vmem:[%s1384 + $0x4] sm:$0xf]
        %v1387 = vld [vmem:[%s1384 + $0x8] sm:$0xf]
        %v1388 = vld [vmem:[%s1384 + $0xc] sm:$0xf]
        %v1389 = vld [vmem:[%s1384 + $0x10] sm:$0xf]
        %v1390 = vld [vmem:[%s1384 + $0x14] sm:$0xf]
        %v1391 = vld [vmem:[%s1384 + $0x18] sm:$0xf]
        %v1392 = vld [vmem:[%s1384 + $0x1c] sm:$0xf]
        %v1393 = vld [vmem:[%s1384 + $0x20] sm:$0xf]
        %v1394 = vld [vmem:[%s1384 + $0x24] sm:$0xf]
        %v1395 = vld [vmem:[%s1384 + $0x28] sm:$0xf]
        %v1396 = vld [vmem:[%s1384 + $0x2c] sm:$0xf]
        %v1397 = vld [vmem:[%s1384 + $0x30] sm:$0xf]
        %v1398 = vld [vmem:[%s1384 + $0x34] sm:$0xf]
        %v1399 = vld [vmem:[%s1384 + $0x38] sm:$0xf]
        %v1400 = vld [vmem:[%s1384 + $0x3c] sm:$0xf]
        %v1401 = vld [vmem:[%s1384 + $0x40] sm:$0xf]
        %v1402 = vld [vmem:[%s1384 + $0x44] sm:$0xf]
        %v1403 = vld [vmem:[%s1384 + $0x48] sm:$0xf]
        %v1404 = vld [vmem:[%s1384 + $0x4c] sm:$0xf]
        %v1405 = vld [vmem:[%s1384 + $0x50] sm:$0xf]
        %v1406 = vld [vmem:[%s1384 + $0x54] sm:$0xf]
        %v1407 = vld [vmem:[%s1384 + $0x58] sm:$0xf]
        %v1408 = vld [vmem:[%s1384 + $0x5c] sm:$0xf]
        %v1433 = vunpack.c.l.b16 %v1385
        %v1434 = vunpack.c.l.b16 %v1386
        %v1435 = vunpack.c.l.b16 %v1387
        %v1436 = vunpack.c.l.b16 %v1388
        %v1437 = vunpack.c.l.b16 %v1389
        %v1438 = vunpack.c.l.b16 %v1390
        %v1439 = vunpack.c.l.b16 %v1391
        %v1440 = vunpack.c.l.b16 %v1392
        %v1441 = vunpack.c.l.b16 %v1393
        %v1442 = vunpack.c.l.b16 %v1394
        %v1443 = vunpack.c.l.b16 %v1395
        %v1444 = vunpack.c.l.b16 %v1396
        %v1445 = vunpack.c.l.b16 %v1397
        %v1446 = vunpack.c.l.b16 %v1398
        %v1447 = vunpack.c.l.b16 %v1399
        %v1448 = vunpack.c.l.b16 %v1400
        %v1449 = vunpack.c.l.b16 %v1401
        %v1450 = vunpack.c.l.b16 %v1402
        %v1451 = vunpack.c.l.b16 %v1403
        %v1452 = vunpack.c.l.b16 %v1404
        %v1453 = vunpack.c.l.b16 %v1405
        %v1454 = vunpack.c.l.b16 %v1406
        %v1455 = vunpack.c.l.b16 %v1407
        %v1456 = vunpack.c.l.b16 %v1408
        %v1457 = vpack.c.b16 %v1434, %v1433
        %v1458 = vpack.c.b16 %v1436, %v1435
        %v1459 = vpack.c.b16 %v1438, %v1437
        %v1460 = vpack.c.b16 %v1440, %v1439
        %v1461 = vpack.c.b16 %v1442, %v1441
        %v1462 = vpack.c.b16 %v1444, %v1443
        %v1463 = vpack.c.b16 %v1446, %v1445
        %v1464 = vpack.c.b16 %v1448, %v1447
        %v1465 = vpack.c.b16 %v1450, %v1449
        %v1466 = vpack.c.b16 %v1452, %v1451
        %v1467 = vpack.c.b16 %v1454, %v1453
        %v1468 = vpack.c.b16 %v1456, %v1455
        %v1482 = vsel %vm171, %v747, 0
        %1484 = vmatprep.subr.bf16.mxu0 0
        %1485 = vmatpush1.bf16.msra.mxu0 %v1457
        %1486 = vmatprep.subr.bf16.mxu0 0
        %1487 = vmatpush1.bf16.msra.mxu0 %v1458
        %1488 = vmatprep.subr.bf16.mxu0 0
        %1489 = vmatpush1.bf16.msra.mxu0 %v1459
        %1490 = vmatprep.subr.bf16.mxu0 0
        %1491 = vmatpush1.bf16.msra.mxu0 %v1460
        %1492 = vmatprep.subr.bf16.mxu0 0
        %1493 = vmatpush1.bf16.msra.mxu0 %v1461
        %1494 = vmatprep.subr.bf16.mxu0 0
        %1495 = vmatpush1.bf16.msra.mxu0 %v1462
        %1496 = vmatprep.subr.bf16.mxu0 0
        %1497 = vmatpush1.bf16.msra.mxu0 %v1463
        %1498 = vmatprep.subr.bf16.mxu0 0
        %1499 = vmatpush1.bf16.msra.mxu0 %v1464
        %1500 = vmatprep.subr.bf16.mxu0 0
        %1501 = vmatpush1.bf16.msra.mxu0 %v1465
        %1502 = vmatprep.subr.bf16.mxu0 0
        %1503 = vmatpush1.bf16.msra.mxu0 %v1466
        %1504 = vmatprep.subr.bf16.mxu0 0
        %1505 = vmatpush1.bf16.msra.mxu0 %v1467
        %1506 = vmatprep.subr.bf16.mxu0 0
        %1507 = vmatpush1.bf16.msra.mxu0 %v1468
        %1508 = vmatprep.subr.bf16.mxu0 0
        %1509 = vmatpush1.bf16.msra.mxu0 0
        %1510 = vmatprep.subr.bf16.mxu0 0
        %1511 = vmatpush1.bf16.msra.mxu0 0
        %1512 = vmatprep.subr.bf16.mxu0 0
        %1513 = vmatpush1.bf16.msra.mxu0 0
        %1514 = vmatprep.subr.bf16.mxu0 0
        %1515 = vmatpush1.bf16.msra.mxu0 0
        %1516 = vmatprep.mubr.bf16.mxu0 %v851
        %1517 = vmatmul.mubr.bf16.gmra.mrb[0].mxu0 %v716
        %v1518 = vpop.f32.mrb[0].mxu0
        %v1519 = vadd.f32 0.0, %v1518
        %v1520 = vpop.f32.mrb[0].mxu0
        %v1521 = vpop.f32.mrb[0].mxu0
        %v1522 = vadd.f32 0.0, %v1521
        %v1523 = vpop.f32.mrb[0].mxu0
        %1524 = vmatprep.mubr.bf16.mxu0 %v854
        %1525 = vmatmul.mubr.bf16.gmra.mrb[0].mxu0 %v718
        %v1526 = vpop.f32.mrb[0].mxu0
        %v1527 = vadd.f32 0.0, %v1526
        %v1528 = vpop.f32.mrb[0].mxu0
        %v1529 = vpop.f32.mrb[0].mxu0
        %v1530 = vadd.f32 0.0, %v1529
        %v1531 = vpop.f32.mrb[0].mxu0
        %1532 = vmatprep.mubr.bf16.mxu0 %v857
        %1533 = vmatmul.mubr.bf16.gmra.mrb[0].mxu0 %v720
        %v1534 = vpop.f32.mrb[0].mxu0
        %v1535 = vadd.f32 0.0, %v1534
        %v1536 = vpop.f32.mrb[0].mxu0
        %v1537 = vpop.f32.mrb[0].mxu0
        %v1538 = vadd.f32 0.0, %v1537
        %v1539 = vpop.f32.mrb[0].mxu0
        %1540 = vmatprep.mubr.bf16.mxu0 %v860
        %1541 = vmatmul.mubr.bf16.gmra.mrb[0].mxu0 %v722
        %v1542 = vpop.f32.mrb[0].mxu0
        %v1543 = vadd.f32 0.0, %v1542
        %v1544 = vpop.f32.mrb[0].mxu0
        %v1545 = vpop.f32.mrb[0].mxu0
        %v1546 = vadd.f32 0.0, %v1545
        %v1547 = vpop.f32.mrb[0].mxu0
        %1548 = vmatprep.mubr.bf16.mxu0 %v863
        %1549 = vmatmul.mubr.bf16.gmra.mrb[0].mxu0 %v724
        %v1550 = vpop.f32.mrb[0].mxu0
        %v1551 = vadd.f32 0.0, %v1550
        %v1552 = vpop.f32.mrb[0].mxu0
        %v1553 = vpop.f32.mrb[0].mxu0
        %v1554 = vadd.f32 0.0, %v1553
        %v1555 = vpop.f32.mrb[0].mxu0
        %1556 = vmatprep.mubr.bf16.mxu0 %v866
        %1557 = vmatmul.mubr.bf16.gmra.mrb[0].mxu0 %v726
        %v1558 = vpop.f32.mrb[0].mxu0
        %v1559 = vadd.f32 0.0, %v1558
        %v1560 = vpop.f32.mrb[0].mxu0
        %v1561 = vpop.f32.mrb[0].mxu0
        %v1562 = vadd.f32 0.0, %v1561
        %v1563 = vpop.f32.mrb[0].mxu0
        %1564 = vmatprep.mubr.bf16.mxu0 %v869
        %1565 = vmatmul.mubr.bf16.gmra.mrb[0].mxu0 %v728
        %v1566 = vpop.f32.mrb[0].mxu0
        %v1567 = vadd.f32 0.0, %v1566
        %v1568 = vpop.f32.mrb[0].mxu0
        %v1569 = vpop.f32.mrb[0].mxu0
        %v1570 = vadd.f32 0.0, %v1569
        %v1571 = vpop.f32.mrb[0].mxu0
        %1572 = vmatprep.mubr.bf16.mxu0 %v872
        %1573 = vmatmul.mubr.bf16.gmra.mrb[0].mxu0 %v730
        %v1574 = vpop.f32.mrb[0].mxu0
        %v1575 = vadd.f32 0.0, %v1574
        %v1576 = vpop.f32.mrb[0].mxu0
        %v1577 = vpop.f32.mrb[0].mxu0
        %v1578 = vadd.f32 0.0, %v1577
        %v1579 = vpop.f32.mrb[0].mxu0
        %1580 = vmatprep.mubr.bf16.mxu0 %v875
        %1581 = vmatmul.mubr.bf16.gmra.mrb[0].mxu0 %v732
        %v1582 = vpop.f32.mrb[0].mxu0
        %v1583 = vadd.f32 0.0, %v1582
        %v1584 = vpop.f32.mrb[0].mxu0
        %v1585 = vpop.f32.mrb[0].mxu0
        %v1586 = vadd.f32 0.0, %v1585
        %v1587 = vpop.f32.mrb[0].mxu0
        %1588 = vmatprep.mubr.bf16.mxu0 %v878
        %1589 = vmatmul.mubr.bf16.gmra.mrb[0].mxu0 %v734
        %v1590 = vpop.f32.mrb[0].mxu0
        %v1591 = vadd.f32 0.0, %v1590
        %v1592 = vpop.f32.mrb[0].mxu0
        %v1593 = vpop.f32.mrb[0].mxu0
        %v1594 = vadd.f32 0.0, %v1593
        %v1595 = vpop.f32.mrb[0].mxu0
        %1596 = vmatprep.mubr.bf16.mxu0 %v881
        %1597 = vmatmul.mubr.bf16.gmra.mrb[0].mxu0 %v736
        %v1598 = vpop.f32.mrb[0].mxu0
        %v1599 = vadd.f32 0.0, %v1598
        %v1600 = vpop.f32.mrb[0].mxu0
        %v1601 = vpop.f32.mrb[0].mxu0
        %v1602 = vadd.f32 0.0, %v1601
        %v1603 = vpop.f32.mrb[0].mxu0
        %1604 = vmatprep.mubr.bf16.mxu0 %v884
        %1605 = vmatmul.mubr.bf16.gmra.mrb[0].mxu0 %v738
        %v1606 = vpop.f32.mrb[0].mxu0
        %v1607 = vadd.f32 0.0, %v1606
        %v1608 = vpop.f32.mrb[0].mxu0
        %v1609 = vpop.f32.mrb[0].mxu0
        %v1610 = vadd.f32 0.0, %v1609
        %v1611 = vpop.f32.mrb[0].mxu0
        %1612 = vmatprep.mubr.bf16.mxu0 %v887
        %1613 = vmatmul.mubr.bf16.gmra.mrb[0].mxu0 %v740
        %v1614 = vpop.f32.mrb[0].mxu0
        %v1615 = vadd.f32 0.0, %v1614
        %v1616 = vpop.f32.mrb[0].mxu0
        %v1617 = vpop.f32.mrb[0].mxu0
        %v1618 = vadd.f32 0.0, %v1617
        %v1619 = vpop.f32.mrb[0].mxu0
        %1620 = vmatprep.mubr.bf16.mxu0 %v890
        %1621 = vmatmul.mubr.bf16.gmra.mrb[0].mxu0 %v742
        %v1622 = vpop.f32.mrb[0].mxu0
        %v1623 = vadd.f32 0.0, %v1622
        %v1624 = vpop.f32.mrb[0].mxu0
        %v1625 = vpop.f32.mrb[0].mxu0
        %v1626 = vadd.f32 0.0, %v1625
        %v1627 = vpop.f32.mrb[0].mxu0
        %1628 = vmatprep.mubr.bf16.mxu0 %v1189
        %1629 = vmatmul.mubr.bf16.gmra.mrb[0].mxu0 %v744
        %v1630 = vpop.f32.mrb[0].mxu0
        %v1631 = vadd.f32 0.0, %v1630
        %v1632 = vpop.f32.mrb[0].mxu0
        %v1633 = vpop.f32.mrb[0].mxu0
        %v1634 = vadd.f32 0.0, %v1633
        %v1635 = vpop.f32.mrb[0].mxu0
        %1636 = vmatprep.mubr.bf16.mxu0 %v1482
        %1637 = vmatmul.mubr.bf16.gmra.mrb[0].mxu0 %v746
        %v1638 = vpop.f32.mrb[0].mxu0
        %v1639 = vadd.f32 0.0, %v1638
        %v1640 = vpop.f32.mrb[0].mxu0
        %v1641 = vpop.f32.mrb[0].mxu0
        %v1642 = vadd.f32 0.0, %v1641
        %v1643 = vpop.f32.mrb[0].mxu0
        %1644 = vdwg.mxu0
        %v1645 = vadd.f32 %v1352, %v1519
        %v1646 = vadd.f32 %v1353, %v1522
        %v1647 = vadd.f32 %v1354, %v1527
        %v1648 = vadd.f32 %v1355, %v1530
        %v1649 = vadd.f32 %v1356, %v1535
        %v1650 = vadd.f32 %v1357, %v1538
        %v1651 = vadd.f32 %v1358, %v1543
        %v1652 = vadd.f32 %v1359, %v1546
        %v1653 = vadd.f32 %v1360, %v1551
        %v1654 = vadd.f32 %v1361, %v1554
        %v1655 = vadd.f32 %v1362, %v1559
        %v1656 = vadd.f32 %v1363, %v1562
        %v1657 = vadd.f32 %v1364, %v1567
        %v1658 = vadd.f32 %v1365, %v1570
        %v1659 = vadd.f32 %v1366, %v1575
        %v1660 = vadd.f32 %v1367, %v1578
        %v1661 = vadd.f32 %v1368, %v1583
        %v1662 = vadd.f32 %v1369, %v1586
        %v1663 = vadd.f32 %v1370, %v1591
        %v1664 = vadd.f32 %v1371, %v1594
        %v1665 = vadd.f32 %v1372, %v1599
        %v1666 = vadd.f32 %v1373, %v1602
        %v1667 = vadd.f32 %v1374, %v1607
        %v1668 = vadd.f32 %v1375, %v1610
        %v1669 = vadd.f32 %v1376, %v1615
        %v1670 = vadd.f32 %v1377, %v1618
        %v1671 = vadd.f32 %v1378, %v1623
        %v1672 = vadd.f32 %v1379, %v1626
        %v1673 = vadd.f32 %v1380, %v1631
        %v1674 = vadd.f32 %v1381, %v1634
        %v1675 = vadd.f32 %v1382, %v1639
        %v1676 = vadd.f32 %v1383, %v1642
        %v1677 = vmax.f32 %v1645, 0.0
        %v1678 = vmax.f32 %v1646, 0.0
        %v1679 = vmax.f32 %v1647, 0.0
        %v1680 = vmax.f32 %v1648, 0.0
        %v1681 = vmax.f32 %v1649, 0.0
        %v1682 = vmax.f32 %v1650, 0.0
        %v1683 = vmax.f32 %v1651, 0.0
        %v1684 = vmax.f32 %v1652, 0.0
        %v1685 = vmax.f32 %v1653, 0.0
        %v1686 = vmax.f32 %v1654, 0.0
        %v1687 = vmax.f32 %v1655, 0.0
        %v1688 = vmax.f32 %v1656, 0.0
        %v1689 = vmax.f32 %v1657, 0.0
        %v1690 = vmax.f32 %v1658, 0.0
        %v1691 = vmax.f32 %v1659, 0.0
        %v1692 = vmax.f32 %v1660, 0.0
        %v1693 = vmax.f32 %v1661, 0.0
        %v1694 = vmax.f32 %v1662, 0.0
        %v1695 = vmax.f32 %v1663, 0.0
        %v1696 = vmax.f32 %v1664, 0.0
        %v1697 = vmax.f32 %v1665, 0.0
        %v1698 = vmax.f32 %v1666, 0.0
        %v1699 = vmax.f32 %v1667, 0.0
        %v1700 = vmax.f32 %v1668, 0.0
        %v1701 = vmax.f32 %v1669, 0.0
        %v1702 = vmax.f32 %v1670, 0.0
        %v1703 = vmax.f32 %v1671, 0.0
        %v1704 = vmax.f32 %v1672, 0.0
        %v1705 = vmax.f32 %v1673, 0.0
        %v1706 = vmax.f32 %v1674, 0.0
        %v1707 = vmax.f32 %v1675, 0.0
        %v1708 = vmax.f32 %v1676, 0.0
        %1741 = vrot.lane.b32.xlu0 %v1677, 64
        %v1742 = vpop.permute.xlu0 %1741
        %1743 = vrot.lane.b32.xlu0 %v1678, 64
        %v1744 = vpop.permute.xlu0 %1743
        %1745 = vrot.lane.b32.xlu0 %v1679, 64
        %v1746 = vpop.permute.xlu0 %1745
        %1747 = vrot.lane.b32.xlu0 %v1680, 64
        %v1748 = vpop.permute.xlu0 %1747
        %1749 = vrot.lane.b32.xlu0 %v1681, 64
        %v1750 = vpop.permute.xlu0 %1749
        %1751 = vrot.lane.b32.xlu0 %v1682, 64
        %v1752 = vpop.permute.xlu0 %1751
        %1753 = vrot.lane.b32.xlu0 %v1683, 64
        %v1754 = vpop.permute.xlu0 %1753
        %1755 = vrot.lane.b32.xlu0 %v1684, 64
        %v1756 = vpop.permute.xlu0 %1755
        %1757 = vrot.lane.b32.xlu0 %v1685, 64
        %v1758 = vpop.permute.xlu0 %1757
        %1759 = vrot.lane.b32.xlu0 %v1686, 64
        %v1760 = vpop.permute.xlu0 %1759
        %1761 = vrot.lane.b32.xlu0 %v1687, 64
        %v1762 = vpop.permute.xlu0 %1761
        %1763 = vrot.lane.b32.xlu0 %v1688, 64
        %v1764 = vpop.permute.xlu0 %1763
        %1765 = vrot.lane.b32.xlu0 %v1689, 64
        %v1766 = vpop.permute.xlu0 %1765
        %1767 = vrot.lane.b32.xlu0 %v1690, 64
        %v1768 = vpop.permute.xlu0 %1767
        %1769 = vrot.lane.b32.xlu0 %v1691, 64
        %v1770 = vpop.permute.xlu0 %1769
        %1771 = vrot.lane.b32.xlu0 %v1692, 64
        %v1772 = vpop.permute.xlu0 %1771
        %1773 = vrot.lane.b32.xlu0 %v1693, 64
        %v1774 = vpop.permute.xlu0 %1773
        %1775 = vrot.lane.b32.xlu0 %v1694, 64
        %v1776 = vpop.permute.xlu0 %1775
        %1777 = vrot.lane.b32.xlu0 %v1695, 64
        %v1778 = vpop.permute.xlu0 %1777
        %1779 = vrot.lane.b32.xlu0 %v1696, 64
        %v1780 = vpop.permute.xlu0 %1779
        %1781 = vrot.lane.b32.xlu0 %v1697, 64
        %v1782 = vpop.permute.xlu0 %1781
        %1783 = vrot.lane.b32.xlu0 %v1698, 64
        %v1784 = vpop.permute.xlu0 %1783
        %1785 = vrot.lane.b32.xlu0 %v1699, 64
        %v1786 = vpop.permute.xlu0 %1785
        %1787 = vrot.lane.b32.xlu0 %v1700, 64
        %v1788 = vpop.permute.xlu0 %1787
        %1789 = vrot.lane.b32.xlu0 %v1701, 64
        %v1790 = vpop.permute.xlu0 %1789
        %1791 = vrot.lane.b32.xlu0 %v1702, 64
        %v1792 = vpop.permute.xlu0 %1791
        %1793 = vrot.lane.b32.xlu0 %v1703, 64
        %v1794 = vpop.permute.xlu0 %1793
        %1795 = vrot.lane.b32.xlu0 %v1704, 64
        %v1796 = vpop.permute.xlu0 %1795
        %1797 = vrot.lane.b32.xlu0 %v1705, 64
        %v1798 = vpop.permute.xlu0 %1797
        %1799 = vrot.lane.b32.xlu0 %v1706, 64
        %v1800 = vpop.permute.xlu0 %1799
        %1801 = vrot.lane.b32.xlu0 %v1707, 64
        %v1802 = vpop.permute.xlu0 %1801
        %1803 = vrot.lane.b32.xlu0 %v1708, 64
        %v1804 = vpop.permute.xlu0 %1803
        %1837 = vst.msk [vmem:[%s377] sm:$0xff] %vm378, %v1742
        %1838 = vst.msk [vmem:[%s377 + $0x10] sm:$0xff] %vm378, %v1744
        %1839 = vst.msk [vmem:[%s377 + $0x20] sm:$0xff] %vm378, %v1746
        %1840 = vst.msk [vmem:[%s377 + $0x30] sm:$0xff] %vm378, %v1748
        %1841 = vst.msk [vmem:[%s377 + $0x40] sm:$0xff] %vm378, %v1750
        %1842 = vst.msk [vmem:[%s377 + $0x50] sm:$0xff] %vm378, %v1752
        %1843 = vst.msk [vmem:[%s377 + $0x60] sm:$0xff] %vm378, %v1754
        %1844 = vst.msk [vmem:[%s377 + $0x70] sm:$0xff] %vm378, %v1756
        %1845 = vst.msk [vmem:[%s377 + $0x80] sm:$0xff] %vm378, %v1758
        %1846 = vst.msk [vmem:[%s377 + $0x90] sm:$0xff] %vm378, %v1760
        %1847 = vst.msk [vmem:[%s377 + $0xa0] sm:$0xff] %vm378, %v1762
        %1848 = vst.msk [vmem:[%s377 + $0xb0] sm:$0xff] %vm378, %v1764
        %1849 = vst.msk [vmem:[%s377 + $0xc0] sm:$0xff] %vm378, %v1766
        %1850 = vst.msk [vmem:[%s377 + $0xd0] sm:$0xff] %vm378, %v1768
        %1851 = vst.msk [vmem:[%s377 + $0xe0] sm:$0xff] %vm378, %v1770
        %1852 = vst.msk [vmem:[%s377 + $0xf0] sm:$0xff] %vm378, %v1772
        %1853 = vst.msk [vmem:[%s377 + $0x100] sm:$0xff] %vm378, %v1774
        %1854 = vst.msk [vmem:[%s377 + $0x110] sm:$0xff] %vm378, %v1776
        %1855 = vst.msk [vmem:[%s377 + $0x120] sm:$0xff] %vm378, %v1778
        %1856 = vst.msk [vmem:[%s377 + $0x130] sm:$0xff] %vm378, %v1780
        %1857 = vst.msk [vmem:[%s377 + $0x140] sm:$0xff] %vm378, %v1782
        %1858 = vst.msk [vmem:[%s377 + $0x150] sm:$0xff] %vm378, %v1784
        %1859 = vst.msk [vmem:[%s377 + $0x160] sm:$0xff] %vm378, %v1786
        %1860 = vst.msk [vmem:[%s377 + $0x170] sm:$0xff] %vm378, %v1788
        %1861 = vst.msk [vmem:[%s377 + $0x180] sm:$0xff] %vm378, %v1790
        %1862 = vst.msk [vmem:[%s377 + $0x190] sm:$0xff] %vm378, %v1792
        %1863 = vst.msk [vmem:[%s377 + $0x1a0] sm:$0xff] %vm378, %v1794
        %1864 = vst.msk [vmem:[%s377 + $0x1b0] sm:$0xff] %vm378, %v1796
        %1865 = vst.msk [vmem:[%s377 + $0x1c0] sm:$0xff] %vm378, %v1798
        %1866 = vst.msk [vmem:[%s377 + $0x1d0] sm:$0xff] %vm378, %v1800
        %1867 = vst.msk [vmem:[%s377 + $0x1e0] sm:$0xff] %vm378, %v1802
        %1868 = vst.msk [vmem:[%s377 + $0x1f0] sm:$0xff] %vm378, %v1804
        %v1869 = vrot.slane %v1677, 7
        %v1870 = vrot.slane %v1678, 7
        %v1871 = vsel %vm411, %v1869, %v1870
        %v1872 = vrot.slane %v1679, 7
        %v1873 = vrot.slane %v1680, 7
        %v1874 = vsel %vm411, %v1872, %v1873
        %v1875 = vrot.slane %v1681, 7
        %v1876 = vrot.slane %v1682, 7
        %v1877 = vsel %vm411, %v1875, %v1876
        %v1878 = vrot.slane %v1683, 7
        %v1879 = vrot.slane %v1684, 7
        %v1880 = vsel %vm411, %v1878, %v1879
        %v1881 = vrot.slane %v1685, 7
        %v1882 = vrot.slane %v1686, 7
        %v1883 = vsel %vm411, %v1881, %v1882
        %v1884 = vrot.slane %v1687, 7
        %v1885 = vrot.slane %v1688, 7
        %v1886 = vsel %vm411, %v1884, %v1885
        %v1887 = vrot.slane %v1689, 7
        %v1888 = vrot.slane %v1690, 7
        %v1889 = vsel %vm411, %v1887, %v1888
        %v1890 = vrot.slane %v1691, 7
        %v1891 = vrot.slane %v1692, 7
        %v1892 = vsel %vm411, %v1890, %v1891
        %v1893 = vrot.slane %v1693, 7
        %v1894 = vrot.slane %v1694, 7
        %v1895 = vsel %vm411, %v1893, %v1894
        %v1896 = vrot.slane %v1695, 7
        %v1897 = vrot.slane %v1696, 7
        %v1898 = vsel %vm411, %v1896, %v1897
        %v1899 = vrot.slane %v1697, 7
        %v1900 = vrot.slane %v1698, 7
        %v1901 = vsel %vm411, %v1899, %v1900
        %v1902 = vrot.slane %v1699, 7
        %v1903 = vrot.slane %v1700, 7
        %v1904 = vsel %vm411, %v1902, %v1903
        %v1905 = vrot.slane %v1701, 7
        %v1906 = vrot.slane %v1702, 7
        %v1907 = vsel %vm411, %v1905, %v1906
        %v1908 = vrot.slane %v1703, 7
        %v1909 = vrot.slane %v1704, 7
        %v1910 = vsel %vm411, %v1908, %v1909
        %v1911 = vrot.slane %v1705, 7
        %v1912 = vrot.slane %v1706, 7
        %v1913 = vsel %vm411, %v1911, %v1912
        %v1914 = vrot.slane %v1707, 7
        %v1915 = vrot.slane %v1708, 7
        %v1916 = vsel %vm411, %v1914, %v1915
        %1949 = vst.msk [vmem:[%s377] sm:$0xfe] %vm492, %v1869
        %1950 = vst.msk [vmem:[%s377 + $0x10] sm:$0xff] %vm171, %v1871
        %1951 = vst.msk [vmem:[%s377 + $0x20] sm:$0xfe] %vm492, %v1872
        %1952 = vst.msk [vmem:[%s377 + $0x30] sm:$0xff] %vm171, %v1874
        %1953 = vst.msk [vmem:[%s377 + $0x40] sm:$0xfe] %vm492, %v1875
        %1954 = vst.msk [vmem:[%s377 + $0x50] sm:$0xff] %vm171, %v1877
        %1955 = vst.msk [vmem:[%s377 + $0x60] sm:$0xfe] %vm492, %v1878
        %1956 = vst.msk [vmem:[%s377 + $0x70] sm:$0xff] %vm171, %v1880
        %1957 = vst.msk [vmem:[%s377 + $0x80] sm:$0xfe] %vm492, %v1881
        %1958 = vst.msk [vmem:[%s377 + $0x90] sm:$0xff] %vm171, %v1883
        %1959 = vst.msk [vmem:[%s377 + $0xa0] sm:$0xfe] %vm492, %v1884
        %1960 = vst.msk [vmem:[%s377 + $0xb0] sm:$0xff] %vm171, %v1886
        %1961 = vst.msk [vmem:[%s377 + $0xc0] sm:$0xfe] %vm492, %v1887
        %1962 = vst.msk [vmem:[%s377 + $0xd0] sm:$0xff] %vm171, %v1889
        %1963 = vst.msk [vmem:[%s377 + $0xe0] sm:$0xfe] %vm492, %v1890
        %1964 = vst.msk [vmem:[%s377 + $0xf0] sm:$0xff] %vm171, %v1892
        %1965 = vst.msk [vmem:[%s377 + $0x100] sm:$0xfe] %vm492, %v1893
        %1966 = vst.msk [vmem:[%s377 + $0x110] sm:$0xff] %vm171, %v1895
        %1967 = vst.msk [vmem:[%s377 + $0x120] sm:$0xfe] %vm492, %v1896
        %1968 = vst.msk [vmem:[%s377 + $0x130] sm:$0xff] %vm171, %v1898
        %1969 = vst.msk [vmem:[%s377 + $0x140] sm:$0xfe] %vm492, %v1899
        %1970 = vst.msk [vmem:[%s377 + $0x150] sm:$0xff] %vm171, %v1901
        %1971 = vst.msk [vmem:[%s377 + $0x160] sm:$0xfe] %vm492, %v1902
        %1972 = vst.msk [vmem:[%s377 + $0x170] sm:$0xff] %vm171, %v1904
        %1973 = vst.msk [vmem:[%s377 + $0x180] sm:$0xfe] %vm492, %v1905
        %1974 = vst.msk [vmem:[%s377 + $0x190] sm:$0xff] %vm171, %v1907
        %1975 = vst.msk [vmem:[%s377 + $0x1a0] sm:$0xfe] %vm492, %v1908
        %1976 = vst.msk [vmem:[%s377 + $0x1b0] sm:$0xff] %vm171, %v1910
        %1977 = vst.msk [vmem:[%s377 + $0x1c0] sm:$0xfe] %vm492, %v1911
        %1978 = vst.msk [vmem:[%s377 + $0x1d0] sm:$0xff] %vm171, %v1913
        %1979 = vst.msk [vmem:[%s377 + $0x1e0] sm:$0xfe] %vm492, %v1914
        %1980 = vst.msk [vmem:[%s377 + $0x1f0] sm:$0xff] %vm171, %v1916
        %v1981 = vrot.slane %v1677, 1
        %v1982 = vrot.slane %v1678, 1
        %v1983 = vsel %vm525, %v1981, %v1982
        %v1984 = vrot.slane %v1679, 1
        %v1985 = vrot.slane %v1680, 1
        %v1986 = vsel %vm525, %v1984, %v1985
        %v1987 = vrot.slane %v1681, 1
        %v1988 = vrot.slane %v1682, 1
        %v1989 = vsel %vm525, %v1987, %v1988
        %v1990 = vrot.slane %v1683, 1
        %v1991 = vrot.slane %v1684, 1
        %v1992 = vsel %vm525, %v1990, %v1991
        %v1993 = vrot.slane %v1685, 1
        %v1994 = vrot.slane %v1686, 1
        %v1995 = vsel %vm525, %v1993, %v1994
        %v1996 = vrot.slane %v1687, 1
        %v1997 = vrot.slane %v1688, 1
        %v1998 = vsel %vm525, %v1996, %v1997
        %v1999 = vrot.slane %v1689, 1
        %v2000 = vrot.slane %v1690, 1
        %v2001 = vsel %vm525, %v1999, %v2000
        %v2002 = vrot.slane %v1691, 1
        %v2003 = vrot.slane %v1692, 1
        %v2004 = vsel %vm525, %v2002, %v2003
        %v2005 = vrot.slane %v1693, 1
        %v2006 = vrot.slane %v1694, 1
        %v2007 = vsel %vm525, %v2005, %v2006
        %v2008 = vrot.slane %v1695, 1
        %v2009 = vrot.slane %v1696, 1
        %v2010 = vsel %vm525, %v2008, %v2009
        %v2011 = vrot.slane %v1697, 1
        %v2012 = vrot.slane %v1698, 1
        %v2013 = vsel %vm525, %v2011, %v2012
        %v2014 = vrot.slane %v1699, 1
        %v2015 = vrot.slane %v1700, 1
        %v2016 = vsel %vm525, %v2014, %v2015
        %v2017 = vrot.slane %v1701, 1
        %v2018 = vrot.slane %v1702, 1
        %v2019 = vsel %vm525, %v2017, %v2018
        %v2020 = vrot.slane %v1703, 1
        %v2021 = vrot.slane %v1704, 1
        %v2022 = vsel %vm525, %v2020, %v2021
        %v2023 = vrot.slane %v1705, 1
        %v2024 = vrot.slane %v1706, 1
        %v2025 = vsel %vm525, %v2023, %v2024
        %v2026 = vrot.slane %v1707, 1
        %v2027 = vrot.slane %v1708, 1
        %v2028 = vsel %vm525, %v2026, %v2027
        %2061 = vst.msk [vmem:[%s377 + $0x8] sm:$0xff] %vm171, %v1983
        %2062 = vst.msk [vmem:[%s377 + $0x18] sm:$0x7f] %vm607, %v1982
        %2063 = vst.msk [vmem:[%s377 + $0x28] sm:$0xff] %vm171, %v1986
        %2064 = vst.msk [vmem:[%s377 + $0x38] sm:$0x7f] %vm607, %v1985
        %2065 = vst.msk [vmem:[%s377 + $0x48] sm:$0xff] %vm171, %v1989
        %2066 = vst.msk [vmem:[%s377 + $0x58] sm:$0x7f] %vm607, %v1988
        %2067 = vst.msk [vmem:[%s377 + $0x68] sm:$0xff] %vm171, %v1992
        %2068 = vst.msk [vmem:[%s377 + $0x78] sm:$0x7f] %vm607, %v1991
        %2069 = vst.msk [vmem:[%s377 + $0x88] sm:$0xff] %vm171, %v1995
        %2070 = vst.msk [vmem:[%s377 + $0x98] sm:$0x7f] %vm607, %v1994
        %2071 = vst.msk [vmem:[%s377 + $0xa8] sm:$0xff] %vm171, %v1998
        %2072 = vst.msk [vmem:[%s377 + $0xb8] sm:$0x7f] %vm607, %v1997
        %2073 = vst.msk [vmem:[%s377 + $0xc8] sm:$0xff] %vm171, %v2001
        %2074 = vst.msk [vmem:[%s377 + $0xd8] sm:$0x7f] %vm607, %v2000
        %2075 = vst.msk [vmem:[%s377 + $0xe8] sm:$0xff] %vm171, %v2004
        %2076 = vst.msk [vmem:[%s377 + $0xf8] sm:$0x7f] %vm607, %v2003
        %2077 = vst.msk [vmem:[%s377 + $0x108] sm:$0xff] %vm171, %v2007
        %2078 = vst.msk [vmem:[%s377 + $0x118] sm:$0x7f] %vm607, %v2006
        %2079 = vst.msk [vmem:[%s377 + $0x128] sm:$0xff] %vm171, %v2010
        %2080 = vst.msk [vmem:[%s377 + $0x138] sm:$0x7f] %vm607, %v2009
        %2081 = vst.msk [vmem:[%s377 + $0x148] sm:$0xff] %vm171, %v2013
        %2082 = vst.msk [vmem:[%s377 + $0x158] sm:$0x7f] %vm607, %v2012
        %2083 = vst.msk [vmem:[%s377 + $0x168] sm:$0xff] %vm171, %v2016
        %2084 = vst.msk [vmem:[%s377 + $0x178] sm:$0x7f] %vm607, %v2015
        %2085 = vst.msk [vmem:[%s377 + $0x188] sm:$0xff] %vm171, %v2019
        %2086 = vst.msk [vmem:[%s377 + $0x198] sm:$0x7f] %vm607, %v2018
        %2087 = vst.msk [vmem:[%s377 + $0x1a8] sm:$0xff] %vm171, %v2022
        %2088 = vst.msk [vmem:[%s377 + $0x1b8] sm:$0x7f] %vm607, %v2021
        %2089 = vst.msk [vmem:[%s377 + $0x1c8] sm:$0xff] %vm171, %v2025
        %2090 = vst.msk [vmem:[%s377 + $0x1d8] sm:$0x7f] %vm607, %v2024
        %2091 = vst.msk [vmem:[%s377 + $0x1e8] sm:$0xff] %vm171, %v2028
        %2092 = vst.msk [vmem:[%s377 + $0x1f8] sm:$0x7f] %vm607, %v2027
        %s2093 = scalar_lea.vmem %s2, 1
        %v2094 = vld [vmem:[%s2093] sm:$0x1]
        %v2095 = vld [vmem:[#allocation2] sm:$0xff]
        %v2096 = vld [vmem:[#allocation2 + $0x8] sm:$0xff]
        %v2097 = vld [vmem:[#allocation2 + $0x10] sm:$0xff]
        %v2098 = vld [vmem:[#allocation2 + $0x18] sm:$0xff]
        %v2099 = vld [vmem:[#allocation2 + $0x20] sm:$0xff]
        %v2100 = vld [vmem:[#allocation2 + $0x28] sm:$0xff]
        %v2101 = vld [vmem:[#allocation2 + $0x30] sm:$0xff]
        %v2102 = vld [vmem:[#allocation2 + $0x38] sm:$0xff]
        %v2103 = vld [vmem:[#allocation2 + $0x40] sm:$0xff]
        %v2104 = vld [vmem:[#allocation2 + $0x48] sm:$0xff]
        %v2105 = vld [vmem:[#allocation2 + $0x50] sm:$0xff]
        %v2106 = vld [vmem:[#allocation2 + $0x58] sm:$0xff]
        %v2107 = vld [vmem:[#allocation2 + $0x60] sm:$0xff]
        %v2108 = vld [vmem:[#allocation2 + $0x68] sm:$0xff]
        %v2109 = vld [vmem:[#allocation2 + $0x70] sm:$0xff]
        %v2110 = vld [vmem:[#allocation2 + $0x78] sm:$0xff]
        %v2111 = vld [vmem:[#allocation2 + $0x80] sm:$0xff]
        %v2112 = vld [vmem:[#allocation2 + $0x88] sm:$0xff]
        %v2113 = vld [vmem:[#allocation2 + $0x90] sm:$0xff]
        %v2114 = vld [vmem:[#allocation2 + $0x98] sm:$0xff]
        %v2115 = vld [vmem:[#allocation2 + $0xa0] sm:$0xff]
        %v2116 = vld [vmem:[#allocation2 + $0xa8] sm:$0xff]
        %v2117 = vld [vmem:[#allocation2 + $0xb0] sm:$0xff]
        %v2118 = vld [vmem:[#allocation2 + $0xb8] sm:$0xff]
        %v2119 = vld [vmem:[#allocation2 + $0xc0] sm:$0xff]
        %v2120 = vld [vmem:[#allocation2 + $0xc8] sm:$0xff]
        %v2121 = vld [vmem:[#allocation2 + $0xd0] sm:$0xff]
        %v2122 = vld [vmem:[#allocation2 + $0xd8] sm:$0xff]
        %v2123 = vld [vmem:[#allocation2 + $0xe0] sm:$0xff]
        %v2124 = vld [vmem:[#allocation2 + $0xe8] sm:$0xff]
        %v2125 = vld [vmem:[#allocation2 + $0xf0] sm:$0xff]
        %v2126 = vld [vmem:[#allocation2 + $0xf8] sm:$0xff]
        %v2127 = vld [vmem:[#allocation2 + $0x100] sm:$0xff]
        %v2128 = vld [vmem:[#allocation2 + $0x108] sm:$0xff]
        %v2129 = vld [vmem:[#allocation2 + $0x110] sm:$0xff]
        %v2130 = vld [vmem:[#allocation2 + $0x118] sm:$0xff]
        %v2131 = vld [vmem:[#allocation2 + $0x120] sm:$0xff]
        %v2132 = vld [vmem:[#allocation2 + $0x128] sm:$0xff]
        %v2133 = vld [vmem:[#allocation2 + $0x130] sm:$0xff]
        %v2134 = vld [vmem:[#allocation2 + $0x138] sm:$0xff]
        %v2135 = vld [vmem:[#allocation2 + $0x140] sm:$0xff]
        %v2136 = vld [vmem:[#allocation2 + $0x148] sm:$0xff]
        %v2137 = vld [vmem:[#allocation2 + $0x150] sm:$0xff]
        %v2138 = vld [vmem:[#allocation2 + $0x158] sm:$0xff]
        %v2139 = vld [vmem:[#allocation2 + $0x160] sm:$0xff]
        %v2140 = vld [vmem:[#allocation2 + $0x168] sm:$0xff]
        %v2141 = vld [vmem:[#allocation2 + $0x170] sm:$0xff]
        %v2142 = vld [vmem:[#allocation2 + $0x178] sm:$0xff]
        %v2143 = vld [vmem:[#allocation2 + $0x180] sm:$0xff]
        %v2144 = vld [vmem:[#allocation2 + $0x188] sm:$0xff]
        %v2145 = vld [vmem:[#allocation2 + $0x190] sm:$0xff]
        %v2146 = vld [vmem:[#allocation2 + $0x198] sm:$0xff]
        %v2147 = vld [vmem:[#allocation2 + $0x1a0] sm:$0xff]
        %v2148 = vld [vmem:[#allocation2 + $0x1a8] sm:$0xff]
        %v2149 = vld [vmem:[#allocation2 + $0x1b0] sm:$0xff]
        %v2150 = vld [vmem:[#allocation2 + $0x1b8] sm:$0xff]
        %v2151 = vld [vmem:[#allocation2 + $0x1c0] sm:$0xff]
        %v2152 = vld [vmem:[#allocation2 + $0x1c8] sm:$0xff]
        %v2153 = vld [vmem:[#allocation2 + $0x1d0] sm:$0xff]
        %v2154 = vld [vmem:[#allocation2 + $0x1d8] sm:$0xff]
        %v2155 = vld [vmem:[#allocation2 + $0x1e0] sm:$0xff]
        %v2156 = vld [vmem:[#allocation2 + $0x1e8] sm:$0xff]
        %v2157 = vld [vmem:[#allocation2 + $0x1f0] sm:$0xff]
        %v2158 = vld [vmem:[#allocation2 + $0x1f8] sm:$0xff]
        %v2159 = vld [vmem:[#allocation2 + $0x200] sm:$0xff]
        %v2160 = vld [vmem:[#allocation2 + $0x208] sm:$0xff]
        %v2161 = vld [vmem:[#allocation2 + $0x210] sm:$0xff]
        %v2162 = vld [vmem:[#allocation2 + $0x218] sm:$0xff]
        %v2163 = vld [vmem:[#allocation2 + $0x220] sm:$0xff]
        %v2164 = vld [vmem:[#allocation2 + $0x228] sm:$0xff]
        %v2165 = vld [vmem:[#allocation2 + $0x230] sm:$0xff]
        %v2166 = vld [vmem:[#allocation2 + $0x238] sm:$0xff]
        %v2167 = vpack.c.bf16 %v2097, %v2095
        %v2168 = vpack.c.bf16 %v2098, %v2096
        %v2169 = vpack.c.bf16 %v2101, %v2099
        %v2170 = vpack.c.bf16 %v2102, %v2100
        %v2171 = vpack.c.bf16 %v2105, %v2103
        %v2172 = vpack.c.bf16 %v2106, %v2104
        %v2173 = vpack.c.bf16 %v2109, %v2107
        %v2174 = vpack.c.bf16 %v2110, %v2108
        %v2175 = vpack.c.bf16 %v2113, %v2111
        %v2176 = vpack.c.bf16 %v2114, %v2112
        %v2177 = vpack.c.bf16 %v2117, %v2115
        %v2178 = vpack.c.bf16 %v2118, %v2116
        %v2179 = vpack.c.bf16 %v2121, %v2119
        %v2180 = vpack.c.bf16 %v2122, %v2120
        %v2181 = vpack.c.bf16 %v2125, %v2123
        %v2182 = vpack.c.bf16 %v2126, %v2124
        %v2183 = vpack.c.bf16 %v2129, %v2127
        %v2184 = vpack.c.bf16 %v2130, %v2128
        %v2185 = vpack.c.bf16 %v2133, %v2131
        %v2186 = vpack.c.bf16 %v2134, %v2132
        %v2187 = vpack.c.bf16 %v2137, %v2135
        %v2188 = vpack.c.bf16 %v2138, %v2136
        %v2189 = vpack.c.bf16 %v2141, %v2139
        %v2190 = vpack.c.bf16 %v2142, %v2140
        %v2191 = vpack.c.bf16 %v2145, %v2143
        %v2192 = vpack.c.bf16 %v2146, %v2144
        %v2193 = vpack.c.bf16 %v2149, %v2147
        %v2194 = vpack.c.bf16 %v2150, %v2148
        %v2195 = vpack.c.bf16 %v2153, %v2151
        %v2196 = vpack.c.bf16 %v2154, %v2152
        %v2197 = vpack.c.bf16 %v2157, %v2155
        %v2198 = vpack.c.bf16 %v2158, %v2156
        %v2199 = vpack.c.bf16 %v2161, %v2159
        %v2200 = vpack.c.bf16 %v2162, %v2160
        %v2201 = vpack.c.bf16 %v2165, %v2163
        %v2202 = vpack.c.bf16 %v2166, %v2164
        %s2203 = scalar_lea.vmem %s1, 288
        %v2204 = vld [vmem:[%s2203] sm:$0xf]
        %v2205 = vld [vmem:[%s2203 + $0x4] sm:$0xf]
        %v2206 = vld [vmem:[%s2203 + $0x8] sm:$0xf]
        %v2207 = vld [vmem:[%s2203 + $0xc] sm:$0xf]
        %v2208 = vld [vmem:[%s2203 + $0x10] sm:$0xf]
        %v2209 = vld [vmem:[%s2203 + $0x14] sm:$0xf]
        %v2210 = vld [vmem:[%s2203 + $0x18] sm:$0xf]
        %v2211 = vld [vmem:[%s2203 + $0x1c] sm:$0xf]
        %v2212 = vld [vmem:[%s2203 + $0x20] sm:$0xf]
        %v2213 = vld [vmem:[%s2203 + $0x24] sm:$0xf]
        %v2214 = vld [vmem:[%s2203 + $0x28] sm:$0xf]
        %v2215 = vld [vmem:[%s2203 + $0x2c] sm:$0xf]
        %v2216 = vld [vmem:[%s2203 + $0x30] sm:$0xf]
        %v2217 = vld [vmem:[%s2203 + $0x34] sm:$0xf]
        %v2218 = vld [vmem:[%s2203 + $0x38] sm:$0xf]
        %v2219 = vld [vmem:[%s2203 + $0x3c] sm:$0xf]
        %v2220 = vld [vmem:[%s2203 + $0x40] sm:$0xf]
        %v2221 = vld [vmem:[%s2203 + $0x44] sm:$0xf]
        %v2222 = vld [vmem:[%s2203 + $0x48] sm:$0xf]
        %v2223 = vld [vmem:[%s2203 + $0x4c] sm:$0xf]
        %v2224 = vld [vmem:[%s2203 + $0x50] sm:$0xf]
        %v2225 = vld [vmem:[%s2203 + $0x54] sm:$0xf]
        %v2226 = vld [vmem:[%s2203 + $0x58] sm:$0xf]
        %v2227 = vld [vmem:[%s2203 + $0x5c] sm:$0xf]
        %v2252 = vunpack.c.l.b16 %v2204
        %v2253 = vunpack.c.l.b16 %v2205
        %v2254 = vunpack.c.l.b16 %v2206
        %v2255 = vunpack.c.l.b16 %v2207
        %v2256 = vunpack.c.l.b16 %v2208
        %v2257 = vunpack.c.l.b16 %v2209
        %v2258 = vunpack.c.l.b16 %v2210
        %v2259 = vunpack.c.l.b16 %v2211
        %v2260 = vunpack.c.l.b16 %v2212
        %v2261 = vunpack.c.l.b16 %v2213
        %v2262 = vunpack.c.l.b16 %v2214
        %v2263 = vunpack.c.l.b16 %v2215
        %v2264 = vunpack.c.l.b16 %v2216
        %v2265 = vunpack.c.l.b16 %v2217
        %v2266 = vunpack.c.l.b16 %v2218
        %v2267 = vunpack.c.l.b16 %v2219
        %v2268 = vunpack.c.l.b16 %v2220
        %v2269 = vunpack.c.l.b16 %v2221
        %v2270 = vunpack.c.l.b16 %v2222
        %v2271 = vunpack.c.l.b16 %v2223
        %v2272 = vunpack.c.l.b16 %v2224
        %v2273 = vunpack.c.l.b16 %v2225
        %v2274 = vunpack.c.l.b16 %v2226
        %v2275 = vunpack.c.l.b16 %v2227
        %v2276 = vpack.c.b16 %v2253, %v2252
        %v2277 = vpack.c.b16 %v2255, %v2254
        %v2278 = vpack.c.b16 %v2257, %v2256
        %v2279 = vpack.c.b16 %v2259, %v2258
        %v2280 = vpack.c.b16 %v2261, %v2260
        %v2281 = vpack.c.b16 %v2263, %v2262
        %v2282 = vpack.c.b16 %v2265, %v2264
        %v2283 = vpack.c.b16 %v2267, %v2266
        %v2284 = vpack.c.b16 %v2269, %v2268
        %v2285 = vpack.c.b16 %v2271, %v2270
        %v2286 = vpack.c.b16 %v2273, %v2272
        %v2287 = vpack.c.b16 %v2275, %v2274
        %v2301 = vsel %vm171, %v2168, 0
        %v2304 = vsel %vm171, %v2170, 0
        %v2307 = vsel %vm171, %v2172, 0
        %v2310 = vsel %vm171, %v2174, 0
        %v2313 = vsel %vm171, %v2176, 0
        %v2316 = vsel %vm171, %v2178, 0
        %v2319 = vsel %vm171, %v2180, 0
        %v2322 = vsel %vm171, %v2182, 0
        %v2325 = vsel %vm171, %v2184, 0
        %v2328 = vsel %vm171, %v2186, 0
        %v2331 = vsel %vm171, %v2188, 0
        %v2334 = vsel %vm171, %v2190, 0
        %v2337 = vsel %vm171, %v2192, 0
        %v2340 = vsel %vm171, %v2194, 0
        %v2343 = vsel %vm171, %v2196, 0
        %v2346 = vsel %vm171, %v2198, 0
        %2348 = vmatprep.subr.bf16.mxu0 0
        %2349 = vmatpush1.bf16.msra.mxu0 %v2276
        %2350 = vmatprep.subr.bf16.mxu0 0
        %2351 = vmatpush1.bf16.msra.mxu0 %v2277
        %2352 = vmatprep.subr.bf16.mxu0 0
        %2353 = vmatpush1.bf16.msra.mxu0 %v2278
        %2354 = vmatprep.subr.bf16.mxu0 0
        %2355 = vmatpush1.bf16.msra.mxu0 %v2279
        %2356 = vmatprep.subr.bf16.mxu0 0
        %2357 = vmatpush1.bf16.msra.mxu0 %v2280
        %2358 = vmatprep.subr.bf16.mxu0 0
        %2359 = vmatpush1.bf16.msra.mxu0 %v2281
        %2360 = vmatprep.subr.bf16.mxu0 0
        %2361 = vmatpush1.bf16.msra.mxu0 %v2282
        %2362 = vmatprep.subr.bf16.mxu0 0
        %2363 = vmatpush1.bf16.msra.mxu0 %v2283
        %2364 = vmatprep.subr.bf16.mxu0 0
        %2365 = vmatpush1.bf16.msra.mxu0 %v2284
        %2366 = vmatprep.subr.bf16.mxu0 0
        %2367 = vmatpush1.bf16.msra.mxu0 %v2285
        %2368 = vmatprep.subr.bf16.mxu0 0
        %2369 = vmatpush1.bf16.msra.mxu0 %v2286
        %2370 = vmatprep.subr.bf16.mxu0 0
        %2371 = vmatpush1.bf16.msra.mxu0 %v2287
        %2372 = vmatprep.subr.bf16.mxu0 0
        %2373 = vmatpush1.bf16.msra.mxu0 0
        %2374 = vmatprep.subr.bf16.mxu0 0
        %2375 = vmatpush1.bf16.msra.mxu0 0
        %2376 = vmatprep.subr.bf16.mxu0 0
        %2377 = vmatpush1.bf16.msra.mxu0 0
        %2378 = vmatprep.subr.bf16.mxu0 0
        %2379 = vmatpush1.bf16.msra.mxu0 0
        %2380 = vmatprep.mubr.bf16.mxu0 %v2301
        %2381 = vmatmul.mubr.bf16.gmra.mrb[0].mxu0 %v2167
        %v2382 = vpop.f32.mrb[0].mxu0
        %v2383 = vadd.f32 0.0, %v2382
        %v2384 = vpop.f32.mrb[0].mxu0
        %v2385 = vpop.f32.mrb[0].mxu0
        %v2386 = vadd.f32 0.0, %v2385
        %v2387 = vpop.f32.mrb[0].mxu0
        %2388 = vmatprep.mubr.bf16.mxu0 %v2304
        %2389 = vmatmul.mubr.bf16.gmra.mrb[0].mxu0 %v2169
        %v2390 = vpop.f32.mrb[0].mxu0
        %v2391 = vadd.f32 0.0, %v2390
        %v2392 = vpop.f32.mrb[0].mxu0
        %v2393 = vpop.f32.mrb[0].mxu0
        %v2394 = vadd.f32 0.0, %v2393
        %v2395 = vpop.f32.mrb[0].mxu0
        %2396 = vmatprep.mubr.bf16.mxu0 %v2307
        %2397 = vmatmul.mubr.bf16.gmra.mrb[0].mxu0 %v2171
        %v2398 = vpop.f32.mrb[0].mxu0
        %v2399 = vadd.f32 0.0, %v2398
        %v2400 = vpop.f32.mrb[0].mxu0
        %v2401 = vpop.f32.mrb[0].mxu0
        %v2402 = vadd.f32 0.0, %v2401
        %v2403 = vpop.f32.mrb[0].mxu0
        %2404 = vmatprep.mubr.bf16.mxu0 %v2310
        %2405 = vmatmul.mubr.bf16.gmra.mrb[0].mxu0 %v2173
        %v2406 = vpop.f32.mrb[0].mxu0
        %v2407 = vadd.f32 0.0, %v2406
        %v2408 = vpop.f32.mrb[0].mxu0
        %v2409 = vpop.f32.mrb[0].mxu0
        %v2410 = vadd.f32 0.0, %v2409
        %v2411 = vpop.f32.mrb[0].mxu0
        %2412 = vmatprep.mubr.bf16.mxu0 %v2313
        %2413 = vmatmul.mubr.bf16.gmra.mrb[0].mxu0 %v2175
        %v2414 = vpop.f32.mrb[0].mxu0
        %v2415 = vadd.f32 0.0, %v2414
        %v2416 = vpop.f32.mrb[0].mxu0
        %v2417 = vpop.f32.mrb[0].mxu0
        %v2418 = vadd.f32 0.0, %v2417
        %v2419 = vpop.f32.mrb[0].mxu0
        %2420 = vmatprep.mubr.bf16.mxu0 %v2316
        %2421 = vmatmul.mubr.bf16.gmra.mrb[0].mxu0 %v2177
        %v2422 = vpop.f32.mrb[0].mxu0
        %v2423 = vadd.f32 0.0, %v2422
        %v2424 = vpop.f32.mrb[0].mxu0
        %v2425 = vpop.f32.mrb[0].mxu0
        %v2426 = vadd.f32 0.0, %v2425
        %v2427 = vpop.f32.mrb[0].mxu0
        %2428 = vmatprep.mubr.bf16.mxu0 %v2319
        %2429 = vmatmul.mubr.bf16.gmra.mrb[0].mxu0 %v2179
        %v2430 = vpop.f32.mrb[0].mxu0
        %v2431 = vadd.f32 0.0, %v2430
        %v2432 = vpop.f32.mrb[0].mxu0
        %v2433 = vpop.f32.mrb[0].mxu0
        %v2434 = vadd.f32 0.0, %v2433
        %v2435 = vpop.f32.mrb[0].mxu0
        %2436 = vmatprep.mubr.bf16.mxu0 %v2322
        %2437 = vmatmul.mubr.bf16.gmra.mrb[0].mxu0 %v2181
        %v2438 = vpop.f32.mrb[0].mxu0
        %v2439 = vadd.f32 0.0, %v2438
        %v2440 = vpop.f32.mrb[0].mxu0
        %v2441 = vpop.f32.mrb[0].mxu0
        %v2442 = vadd.f32 0.0, %v2441
        %v2443 = vpop.f32.mrb[0].mxu0
        %2444 = vmatprep.mubr.bf16.mxu0 %v2325
        %2445 = vmatmul.mubr.bf16.gmra.mrb[0].mxu0 %v2183
        %v2446 = vpop.f32.mrb[0].mxu0
        %v2447 = vadd.f32 0.0, %v2446
        %v2448 = vpop.f32.mrb[0].mxu0
        %v2449 = vpop.f32.mrb[0].mxu0
        %v2450 = vadd.f32 0.0, %v2449
        %v2451 = vpop.f32.mrb[0].mxu0
        %2452 = vmatprep.mubr.bf16.mxu0 %v2328
        %2453 = vmatmul.mubr.bf16.gmra.mrb[0].mxu0 %v2185
        %v2454 = vpop.f32.mrb[0].mxu0
        %v2455 = vadd.f32 0.0, %v2454
        %v2456 = vpop.f32.mrb[0].mxu0
        %v2457 = vpop.f32.mrb[0].mxu0
        %v2458 = vadd.f32 0.0, %v2457
        %v2459 = vpop.f32.mrb[0].mxu0
        %2460 = vmatprep.mubr.bf16.mxu0 %v2331
        %2461 = vmatmul.mubr.bf16.gmra.mrb[0].mxu0 %v2187
        %v2462 = vpop.f32.mrb[0].mxu0
        %v2463 = vadd.f32 0.0, %v2462
        %v2464 = vpop.f32.mrb[0].mxu0
        %v2465 = vpop.f32.mrb[0].mxu0
        %v2466 = vadd.f32 0.0, %v2465
        %v2467 = vpop.f32.mrb[0].mxu0
        %2468 = vmatprep.mubr.bf16.mxu0 %v2334
        %2469 = vmatmul.mubr.bf16.gmra.mrb[0].mxu0 %v2189
        %v2470 = vpop.f32.mrb[0].mxu0
        %v2471 = vadd.f32 0.0, %v2470
        %v2472 = vpop.f32.mrb[0].mxu0
        %v2473 = vpop.f32.mrb[0].mxu0
        %v2474 = vadd.f32 0.0, %v2473
        %v2475 = vpop.f32.mrb[0].mxu0
        %2476 = vmatprep.mubr.bf16.mxu0 %v2337
        %2477 = vmatmul.mubr.bf16.gmra.mrb[0].mxu0 %v2191
        %v2478 = vpop.f32.mrb[0].mxu0
        %v2479 = vadd.f32 0.0, %v2478
        %v2480 = vpop.f32.mrb[0].mxu0
        %v2481 = vpop.f32.mrb[0].mxu0
        %v2482 = vadd.f32 0.0, %v2481
        %v2483 = vpop.f32.mrb[0].mxu0
        %2484 = vmatprep.mubr.bf16.mxu0 %v2340
        %2485 = vmatmul.mubr.bf16.gmra.mrb[0].mxu0 %v2193
        %v2486 = vpop.f32.mrb[0].mxu0
        %v2487 = vadd.f32 0.0, %v2486
        %v2488 = vpop.f32.mrb[0].mxu0
        %v2489 = vpop.f32.mrb[0].mxu0
        %v2490 = vadd.f32 0.0, %v2489
        %v2491 = vpop.f32.mrb[0].mxu0
        %2492 = vmatprep.mubr.bf16.mxu0 %v2343
        %2493 = vmatmul.mubr.bf16.gmra.mrb[0].mxu0 %v2195
        %v2494 = vpop.f32.mrb[0].mxu0
        %v2495 = vadd.f32 0.0, %v2494
        %v2496 = vpop.f32.mrb[0].mxu0
        %v2497 = vpop.f32.mrb[0].mxu0
        %v2498 = vadd.f32 0.0, %v2497
        %v2499 = vpop.f32.mrb[0].mxu0
        %2500 = vmatprep.mubr.bf16.mxu0 %v2346
        %2501 = vmatmul.mubr.bf16.gmra.mrb[0].mxu0 %v2197
        %v2502 = vpop.f32.mrb[0].mxu0
        %v2503 = vadd.f32 0.0, %v2502
        %v2504 = vpop.f32.mrb[0].mxu0
        %v2505 = vpop.f32.mrb[0].mxu0
        %v2506 = vadd.f32 0.0, %v2505
        %v2507 = vpop.f32.mrb[0].mxu0
        %2508 = vdwg.mxu0
        %v2510 = vlaneseq
        %v2511 = vshrl.u32 %v2510, 7
        %v2512 = vsub.s32 0, %v2511
        %v2513 = vrot.slane %v2094, %v2512
        %v2515 = vadd.f32 %v2513, %v2383
        %v2516 = vadd.f32 %v2513, %v2386
        %v2517 = vadd.f32 %v2513, %v2391
        %v2518 = vadd.f32 %v2513, %v2394
        %v2519 = vadd.f32 %v2513, %v2399
        %v2520 = vadd.f32 %v2513, %v2402
        %v2521 = vadd.f32 %v2513, %v2407
        %v2522 = vadd.f32 %v2513, %v2410
        %v2523 = vadd.f32 %v2513, %v2415
        %v2524 = vadd.f32 %v2513, %v2418
        %v2525 = vadd.f32 %v2513, %v2423
        %v2526 = vadd.f32 %v2513, %v2426
        %v2527 = vadd.f32 %v2513, %v2431
        %v2528 = vadd.f32 %v2513, %v2434
        %v2529 = vadd.f32 %v2513, %v2439
        %v2530 = vadd.f32 %v2513, %v2442
        %v2531 = vadd.f32 %v2513, %v2447
        %v2532 = vadd.f32 %v2513, %v2450
        %v2533 = vadd.f32 %v2513, %v2455
        %v2534 = vadd.f32 %v2513, %v2458
        %v2535 = vadd.f32 %v2513, %v2463
        %v2536 = vadd.f32 %v2513, %v2466
        %v2537 = vadd.f32 %v2513, %v2471
        %v2538 = vadd.f32 %v2513, %v2474
        %v2539 = vadd.f32 %v2513, %v2479
        %v2540 = vadd.f32 %v2513, %v2482
        %v2541 = vadd.f32 %v2513, %v2487
        %v2542 = vadd.f32 %v2513, %v2490
        %v2543 = vadd.f32 %v2513, %v2495
        %v2544 = vadd.f32 %v2513, %v2498
        %v2545 = vadd.f32 %v2513, %v2503
        %v2546 = vadd.f32 %v2513, %v2506
        %s2547 = scalar_lea.vmem %s1, 384
        %v2548 = vld [vmem:[%s2547] sm:$0xf]
        %v2549 = vld [vmem:[%s2547 + $0x4] sm:$0xf]
        %v2550 = vld [vmem:[%s2547 + $0x8] sm:$0xf]
        %v2551 = vld [vmem:[%s2547 + $0xc] sm:$0xf]
        %v2552 = vld [vmem:[%s2547 + $0x10] sm:$0xf]
        %v2553 = vld [vmem:[%s2547 + $0x14] sm:$0xf]
        %v2554 = vld [vmem:[%s2547 + $0x18] sm:$0xf]
        %v2555 = vld [vmem:[%s2547 + $0x1c] sm:$0xf]
        %v2556 = vld [vmem:[%s2547 + $0x20] sm:$0xf]
        %v2557 = vld [vmem:[%s2547 + $0x24] sm:$0xf]
        %v2558 = vld [vmem:[%s2547 + $0x28] sm:$0xf]
        %v2559 = vld [vmem:[%s2547 + $0x2c] sm:$0xf]
        %v2560 = vld [vmem:[%s2547 + $0x30] sm:$0xf]
        %v2561 = vld [vmem:[%s2547 + $0x34] sm:$0xf]
        %v2562 = vld [vmem:[%s2547 + $0x38] sm:$0xf]
        %v2563 = vld [vmem:[%s2547 + $0x3c] sm:$0xf]
        %v2564 = vld [vmem:[%s2547 + $0x40] sm:$0xf]
        %v2565 = vld [vmem:[%s2547 + $0x44] sm:$0xf]
        %v2566 = vld [vmem:[%s2547 + $0x48] sm:$0xf]
        %v2567 = vld [vmem:[%s2547 + $0x4c] sm:$0xf]
        %v2568 = vld [vmem:[%s2547 + $0x50] sm:$0xf]
        %v2569 = vld [vmem:[%s2547 + $0x54] sm:$0xf]
        %v2570 = vld [vmem:[%s2547 + $0x58] sm:$0xf]
        %v2571 = vld [vmem:[%s2547 + $0x5c] sm:$0xf]
        %v2596 = vunpack.c.l.b16 %v2548
        %v2597 = vunpack.c.l.b16 %v2549
        %v2598 = vunpack.c.l.b16 %v2550
        %v2599 = vunpack.c.l.b16 %v2551
        %v2600 = vunpack.c.l.b16 %v2552
        %v2601 = vunpack.c.l.b16 %v2553
        %v2602 = vunpack.c.l.b16 %v2554
        %v2603 = vunpack.c.l.b16 %v2555
        %v2604 = vunpack.c.l.b16 %v2556
        %v2605 = vunpack.c.l.b16 %v2557
        %v2606 = vunpack.c.l.b16 %v2558
        %v2607 = vunpack.c.l.b16 %v2559
        %v2608 = vunpack.c.l.b16 %v2560
        %v2609 = vunpack.c.l.b16 %v2561
        %v2610 = vunpack.c.l.b16 %v2562
        %v2611 = vunpack.c.l.b16 %v2563
        %v2612 = vunpack.c.l.b16 %v2564
        %v2613 = vunpack.c.l.b16 %v2565
        %v2614 = vunpack.c.l.b16 %v2566
        %v2615 = vunpack.c.l.b16 %v2567
        %v2616 = vunpack.c.l.b16 %v2568
        %v2617 = vunpack.c.l.b16 %v2569
        %v2618 = vunpack.c.l.b16 %v2570
        %v2619 = vunpack.c.l.b16 %v2571
        %v2620 = vpack.c.b16 %v2597, %v2596
        %v2621 = vpack.c.b16 %v2599, %v2598
        %v2622 = vpack.c.b16 %v2601, %v2600
        %v2623 = vpack.c.b16 %v2603, %v2602
        %v2624 = vpack.c.b16 %v2605, %v2604
        %v2625 = vpack.c.b16 %v2607, %v2606
        %v2626 = vpack.c.b16 %v2609, %v2608
        %v2627 = vpack.c.b16 %v2611, %v2610
        %v2628 = vpack.c.b16 %v2613, %v2612
        %v2629 = vpack.c.b16 %v2615, %v2614
        %v2630 = vpack.c.b16 %v2617, %v2616
        %v2631 = vpack.c.b16 %v2619, %v2618
        %v2645 = vsel %vm171, %v2200, 0
        %2647 = vmatprep.subr.bf16.mxu0 0
        %2648 = vmatpush1.bf16.msra.mxu0 %v2620
        %2649 = vmatprep.subr.bf16.mxu0 0
        %2650 = vmatpush1.bf16.msra.mxu0 %v2621
        %2651 = vmatprep.subr.bf16.mxu0 0
        %2652 = vmatpush1.bf16.msra.mxu0 %v2622
        %2653 = vmatprep.subr.bf16.mxu0 0
        %2654 = vmatpush1.bf16.msra.mxu0 %v2623
        %2655 = vmatprep.subr.bf16.mxu0 0
        %2656 = vmatpush1.bf16.msra.mxu0 %v2624
        %2657 = vmatprep.subr.bf16.mxu0 0
        %2658 = vmatpush1.bf16.msra.mxu0 %v2625
        %2659 = vmatprep.subr.bf16.mxu0 0
        %2660 = vmatpush1.bf16.msra.mxu0 %v2626
        %2661 = vmatprep.subr.bf16.mxu0 0
        %2662 = vmatpush1.bf16.msra.mxu0 %v2627
        %2663 = vmatprep.subr.bf16.mxu0 0
        %2664 = vmatpush1.bf16.msra.mxu0 %v2628
        %2665 = vmatprep.subr.bf16.mxu0 0
        %2666 = vmatpush1.bf16.msra.mxu0 %v2629
        %2667 = vmatprep.subr.bf16.mxu0 0
        %2668 = vmatpush1.bf16.msra.mxu0 %v2630
        %2669 = vmatprep.subr.bf16.mxu0 0
        %2670 = vmatpush1.bf16.msra.mxu0 %v2631
        %2671 = vmatprep.subr.bf16.mxu0 0
        %2672 = vmatpush1.bf16.msra.mxu0 0
        %2673 = vmatprep.subr.bf16.mxu0 0
        %2674 = vmatpush1.bf16.msra.mxu0 0
        %2675 = vmatprep.subr.bf16.mxu0 0
        %2676 = vmatpush1.bf16.msra.mxu0 0
        %2677 = vmatprep.subr.bf16.mxu0 0
        %2678 = vmatpush1.bf16.msra.mxu0 0
        %2679 = vmatprep.mubr.bf16.mxu0 %v2304
        %2680 = vmatmul.mubr.bf16.gmra.mrb[0].mxu0 %v2169
        %v2681 = vpop.f32.mrb[0].mxu0
        %v2682 = vadd.f32 0.0, %v2681
        %v2683 = vpop.f32.mrb[0].mxu0
        %v2684 = vpop.f32.mrb[0].mxu0
        %v2685 = vadd.f32 0.0, %v2684
        %v2686 = vpop.f32.mrb[0].mxu0
        %2687 = vmatprep.mubr.bf16.mxu0 %v2307
        %2688 = vmatmul.mubr.bf16.gmra.mrb[0].mxu0 %v2171
        %v2689 = vpop.f32.mrb[0].mxu0
        %v2690 = vadd.f32 0.0, %v2689
        %v2691 = vpop.f32.mrb[0].mxu0
        %v2692 = vpop.f32.mrb[0].mxu0
        %v2693 = vadd.f32 0.0, %v2692
        %v2694 = vpop.f32.mrb[0].mxu0
        %2695 = vmatprep.mubr.bf16.mxu0 %v2310
        %2696 = vmatmul.mubr.bf16.gmra.mrb[0].mxu0 %v2173
        %v2697 = vpop.f32.mrb[0].mxu0
        %v2698 = vadd.f32 0.0, %v2697
        %v2699 = vpop.f32.mrb[0].mxu0
        %v2700 = vpop.f32.mrb[0].mxu0
        %v2701 = vadd.f32 0.0, %v2700
        %v2702 = vpop.f32.mrb[0].mxu0
        %2703 = vmatprep.mubr.bf16.mxu0 %v2313
        %2704 = vmatmul.mubr.bf16.gmra.mrb[0].mxu0 %v2175
        %v2705 = vpop.f32.mrb[0].mxu0
        %v2706 = vadd.f32 0.0, %v2705
        %v2707 = vpop.f32.mrb[0].mxu0
        %v2708 = vpop.f32.mrb[0].mxu0
        %v2709 = vadd.f32 0.0, %v2708
        %v2710 = vpop.f32.mrb[0].mxu0
        %2711 = vmatprep.mubr.bf16.mxu0 %v2316
        %2712 = vmatmul.mubr.bf16.gmra.mrb[0].mxu0 %v2177
        %v2713 = vpop.f32.mrb[0].mxu0
        %v2714 = vadd.f32 0.0, %v2713
        %v2715 = vpop.f32.mrb[0].mxu0
        %v2716 = vpop.f32.mrb[0].mxu0
        %v2717 = vadd.f32 0.0, %v2716
        %v2718 = vpop.f32.mrb[0].mxu0
        %2719 = vmatprep.mubr.bf16.mxu0 %v2319
        %2720 = vmatmul.mubr.bf16.gmra.mrb[0].mxu0 %v2179
        %v2721 = vpop.f32.mrb[0].mxu0
        %v2722 = vadd.f32 0.0, %v2721
        %v2723 = vpop.f32.mrb[0].mxu0
        %v2724 = vpop.f32.mrb[0].mxu0
        %v2725 = vadd.f32 0.0, %v2724
        %v2726 = vpop.f32.mrb[0].mxu0
        %2727 = vmatprep.mubr.bf16.mxu0 %v2322
        %2728 = vmatmul.mubr.bf16.gmra.mrb[0].mxu0 %v2181
        %v2729 = vpop.f32.mrb[0].mxu0
        %v2730 = vadd.f32 0.0, %v2729
        %v2731 = vpop.f32.mrb[0].mxu0
        %v2732 = vpop.f32.mrb[0].mxu0
        %v2733 = vadd.f32 0.0, %v2732
        %v2734 = vpop.f32.mrb[0].mxu0
        %2735 = vmatprep.mubr.bf16.mxu0 %v2325
        %2736 = vmatmul.mubr.bf16.gmra.mrb[0].mxu0 %v2183
        %v2737 = vpop.f32.mrb[0].mxu0
        %v2738 = vadd.f32 0.0, %v2737
        %v2739 = vpop.f32.mrb[0].mxu0
        %v2740 = vpop.f32.mrb[0].mxu0
        %v2741 = vadd.f32 0.0, %v2740
        %v2742 = vpop.f32.mrb[0].mxu0
        %2743 = vmatprep.mubr.bf16.mxu0 %v2328
        %2744 = vmatmul.mubr.bf16.gmra.mrb[0].mxu0 %v2185
        %v2745 = vpop.f32.mrb[0].mxu0
        %v2746 = vadd.f32 0.0, %v2745
        %v2747 = vpop.f32.mrb[0].mxu0
        %v2748 = vpop.f32.mrb[0].mxu0
        %v2749 = vadd.f32 0.0, %v2748
        %v2750 = vpop.f32.mrb[0].mxu0
        %2751 = vmatprep.mubr.bf16.mxu0 %v2331
        %2752 = vmatmul.mubr.bf16.gmra.mrb[0].mxu0 %v2187
        %v2753 = vpop.f32.mrb[0].mxu0
        %v2754 = vadd.f32 0.0, %v2753
        %v2755 = vpop.f32.mrb[0].mxu0
        %v2756 = vpop.f32.mrb[0].mxu0
        %v2757 = vadd.f32 0.0, %v2756
        %v2758 = vpop.f32.mrb[0].mxu0
        %2759 = vmatprep.mubr.bf16.mxu0 %v2334
        %2760 = vmatmul.mubr.bf16.gmra.mrb[0].mxu0 %v2189
        %v2761 = vpop.f32.mrb[0].mxu0
        %v2762 = vadd.f32 0.0, %v2761
        %v2763 = vpop.f32.mrb[0].mxu0
        %v2764 = vpop.f32.mrb[0].mxu0
        %v2765 = vadd.f32 0.0, %v2764
        %v2766 = vpop.f32.mrb[0].mxu0
        %2767 = vmatprep.mubr.bf16.mxu0 %v2337
        %2768 = vmatmul.mubr.bf16.gmra.mrb[0].mxu0 %v2191
        %v2769 = vpop.f32.mrb[0].mxu0
        %v2770 = vadd.f32 0.0, %v2769
        %v2771 = vpop.f32.mrb[0].mxu0
        %v2772 = vpop.f32.mrb[0].mxu0
        %v2773 = vadd.f32 0.0, %v2772
        %v2774 = vpop.f32.mrb[0].mxu0
        %2775 = vmatprep.mubr.bf16.mxu0 %v2340
        %2776 = vmatmul.mubr.bf16.gmra.mrb[0].mxu0 %v2193
        %v2777 = vpop.f32.mrb[0].mxu0
        %v2778 = vadd.f32 0.0, %v2777
        %v2779 = vpop.f32.mrb[0].mxu0
        %v2780 = vpop.f32.mrb[0].mxu0
        %v2781 = vadd.f32 0.0, %v2780
        %v2782 = vpop.f32.mrb[0].mxu0
        %2783 = vmatprep.mubr.bf16.mxu0 %v2343
        %2784 = vmatmul.mubr.bf16.gmra.mrb[0].mxu0 %v2195
        %v2785 = vpop.f32.mrb[0].mxu0
        %v2786 = vadd.f32 0.0, %v2785
        %v2787 = vpop.f32.mrb[0].mxu0
        %v2788 = vpop.f32.mrb[0].mxu0
        %v2789 = vadd.f32 0.0, %v2788
        %v2790 = vpop.f32.mrb[0].mxu0
        %2791 = vmatprep.mubr.bf16.mxu0 %v2346
        %2792 = vmatmul.mubr.bf16.gmra.mrb[0].mxu0 %v2197
        %v2793 = vpop.f32.mrb[0].mxu0
        %v2794 = vadd.f32 0.0, %v2793
        %v2795 = vpop.f32.mrb[0].mxu0
        %v2796 = vpop.f32.mrb[0].mxu0
        %v2797 = vadd.f32 0.0, %v2796
        %v2798 = vpop.f32.mrb[0].mxu0
        %2799 = vmatprep.mubr.bf16.mxu0 %v2645
        %2800 = vmatmul.mubr.bf16.gmra.mrb[0].mxu0 %v2199
        %v2801 = vpop.f32.mrb[0].mxu0
        %v2802 = vadd.f32 0.0, %v2801
        %v2803 = vpop.f32.mrb[0].mxu0
        %v2804 = vpop.f32.mrb[0].mxu0
        %v2805 = vadd.f32 0.0, %v2804
        %v2806 = vpop.f32.mrb[0].mxu0
        %2807 = vdwg.mxu0
        %v2808 = vadd.f32 %v2515, %v2682
        %v2809 = vadd.f32 %v2516, %v2685
        %v2810 = vadd.f32 %v2517, %v2690
        %v2811 = vadd.f32 %v2518, %v2693
        %v2812 = vadd.f32 %v2519, %v2698
        %v2813 = vadd.f32 %v2520, %v2701
        %v2814 = vadd.f32 %v2521, %v2706
        %v2815 = vadd.f32 %v2522, %v2709
        %v2816 = vadd.f32 %v2523, %v2714
        %v2817 = vadd.f32 %v2524, %v2717
        %v2818 = vadd.f32 %v2525, %v2722
        %v2819 = vadd.f32 %v2526, %v2725
        %v2820 = vadd.f32 %v2527, %v2730
        %v2821 = vadd.f32 %v2528, %v2733
        %v2822 = vadd.f32 %v2529, %v2738
        %v2823 = vadd.f32 %v2530, %v2741
        %v2824 = vadd.f32 %v2531, %v2746
        %v2825 = vadd.f32 %v2532, %v2749
        %v2826 = vadd.f32 %v2533, %v2754
        %v2827 = vadd.f32 %v2534, %v2757
        %v2828 = vadd.f32 %v2535, %v2762
        %v2829 = vadd.f32 %v2536, %v2765
        %v2830 = vadd.f32 %v2537, %v2770
        %v2831 = vadd.f32 %v2538, %v2773
        %v2832 = vadd.f32 %v2539, %v2778
        %v2833 = vadd.f32 %v2540, %v2781
        %v2834 = vadd.f32 %v2541, %v2786
        %v2835 = vadd.f32 %v2542, %v2789
        %v2836 = vadd.f32 %v2543, %v2794
        %v2837 = vadd.f32 %v2544, %v2797
        %v2838 = vadd.f32 %v2545, %v2802
        %v2839 = vadd.f32 %v2546, %v2805
        %s2840 = scalar_lea.vmem %s1, 480
        %v2841 = vld [vmem:[%s2840] sm:$0xf]
        %v2842 = vld [vmem:[%s2840 + $0x4] sm:$0xf]
        %v2843 = vld [vmem:[%s2840 + $0x8] sm:$0xf]
        %v2844 = vld [vmem:[%s2840 + $0xc] sm:$0xf]
        %v2845 = vld [vmem:[%s2840 + $0x10] sm:$0xf]
        %v2846 = vld [vmem:[%s2840 + $0x14] sm:$0xf]
        %v2847 = vld [vmem:[%s2840 + $0x18] sm:$0xf]
        %v2848 = vld [vmem:[%s2840 + $0x1c] sm:$0xf]
        %v2849 = vld [vmem:[%s2840 + $0x20] sm:$0xf]
        %v2850 = vld [vmem:[%s2840 + $0x24] sm:$0xf]
        %v2851 = vld [vmem:[%s2840 + $0x28] sm:$0xf]
        %v2852 = vld [vmem:[%s2840 + $0x2c] sm:$0xf]
        %v2853 = vld [vmem:[%s2840 + $0x30] sm:$0xf]
        %v2854 = vld [vmem:[%s2840 + $0x34] sm:$0xf]
        %v2855 = vld [vmem:[%s2840 + $0x38] sm:$0xf]
        %v2856 = vld [vmem:[%s2840 + $0x3c] sm:$0xf]
        %v2857 = vld [vmem:[%s2840 + $0x40] sm:$0xf]
        %v2858 = vld [vmem:[%s2840 + $0x44] sm:$0xf]
        %v2859 = vld [vmem:[%s2840 + $0x48] sm:$0xf]
        %v2860 = vld [vmem:[%s2840 + $0x4c] sm:$0xf]
        %v2861 = vld [vmem:[%s2840 + $0x50] sm:$0xf]
        %v2862 = vld [vmem:[%s2840 + $0x54] sm:$0xf]
        %v2863 = vld [vmem:[%s2840 + $0x58] sm:$0xf]
        %v2864 = vld [vmem:[%s2840 + $0x5c] sm:$0xf]
        %v2889 = vunpack.c.l.b16 %v2841
        %v2890 = vunpack.c.l.b16 %v2842
        %v2891 = vunpack.c.l.b16 %v2843
        %v2892 = vunpack.c.l.b16 %v2844
        %v2893 = vunpack.c.l.b16 %v2845
        %v2894 = vunpack.c.l.b16 %v2846
        %v2895 = vunpack.c.l.b16 %v2847
        %v2896 = vunpack.c.l.b16 %v2848
        %v2897 = vunpack.c.l.b16 %v2849
        %v2898 = vunpack.c.l.b16 %v2850
        %v2899 = vunpack.c.l.b16 %v2851
        %v2900 = vunpack.c.l.b16 %v2852
        %v2901 = vunpack.c.l.b16 %v2853
        %v2902 = vunpack.c.l.b16 %v2854
        %v2903 = vunpack.c.l.b16 %v2855
        %v2904 = vunpack.c.l.b16 %v2856
        %v2905 = vunpack.c.l.b16 %v2857
        %v2906 = vunpack.c.l.b16 %v2858
        %v2907 = vunpack.c.l.b16 %v2859
        %v2908 = vunpack.c.l.b16 %v2860
        %v2909 = vunpack.c.l.b16 %v2861
        %v2910 = vunpack.c.l.b16 %v2862
        %v2911 = vunpack.c.l.b16 %v2863
        %v2912 = vunpack.c.l.b16 %v2864
        %v2913 = vpack.c.b16 %v2890, %v2889
        %v2914 = vpack.c.b16 %v2892, %v2891
        %v2915 = vpack.c.b16 %v2894, %v2893
        %v2916 = vpack.c.b16 %v2896, %v2895
        %v2917 = vpack.c.b16 %v2898, %v2897
        %v2918 = vpack.c.b16 %v2900, %v2899
        %v2919 = vpack.c.b16 %v2902, %v2901
        %v2920 = vpack.c.b16 %v2904, %v2903
        %v2921 = vpack.c.b16 %v2906, %v2905
        %v2922 = vpack.c.b16 %v2908, %v2907
        %v2923 = vpack.c.b16 %v2910, %v2909
        %v2924 = vpack.c.b16 %v2912, %v2911
        %v2938 = vsel %vm171, %v2202, 0
        %2940 = vmatprep.subr.bf16.mxu0 0
        %2941 = vmatpush1.bf16.msra.mxu0 %v2913
        %2942 = vmatprep.subr.bf16.mxu0 0
        %2943 = vmatpush1.bf16.msra.mxu0 %v2914
        %2944 = vmatprep.subr.bf16.mxu0 0
        %2945 = vmatpush1.bf16.msra.mxu0 %v2915
        %2946 = vmatprep.subr.bf16.mxu0 0
        %2947 = vmatpush1.bf16.msra.mxu0 %v2916
        %2948 = vmatprep.subr.bf16.mxu0 0
        %2949 = vmatpush1.bf16.msra.mxu0 %v2917
        %2950 = vmatprep.subr.bf16.mxu0 0
        %2951 = vmatpush1.bf16.msra.mxu0 %v2918
        %2952 = vmatprep.subr.bf16.mxu0 0
        %2953 = vmatpush1.bf16.msra.mxu0 %v2919
        %2954 = vmatprep.subr.bf16.mxu0 0
        %2955 = vmatpush1.bf16.msra.mxu0 %v2920
        %2956 = vmatprep.subr.bf16.mxu0 0
        %2957 = vmatpush1.bf16.msra.mxu0 %v2921
        %2958 = vmatprep.subr.bf16.mxu0 0
        %2959 = vmatpush1.bf16.msra.mxu0 %v2922
        %2960 = vmatprep.subr.bf16.mxu0 0
        %2961 = vmatpush1.bf16.msra.mxu0 %v2923
        %2962 = vmatprep.subr.bf16.mxu0 0
        %2963 = vmatpush1.bf16.msra.mxu0 %v2924
        %2964 = vmatprep.subr.bf16.mxu0 0
        %2965 = vmatpush1.bf16.msra.mxu0 0
        %2966 = vmatprep.subr.bf16.mxu0 0
        %2967 = vmatpush1.bf16.msra.mxu0 0
        %2968 = vmatprep.subr.bf16.mxu0 0
        %2969 = vmatpush1.bf16.msra.mxu0 0
        %2970 = vmatprep.subr.bf16.mxu0 0
        %2971 = vmatpush1.bf16.msra.mxu0 0
        %2972 = vmatprep.mubr.bf16.mxu0 %v2307
        %2973 = vmatmul.mubr.bf16.gmra.mrb[0].mxu0 %v2171
        %v2974 = vpop.f32.mrb[0].mxu0
        %v2975 = vadd.f32 0.0, %v2974
        %v2976 = vpop.f32.mrb[0].mxu0
        %v2977 = vpop.f32.mrb[0].mxu0
        %v2978 = vadd.f32 0.0, %v2977
        %v2979 = vpop.f32.mrb[0].mxu0
        %2980 = vmatprep.mubr.bf16.mxu0 %v2310
        %2981 = vmatmul.mubr.bf16.gmra.mrb[0].mxu0 %v2173
        %v2982 = vpop.f32.mrb[0].mxu0
        %v2983 = vadd.f32 0.0, %v2982
        %v2984 = vpop.f32.mrb[0].mxu0
        %v2985 = vpop.f32.mrb[0].mxu0
        %v2986 = vadd.f32 0.0, %v2985
        %v2987 = vpop.f32.mrb[0].mxu0
        %2988 = vmatprep.mubr.bf16.mxu0 %v2313
        %2989 = vmatmul.mubr.bf16.gmra.mrb[0].mxu0 %v2175
        %v2990 = vpop.f32.mrb[0].mxu0
        %v2991 = vadd.f32 0.0, %v2990
        %v2992 = vpop.f32.mrb[0].mxu0
        %v2993 = vpop.f32.mrb[0].mxu0
        %v2994 = vadd.f32 0.0, %v2993
        %v2995 = vpop.f32.mrb[0].mxu0
        %2996 = vmatprep.mubr.bf16.mxu0 %v2316
        %2997 = vmatmul.mubr.bf16.gmra.mrb[0].mxu0 %v2177
        %v2998 = vpop.f32.mrb[0].mxu0
        %v2999 = vadd.f32 0.0, %v2998
        %v3000 = vpop.f32.mrb[0].mxu0
        %v3001 = vpop.f32.mrb[0].mxu0
        %v3002 = vadd.f32 0.0, %v3001
        %v3003 = vpop.f32.mrb[0].mxu0
        %3004 = vmatprep.mubr.bf16.mxu0 %v2319
        %3005 = vmatmul.mubr.bf16.gmra.mrb[0].mxu0 %v2179
        %v3006 = vpop.f32.mrb[0].mxu0
        %v3007 = vadd.f32 0.0, %v3006
        %v3008 = vpop.f32.mrb[0].mxu0
        %v3009 = vpop.f32.mrb[0].mxu0
        %v3010 = vadd.f32 0.0, %v3009
        %v3011 = vpop.f32.mrb[0].mxu0
        %3012 = vmatprep.mubr.bf16.mxu0 %v2322
        %3013 = vmatmul.mubr.bf16.gmra.mrb[0].mxu0 %v2181
        %v3014 = vpop.f32.mrb[0].mxu0
        %v3015 = vadd.f32 0.0, %v3014
        %v3016 = vpop.f32.mrb[0].mxu0
        %v3017 = vpop.f32.mrb[0].mxu0
        %v3018 = vadd.f32 0.0, %v3017
        %v3019 = vpop.f32.mrb[0].mxu0
        %3020 = vmatprep.mubr.bf16.mxu0 %v2325
        %3021 = vmatmul.mubr.bf16.gmra.mrb[0].mxu0 %v2183
        %v3022 = vpop.f32.mrb[0].mxu0
        %v3023 = vadd.f32 0.0, %v3022
        %v3024 = vpop.f32.mrb[0].mxu0
        %v3025 = vpop.f32.mrb[0].mxu0
        %v3026 = vadd.f32 0.0, %v3025
        %v3027 = vpop.f32.mrb[0].mxu0
        %3028 = vmatprep.mubr.bf16.mxu0 %v2328
        %3029 = vmatmul.mubr.bf16.gmra.mrb[0].mxu0 %v2185
        %v3030 = vpop.f32.mrb[0].mxu0
        %v3031 = vadd.f32 0.0, %v3030
        %v3032 = vpop.f32.mrb[0].mxu0
        %v3033 = vpop.f32.mrb[0].mxu0
        %v3034 = vadd.f32 0.0, %v3033
        %v3035 = vpop.f32.mrb[0].mxu0
        %3036 = vmatprep.mubr.bf16.mxu0 %v2331
        %3037 = vmatmul.mubr.bf16.gmra.mrb[0].mxu0 %v2187
        %v3038 = vpop.f32.mrb[0].mxu0
        %v3039 = vadd.f32 0.0, %v3038
        %v3040 = vpop.f32.mrb[0].mxu0
        %v3041 = vpop.f32.mrb[0].mxu0
        %v3042 = vadd.f32 0.0, %v3041
        %v3043 = vpop.f32.mrb[0].mxu0
        %3044 = vmatprep.mubr.bf16.mxu0 %v2334
        %3045 = vmatmul.mubr.bf16.gmra.mrb[0].mxu0 %v2189
        %v3046 = vpop.f32.mrb[0].mxu0
        %v3047 = vadd.f32 0.0, %v3046
        %v3048 = vpop.f32.mrb[0].mxu0
        %v3049 = vpop.f32.mrb[0].mxu0
        %v3050 = vadd.f32 0.0, %v3049
        %v3051 = vpop.f32.mrb[0].mxu0
        %3052 = vmatprep.mubr.bf16.mxu0 %v2337
        %3053 = vmatmul.mubr.bf16.gmra.mrb[0].mxu0 %v2191
        %v3054 = vpop.f32.mrb[0].mxu0
        %v3055 = vadd.f32 0.0, %v3054
        %v3056 = vpop.f32.mrb[0].mxu0
        %v3057 = vpop.f32.mrb[0].mxu0
        %v3058 = vadd.f32 0.0, %v3057
        %v3059 = vpop.f32.mrb[0].mxu0
        %3060 = vmatprep.mubr.bf16.mxu0 %v2340
        %3061 = vmatmul.mubr.bf16.gmra.mrb[0].mxu0 %v2193
        %v3062 = vpop.f32.mrb[0].mxu0
        %v3063 = vadd.f32 0.0, %v3062
        %v3064 = vpop.f32.mrb[0].mxu0
        %v3065 = vpop.f32.mrb[0].mxu0
        %v3066 = vadd.f32 0.0, %v3065
        %v3067 = vpop.f32.mrb[0].mxu0
        %3068 = vmatprep.mubr.bf16.mxu0 %v2343
        %3069 = vmatmul.mubr.bf16.gmra.mrb[0].mxu0 %v2195
        %v3070 = vpop.f32.mrb[0].mxu0
        %v3071 = vadd.f32 0.0, %v3070
        %v3072 = vpop.f32.mrb[0].mxu0
        %v3073 = vpop.f32.mrb[0].mxu0
        %v3074 = vadd.f32 0.0, %v3073
        %v3075 = vpop.f32.mrb[0].mxu0
        %3076 = vmatprep.mubr.bf16.mxu0 %v2346
        %3077 = vmatmul.mubr.bf16.gmra.mrb[0].mxu0 %v2197
        %v3078 = vpop.f32.mrb[0].mxu0
        %v3079 = vadd.f32 0.0, %v3078
        %v3080 = vpop.f32.mrb[0].mxu0
        %v3081 = vpop.f32.mrb[0].mxu0
        %v3082 = vadd.f32 0.0, %v3081
        %v3083 = vpop.f32.mrb[0].mxu0
        %3084 = vmatprep.mubr.bf16.mxu0 %v2645
        %3085 = vmatmul.mubr.bf16.gmra.mrb[0].mxu0 %v2199
        %v3086 = vpop.f32.mrb[0].mxu0
        %v3087 = vadd.f32 0.0, %v3086
        %v3088 = vpop.f32.mrb[0].mxu0
        %v3089 = vpop.f32.mrb[0].mxu0
        %v3090 = vadd.f32 0.0, %v3089
        %v3091 = vpop.f32.mrb[0].mxu0
        %3092 = vmatprep.mubr.bf16.mxu0 %v2938
        %3093 = vmatmul.mubr.bf16.gmra.mrb[0].mxu0 %v2201
        %v3094 = vpop.f32.mrb[0].mxu0
        %v3095 = vadd.f32 0.0, %v3094
        %v3096 = vpop.f32.mrb[0].mxu0
        %v3097 = vpop.f32.mrb[0].mxu0
        %v3098 = vadd.f32 0.0, %v3097
        %v3099 = vpop.f32.mrb[0].mxu0
        %3100 = vdwg.mxu0
        %v3101 = vadd.f32 %v2808, %v2975
        %v3102 = vadd.f32 %v2809, %v2978
        %v3103 = vadd.f32 %v2810, %v2983
        %v3104 = vadd.f32 %v2811, %v2986
        %v3105 = vadd.f32 %v2812, %v2991
        %v3106 = vadd.f32 %v2813, %v2994
        %v3107 = vadd.f32 %v2814, %v2999
        %v3108 = vadd.f32 %v2815, %v3002
        %v3109 = vadd.f32 %v2816, %v3007
        %v3110 = vadd.f32 %v2817, %v3010
        %v3111 = vadd.f32 %v2818, %v3015
        %v3112 = vadd.f32 %v2819, %v3018
        %v3113 = vadd.f32 %v2820, %v3023
        %v3114 = vadd.f32 %v2821, %v3026
        %v3115 = vadd.f32 %v2822, %v3031
        %v3116 = vadd.f32 %v2823, %v3034
        %v3117 = vadd.f32 %v2824, %v3039
        %v3118 = vadd.f32 %v2825, %v3042
        %v3119 = vadd.f32 %v2826, %v3047
        %v3120 = vadd.f32 %v2827, %v3050
        %v3121 = vadd.f32 %v2828, %v3055
        %v3122 = vadd.f32 %v2829, %v3058
        %v3123 = vadd.f32 %v2830, %v3063
        %v3124 = vadd.f32 %v2831, %v3066
        %v3125 = vadd.f32 %v2832, %v3071
        %v3126 = vadd.f32 %v2833, %v3074
        %v3127 = vadd.f32 %v2834, %v3079
        %v3128 = vadd.f32 %v2835, %v3082
        %v3129 = vadd.f32 %v2836, %v3087
        %v3130 = vadd.f32 %v2837, %v3090
        %v3131 = vadd.f32 %v2838, %v3095
        %v3132 = vadd.f32 %v2839, %v3098
        %v3133 = vmax.f32 %v3101, 0.0
        %v3134 = vmax.f32 %v3102, 0.0
        %v3135 = vmax.f32 %v3103, 0.0
        %v3136 = vmax.f32 %v3104, 0.0
        %v3137 = vmax.f32 %v3105, 0.0
        %v3138 = vmax.f32 %v3106, 0.0
        %v3139 = vmax.f32 %v3107, 0.0
        %v3140 = vmax.f32 %v3108, 0.0
        %v3141 = vmax.f32 %v3109, 0.0
        %v3142 = vmax.f32 %v3110, 0.0
        %v3143 = vmax.f32 %v3111, 0.0
        %v3144 = vmax.f32 %v3112, 0.0
        %v3145 = vmax.f32 %v3113, 0.0
        %v3146 = vmax.f32 %v3114, 0.0
        %v3147 = vmax.f32 %v3115, 0.0
        %v3148 = vmax.f32 %v3116, 0.0
        %v3149 = vmax.f32 %v3117, 0.0
        %v3150 = vmax.f32 %v3118, 0.0
        %v3151 = vmax.f32 %v3119, 0.0
        %v3152 = vmax.f32 %v3120, 0.0
        %v3153 = vmax.f32 %v3121, 0.0
        %v3154 = vmax.f32 %v3122, 0.0
        %v3155 = vmax.f32 %v3123, 0.0
        %v3156 = vmax.f32 %v3124, 0.0
        %v3157 = vmax.f32 %v3125, 0.0
        %v3158 = vmax.f32 %v3126, 0.0
        %v3159 = vmax.f32 %v3127, 0.0
        %v3160 = vmax.f32 %v3128, 0.0
        %v3161 = vmax.f32 %v3129, 0.0
        %v3162 = vmax.f32 %v3130, 0.0
        %v3163 = vmax.f32 %v3131, 0.0
        %v3164 = vmax.f32 %v3132, 0.0
        %3197 = vrot.lane.b32.xlu0 %v3133, 64
        %v3198 = vpop.permute.xlu0 %3197
        %3199 = vrot.lane.b32.xlu0 %v3134, 64
        %v3200 = vpop.permute.xlu0 %3199
        %3201 = vrot.lane.b32.xlu0 %v3135, 64
        %v3202 = vpop.permute.xlu0 %3201
        %3203 = vrot.lane.b32.xlu0 %v3136, 64
        %v3204 = vpop.permute.xlu0 %3203
        %3205 = vrot.lane.b32.xlu0 %v3137, 64
        %v3206 = vpop.permute.xlu0 %3205
        %3207 = vrot.lane.b32.xlu0 %v3138, 64
        %v3208 = vpop.permute.xlu0 %3207
        %3209 = vrot.lane.b32.xlu0 %v3139, 64
        %v3210 = vpop.permute.xlu0 %3209
        %3211 = vrot.lane.b32.xlu0 %v3140, 64
        %v3212 = vpop.permute.xlu0 %3211
        %3213 = vrot.lane.b32.xlu0 %v3141, 64
        %v3214 = vpop.permute.xlu0 %3213
        %3215 = vrot.lane.b32.xlu0 %v3142, 64
        %v3216 = vpop.permute.xlu0 %3215
        %3217 = vrot.lane.b32.xlu0 %v3143, 64
        %v3218 = vpop.permute.xlu0 %3217
        %3219 = vrot.lane.b32.xlu0 %v3144, 64
        %v3220 = vpop.permute.xlu0 %3219
        %3221 = vrot.lane.b32.xlu0 %v3145, 64
        %v3222 = vpop.permute.xlu0 %3221
        %3223 = vrot.lane.b32.xlu0 %v3146, 64
        %v3224 = vpop.permute.xlu0 %3223
        %3225 = vrot.lane.b32.xlu0 %v3147, 64
        %v3226 = vpop.permute.xlu0 %3225
        %3227 = vrot.lane.b32.xlu0 %v3148, 64
        %v3228 = vpop.permute.xlu0 %3227
        %3229 = vrot.lane.b32.xlu0 %v3149, 64
        %v3230 = vpop.permute.xlu0 %3229
        %3231 = vrot.lane.b32.xlu0 %v3150, 64
        %v3232 = vpop.permute.xlu0 %3231
        %3233 = vrot.lane.b32.xlu0 %v3151, 64
        %v3234 = vpop.permute.xlu0 %3233
        %3235 = vrot.lane.b32.xlu0 %v3152, 64
        %v3236 = vpop.permute.xlu0 %3235
        %3237 = vrot.lane.b32.xlu0 %v3153, 64
        %v3238 = vpop.permute.xlu0 %3237
        %3239 = vrot.lane.b32.xlu0 %v3154, 64
        %v3240 = vpop.permute.xlu0 %3239
        %3241 = vrot.lane.b32.xlu0 %v3155, 64
        %v3242 = vpop.permute.xlu0 %3241
        %3243 = vrot.lane.b32.xlu0 %v3156, 64
        %v3244 = vpop.permute.xlu0 %3243
        %3245 = vrot.lane.b32.xlu0 %v3157, 64
        %v3246 = vpop.permute.xlu0 %3245
        %3247 = vrot.lane.b32.xlu0 %v3158, 64
        %v3248 = vpop.permute.xlu0 %3247
        %3249 = vrot.lane.b32.xlu0 %v3159, 64
        %v3250 = vpop.permute.xlu0 %3249
        %3251 = vrot.lane.b32.xlu0 %v3160, 64
        %v3252 = vpop.permute.xlu0 %3251
        %3253 = vrot.lane.b32.xlu0 %v3161, 64
        %v3254 = vpop.permute.xlu0 %3253
        %3255 = vrot.lane.b32.xlu0 %v3162, 64
        %v3256 = vpop.permute.xlu0 %3255
        %3257 = vrot.lane.b32.xlu0 %v3163, 64
        %v3258 = vpop.permute.xlu0 %3257
        %3259 = vrot.lane.b32.xlu0 %v3164, 64
        %v3260 = vpop.permute.xlu0 %3259
        %3293 = vst.msk [vmem:[%s377] sm:$0xff] %vm378, %v3198
        %3294 = vst.msk [vmem:[%s377 + $0x10] sm:$0xff] %vm378, %v3200
        %3295 = vst.msk [vmem:[%s377 + $0x20] sm:$0xff] %vm378, %v3202
        %3296 = vst.msk [vmem:[%s377 + $0x30] sm:$0xff] %vm378, %v3204
        %3297 = vst.msk [vmem:[%s377 + $0x40] sm:$0xff] %vm378, %v3206
        %3298 = vst.msk [vmem:[%s377 + $0x50] sm:$0xff] %vm378, %v3208
        %3299 = vst.msk [vmem:[%s377 + $0x60] sm:$0xff] %vm378, %v3210
        %3300 = vst.msk [vmem:[%s377 + $0x70] sm:$0xff] %vm378, %v3212
        %3301 = vst.msk [vmem:[%s377 + $0x80] sm:$0xff] %vm378, %v3214
        %3302 = vst.msk [vmem:[%s377 + $0x90] sm:$0xff] %vm378, %v3216
        %3303 = vst.msk [vmem:[%s377 + $0xa0] sm:$0xff] %vm378, %v3218
        %3304 = vst.msk [vmem:[%s377 + $0xb0] sm:$0xff] %vm378, %v3220
        %3305 = vst.msk [vmem:[%s377 + $0xc0] sm:$0xff] %vm378, %v3222
        %3306 = vst.msk [vmem:[%s377 + $0xd0] sm:$0xff] %vm378, %v3224
        %3307 = vst.msk [vmem:[%s377 + $0xe0] sm:$0xff] %vm378, %v3226
        %3308 = vst.msk [vmem:[%s377 + $0xf0] sm:$0xff] %vm378, %v3228
        %3309 = vst.msk [vmem:[%s377 + $0x100] sm:$0xff] %vm378, %v3230
        %3310 = vst.msk [vmem:[%s377 + $0x110] sm:$0xff] %vm378, %v3232
        %3311 = vst.msk [vmem:[%s377 + $0x120] sm:$0xff] %vm378, %v3234
        %3312 = vst.msk [vmem:[%s377 + $0x130] sm:$0xff] %vm378, %v3236
        %3313 = vst.msk [vmem:[%s377 + $0x140] sm:$0xff] %vm378, %v3238
        %3314 = vst.msk [vmem:[%s377 + $0x150] sm:$0xff] %vm378, %v3240
        %3315 = vst.msk [vmem:[%s377 + $0x160] sm:$0xff] %vm378, %v3242
        %3316 = vst.msk [vmem:[%s377 + $0x170] sm:$0xff] %vm378, %v3244
        %3317 = vst.msk [vmem:[%s377 + $0x180] sm:$0xff] %vm378, %v3246
        %3318 = vst.msk [vmem:[%s377 + $0x190] sm:$0xff] %vm378, %v3248
        %3319 = vst.msk [vmem:[%s377 + $0x1a0] sm:$0xff] %vm378, %v3250
        %3320 = vst.msk [vmem:[%s377 + $0x1b0] sm:$0xff] %vm378, %v3252
        %3321 = vst.msk [vmem:[%s377 + $0x1c0] sm:$0xff] %vm378, %v3254
        %3322 = vst.msk [vmem:[%s377 + $0x1d0] sm:$0xff] %vm378, %v3256
        %3323 = vst.msk [vmem:[%s377 + $0x1e0] sm:$0xff] %vm378, %v3258
        %3324 = vst.msk [vmem:[%s377 + $0x1f0] sm:$0xff] %vm378, %v3260
        %v3325 = vrot.slane %v3133, 7
        %v3326 = vrot.slane %v3134, 7
        %v3327 = vsel %vm411, %v3325, %v3326
        %v3328 = vrot.slane %v3135, 7
        %v3329 = vrot.slane %v3136, 7
        %v3330 = vsel %vm411, %v3328, %v3329
        %v3331 = vrot.slane %v3137, 7
        %v3332 = vrot.slane %v3138, 7
        %v3333 = vsel %vm411, %v3331, %v3332
        %v3334 = vrot.slane %v3139, 7
        %v3335 = vrot.slane %v3140, 7
        %v3336 = vsel %vm411, %v3334, %v3335
        %v3337 = vrot.slane %v3141, 7
        %v3338 = vrot.slane %v3142, 7
        %v3339 = vsel %vm411, %v3337, %v3338
        %v3340 = vrot.slane %v3143, 7
        %v3341 = vrot.slane %v3144, 7
        %v3342 = vsel %vm411, %v3340, %v3341
        %v3343 = vrot.slane %v3145, 7
        %v3344 = vrot.slane %v3146, 7
        %v3345 = vsel %vm411, %v3343, %v3344
        %v3346 = vrot.slane %v3147, 7
        %v3347 = vrot.slane %v3148, 7
        %v3348 = vsel %vm411, %v3346, %v3347
        %v3349 = vrot.slane %v3149, 7
        %v3350 = vrot.slane %v3150, 7
        %v3351 = vsel %vm411, %v3349, %v3350
        %v3352 = vrot.slane %v3151, 7
        %v3353 = vrot.slane %v3152, 7
        %v3354 = vsel %vm411, %v3352, %v3353
        %v3355 = vrot.slane %v3153, 7
        %v3356 = vrot.slane %v3154, 7
        %v3357 = vsel %vm411, %v3355, %v3356
        %v3358 = vrot.slane %v3155, 7
        %v3359 = vrot.slane %v3156, 7
        %v3360 = vsel %vm411, %v3358, %v3359
        %v3361 = vrot.slane %v3157, 7
        %v3362 = vrot.slane %v3158, 7
        %v3363 = vsel %vm411, %v3361, %v3362
        %v3364 = vrot.slane %v3159, 7
        %v3365 = vrot.slane %v3160, 7
        %v3366 = vsel %vm411, %v3364, %v3365
        %v3367 = vrot.slane %v3161, 7
        %v3368 = vrot.slane %v3162, 7
        %v3369 = vsel %vm411, %v3367, %v3368
        %v3370 = vrot.slane %v3163, 7
        %v3371 = vrot.slane %v3164, 7
        %v3372 = vsel %vm411, %v3370, %v3371
        %3405 = vst.msk [vmem:[%s377] sm:$0xfe] %vm492, %v3325
        %3406 = vst.msk [vmem:[%s377 + $0x10] sm:$0xff] %vm171, %v3327
        %3407 = vst.msk [vmem:[%s377 + $0x20] sm:$0xfe] %vm492, %v3328
        %3408 = vst.msk [vmem:[%s377 + $0x30] sm:$0xff] %vm171, %v3330
        %3409 = vst.msk [vmem:[%s377 + $0x40] sm:$0xfe] %vm492, %v3331
        %3410 = vst.msk [vmem:[%s377 + $0x50] sm:$0xff] %vm171, %v3333
        %3411 = vst.msk [vmem:[%s377 + $0x60] sm:$0xfe] %vm492, %v3334
        %3412 = vst.msk [vmem:[%s377 + $0x70] sm:$0xff] %vm171, %v3336
        %3413 = vst.msk [vmem:[%s377 + $0x80] sm:$0xfe] %vm492, %v3337
        %3414 = vst.msk [vmem:[%s377 + $0x90] sm:$0xff] %vm171, %v3339
        %3415 = vst.msk [vmem:[%s377 + $0xa0] sm:$0xfe] %vm492, %v3340
        %3416 = vst.msk [vmem:[%s377 + $0xb0] sm:$0xff] %vm171, %v3342
        %3417 = vst.msk [vmem:[%s377 + $0xc0] sm:$0xfe] %vm492, %v3343
        %3418 = vst.msk [vmem:[%s377 + $0xd0] sm:$0xff] %vm171, %v3345
        %3419 = vst.msk [vmem:[%s377 + $0xe0] sm:$0xfe] %vm492, %v3346
        %3420 = vst.msk [vmem:[%s377 + $0xf0] sm:$0xff] %vm171, %v3348
        %3421 = vst.msk [vmem:[%s377 + $0x100] sm:$0xfe] %vm492, %v3349
        %3422 = vst.msk [vmem:[%s377 + $0x110] sm:$0xff] %vm171, %v3351
        %3423 = vst.msk [vmem:[%s377 + $0x120] sm:$0xfe] %vm492, %v3352
        %3424 = vst.msk [vmem:[%s377 + $0x130] sm:$0xff] %vm171, %v3354
        %3425 = vst.msk [vmem:[%s377 + $0x140] sm:$0xfe] %vm492, %v3355
        %3426 = vst.msk [vmem:[%s377 + $0x150] sm:$0xff] %vm171, %v3357
        %3427 = vst.msk [vmem:[%s377 + $0x160] sm:$0xfe] %vm492, %v3358
        %3428 = vst.msk [vmem:[%s377 + $0x170] sm:$0xff] %vm171, %v3360
        %3429 = vst.msk [vmem:[%s377 + $0x180] sm:$0xfe] %vm492, %v3361
        %3430 = vst.msk [vmem:[%s377 + $0x190] sm:$0xff] %vm171, %v3363
        %3431 = vst.msk [vmem:[%s377 + $0x1a0] sm:$0xfe] %vm492, %v3364
        %3432 = vst.msk [vmem:[%s377 + $0x1b0] sm:$0xff] %vm171, %v3366
        %3433 = vst.msk [vmem:[%s377 + $0x1c0] sm:$0xfe] %vm492, %v3367
        %3434 = vst.msk [vmem:[%s377 + $0x1d0] sm:$0xff] %vm171, %v3369
        %3435 = vst.msk [vmem:[%s377 + $0x1e0] sm:$0xfe] %vm492, %v3370
        %3436 = vst.msk [vmem:[%s377 + $0x1f0] sm:$0xff] %vm171, %v3372
        %v3437 = vrot.slane %v3133, 1
        %v3438 = vrot.slane %v3134, 1
        %v3439 = vsel %vm525, %v3437, %v3438
        %v3440 = vrot.slane %v3135, 1
        %v3441 = vrot.slane %v3136, 1
        %v3442 = vsel %vm525, %v3440, %v3441
        %v3443 = vrot.slane %v3137, 1
        %v3444 = vrot.slane %v3138, 1
        %v3445 = vsel %vm525, %v3443, %v3444
        %v3446 = vrot.slane %v3139, 1
        %v3447 = vrot.slane %v3140, 1
        %v3448 = vsel %vm525, %v3446, %v3447
        %v3449 = vrot.slane %v3141, 1
        %v3450 = vrot.slane %v3142, 1
        %v3451 = vsel %vm525, %v3449, %v3450
        %v3452 = vrot.slane %v3143, 1
        %v3453 = vrot.slane %v3144, 1
        %v3454 = vsel %vm525, %v3452, %v3453
        %v3455 = vrot.slane %v3145, 1
        %v3456 = vrot.slane %v3146, 1
        %v3457 = vsel %vm525, %v3455, %v3456
        %v3458 = vrot.slane %v3147, 1
        %v3459 = vrot.slane %v3148, 1
        %v3460 = vsel %vm525, %v3458, %v3459
        %v3461 = vrot.slane %v3149, 1
        %v3462 = vrot.slane %v3150, 1
        %v3463 = vsel %vm525, %v3461, %v3462
        %v3464 = vrot.slane %v3151, 1
        %v3465 = vrot.slane %v3152, 1
        %v3466 = vsel %vm525, %v3464, %v3465
        %v3467 = vrot.slane %v3153, 1
        %v3468 = vrot.slane %v3154, 1
        %v3469 = vsel %vm525, %v3467, %v3468
        %v3470 = vrot.slane %v3155, 1
        %v3471 = vrot.slane %v3156, 1
        %v3472 = vsel %vm525, %v3470, %v3471
        %v3473 = vrot.slane %v3157, 1
        %v3474 = vrot.slane %v3158, 1
        %v3475 = vsel %vm525, %v3473, %v3474
        %v3476 = vrot.slane %v3159, 1
        %v3477 = vrot.slane %v3160, 1
        %v3478 = vsel %vm525, %v3476, %v3477
        %v3479 = vrot.slane %v3161, 1
        %v3480 = vrot.slane %v3162, 1
        %v3481 = vsel %vm525, %v3479, %v3480
        %v3482 = vrot.slane %v3163, 1
        %v3483 = vrot.slane %v3164, 1
        %v3484 = vsel %vm525, %v3482, %v3483
        %3517 = vst.msk [vmem:[%s377 + $0x8] sm:$0xff] %vm171, %v3439
        %3518 = vst.msk [vmem:[%s377 + $0x18] sm:$0x7f] %vm607, %v3438
        %3519 = vst.msk [vmem:[%s377 + $0x28] sm:$0xff] %vm171, %v3442
        %3520 = vst.msk [vmem:[%s377 + $0x38] sm:$0x7f] %vm607, %v3441
        %3521 = vst.msk [vmem:[%s377 + $0x48] sm:$0xff] %vm171, %v3445
        %3522 = vst.msk [vmem:[%s377 + $0x58] sm:$0x7f] %vm607, %v3444
        %3523 = vst.msk [vmem:[%s377 + $0x68] sm:$0xff] %vm171, %v3448
        %3524 = vst.msk [vmem:[%s377 + $0x78] sm:$0x7f] %vm607, %v3447
        %3525 = vst.msk [vmem:[%s377 + $0x88] sm:$0xff] %vm171, %v3451
        %3526 = vst.msk [vmem:[%s377 + $0x98] sm:$0x7f] %vm607, %v3450
        %3527 = vst.msk [vmem:[%s377 + $0xa8] sm:$0xff] %vm171, %v3454
        %3528 = vst.msk [vmem:[%s377 + $0xb8] sm:$0x7f] %vm607, %v3453
        %3529 = vst.msk [vmem:[%s377 + $0xc8] sm:$0xff] %vm171, %v3457
        %3530 = vst.msk [vmem:[%s377 + $0xd8] sm:$0x7f] %vm607, %v3456
        %3531 = vst.msk [vmem:[%s377 + $0xe8] sm:$0xff] %vm171, %v3460
        %3532 = vst.msk [vmem:[%s377 + $0xf8] sm:$0x7f] %vm607, %v3459
        %3533 = vst.msk [vmem:[%s377 + $0x108] sm:$0xff] %vm171, %v3463
        %3534 = vst.msk [vmem:[%s377 + $0x118] sm:$0x7f] %vm607, %v3462
        %3535 = vst.msk [vmem:[%s377 + $0x128] sm:$0xff] %vm171, %v3466
        %3536 = vst.msk [vmem:[%s377 + $0x138] sm:$0x7f] %vm607, %v3465
        %3537 = vst.msk [vmem:[%s377 + $0x148] sm:$0xff] %vm171, %v3469
        %3538 = vst.msk [vmem:[%s377 + $0x158] sm:$0x7f] %vm607, %v3468
        %3539 = vst.msk [vmem:[%s377 + $0x168] sm:$0xff] %vm171, %v3472
        %3540 = vst.msk [vmem:[%s377 + $0x178] sm:$0x7f] %vm607, %v3471
        %3541 = vst.msk [vmem:[%s377 + $0x188] sm:$0xff] %vm171, %v3475
        %3542 = vst.msk [vmem:[%s377 + $0x198] sm:$0x7f] %vm607, %v3474
        %3543 = vst.msk [vmem:[%s377 + $0x1a8] sm:$0xff] %vm171, %v3478
        %3544 = vst.msk [vmem:[%s377 + $0x1b8] sm:$0x7f] %vm607, %v3477
        %3545 = vst.msk [vmem:[%s377 + $0x1c8] sm:$0xff] %vm171, %v3481
        %3546 = vst.msk [vmem:[%s377 + $0x1d8] sm:$0x7f] %vm607, %v3480
        %3547 = vst.msk [vmem:[%s377 + $0x1e8] sm:$0xff] %vm171, %v3484
        %3548 = vst.msk [vmem:[%s377 + $0x1f8] sm:$0x7f] %vm607, %v3483
        %s3549 = scalar_lea.vmem %s2, 2
        %v3550 = vld [vmem:[%s3549] sm:$0x1]
        %v3552 = vlaneseq
        %v3553 = vshrl.u32 %v3552, 7
        %v3554 = vsub.s32 0, %v3553
        %v3555 = vrot.slane %v3550, %v3554
        %v3557 = vadd.f32 %v1677, %v3555
        %v3558 = vadd.f32 %v1678, %v3555
        %v3559 = vadd.f32 %v1679, %v3555
        %v3560 = vadd.f32 %v1680, %v3555
        %v3561 = vadd.f32 %v1681, %v3555
        %v3562 = vadd.f32 %v1682, %v3555
        %v3563 = vadd.f32 %v1683, %v3555
        %v3564 = vadd.f32 %v1684, %v3555
        %v3565 = vadd.f32 %v1685, %v3555
        %v3566 = vadd.f32 %v1686, %v3555
        %v3567 = vadd.f32 %v1687, %v3555
        %v3568 = vadd.f32 %v1688, %v3555
        %v3569 = vadd.f32 %v1689, %v3555
        %v3570 = vadd.f32 %v1690, %v3555
        %v3571 = vadd.f32 %v1691, %v3555
        %v3572 = vadd.f32 %v1692, %v3555
        %v3573 = vadd.f32 %v1693, %v3555
        %v3574 = vadd.f32 %v1694, %v3555
        %v3575 = vadd.f32 %v1695, %v3555
        %v3576 = vadd.f32 %v1696, %v3555
        %v3577 = vadd.f32 %v1697, %v3555
        %v3578 = vadd.f32 %v1698, %v3555
        %v3579 = vadd.f32 %v1699, %v3555
        %v3580 = vadd.f32 %v1700, %v3555
        %v3581 = vadd.f32 %v1701, %v3555
        %v3582 = vadd.f32 %v1702, %v3555
        %v3583 = vadd.f32 %v1703, %v3555
        %v3584 = vadd.f32 %v1704, %v3555
        %v3585 = vadd.f32 %v1705, %v3555
        %v3586 = vadd.f32 %v1706, %v3555
        %v3587 = vadd.f32 %v1707, %v3555
        %v3588 = vadd.f32 %v1708, %v3555
        %v3589 = vld [vmem:[#allocation2] sm:$0xff]
        %v3590 = vld [vmem:[#allocation2 + $0x8] sm:$0xff]
        %v3591 = vld [vmem:[#allocation2 + $0x10] sm:$0xff]
        %v3592 = vld [vmem:[#allocation2 + $0x18] sm:$0xff]
        %v3593 = vld [vmem:[#allocation2 + $0x20] sm:$0xff]
        %v3594 = vld [vmem:[#allocation2 + $0x28] sm:$0xff]
        %v3595 = vld [vmem:[#allocation2 + $0x30] sm:$0xff]
        %v3596 = vld [vmem:[#allocation2 + $0x38] sm:$0xff]
        %v3597 = vld [vmem:[#allocation2 + $0x40] sm:$0xff]
        %v3598 = vld [vmem:[#allocation2 + $0x48] sm:$0xff]
        %v3599 = vld [vmem:[#allocation2 + $0x50] sm:$0xff]
        %v3600 = vld [vmem:[#allocation2 + $0x58] sm:$0xff]
        %v3601 = vld [vmem:[#allocation2 + $0x60] sm:$0xff]
        %v3602 = vld [vmem:[#allocation2 + $0x68] sm:$0xff]
        %v3603 = vld [vmem:[#allocation2 + $0x70] sm:$0xff]
        %v3604 = vld [vmem:[#allocation2 + $0x78] sm:$0xff]
        %v3605 = vld [vmem:[#allocation2 + $0x80] sm:$0xff]
        %v3606 = vld [vmem:[#allocation2 + $0x88] sm:$0xff]
        %v3607 = vld [vmem:[#allocation2 + $0x90] sm:$0xff]
        %v3608 = vld [vmem:[#allocation2 + $0x98] sm:$0xff]
        %v3609 = vld [vmem:[#allocation2 + $0xa0] sm:$0xff]
        %v3610 = vld [vmem:[#allocation2 + $0xa8] sm:$0xff]
        %v3611 = vld [vmem:[#allocation2 + $0xb0] sm:$0xff]
        %v3612 = vld [vmem:[#allocation2 + $0xb8] sm:$0xff]
        %v3613 = vld [vmem:[#allocation2 + $0xc0] sm:$0xff]
        %v3614 = vld [vmem:[#allocation2 + $0xc8] sm:$0xff]
        %v3615 = vld [vmem:[#allocation2 + $0xd0] sm:$0xff]
        %v3616 = vld [vmem:[#allocation2 + $0xd8] sm:$0xff]
        %v3617 = vld [vmem:[#allocation2 + $0xe0] sm:$0xff]
        %v3618 = vld [vmem:[#allocation2 + $0xe8] sm:$0xff]
        %v3619 = vld [vmem:[#allocation2 + $0xf0] sm:$0xff]
        %v3620 = vld [vmem:[#allocation2 + $0xf8] sm:$0xff]
        %v3621 = vld [vmem:[#allocation2 + $0x100] sm:$0xff]
        %v3622 = vld [vmem:[#allocation2 + $0x108] sm:$0xff]
        %v3623 = vld [vmem:[#allocation2 + $0x110] sm:$0xff]
        %v3624 = vld [vmem:[#allocation2 + $0x118] sm:$0xff]
        %v3625 = vld [vmem:[#allocation2 + $0x120] sm:$0xff]
        %v3626 = vld [vmem:[#allocation2 + $0x128] sm:$0xff]
        %v3627 = vld [vmem:[#allocation2 + $0x130] sm:$0xff]
        %v3628 = vld [vmem:[#allocation2 + $0x138] sm:$0xff]
        %v3629 = vld [vmem:[#allocation2 + $0x140] sm:$0xff]
        %v3630 = vld [vmem:[#allocation2 + $0x148] sm:$0xff]
        %v3631 = vld [vmem:[#allocation2 + $0x150] sm:$0xff]
        %v3632 = vld [vmem:[#allocation2 + $0x158] sm:$0xff]
        %v3633 = vld [vmem:[#allocation2 + $0x160] sm:$0xff]
        %v3634 = vld [vmem:[#allocation2 + $0x168] sm:$0xff]
        %v3635 = vld [vmem:[#allocation2 + $0x170] sm:$0xff]
        %v3636 = vld [vmem:[#allocation2 + $0x178] sm:$0xff]
        %v3637 = vld [vmem:[#allocation2 + $0x180] sm:$0xff]
        %v3638 = vld [vmem:[#allocation2 + $0x188] sm:$0xff]
        %v3639 = vld [vmem:[#allocation2 + $0x190] sm:$0xff]
        %v3640 = vld [vmem:[#allocation2 + $0x198] sm:$0xff]
        %v3641 = vld [vmem:[#allocation2 + $0x1a0] sm:$0xff]
        %v3642 = vld [vmem:[#allocation2 + $0x1a8] sm:$0xff]
        %v3643 = vld [vmem:[#allocation2 + $0x1b0] sm:$0xff]
        %v3644 = vld [vmem:[#allocation2 + $0x1b8] sm:$0xff]
        %v3645 = vld [vmem:[#allocation2 + $0x1c0] sm:$0xff]
        %v3646 = vld [vmem:[#allocation2 + $0x1c8] sm:$0xff]
        %v3647 = vld [vmem:[#allocation2 + $0x1d0] sm:$0xff]
        %v3648 = vld [vmem:[#allocation2 + $0x1d8] sm:$0xff]
        %v3649 = vld [vmem:[#allocation2 + $0x1e0] sm:$0xff]
        %v3650 = vld [vmem:[#allocation2 + $0x1e8] sm:$0xff]
        %v3651 = vld [vmem:[#allocation2 + $0x1f0] sm:$0xff]
        %v3652 = vld [vmem:[#allocation2 + $0x1f8] sm:$0xff]
        %v3653 = vld [vmem:[#allocation2 + $0x200] sm:$0xff]
        %v3654 = vld [vmem:[#allocation2 + $0x208] sm:$0xff]
        %v3655 = vld [vmem:[#allocation2 + $0x210] sm:$0xff]
        %v3656 = vld [vmem:[#allocation2 + $0x218] sm:$0xff]
        %v3657 = vld [vmem:[#allocation2 + $0x220] sm:$0xff]
        %v3658 = vld [vmem:[#allocation2 + $0x228] sm:$0xff]
        %v3659 = vld [vmem:[#allocation2 + $0x230] sm:$0xff]
        %v3660 = vld [vmem:[#allocation2 + $0x238] sm:$0xff]
        %v3661 = vpack.c.bf16 %v3591, %v3589
        %v3662 = vpack.c.bf16 %v3592, %v3590
        %v3663 = vpack.c.bf16 %v3595, %v3593
        %v3664 = vpack.c.bf16 %v3596, %v3594
        %v3665 = vpack.c.bf16 %v3599, %v3597
        %v3666 = vpack.c.bf16 %v3600, %v3598
        %v3667 = vpack.c.bf16 %v3603, %v3601
        %v3668 = vpack.c.bf16 %v3604, %v3602
        %v3669 = vpack.c.bf16 %v3607, %v3605
        %v3670 = vpack.c.bf16 %v3608, %v3606
        %v3671 = vpack.c.bf16 %v3611, %v3609
        %v3672 = vpack.c.bf16 %v3612, %v3610
        %v3673 = vpack.c.bf16 %v3615, %v3613
        %v3674 = vpack.c.bf16 %v3616, %v3614
        %v3675 = vpack.c.bf16 %v3619, %v3617
        %v3676 = vpack.c.bf16 %v3620, %v3618
        %v3677 = vpack.c.bf16 %v3623, %v3621
        %v3678 = vpack.c.bf16 %v3624, %v3622
        %v3679 = vpack.c.bf16 %v3627, %v3625
        %v3680 = vpack.c.bf16 %v3628, %v3626
        %v3681 = vpack.c.bf16 %v3631, %v3629
        %v3682 = vpack.c.bf16 %v3632, %v3630
        %v3683 = vpack.c.bf16 %v3635, %v3633
        %v3684 = vpack.c.bf16 %v3636, %v3634
        %v3685 = vpack.c.bf16 %v3639, %v3637
        %v3686 = vpack.c.bf16 %v3640, %v3638
        %v3687 = vpack.c.bf16 %v3643, %v3641
        %v3688 = vpack.c.bf16 %v3644, %v3642
        %v3689 = vpack.c.bf16 %v3647, %v3645
        %v3690 = vpack.c.bf16 %v3648, %v3646
        %v3691 = vpack.c.bf16 %v3651, %v3649
        %v3692 = vpack.c.bf16 %v3652, %v3650
        %v3693 = vpack.c.bf16 %v3655, %v3653
        %v3694 = vpack.c.bf16 %v3656, %v3654
        %v3695 = vpack.c.bf16 %v3659, %v3657
        %v3696 = vpack.c.bf16 %v3660, %v3658
        %s3697 = scalar_lea.vmem %s1, 576
        %v3698 = vld [vmem:[%s3697] sm:$0xf]
        %v3699 = vld [vmem:[%s3697 + $0x4] sm:$0xf]
        %v3700 = vld [vmem:[%s3697 + $0x8] sm:$0xf]
        %v3701 = vld [vmem:[%s3697 + $0xc] sm:$0xf]
        %v3702 = vld [vmem:[%s3697 + $0x10] sm:$0xf]
        %v3703 = vld [vmem:[%s3697 + $0x14] sm:$0xf]
        %v3704 = vld [vmem:[%s3697 + $0x18] sm:$0xf]
        %v3705 = vld [vmem:[%s3697 + $0x1c] sm:$0xf]
        %v3706 = vld [vmem:[%s3697 + $0x20] sm:$0xf]
        %v3707 = vld [vmem:[%s3697 + $0x24] sm:$0xf]
        %v3708 = vld [vmem:[%s3697 + $0x28] sm:$0xf]
        %v3709 = vld [vmem:[%s3697 + $0x2c] sm:$0xf]
        %v3710 = vld [vmem:[%s3697 + $0x30] sm:$0xf]
        %v3711 = vld [vmem:[%s3697 + $0x34] sm:$0xf]
        %v3712 = vld [vmem:[%s3697 + $0x38] sm:$0xf]
        %v3713 = vld [vmem:[%s3697 + $0x3c] sm:$0xf]
        %v3714 = vld [vmem:[%s3697 + $0x40] sm:$0xf]
        %v3715 = vld [vmem:[%s3697 + $0x44] sm:$0xf]
        %v3716 = vld [vmem:[%s3697 + $0x48] sm:$0xf]
        %v3717 = vld [vmem:[%s3697 + $0x4c] sm:$0xf]
        %v3718 = vld [vmem:[%s3697 + $0x50] sm:$0xf]
        %v3719 = vld [vmem:[%s3697 + $0x54] sm:$0xf]
        %v3720 = vld [vmem:[%s3697 + $0x58] sm:$0xf]
        %v3721 = vld [vmem:[%s3697 + $0x5c] sm:$0xf]
        %v3746 = vunpack.c.l.b16 %v3698
        %v3747 = vunpack.c.l.b16 %v3699
        %v3748 = vunpack.c.l.b16 %v3700
        %v3749 = vunpack.c.l.b16 %v3701
        %v3750 = vunpack.c.l.b16 %v3702
        %v3751 = vunpack.c.l.b16 %v3703
        %v3752 = vunpack.c.l.b16 %v3704
        %v3753 = vunpack.c.l.b16 %v3705
        %v3754 = vunpack.c.l.b16 %v3706
        %v3755 = vunpack.c.l.b16 %v3707
        %v3756 = vunpack.c.l.b16 %v3708
        %v3757 = vunpack.c.l.b16 %v3709
        %v3758 = vunpack.c.l.b16 %v3710
        %v3759 = vunpack.c.l.b16 %v3711
        %v3760 = vunpack.c.l.b16 %v3712
        %v3761 = vunpack.c.l.b16 %v3713
        %v3762 = vunpack.c.l.b16 %v3714
        %v3763 = vunpack.c.l.b16 %v3715
        %v3764 = vunpack.c.l.b16 %v3716
        %v3765 = vunpack.c.l.b16 %v3717
        %v3766 = vunpack.c.l.b16 %v3718
        %v3767 = vunpack.c.l.b16 %v3719
        %v3768 = vunpack.c.l.b16 %v3720
        %v3769 = vunpack.c.l.b16 %v3721
        %v3770 = vpack.c.b16 %v3747, %v3746
        %v3771 = vpack.c.b16 %v3749, %v3748
        %v3772 = vpack.c.b16 %v3751, %v3750
        %v3773 = vpack.c.b16 %v3753, %v3752
        %v3774 = vpack.c.b16 %v3755, %v3754
        %v3775 = vpack.c.b16 %v3757, %v3756
        %v3776 = vpack.c.b16 %v3759, %v3758
        %v3777 = vpack.c.b16 %v3761, %v3760
        %v3778 = vpack.c.b16 %v3763, %v3762
        %v3779 = vpack.c.b16 %v3765, %v3764
        %v3780 = vpack.c.b16 %v3767, %v3766
        %v3781 = vpack.c.b16 %v3769, %v3768
        %v3795 = vsel %vm171, %v3662, 0
        %v3798 = vsel %vm171, %v3664, 0
        %v3801 = vsel %vm171, %v3666, 0
        %v3804 = vsel %vm171, %v3668, 0
        %v3807 = vsel %vm171, %v3670, 0
        %v3810 = vsel %vm171, %v3672, 0
        %v3813 = vsel %vm171, %v3674, 0
        %v3816 = vsel %vm171, %v3676, 0
        %v3819 = vsel %vm171, %v3678, 0
        %v3822 = vsel %vm171, %v3680, 0
        %v3825 = vsel %vm171, %v3682, 0
        %v3828 = vsel %vm171, %v3684, 0
        %v3831 = vsel %vm171, %v3686, 0
        %v3834 = vsel %vm171, %v3688, 0
        %v3837 = vsel %vm171, %v3690, 0
        %v3840 = vsel %vm171, %v3692, 0
        %3842 = vmatprep.subr.bf16.mxu0 0
        %3843 = vmatpush1.bf16.msra.mxu0 %v3770
        %3844 = vmatprep.subr.bf16.mxu0 0
        %3845 = vmatpush1.bf16.msra.mxu0 %v3771
        %3846 = vmatprep.subr.bf16.mxu0 0
        %3847 = vmatpush1.bf16.msra.mxu0 %v3772
        %3848 = vmatprep.subr.bf16.mxu0 0
        %3849 = vmatpush1.bf16.msra.mxu0 %v3773
        %3850 = vmatprep.subr.bf16.mxu0 0
        %3851 = vmatpush1.bf16.msra.mxu0 %v3774
        %3852 = vmatprep.subr.bf16.mxu0 0
        %3853 = vmatpush1.bf16.msra.mxu0 %v3775
        %3854 = vmatprep.subr.bf16.mxu0 0
        %3855 = vmatpush1.bf16.msra.mxu0 %v3776
        %3856 = vmatprep.subr.bf16.mxu0 0
        %3857 = vmatpush1.bf16.msra.mxu0 %v3777
        %3858 = vmatprep.subr.bf16.mxu0 0
        %3859 = vmatpush1.bf16.msra.mxu0 %v3778
        %3860 = vmatprep.subr.bf16.mxu0 0
        %3861 = vmatpush1.bf16.msra.mxu0 %v3779
        %3862 = vmatprep.subr.bf16.mxu0 0
        %3863 = vmatpush1.bf16.msra.mxu0 %v3780
        %3864 = vmatprep.subr.bf16.mxu0 0
        %3865 = vmatpush1.bf16.msra.mxu0 %v3781
        %3866 = vmatprep.subr.bf16.mxu0 0
        %3867 = vmatpush1.bf16.msra.mxu0 0
        %3868 = vmatprep.subr.bf16.mxu0 0
        %3869 = vmatpush1.bf16.msra.mxu0 0
        %3870 = vmatprep.subr.bf16.mxu0 0
        %3871 = vmatpush1.bf16.msra.mxu0 0
        %3872 = vmatprep.subr.bf16.mxu0 0
        %3873 = vmatpush1.bf16.msra.mxu0 0
        %3874 = vmatprep.mubr.bf16.mxu0 %v3795
        %3875 = vmatmul.mubr.bf16.gmra.mrb[0].mxu0 %v3661
        %v3876 = vpop.f32.mrb[0].mxu0
        %v3877 = vadd.f32 0.0, %v3876
        %v3878 = vpop.f32.mrb[0].mxu0
        %v3879 = vpop.f32.mrb[0].mxu0
        %v3880 = vadd.f32 0.0, %v3879
        %v3881 = vpop.f32.mrb[0].mxu0
        %3882 = vmatprep.mubr.bf16.mxu0 %v3798
        %3883 = vmatmul.mubr.bf16.gmra.mrb[0].mxu0 %v3663
        %v3884 = vpop.f32.mrb[0].mxu0
        %v3885 = vadd.f32 0.0, %v3884
        %v3886 = vpop.f32.mrb[0].mxu0
        %v3887 = vpop.f32.mrb[0].mxu0
        %v3888 = vadd.f32 0.0, %v3887
        %v3889 = vpop.f32.mrb[0].mxu0
        %3890 = vmatprep.mubr.bf16.mxu0 %v3801
        %3891 = vmatmul.mubr.bf16.gmra.mrb[0].mxu0 %v3665
        %v3892 = vpop.f32.mrb[0].mxu0
        %v3893 = vadd.f32 0.0, %v3892
        %v3894 = vpop.f32.mrb[0].mxu0
        %v3895 = vpop.f32.mrb[0].mxu0
        %v3896 = vadd.f32 0.0, %v3895
        %v3897 = vpop.f32.mrb[0].mxu0
        %3898 = vmatprep.mubr.bf16.mxu0 %v3804
        %3899 = vmatmul.mubr.bf16.gmra.mrb[0].mxu0 %v3667
        %v3900 = vpop.f32.mrb[0].mxu0
        %v3901 = vadd.f32 0.0, %v3900
        %v3902 = vpop.f32.mrb[0].mxu0
        %v3903 = vpop.f32.mrb[0].mxu0
        %v3904 = vadd.f32 0.0, %v3903
        %v3905 = vpop.f32.mrb[0].mxu0
        %3906 = vmatprep.mubr.bf16.mxu0 %v3807
        %3907 = vmatmul.mubr.bf16.gmra.mrb[0].mxu0 %v3669
        %v3908 = vpop.f32.mrb[0].mxu0
        %v3909 = vadd.f32 0.0, %v3908
        %v3910 = vpop.f32.mrb[0].mxu0
        %v3911 = vpop.f32.mrb[0].mxu0
        %v3912 = vadd.f32 0.0, %v3911
        %v3913 = vpop.f32.mrb[0].mxu0
        %3914 = vmatprep.mubr.bf16.mxu0 %v3810
        %3915 = vmatmul.mubr.bf16.gmra.mrb[0].mxu0 %v3671
        %v3916 = vpop.f32.mrb[0].mxu0
        %v3917 = vadd.f32 0.0, %v3916
        %v3918 = vpop.f32.mrb[0].mxu0
        %v3919 = vpop.f32.mrb[0].mxu0
        %v3920 = vadd.f32 0.0, %v3919
        %v3921 = vpop.f32.mrb[0].mxu0
        %3922 = vmatprep.mubr.bf16.mxu0 %v3813
        %3923 = vmatmul.mubr.bf16.gmra.mrb[0].mxu0 %v3673
        %v3924 = vpop.f32.mrb[0].mxu0
        %v3925 = vadd.f32 0.0, %v3924
        %v3926 = vpop.f32.mrb[0].mxu0
        %v3927 = vpop.f32.mrb[0].mxu0
        %v3928 = vadd.f32 0.0, %v3927
        %v3929 = vpop.f32.mrb[0].mxu0
        %3930 = vmatprep.mubr.bf16.mxu0 %v3816
        %3931 = vmatmul.mubr.bf16.gmra.mrb[0].mxu0 %v3675
        %v3932 = vpop.f32.mrb[0].mxu0
        %v3933 = vadd.f32 0.0, %v3932
        %v3934 = vpop.f32.mrb[0].mxu0
        %v3935 = vpop.f32.mrb[0].mxu0
        %v3936 = vadd.f32 0.0, %v3935
        %v3937 = vpop.f32.mrb[0].mxu0
        %3938 = vmatprep.mubr.bf16.mxu0 %v3819
        %3939 = vmatmul.mubr.bf16.gmra.mrb[0].mxu0 %v3677
        %v3940 = vpop.f32.mrb[0].mxu0
        %v3941 = vadd.f32 0.0, %v3940
        %v3942 = vpop.f32.mrb[0].mxu0
        %v3943 = vpop.f32.mrb[0].mxu0
        %v3944 = vadd.f32 0.0, %v3943
        %v3945 = vpop.f32.mrb[0].mxu0
        %3946 = vmatprep.mubr.bf16.mxu0 %v3822
        %3947 = vmatmul.mubr.bf16.gmra.mrb[0].mxu0 %v3679
        %v3948 = vpop.f32.mrb[0].mxu0
        %v3949 = vadd.f32 0.0, %v3948
        %v3950 = vpop.f32.mrb[0].mxu0
        %v3951 = vpop.f32.mrb[0].mxu0
        %v3952 = vadd.f32 0.0, %v3951
        %v3953 = vpop.f32.mrb[0].mxu0
        %3954 = vmatprep.mubr.bf16.mxu0 %v3825
        %3955 = vmatmul.mubr.bf16.gmra.mrb[0].mxu0 %v3681
        %v3956 = vpop.f32.mrb[0].mxu0
        %v3957 = vadd.f32 0.0, %v3956
        %v3958 = vpop.f32.mrb[0].mxu0
        %v3959 = vpop.f32.mrb[0].mxu0
        %v3960 = vadd.f32 0.0, %v3959
        %v3961 = vpop.f32.mrb[0].mxu0
        %3962 = vmatprep.mubr.bf16.mxu0 %v3828
        %3963 = vmatmul.mubr.bf16.gmra.mrb[0].mxu0 %v3683
        %v3964 = vpop.f32.mrb[0].mxu0
        %v3965 = vadd.f32 0.0, %v3964
        %v3966 = vpop.f32.mrb[0].mxu0
        %v3967 = vpop.f32.mrb[0].mxu0
        %v3968 = vadd.f32 0.0, %v3967
        %v3969 = vpop.f32.mrb[0].mxu0
        %3970 = vmatprep.mubr.bf16.mxu0 %v3831
        %3971 = vmatmul.mubr.bf16.gmra.mrb[0].mxu0 %v3685
        %v3972 = vpop.f32.mrb[0].mxu0
        %v3973 = vadd.f32 0.0, %v3972
        %v3974 = vpop.f32.mrb[0].mxu0
        %v3975 = vpop.f32.mrb[0].mxu0
        %v3976 = vadd.f32 0.0, %v3975
        %v3977 = vpop.f32.mrb[0].mxu0
        %3978 = vmatprep.mubr.bf16.mxu0 %v3834
        %3979 = vmatmul.mubr.bf16.gmra.mrb[0].mxu0 %v3687
        %v3980 = vpop.f32.mrb[0].mxu0
        %v3981 = vadd.f32 0.0, %v3980
        %v3982 = vpop.f32.mrb[0].mxu0
        %v3983 = vpop.f32.mrb[0].mxu0
        %v3984 = vadd.f32 0.0, %v3983
        %v3985 = vpop.f32.mrb[0].mxu0
        %3986 = vmatprep.mubr.bf16.mxu0 %v3837
        %3987 = vmatmul.mubr.bf16.gmra.mrb[0].mxu0 %v3689
        %v3988 = vpop.f32.mrb[0].mxu0
        %v3989 = vadd.f32 0.0, %v3988
        %v3990 = vpop.f32.mrb[0].mxu0
        %v3991 = vpop.f32.mrb[0].mxu0
        %v3992 = vadd.f32 0.0, %v3991
        %v3993 = vpop.f32.mrb[0].mxu0
        %3994 = vmatprep.mubr.bf16.mxu0 %v3840
        %3995 = vmatmul.mubr.bf16.gmra.mrb[0].mxu0 %v3691
        %v3996 = vpop.f32.mrb[0].mxu0
        %v3997 = vadd.f32 0.0, %v3996
        %v3998 = vpop.f32.mrb[0].mxu0
        %v3999 = vpop.f32.mrb[0].mxu0
        %v4000 = vadd.f32 0.0, %v3999
        %v4001 = vpop.f32.mrb[0].mxu0
        %4002 = vdwg.mxu0
        %v4003 = vadd.f32 %v3557, %v3877
        %v4004 = vadd.f32 %v3558, %v3880
        %v4005 = vadd.f32 %v3559, %v3885
        %v4006 = vadd.f32 %v3560, %v3888
        %v4007 = vadd.f32 %v3561, %v3893
        %v4008 = vadd.f32 %v3562, %v3896
        %v4009 = vadd.f32 %v3563, %v3901
        %v4010 = vadd.f32 %v3564, %v3904
        %v4011 = vadd.f32 %v3565, %v3909
        %v4012 = vadd.f32 %v3566, %v3912
        %v4013 = vadd.f32 %v3567, %v3917
        %v4014 = vadd.f32 %v3568, %v3920
        %v4015 = vadd.f32 %v3569, %v3925
        %v4016 = vadd.f32 %v3570, %v3928
        %v4017 = vadd.f32 %v3571, %v3933
        %v4018 = vadd.f32 %v3572, %v3936
        %v4019 = vadd.f32 %v3573, %v3941
        %v4020 = vadd.f32 %v3574, %v3944
        %v4021 = vadd.f32 %v3575, %v3949
        %v4022 = vadd.f32 %v3576, %v3952
        %v4023 = vadd.f32 %v3577, %v3957
        %v4024 = vadd.f32 %v3578, %v3960
        %v4025 = vadd.f32 %v3579, %v3965
        %v4026 = vadd.f32 %v3580, %v3968
        %v4027 = vadd.f32 %v3581, %v3973
        %v4028 = vadd.f32 %v3582, %v3976
        %v4029 = vadd.f32 %v3583, %v3981
        %v4030 = vadd.f32 %v3584, %v3984
        %v4031 = vadd.f32 %v3585, %v3989
        %v4032 = vadd.f32 %v3586, %v3992
        %v4033 = vadd.f32 %v3587, %v3997
        %v4034 = vadd.f32 %v3588, %v4000
        %s4035 = scalar_lea.vmem %s1, 672
        %v4036 = vld [vmem:[%s4035] sm:$0xf]
        %v4037 = vld [vmem:[%s4035 + $0x4] sm:$0xf]
        %v4038 = vld [vmem:[%s4035 + $0x8] sm:$0xf]
        %v4039 = vld [vmem:[%s4035 + $0xc] sm:$0xf]
        %v4040 = vld [vmem:[%s4035 + $0x10] sm:$0xf]
        %v4041 = vld [vmem:[%s4035 + $0x14] sm:$0xf]
        %v4042 = vld [vmem:[%s4035 + $0x18] sm:$0xf]
        %v4043 = vld [vmem:[%s4035 + $0x1c] sm:$0xf]
        %v4044 = vld [vmem:[%s4035 + $0x20] sm:$0xf]
        %v4045 = vld [vmem:[%s4035 + $0x24] sm:$0xf]
        %v4046 = vld [vmem:[%s4035 + $0x28] sm:$0xf]
        %v4047 = vld [vmem:[%s4035 + $0x2c] sm:$0xf]
        %v4048 = vld [vmem:[%s4035 + $0x30] sm:$0xf]
        %v4049 = vld [vmem:[%s4035 + $0x34] sm:$0xf]
        %v4050 = vld [vmem:[%s4035 + $0x38] sm:$0xf]
        %v4051 = vld [vmem:[%s4035 + $0x3c] sm:$0xf]
        %v4052 = vld [vmem:[%s4035 + $0x40] sm:$0xf]
        %v4053 = vld [vmem:[%s4035 + $0x44] sm:$0xf]
        %v4054 = vld [vmem:[%s4035 + $0x48] sm:$0xf]
        %v4055 = vld [vmem:[%s4035 + $0x4c] sm:$0xf]
        %v4056 = vld [vmem:[%s4035 + $0x50] sm:$0xf]
        %v4057 = vld [vmem:[%s4035 + $0x54] sm:$0xf]
        %v4058 = vld [vmem:[%s4035 + $0x58] sm:$0xf]
        %v4059 = vld [vmem:[%s4035 + $0x5c] sm:$0xf]
        %v4084 = vunpack.c.l.b16 %v4036
        %v4085 = vunpack.c.l.b16 %v4037
        %v4086 = vunpack.c.l.b16 %v4038
        %v4087 = vunpack.c.l.b16 %v4039
        %v4088 = vunpack.c.l.b16 %v4040
        %v4089 = vunpack.c.l.b16 %v4041
        %v4090 = vunpack.c.l.b16 %v4042
        %v4091 = vunpack.c.l.b16 %v4043
        %v4092 = vunpack.c.l.b16 %v4044
        %v4093 = vunpack.c.l.b16 %v4045
        %v4094 = vunpack.c.l.b16 %v4046
        %v4095 = vunpack.c.l.b16 %v4047
        %v4096 = vunpack.c.l.b16 %v4048
        %v4097 = vunpack.c.l.b16 %v4049
        %v4098 = vunpack.c.l.b16 %v4050
        %v4099 = vunpack.c.l.b16 %v4051
        %v4100 = vunpack.c.l.b16 %v4052
        %v4101 = vunpack.c.l.b16 %v4053
        %v4102 = vunpack.c.l.b16 %v4054
        %v4103 = vunpack.c.l.b16 %v4055
        %v4104 = vunpack.c.l.b16 %v4056
        %v4105 = vunpack.c.l.b16 %v4057
        %v4106 = vunpack.c.l.b16 %v4058
        %v4107 = vunpack.c.l.b16 %v4059
        %v4108 = vpack.c.b16 %v4085, %v4084
        %v4109 = vpack.c.b16 %v4087, %v4086
        %v4110 = vpack.c.b16 %v4089, %v4088
        %v4111 = vpack.c.b16 %v4091, %v4090
        %v4112 = vpack.c.b16 %v4093, %v4092
        %v4113 = vpack.c.b16 %v4095, %v4094
        %v4114 = vpack.c.b16 %v4097, %v4096
        %v4115 = vpack.c.b16 %v4099, %v4098
        %v4116 = vpack.c.b16 %v4101, %v4100
        %v4117 = vpack.c.b16 %v4103, %v4102
        %v4118 = vpack.c.b16 %v4105, %v4104
        %v4119 = vpack.c.b16 %v4107, %v4106
        %v4133 = vsel %vm171, %v3694, 0
        %4135 = vmatprep.subr.bf16.mxu0 0
        %4136 = vmatpush1.bf16.msra.mxu0 %v4108
        %4137 = vmatprep.subr.bf16.mxu0 0
        %4138 = vmatpush1.bf16.msra.mxu0 %v4109
        %4139 = vmatprep.subr.bf16.mxu0 0
        %4140 = vmatpush1.bf16.msra.mxu0 %v4110
        %4141 = vmatprep.subr.bf16.mxu0 0
        %4142 = vmatpush1.bf16.msra.mxu0 %v4111
        %4143 = vmatprep.subr.bf16.mxu0 0
        %4144 = vmatpush1.bf16.msra.mxu0 %v4112
        %4145 = vmatprep.subr.bf16.mxu0 0
        %4146 = vmatpush1.bf16.msra.mxu0 %v4113
        %4147 = vmatprep.subr.bf16.mxu0 0
        %4148 = vmatpush1.bf16.msra.mxu0 %v4114
        %4149 = vmatprep.subr.bf16.mxu0 0
        %4150 = vmatpush1.bf16.msra.mxu0 %v4115
        %4151 = vmatprep.subr.bf16.mxu0 0
        %4152 = vmatpush1.bf16.msra.mxu0 %v4116
        %4153 = vmatprep.subr.bf16.mxu0 0
        %4154 = vmatpush1.bf16.msra.mxu0 %v4117
        %4155 = vmatprep.subr.bf16.mxu0 0
        %4156 = vmatpush1.bf16.msra.mxu0 %v4118
        %4157 = vmatprep.subr.bf16.mxu0 0
        %4158 = vmatpush1.bf16.msra.mxu0 %v4119
        %4159 = vmatprep.subr.bf16.mxu0 0
        %4160 = vmatpush1.bf16.msra.mxu0 0
        %4161 = vmatprep.subr.bf16.mxu0 0
        %4162 = vmatpush1.bf16.msra.mxu0 0
        %4163 = vmatprep.subr.bf16.mxu0 0
        %4164 = vmatpush1.bf16.msra.mxu0 0
        %4165 = vmatprep.subr.bf16.mxu0 0
        %4166 = vmatpush1.bf16.msra.mxu0 0
        %4167 = vmatprep.mubr.bf16.mxu0 %v3798
        %4168 = vmatmul.mubr.bf16.gmra.mrb[0].mxu0 %v3663
        %v4169 = vpop.f32.mrb[0].mxu0
        %v4170 = vadd.f32 0.0, %v4169
        %v4171 = vpop.f32.mrb[0].mxu0
        %v4172 = vpop.f32.mrb[0].mxu0
        %v4173 = vadd.f32 0.0, %v4172
        %v4174 = vpop.f32.mrb[0].mxu0
        %4175 = vmatprep.mubr.bf16.mxu0 %v3801
        %4176 = vmatmul.mubr.bf16.gmra.mrb[0].mxu0 %v3665
        %v4177 = vpop.f32.mrb[0].mxu0
        %v4178 = vadd.f32 0.0, %v4177
        %v4179 = vpop.f32.mrb[0].mxu0
        %v4180 = vpop.f32.mrb[0].mxu0
        %v4181 = vadd.f32 0.0, %v4180
        %v4182 = vpop.f32.mrb[0].mxu0
        %4183 = vmatprep.mubr.bf16.mxu0 %v3804
        %4184 = vmatmul.mubr.bf16.gmra.mrb[0].mxu0 %v3667
        %v4185 = vpop.f32.mrb[0].mxu0
        %v4186 = vadd.f32 0.0, %v4185
        %v4187 = vpop.f32.mrb[0].mxu0
        %v4188 = vpop.f32.mrb[0].mxu0
        %v4189 = vadd.f32 0.0, %v4188
        %v4190 = vpop.f32.mrb[0].mxu0
        %4191 = vmatprep.mubr.bf16.mxu0 %v3807
        %4192 = vmatmul.mubr.bf16.gmra.mrb[0].mxu0 %v3669
        %v4193 = vpop.f32.mrb[0].mxu0
        %v4194 = vadd.f32 0.0, %v4193
        %v4195 = vpop.f32.mrb[0].mxu0
        %v4196 = vpop.f32.mrb[0].mxu0
        %v4197 = vadd.f32 0.0, %v4196
        %v4198 = vpop.f32.mrb[0].mxu0
        %4199 = vmatprep.mubr.bf16.mxu0 %v3810
        %4200 = vmatmul.mubr.bf16.gmra.mrb[0].mxu0 %v3671
        %v4201 = vpop.f32.mrb[0].mxu0
        %v4202 = vadd.f32 0.0, %v4201
        %v4203 = vpop.f32.mrb[0].mxu0
        %v4204 = vpop.f32.mrb[0].mxu0
        %v4205 = vadd.f32 0.0, %v4204
        %v4206 = vpop.f32.mrb[0].mxu0
        %4207 = vmatprep.mubr.bf16.mxu0 %v3813
        %4208 = vmatmul.mubr.bf16.gmra.mrb[0].mxu0 %v3673
        %v4209 = vpop.f32.mrb[0].mxu0
        %v4210 = vadd.f32 0.0, %v4209
        %v4211 = vpop.f32.mrb[0].mxu0
        %v4212 = vpop.f32.mrb[0].mxu0
        %v4213 = vadd.f32 0.0, %v4212
        %v4214 = vpop.f32.mrb[0].mxu0
        %4215 = vmatprep.mubr.bf16.mxu0 %v3816
        %4216 = vmatmul.mubr.bf16.gmra.mrb[0].mxu0 %v3675
        %v4217 = vpop.f32.mrb[0].mxu0
        %v4218 = vadd.f32 0.0, %v4217
        %v4219 = vpop.f32.mrb[0].mxu0
        %v4220 = vpop.f32.mrb[0].mxu0
        %v4221 = vadd.f32 0.0, %v4220
        %v4222 = vpop.f32.mrb[0].mxu0
        %4223 = vmatprep.mubr.bf16.mxu0 %v3819
        %4224 = vmatmul.mubr.bf16.gmra.mrb[0].mxu0 %v3677
        %v4225 = vpop.f32.mrb[0].mxu0
        %v4226 = vadd.f32 0.0, %v4225
        %v4227 = vpop.f32.mrb[0].mxu0
        %v4228 = vpop.f32.mrb[0].mxu0
        %v4229 = vadd.f32 0.0, %v4228
        %v4230 = vpop.f32.mrb[0].mxu0
        %4231 = vmatprep.mubr.bf16.mxu0 %v3822
        %4232 = vmatmul.mubr.bf16.gmra.mrb[0].mxu0 %v3679
        %v4233 = vpop.f32.mrb[0].mxu0
        %v4234 = vadd.f32 0.0, %v4233
        %v4235 = vpop.f32.mrb[0].mxu0
        %v4236 = vpop.f32.mrb[0].mxu0
        %v4237 = vadd.f32 0.0, %v4236
        %v4238 = vpop.f32.mrb[0].mxu0
        %4239 = vmatprep.mubr.bf16.mxu0 %v3825
        %4240 = vmatmul.mubr.bf16.gmra.mrb[0].mxu0 %v3681
        %v4241 = vpop.f32.mrb[0].mxu0
        %v4242 = vadd.f32 0.0, %v4241
        %v4243 = vpop.f32.mrb[0].mxu0
        %v4244 = vpop.f32.mrb[0].mxu0
        %v4245 = vadd.f32 0.0, %v4244
        %v4246 = vpop.f32.mrb[0].mxu0
        %4247 = vmatprep.mubr.bf16.mxu0 %v3828
        %4248 = vmatmul.mubr.bf16.gmra.mrb[0].mxu0 %v3683
        %v4249 = vpop.f32.mrb[0].mxu0
        %v4250 = vadd.f32 0.0, %v4249
        %v4251 = vpop.f32.mrb[0].mxu0
        %v4252 = vpop.f32.mrb[0].mxu0
        %v4253 = vadd.f32 0.0, %v4252
        %v4254 = vpop.f32.mrb[0].mxu0
        %4255 = vmatprep.mubr.bf16.mxu0 %v3831
        %4256 = vmatmul.mubr.bf16.gmra.mrb[0].mxu0 %v3685
        %v4257 = vpop.f32.mrb[0].mxu0
        %v4258 = vadd.f32 0.0, %v4257
        %v4259 = vpop.f32.mrb[0].mxu0
        %v4260 = vpop.f32.mrb[0].mxu0
        %v4261 = vadd.f32 0.0, %v4260
        %v4262 = vpop.f32.mrb[0].mxu0
        %4263 = vmatprep.mubr.bf16.mxu0 %v3834
        %4264 = vmatmul.mubr.bf16.gmra.mrb[0].mxu0 %v3687
        %v4265 = vpop.f32.mrb[0].mxu0
        %v4266 = vadd.f32 0.0, %v4265
        %v4267 = vpop.f32.mrb[0].mxu0
        %v4268 = vpop.f32.mrb[0].mxu0
        %v4269 = vadd.f32 0.0, %v4268
        %v4270 = vpop.f32.mrb[0].mxu0
        %4271 = vmatprep.mubr.bf16.mxu0 %v3837
        %4272 = vmatmul.mubr.bf16.gmra.mrb[0].mxu0 %v3689
        %v4273 = vpop.f32.mrb[0].mxu0
        %v4274 = vadd.f32 0.0, %v4273
        %v4275 = vpop.f32.mrb[0].mxu0
        %v4276 = vpop.f32.mrb[0].mxu0
        %v4277 = vadd.f32 0.0, %v4276
        %v4278 = vpop.f32.mrb[0].mxu0
        %4279 = vmatprep.mubr.bf16.mxu0 %v3840
        %4280 = vmatmul.mubr.bf16.gmra.mrb[0].mxu0 %v3691
        %v4281 = vpop.f32.mrb[0].mxu0
        %v4282 = vadd.f32 0.0, %v4281
        %v4283 = vpop.f32.mrb[0].mxu0
        %v4284 = vpop.f32.mrb[0].mxu0
        %v4285 = vadd.f32 0.0, %v4284
        %v4286 = vpop.f32.mrb[0].mxu0
        %4287 = vmatprep.mubr.bf16.mxu0 %v4133
        %4288 = vmatmul.mubr.bf16.gmra.mrb[0].mxu0 %v3693
        %v4289 = vpop.f32.mrb[0].mxu0
        %v4290 = vadd.f32 0.0, %v4289
        %v4291 = vpop.f32.mrb[0].mxu0
        %v4292 = vpop.f32.mrb[0].mxu0
        %v4293 = vadd.f32 0.0, %v4292
        %v4294 = vpop.f32.mrb[0].mxu0
        %4295 = vdwg.mxu0
        %v4296 = vadd.f32 %v4003, %v4170
        %v4297 = vadd.f32 %v4004, %v4173
        %v4298 = vadd.f32 %v4005, %v4178
        %v4299 = vadd.f32 %v4006, %v4181
        %v4300 = vadd.f32 %v4007, %v4186
        %v4301 = vadd.f32 %v4008, %v4189
        %v4302 = vadd.f32 %v4009, %v4194
        %v4303 = vadd.f32 %v4010, %v4197
        %v4304 = vadd.f32 %v4011, %v4202
        %v4305 = vadd.f32 %v4012, %v4205
        %v4306 = vadd.f32 %v4013, %v4210
        %v4307 = vadd.f32 %v4014, %v4213
        %v4308 = vadd.f32 %v4015, %v4218
        %v4309 = vadd.f32 %v4016, %v4221
        %v4310 = vadd.f32 %v4017, %v4226
        %v4311 = vadd.f32 %v4018, %v4229
        %v4312 = vadd.f32 %v4019, %v4234
        %v4313 = vadd.f32 %v4020, %v4237
        %v4314 = vadd.f32 %v4021, %v4242
        %v4315 = vadd.f32 %v4022, %v4245
        %v4316 = vadd.f32 %v4023, %v4250
        %v4317 = vadd.f32 %v4024, %v4253
        %v4318 = vadd.f32 %v4025, %v4258
        %v4319 = vadd.f32 %v4026, %v4261
        %v4320 = vadd.f32 %v4027, %v4266
        %v4321 = vadd.f32 %v4028, %v4269
        %v4322 = vadd.f32 %v4029, %v4274
        %v4323 = vadd.f32 %v4030, %v4277
        %v4324 = vadd.f32 %v4031, %v4282
        %v4325 = vadd.f32 %v4032, %v4285
        %v4326 = vadd.f32 %v4033, %v4290
        %v4327 = vadd.f32 %v4034, %v4293
        %s4328 = scalar_lea.vmem %s1, 768
        %v4329 = vld [vmem:[%s4328] sm:$0xf]
        %v4330 = vld [vmem:[%s4328 + $0x4] sm:$0xf]
        %v4331 = vld [vmem:[%s4328 + $0x8] sm:$0xf]
        %v4332 = vld [vmem:[%s4328 + $0xc] sm:$0xf]
        %v4333 = vld [vmem:[%s4328 + $0x10] sm:$0xf]
        %v4334 = vld [vmem:[%s4328 + $0x14] sm:$0xf]
        %v4335 = vld [vmem:[%s4328 + $0x18] sm:$0xf]
        %v4336 = vld [vmem:[%s4328 + $0x1c] sm:$0xf]
        %v4337 = vld [vmem:[%s4328 + $0x20] sm:$0xf]
        %v4338 = vld [vmem:[%s4328 + $0x24] sm:$0xf]
        %v4339 = vld [vmem:[%s4328 + $0x28] sm:$0xf]
        %v4340 = vld [vmem:[%s4328 + $0x2c] sm:$0xf]
        %v4341 = vld [vmem:[%s4328 + $0x30] sm:$0xf]
        %v4342 = vld [vmem:[%s4328 + $0x34] sm:$0xf]
        %v4343 = vld [vmem:[%s4328 + $0x38] sm:$0xf]
        %v4344 = vld [vmem:[%s4328 + $0x3c] sm:$0xf]
        %v4345 = vld [vmem:[%s4328 + $0x40] sm:$0xf]
        %v4346 = vld [vmem:[%s4328 + $0x44] sm:$0xf]
        %v4347 = vld [vmem:[%s4328 + $0x48] sm:$0xf]
        %v4348 = vld [vmem:[%s4328 + $0x4c] sm:$0xf]
        %v4349 = vld [vmem:[%s4328 + $0x50] sm:$0xf]
        %v4350 = vld [vmem:[%s4328 + $0x54] sm:$0xf]
        %v4351 = vld [vmem:[%s4328 + $0x58] sm:$0xf]
        %v4352 = vld [vmem:[%s4328 + $0x5c] sm:$0xf]
        %v4377 = vunpack.c.l.b16 %v4329
        %v4378 = vunpack.c.l.b16 %v4330
        %v4379 = vunpack.c.l.b16 %v4331
        %v4380 = vunpack.c.l.b16 %v4332
        %v4381 = vunpack.c.l.b16 %v4333
        %v4382 = vunpack.c.l.b16 %v4334
        %v4383 = vunpack.c.l.b16 %v4335
        %v4384 = vunpack.c.l.b16 %v4336
        %v4385 = vunpack.c.l.b16 %v4337
        %v4386 = vunpack.c.l.b16 %v4338
        %v4387 = vunpack.c.l.b16 %v4339
        %v4388 = vunpack.c.l.b16 %v4340
        %v4389 = vunpack.c.l.b16 %v4341
        %v4390 = vunpack.c.l.b16 %v4342
        %v4391 = vunpack.c.l.b16 %v4343
        %v4392 = vunpack.c.l.b16 %v4344
        %v4393 = vunpack.c.l.b16 %v4345
        %v4394 = vunpack.c.l.b16 %v4346
        %v4395 = vunpack.c.l.b16 %v4347
        %v4396 = vunpack.c.l.b16 %v4348
        %v4397 = vunpack.c.l.b16 %v4349
        %v4398 = vunpack.c.l.b16 %v4350
        %v4399 = vunpack.c.l.b16 %v4351
        %v4400 = vunpack.c.l.b16 %v4352
        %v4401 = vpack.c.b16 %v4378, %v4377
        %v4402 = vpack.c.b16 %v4380, %v4379
        %v4403 = vpack.c.b16 %v4382, %v4381
        %v4404 = vpack.c.b16 %v4384, %v4383
        %v4405 = vpack.c.b16 %v4386, %v4385
        %v4406 = vpack.c.b16 %v4388, %v4387
        %v4407 = vpack.c.b16 %v4390, %v4389
        %v4408 = vpack.c.b16 %v4392, %v4391
        %v4409 = vpack.c.b16 %v4394, %v4393
        %v4410 = vpack.c.b16 %v4396, %v4395
        %v4411 = vpack.c.b16 %v4398, %v4397
        %v4412 = vpack.c.b16 %v4400, %v4399
        %v4426 = vsel %vm171, %v3696, 0
        %4428 = vmatprep.subr.bf16.mxu0 0
        %4429 = vmatpush1.bf16.msra.mxu0 %v4401
        %4430 = vmatprep.subr.bf16.mxu0 0
        %4431 = vmatpush1.bf16.msra.mxu0 %v4402
        %4432 = vmatprep.subr.bf16.mxu0 0
        %4433 = vmatpush1.bf16.msra.mxu0 %v4403
        %4434 = vmatprep.subr.bf16.mxu0 0
        %4435 = vmatpush1.bf16.msra.mxu0 %v4404
        %4436 = vmatprep.subr.bf16.mxu0 0
        %4437 = vmatpush1.bf16.msra.mxu0 %v4405
        %4438 = vmatprep.subr.bf16.mxu0 0
        %4439 = vmatpush1.bf16.msra.mxu0 %v4406
        %4440 = vmatprep.subr.bf16.mxu0 0
        %4441 = vmatpush1.bf16.msra.mxu0 %v4407
        %4442 = vmatprep.subr.bf16.mxu0 0
        %4443 = vmatpush1.bf16.msra.mxu0 %v4408
        %4444 = vmatprep.subr.bf16.mxu0 0
        %4445 = vmatpush1.bf16.msra.mxu0 %v4409
        %4446 = vmatprep.subr.bf16.mxu0 0
        %4447 = vmatpush1.bf16.msra.mxu0 %v4410
        %4448 = vmatprep.subr.bf16.mxu0 0
        %4449 = vmatpush1.bf16.msra.mxu0 %v4411
        %4450 = vmatprep.subr.bf16.mxu0 0
        %4451 = vmatpush1.bf16.msra.mxu0 %v4412
        %4452 = vmatprep.subr.bf16.mxu0 0
        %4453 = vmatpush1.bf16.msra.mxu0 0
        %4454 = vmatprep.subr.bf16.mxu0 0
        %4455 = vmatpush1.bf16.msra.mxu0 0
        %4456 = vmatprep.subr.bf16.mxu0 0
        %4457 = vmatpush1.bf16.msra.mxu0 0
        %4458 = vmatprep.subr.bf16.mxu0 0
        %4459 = vmatpush1.bf16.msra.mxu0 0
        %4460 = vmatprep.mubr.bf16.mxu0 %v3801
        %4461 = vmatmul.mubr.bf16.gmra.mrb[0].mxu0 %v3665
        %v4462 = vpop.f32.mrb[0].mxu0
        %v4463 = vadd.f32 0.0, %v4462
        %v4464 = vpop.f32.mrb[0].mxu0
        %v4465 = vpop.f32.mrb[0].mxu0
        %v4466 = vadd.f32 0.0, %v4465
        %v4467 = vpop.f32.mrb[0].mxu0
        %4468 = vmatprep.mubr.bf16.mxu0 %v3804
        %4469 = vmatmul.mubr.bf16.gmra.mrb[0].mxu0 %v3667
        %v4470 = vpop.f32.mrb[0].mxu0
        %v4471 = vadd.f32 0.0, %v4470
        %v4472 = vpop.f32.mrb[0].mxu0
        %v4473 = vpop.f32.mrb[0].mxu0
        %v4474 = vadd.f32 0.0, %v4473
        %v4475 = vpop.f32.mrb[0].mxu0
        %4476 = vmatprep.mubr.bf16.mxu0 %v3807
        %4477 = vmatmul.mubr.bf16.gmra.mrb[0].mxu0 %v3669
        %v4478 = vpop.f32.mrb[0].mxu0
        %v4479 = vadd.f32 0.0, %v4478
        %v4480 = vpop.f32.mrb[0].mxu0
        %v4481 = vpop.f32.mrb[0].mxu0
        %v4482 = vadd.f32 0.0, %v4481
        %v4483 = vpop.f32.mrb[0].mxu0
        %4484 = vmatprep.mubr.bf16.mxu0 %v3810
        %4485 = vmatmul.mubr.bf16.gmra.mrb[0].mxu0 %v3671
        %v4486 = vpop.f32.mrb[0].mxu0
        %v4487 = vadd.f32 0.0, %v4486
        %v4488 = vpop.f32.mrb[0].mxu0
        %v4489 = vpop.f32.mrb[0].mxu0
        %v4490 = vadd.f32 0.0, %v4489
        %v4491 = vpop.f32.mrb[0].mxu0
        %4492 = vmatprep.mubr.bf16.mxu0 %v3813
        %4493 = vmatmul.mubr.bf16.gmra.mrb[0].mxu0 %v3673
        %v4494 = vpop.f32.mrb[0].mxu0
        %v4495 = vadd.f32 0.0, %v4494
        %v4496 = vpop.f32.mrb[0].mxu0
        %v4497 = vpop.f32.mrb[0].mxu0
        %v4498 = vadd.f32 0.0, %v4497
        %v4499 = vpop.f32.mrb[0].mxu0
        %4500 = vmatprep.mubr.bf16.mxu0 %v3816
        %4501 = vmatmul.mubr.bf16.gmra.mrb[0].mxu0 %v3675
        %v4502 = vpop.f32.mrb[0].mxu0
        %v4503 = vadd.f32 0.0, %v4502
        %v4504 = vpop.f32.mrb[0].mxu0
        %v4505 = vpop.f32.mrb[0].mxu0
        %v4506 = vadd.f32 0.0, %v4505
        %v4507 = vpop.f32.mrb[0].mxu0
        %4508 = vmatprep.mubr.bf16.mxu0 %v3819
        %4509 = vmatmul.mubr.bf16.gmra.mrb[0].mxu0 %v3677
        %v4510 = vpop.f32.mrb[0].mxu0
        %v4511 = vadd.f32 0.0, %v4510
        %v4512 = vpop.f32.mrb[0].mxu0
        %v4513 = vpop.f32.mrb[0].mxu0
        %v4514 = vadd.f32 0.0, %v4513
        %v4515 = vpop.f32.mrb[0].mxu0
        %4516 = vmatprep.mubr.bf16.mxu0 %v3822
        %4517 = vmatmul.mubr.bf16.gmra.mrb[0].mxu0 %v3679
        %v4518 = vpop.f32.mrb[0].mxu0
        %v4519 = vadd.f32 0.0, %v4518
        %v4520 = vpop.f32.mrb[0].mxu0
        %v4521 = vpop.f32.mrb[0].mxu0
        %v4522 = vadd.f32 0.0, %v4521
        %v4523 = vpop.f32.mrb[0].mxu0
        %4524 = vmatprep.mubr.bf16.mxu0 %v3825
        %4525 = vmatmul.mubr.bf16.gmra.mrb[0].mxu0 %v3681
        %v4526 = vpop.f32.mrb[0].mxu0
        %v4527 = vadd.f32 0.0, %v4526
        %v4528 = vpop.f32.mrb[0].mxu0
        %v4529 = vpop.f32.mrb[0].mxu0
        %v4530 = vadd.f32 0.0, %v4529
        %v4531 = vpop.f32.mrb[0].mxu0
        %4532 = vmatprep.mubr.bf16.mxu0 %v3828
        %4533 = vmatmul.mubr.bf16.gmra.mrb[0].mxu0 %v3683
        %v4534 = vpop.f32.mrb[0].mxu0
        %v4535 = vadd.f32 0.0, %v4534
        %v4536 = vpop.f32.mrb[0].mxu0
        %v4537 = vpop.f32.mrb[0].mxu0
        %v4538 = vadd.f32 0.0, %v4537
        %v4539 = vpop.f32.mrb[0].mxu0
        %4540 = vmatprep.mubr.bf16.mxu0 %v3831
        %4541 = vmatmul.mubr.bf16.gmra.mrb[0].mxu0 %v3685
        %v4542 = vpop.f32.mrb[0].mxu0
        %v4543 = vadd.f32 0.0, %v4542
        %v4544 = vpop.f32.mrb[0].mxu0
        %v4545 = vpop.f32.mrb[0].mxu0
        %v4546 = vadd.f32 0.0, %v4545
        %v4547 = vpop.f32.mrb[0].mxu0
        %4548 = vmatprep.mubr.bf16.mxu0 %v3834
        %4549 = vmatmul.mubr.bf16.gmra.mrb[0].mxu0 %v3687
        %v4550 = vpop.f32.mrb[0].mxu0
        %v4551 = vadd.f32 0.0, %v4550
        %v4552 = vpop.f32.mrb[0].mxu0
        %v4553 = vpop.f32.mrb[0].mxu0
        %v4554 = vadd.f32 0.0, %v4553
        %v4555 = vpop.f32.mrb[0].mxu0
        %4556 = vmatprep.mubr.bf16.mxu0 %v3837
        %4557 = vmatmul.mubr.bf16.gmra.mrb[0].mxu0 %v3689
        %v4558 = vpop.f32.mrb[0].mxu0
        %v4559 = vadd.f32 0.0, %v4558
        %v4560 = vpop.f32.mrb[0].mxu0
        %v4561 = vpop.f32.mrb[0].mxu0
        %v4562 = vadd.f32 0.0, %v4561
        %v4563 = vpop.f32.mrb[0].mxu0
        %4564 = vmatprep.mubr.bf16.mxu0 %v3840
        %4565 = vmatmul.mubr.bf16.gmra.mrb[0].mxu0 %v3691
        %v4566 = vpop.f32.mrb[0].mxu0
        %v4567 = vadd.f32 0.0, %v4566
        %v4568 = vpop.f32.mrb[0].mxu0
        %v4569 = vpop.f32.mrb[0].mxu0
        %v4570 = vadd.f32 0.0, %v4569
        %v4571 = vpop.f32.mrb[0].mxu0
        %4572 = vmatprep.mubr.bf16.mxu0 %v4133
        %4573 = vmatmul.mubr.bf16.gmra.mrb[0].mxu0 %v3693
        %v4574 = vpop.f32.mrb[0].mxu0
        %v4575 = vadd.f32 0.0, %v4574
        %v4576 = vpop.f32.mrb[0].mxu0
        %v4577 = vpop.f32.mrb[0].mxu0
        %v4578 = vadd.f32 0.0, %v4577
        %v4579 = vpop.f32.mrb[0].mxu0
        %4580 = vmatprep.mubr.bf16.mxu0 %v4426
        %4581 = vmatmul.mubr.bf16.gmra.mrb[0].mxu0 %v3695
        %v4582 = vpop.f32.mrb[0].mxu0
        %v4583 = vadd.f32 0.0, %v4582
        %v4584 = vpop.f32.mrb[0].mxu0
        %v4585 = vpop.f32.mrb[0].mxu0
        %v4586 = vadd.f32 0.0, %v4585
        %v4587 = vpop.f32.mrb[0].mxu0
        %4588 = vdwg.mxu0
        %v4589 = vadd.f32 %v4296, %v4463
        %v4590 = vadd.f32 %v4297, %v4466
        %v4591 = vadd.f32 %v4298, %v4471
        %v4592 = vadd.f32 %v4299, %v4474
        %v4593 = vadd.f32 %v4300, %v4479
        %v4594 = vadd.f32 %v4301, %v4482
        %v4595 = vadd.f32 %v4302, %v4487
        %v4596 = vadd.f32 %v4303, %v4490
        %v4597 = vadd.f32 %v4304, %v4495
        %v4598 = vadd.f32 %v4305, %v4498
        %v4599 = vadd.f32 %v4306, %v4503
        %v4600 = vadd.f32 %v4307, %v4506
        %v4601 = vadd.f32 %v4308, %v4511
        %v4602 = vadd.f32 %v4309, %v4514
        %v4603 = vadd.f32 %v4310, %v4519
        %v4604 = vadd.f32 %v4311, %v4522
        %v4605 = vadd.f32 %v4312, %v4527
        %v4606 = vadd.f32 %v4313, %v4530
        %v4607 = vadd.f32 %v4314, %v4535
        %v4608 = vadd.f32 %v4315, %v4538
        %v4609 = vadd.f32 %v4316, %v4543
        %v4610 = vadd.f32 %v4317, %v4546
        %v4611 = vadd.f32 %v4318, %v4551
        %v4612 = vadd.f32 %v4319, %v4554
        %v4613 = vadd.f32 %v4320, %v4559
        %v4614 = vadd.f32 %v4321, %v4562
        %v4615 = vadd.f32 %v4322, %v4567
        %v4616 = vadd.f32 %v4323, %v4570
        %v4617 = vadd.f32 %v4324, %v4575
        %v4618 = vadd.f32 %v4325, %v4578
        %v4619 = vadd.f32 %v4326, %v4583
        %v4620 = vadd.f32 %v4327, %v4586
        %4653 = vrot.lane.b32.xlu0 %v4589, 64
        %v4654 = vpop.permute.xlu0 %4653
        %4655 = vrot.lane.b32.xlu0 %v4590, 64
        %v4656 = vpop.permute.xlu0 %4655
        %4657 = vrot.lane.b32.xlu0 %v4591, 64
        %v4658 = vpop.permute.xlu0 %4657
        %4659 = vrot.lane.b32.xlu0 %v4592, 64
        %v4660 = vpop.permute.xlu0 %4659
        %4661 = vrot.lane.b32.xlu0 %v4593, 64
        %v4662 = vpop.permute.xlu0 %4661
        %4663 = vrot.lane.b32.xlu0 %v4594, 64
        %v4664 = vpop.permute.xlu0 %4663
        %4665 = vrot.lane.b32.xlu0 %v4595, 64
        %v4666 = vpop.permute.xlu0 %4665
        %4667 = vrot.lane.b32.xlu0 %v4596, 64
        %v4668 = vpop.permute.xlu0 %4667
        %4669 = vrot.lane.b32.xlu0 %v4597, 64
        %v4670 = vpop.permute.xlu0 %4669
        %4671 = vrot.lane.b32.xlu0 %v4598, 64
        %v4672 = vpop.permute.xlu0 %4671
        %4673 = vrot.lane.b32.xlu0 %v4599, 64
        %v4674 = vpop.permute.xlu0 %4673
        %4675 = vrot.lane.b32.xlu0 %v4600, 64
        %v4676 = vpop.permute.xlu0 %4675
        %4677 = vrot.lane.b32.xlu0 %v4601, 64
        %v4678 = vpop.permute.xlu0 %4677
        %4679 = vrot.lane.b32.xlu0 %v4602, 64
        %v4680 = vpop.permute.xlu0 %4679
        %4681 = vrot.lane.b32.xlu0 %v4603, 64
        %v4682 = vpop.permute.xlu0 %4681
        %4683 = vrot.lane.b32.xlu0 %v4604, 64
        %v4684 = vpop.permute.xlu0 %4683
        %4685 = vrot.lane.b32.xlu0 %v4605, 64
        %v4686 = vpop.permute.xlu0 %4685
        %4687 = vrot.lane.b32.xlu0 %v4606, 64
        %v4688 = vpop.permute.xlu0 %4687
        %4689 = vrot.lane.b32.xlu0 %v4607, 64
        %v4690 = vpop.permute.xlu0 %4689
        %4691 = vrot.lane.b32.xlu0 %v4608, 64
        %v4692 = vpop.permute.xlu0 %4691
        %4693 = vrot.lane.b32.xlu0 %v4609, 64
        %v4694 = vpop.permute.xlu0 %4693
        %4695 = vrot.lane.b32.xlu0 %v4610, 64
        %v4696 = vpop.permute.xlu0 %4695
        %4697 = vrot.lane.b32.xlu0 %v4611, 64
        %v4698 = vpop.permute.xlu0 %4697
        %4699 = vrot.lane.b32.xlu0 %v4612, 64
        %v4700 = vpop.permute.xlu0 %4699
        %4701 = vrot.lane.b32.xlu0 %v4613, 64
        %v4702 = vpop.permute.xlu0 %4701
        %4703 = vrot.lane.b32.xlu0 %v4614, 64
        %v4704 = vpop.permute.xlu0 %4703
        %4705 = vrot.lane.b32.xlu0 %v4615, 64
        %v4706 = vpop.permute.xlu0 %4705
        %4707 = vrot.lane.b32.xlu0 %v4616, 64
        %v4708 = vpop.permute.xlu0 %4707
        %4709 = vrot.lane.b32.xlu0 %v4617, 64
        %v4710 = vpop.permute.xlu0 %4709
        %4711 = vrot.lane.b32.xlu0 %v4618, 64
        %v4712 = vpop.permute.xlu0 %4711
        %4713 = vrot.lane.b32.xlu0 %v4619, 64
        %v4714 = vpop.permute.xlu0 %4713
        %4715 = vrot.lane.b32.xlu0 %v4620, 64
        %v4716 = vpop.permute.xlu0 %4715
        %4749 = vst.msk [vmem:[%s377] sm:$0xff] %vm378, %v4654
        %4750 = vst.msk [vmem:[%s377 + $0x10] sm:$0xff] %vm378, %v4656
        %4751 = vst.msk [vmem:[%s377 + $0x20] sm:$0xff] %vm378, %v4658
        %4752 = vst.msk [vmem:[%s377 + $0x30] sm:$0xff] %vm378, %v4660
        %4753 = vst.msk [vmem:[%s377 + $0x40] sm:$0xff] %vm378, %v4662
        %4754 = vst.msk [vmem:[%s377 + $0x50] sm:$0xff] %vm378, %v4664
        %4755 = vst.msk [vmem:[%s377 + $0x60] sm:$0xff] %vm378, %v4666
        %4756 = vst.msk [vmem:[%s377 + $0x70] sm:$0xff] %vm378, %v4668
        %4757 = vst.msk [vmem:[%s377 + $0x80] sm:$0xff] %vm378, %v4670
        %4758 = vst.msk [vmem:[%s377 + $0x90] sm:$0xff] %vm378, %v4672
        %4759 = vst.msk [vmem:[%s377 + $0xa0] sm:$0xff] %vm378, %v4674
        %4760 = vst.msk [vmem:[%s377 + $0xb0] sm:$0xff] %vm378, %v4676
        %4761 = vst.msk [vmem:[%s377 + $0xc0] sm:$0xff] %vm378, %v4678
        %4762 = vst.msk [vmem:[%s377 + $0xd0] sm:$0xff] %vm378, %v4680
        %4763 = vst.msk [vmem:[%s377 + $0xe0] sm:$0xff] %vm378, %v4682
        %4764 = vst.msk [vmem:[%s377 + $0xf0] sm:$0xff] %vm378, %v4684
        %4765 = vst.msk [vmem:[%s377 + $0x100] sm:$0xff] %vm378, %v4686
        %4766 = vst.msk [vmem:[%s377 + $0x110] sm:$0xff] %vm378, %v4688
        %4767 = vst.msk [vmem:[%s377 + $0x120] sm:$0xff] %vm378, %v4690
        %4768 = vst.msk [vmem:[%s377 + $0x130] sm:$0xff] %vm378, %v4692
        %4769 = vst.msk [vmem:[%s377 + $0x140] sm:$0xff] %vm378, %v4694
        %4770 = vst.msk [vmem:[%s377 + $0x150] sm:$0xff] %vm378, %v4696
        %4771 = vst.msk [vmem:[%s377 + $0x160] sm:$0xff] %vm378, %v4698
        %4772 = vst.msk [vmem:[%s377 + $0x170] sm:$0xff] %vm378, %v4700
        %4773 = vst.msk [vmem:[%s377 + $0x180] sm:$0xff] %vm378, %v4702
        %4774 = vst.msk [vmem:[%s377 + $0x190] sm:$0xff] %vm378, %v4704
        %4775 = vst.msk [vmem:[%s377 + $0x1a0] sm:$0xff] %vm378, %v4706
        %4776 = vst.msk [vmem:[%s377 + $0x1b0] sm:$0xff] %vm378, %v4708
        %4777 = vst.msk [vmem:[%s377 + $0x1c0] sm:$0xff] %vm378, %v4710
        %4778 = vst.msk [vmem:[%s377 + $0x1d0] sm:$0xff] %vm378, %v4712
        %4779 = vst.msk [vmem:[%s377 + $0x1e0] sm:$0xff] %vm378, %v4714
        %4780 = vst.msk [vmem:[%s377 + $0x1f0] sm:$0xff] %vm378, %v4716
        %v4781 = vrot.slane %v4589, 7
        %v4782 = vrot.slane %v4590, 7
        %v4783 = vsel %vm411, %v4781, %v4782
        %v4784 = vrot.slane %v4591, 7
        %v4785 = vrot.slane %v4592, 7
        %v4786 = vsel %vm411, %v4784, %v4785
        %v4787 = vrot.slane %v4593, 7
        %v4788 = vrot.slane %v4594, 7
        %v4789 = vsel %vm411, %v4787, %v4788
        %v4790 = vrot.slane %v4595, 7
        %v4791 = vrot.slane %v4596, 7
        %v4792 = vsel %vm411, %v4790, %v4791
        %v4793 = vrot.slane %v4597, 7
        %v4794 = vrot.slane %v4598, 7
        %v4795 = vsel %vm411, %v4793, %v4794
        %v4796 = vrot.slane %v4599, 7
        %v4797 = vrot.slane %v4600, 7
        %v4798 = vsel %vm411, %v4796, %v4797
        %v4799 = vrot.slane %v4601, 7
        %v4800 = vrot.slane %v4602, 7
        %v4801 = vsel %vm411, %v4799, %v4800
        %v4802 = vrot.slane %v4603, 7
        %v4803 = vrot.slane %v4604, 7
        %v4804 = vsel %vm411, %v4802, %v4803
        %v4805 = vrot.slane %v4605, 7
        %v4806 = vrot.slane %v4606, 7
        %v4807 = vsel %vm411, %v4805, %v4806
        %v4808 = vrot.slane %v4607, 7
        %v4809 = vrot.slane %v4608, 7
        %v4810 = vsel %vm411, %v4808, %v4809
        %v4811 = vrot.slane %v4609, 7
        %v4812 = vrot.slane %v4610, 7
        %v4813 = vsel %vm411, %v4811, %v4812
        %v4814 = vrot.slane %v4611, 7
        %v4815 = vrot.slane %v4612, 7
        %v4816 = vsel %vm411, %v4814, %v4815
        %v4817 = vrot.slane %v4613, 7
        %v4818 = vrot.slane %v4614, 7
        %v4819 = vsel %vm411, %v4817, %v4818
        %v4820 = vrot.slane %v4615, 7
        %v4821 = vrot.slane %v4616, 7
        %v4822 = vsel %vm411, %v4820, %v4821
        %v4823 = vrot.slane %v4617, 7
        %v4824 = vrot.slane %v4618, 7
        %v4825 = vsel %vm411, %v4823, %v4824
        %v4826 = vrot.slane %v4619, 7
        %v4827 = vrot.slane %v4620, 7
        %v4828 = vsel %vm411, %v4826, %v4827
        %4861 = vst.msk [vmem:[%s377] sm:$0xfe] %vm492, %v4781
        %4862 = vst.msk [vmem:[%s377 + $0x10] sm:$0xff] %vm171, %v4783
        %4863 = vst.msk [vmem:[%s377 + $0x20] sm:$0xfe] %vm492, %v4784
        %4864 = vst.msk [vmem:[%s377 + $0x30] sm:$0xff] %vm171, %v4786
        %4865 = vst.msk [vmem:[%s377 + $0x40] sm:$0xfe] %vm492, %v4787
        %4866 = vst.msk [vmem:[%s377 + $0x50] sm:$0xff] %vm171, %v4789
        %4867 = vst.msk [vmem:[%s377 + $0x60] sm:$0xfe] %vm492, %v4790
        %4868 = vst.msk [vmem:[%s377 + $0x70] sm:$0xff] %vm171, %v4792
        %4869 = vst.msk [vmem:[%s377 + $0x80] sm:$0xfe] %vm492, %v4793
        %4870 = vst.msk [vmem:[%s377 + $0x90] sm:$0xff] %vm171, %v4795
        %4871 = vst.msk [vmem:[%s377 + $0xa0] sm:$0xfe] %vm492, %v4796
        %4872 = vst.msk [vmem:[%s377 + $0xb0] sm:$0xff] %vm171, %v4798
        %4873 = vst.msk [vmem:[%s377 + $0xc0] sm:$0xfe] %vm492, %v4799
        %4874 = vst.msk [vmem:[%s377 + $0xd0] sm:$0xff] %vm171, %v4801
        %4875 = vst.msk [vmem:[%s377 + $0xe0] sm:$0xfe] %vm492, %v4802
        %4876 = vst.msk [vmem:[%s377 + $0xf0] sm:$0xff] %vm171, %v4804
        %4877 = vst.msk [vmem:[%s377 + $0x100] sm:$0xfe] %vm492, %v4805
        %4878 = vst.msk [vmem:[%s377 + $0x110] sm:$0xff] %vm171, %v4807
        %4879 = vst.msk [vmem:[%s377 + $0x120] sm:$0xfe] %vm492, %v4808
        %4880 = vst.msk [vmem:[%s377 + $0x130] sm:$0xff] %vm171, %v4810
        %4881 = vst.msk [vmem:[%s377 + $0x140] sm:$0xfe] %vm492, %v4811
        %4882 = vst.msk [vmem:[%s377 + $0x150] sm:$0xff] %vm171, %v4813
        %4883 = vst.msk [vmem:[%s377 + $0x160] sm:$0xfe] %vm492, %v4814
        %4884 = vst.msk [vmem:[%s377 + $0x170] sm:$0xff] %vm171, %v4816
        %4885 = vst.msk [vmem:[%s377 + $0x180] sm:$0xfe] %vm492, %v4817
        %4886 = vst.msk [vmem:[%s377 + $0x190] sm:$0xff] %vm171, %v4819
        %4887 = vst.msk [vmem:[%s377 + $0x1a0] sm:$0xfe] %vm492, %v4820
        %4888 = vst.msk [vmem:[%s377 + $0x1b0] sm:$0xff] %vm171, %v4822
        %4889 = vst.msk [vmem:[%s377 + $0x1c0] sm:$0xfe] %vm492, %v4823
        %4890 = vst.msk [vmem:[%s377 + $0x1d0] sm:$0xff] %vm171, %v4825
        %4891 = vst.msk [vmem:[%s377 + $0x1e0] sm:$0xfe] %vm492, %v4826
        %4892 = vst.msk [vmem:[%s377 + $0x1f0] sm:$0xff] %vm171, %v4828
        %v4893 = vrot.slane %v4589, 1
        %v4894 = vrot.slane %v4590, 1
        %v4895 = vsel %vm525, %v4893, %v4894
        %v4896 = vrot.slane %v4591, 1
        %v4897 = vrot.slane %v4592, 1
        %v4898 = vsel %vm525, %v4896, %v4897
        %v4899 = vrot.slane %v4593, 1
        %v4900 = vrot.slane %v4594, 1
        %v4901 = vsel %vm525, %v4899, %v4900
        %v4902 = vrot.slane %v4595, 1
        %v4903 = vrot.slane %v4596, 1
        %v4904 = vsel %vm525, %v4902, %v4903
        %v4905 = vrot.slane %v4597, 1
        %v4906 = vrot.slane %v4598, 1
        %v4907 = vsel %vm525, %v4905, %v4906
        %v4908 = vrot.slane %v4599, 1
        %v4909 = vrot.slane %v4600, 1
        %v4910 = vsel %vm525, %v4908, %v4909
        %v4911 = vrot.slane %v4601, 1
        %v4912 = vrot.slane %v4602, 1
        %v4913 = vsel %vm525, %v4911, %v4912
        %v4914 = vrot.slane %v4603, 1
        %v4915 = vrot.slane %v4604, 1
        %v4916 = vsel %vm525, %v4914, %v4915
        %v4917 = vrot.slane %v4605, 1
        %v4918 = vrot.slane %v4606, 1
        %v4919 = vsel %vm525, %v4917, %v4918
        %v4920 = vrot.slane %v4607, 1
        %v4921 = vrot.slane %v4608, 1
        %v4922 = vsel %vm525, %v4920, %v4921
        %v4923 = vrot.slane %v4609, 1
        %v4924 = vrot.slane %v4610, 1
        %v4925 = vsel %vm525, %v4923, %v4924
        %v4926 = vrot.slane %v4611, 1
        %v4927 = vrot.slane %v4612, 1
        %v4928 = vsel %vm525, %v4926, %v4927
        %v4929 = vrot.slane %v4613, 1
        %v4930 = vrot.slane %v4614, 1
        %v4931 = vsel %vm525, %v4929, %v4930
        %v4932 = vrot.slane %v4615, 1
        %v4933 = vrot.slane %v4616, 1
        %v4934 = vsel %vm525, %v4932, %v4933
        %v4935 = vrot.slane %v4617, 1
        %v4936 = vrot.slane %v4618, 1
        %v4937 = vsel %vm525, %v4935, %v4936
        %v4938 = vrot.slane %v4619, 1
        %v4939 = vrot.slane %v4620, 1
        %v4940 = vsel %vm525, %v4938, %v4939
        %4973 = vst.msk [vmem:[%s377 + $0x8] sm:$0xff] %vm171, %v4895
        %4974 = vst.msk [vmem:[%s377 + $0x18] sm:$0x7f] %vm607, %v4894
        %4975 = vst.msk [vmem:[%s377 + $0x28] sm:$0xff] %vm171, %v4898
        %4976 = vst.msk [vmem:[%s377 + $0x38] sm:$0x7f] %vm607, %v4897
        %4977 = vst.msk [vmem:[%s377 + $0x48] sm:$0xff] %vm171, %v4901
        %4978 = vst.msk [vmem:[%s377 + $0x58] sm:$0x7f] %vm607, %v4900
        %4979 = vst.msk [vmem:[%s377 + $0x68] sm:$0xff] %vm171, %v4904
        %4980 = vst.msk [vmem:[%s377 + $0x78] sm:$0x7f] %vm607, %v4903
        %4981 = vst.msk [vmem:[%s377 + $0x88] sm:$0xff] %vm171, %v4907
        %4982 = vst.msk [vmem:[%s377 + $0x98] sm:$0x7f] %vm607, %v4906
        %4983 = vst.msk [vmem:[%s377 + $0xa8] sm:$0xff] %vm171, %v4910
        %4984 = vst.msk [vmem:[%s377 + $0xb8] sm:$0x7f] %vm607, %v4909
        %4985 = vst.msk [vmem:[%s377 + $0xc8] sm:$0xff] %vm171, %v4913
        %4986 = vst.msk [vmem:[%s377 + $0xd8] sm:$0x7f] %vm607, %v4912
        %4987 = vst.msk [vmem:[%s377 + $0xe8] sm:$0xff] %vm171, %v4916
        %4988 = vst.msk [vmem:[%s377 + $0xf8] sm:$0x7f] %vm607, %v4915
        %4989 = vst.msk [vmem:[%s377 + $0x108] sm:$0xff] %vm171, %v4919
        %4990 = vst.msk [vmem:[%s377 + $0x118] sm:$0x7f] %vm607, %v4918
        %4991 = vst.msk [vmem:[%s377 + $0x128] sm:$0xff] %vm171, %v4922
        %4992 = vst.msk [vmem:[%s377 + $0x138] sm:$0x7f] %vm607, %v4921
        %4993 = vst.msk [vmem:[%s377 + $0x148] sm:$0xff] %vm171, %v4925
        %4994 = vst.msk [vmem:[%s377 + $0x158] sm:$0x7f] %vm607, %v4924
        %4995 = vst.msk [vmem:[%s377 + $0x168] sm:$0xff] %vm171, %v4928
        %4996 = vst.msk [vmem:[%s377 + $0x178] sm:$0x7f] %vm607, %v4927
        %4997 = vst.msk [vmem:[%s377 + $0x188] sm:$0xff] %vm171, %v4931
        %4998 = vst.msk [vmem:[%s377 + $0x198] sm:$0x7f] %vm607, %v4930
        %4999 = vst.msk [vmem:[%s377 + $0x1a8] sm:$0xff] %vm171, %v4934
        %5000 = vst.msk [vmem:[%s377 + $0x1b8] sm:$0x7f] %vm607, %v4933
        %5001 = vst.msk [vmem:[%s377 + $0x1c8] sm:$0xff] %vm171, %v4937
        %5002 = vst.msk [vmem:[%s377 + $0x1d8] sm:$0x7f] %vm607, %v4936
        %5003 = vst.msk [vmem:[%s377 + $0x1e8] sm:$0xff] %vm171, %v4940
        %5004 = vst.msk [vmem:[%s377 + $0x1f8] sm:$0x7f] %vm607, %v4939
        %s5005 = scalar_lea.vmem %s2, 3
        %v5006 = vld [vmem:[%s5005] sm:$0x1]
        %v5007 = vld [vmem:[#allocation2] sm:$0xff]
        %v5008 = vld [vmem:[#allocation2 + $0x8] sm:$0xff]
        %v5009 = vld [vmem:[#allocation2 + $0x10] sm:$0xff]
        %v5010 = vld [vmem:[#allocation2 + $0x18] sm:$0xff]
        %v5011 = vld [vmem:[#allocation2 + $0x20] sm:$0xff]
        %v5012 = vld [vmem:[#allocation2 + $0x28] sm:$0xff]
        %v5013 = vld [vmem:[#allocation2 + $0x30] sm:$0xff]
        %v5014 = vld [vmem:[#allocation2 + $0x38] sm:$0xff]
        %v5015 = vld [vmem:[#allocation2 + $0x40] sm:$0xff]
        %v5016 = vld [vmem:[#allocation2 + $0x48] sm:$0xff]
        %v5017 = vld [vmem:[#allocation2 + $0x50] sm:$0xff]
        %v5018 = vld [vmem:[#allocation2 + $0x58] sm:$0xff]
        %v5019 = vld [vmem:[#allocation2 + $0x60] sm:$0xff]
        %v5020 = vld [vmem:[#allocation2 + $0x68] sm:$0xff]
        %v5021 = vld [vmem:[#allocation2 + $0x70] sm:$0xff]
        %v5022 = vld [vmem:[#allocation2 + $0x78] sm:$0xff]
        %v5023 = vld [vmem:[#allocation2 + $0x80] sm:$0xff]
        %v5024 = vld [vmem:[#allocation2 + $0x88] sm:$0xff]
        %v5025 = vld [vmem:[#allocation2 + $0x90] sm:$0xff]
        %v5026 = vld [vmem:[#allocation2 + $0x98] sm:$0xff]
        %v5027 = vld [vmem:[#allocation2 + $0xa0] sm:$0xff]
        %v5028 = vld [vmem:[#allocation2 + $0xa8] sm:$0xff]
        %v5029 = vld [vmem:[#allocation2 + $0xb0] sm:$0xff]
        %v5030 = vld [vmem:[#allocation2 + $0xb8] sm:$0xff]
        %v5031 = vld [vmem:[#allocation2 + $0xc0] sm:$0xff]
        %v5032 = vld [vmem:[#allocation2 + $0xc8] sm:$0xff]
        %v5033 = vld [vmem:[#allocation2 + $0xd0] sm:$0xff]
        %v5034 = vld [vmem:[#allocation2 + $0xd8] sm:$0xff]
        %v5035 = vld [vmem:[#allocation2 + $0xe0] sm:$0xff]
        %v5036 = vld [vmem:[#allocation2 + $0xe8] sm:$0xff]
        %v5037 = vld [vmem:[#allocation2 + $0xf0] sm:$0xff]
        %v5038 = vld [vmem:[#allocation2 + $0xf8] sm:$0xff]
        %v5039 = vld [vmem:[#allocation2 + $0x100] sm:$0xff]
        %v5040 = vld [vmem:[#allocation2 + $0x108] sm:$0xff]
        %v5041 = vld [vmem:[#allocation2 + $0x110] sm:$0xff]
        %v5042 = vld [vmem:[#allocation2 + $0x118] sm:$0xff]
        %v5043 = vld [vmem:[#allocation2 + $0x120] sm:$0xff]
        %v5044 = vld [vmem:[#allocation2 + $0x128] sm:$0xff]
        %v5045 = vld [vmem:[#allocation2 + $0x130] sm:$0xff]
        %v5046 = vld [vmem:[#allocation2 + $0x138] sm:$0xff]
        %v5047 = vld [vmem:[#allocation2 + $0x140] sm:$0xff]
        %v5048 = vld [vmem:[#allocation2 + $0x148] sm:$0xff]
        %v5049 = vld [vmem:[#allocation2 + $0x150] sm:$0xff]
        %v5050 = vld [vmem:[#allocation2 + $0x158] sm:$0xff]
        %v5051 = vld [vmem:[#allocation2 + $0x160] sm:$0xff]
        %v5052 = vld [vmem:[#allocation2 + $0x168] sm:$0xff]
        %v5053 = vld [vmem:[#allocation2 + $0x170] sm:$0xff]
        %v5054 = vld [vmem:[#allocation2 + $0x178] sm:$0xff]
        %v5055 = vld [vmem:[#allocation2 + $0x180] sm:$0xff]
        %v5056 = vld [vmem:[#allocation2 + $0x188] sm:$0xff]
        %v5057 = vld [vmem:[#allocation2 + $0x190] sm:$0xff]
        %v5058 = vld [vmem:[#allocation2 + $0x198] sm:$0xff]
        %v5059 = vld [vmem:[#allocation2 + $0x1a0] sm:$0xff]
        %v5060 = vld [vmem:[#allocation2 + $0x1a8] sm:$0xff]
        %v5061 = vld [vmem:[#allocation2 + $0x1b0] sm:$0xff]
        %v5062 = vld [vmem:[#allocation2 + $0x1b8] sm:$0xff]
        %v5063 = vld [vmem:[#allocation2 + $0x1c0] sm:$0xff]
        %v5064 = vld [vmem:[#allocation2 + $0x1c8] sm:$0xff]
        %v5065 = vld [vmem:[#allocation2 + $0x1d0] sm:$0xff]
        %v5066 = vld [vmem:[#allocation2 + $0x1d8] sm:$0xff]
        %v5067 = vld [vmem:[#allocation2 + $0x1e0] sm:$0xff]
        %v5068 = vld [vmem:[#allocation2 + $0x1e8] sm:$0xff]
        %v5069 = vld [vmem:[#allocation2 + $0x1f0] sm:$0xff]
        %v5070 = vld [vmem:[#allocation2 + $0x1f8] sm:$0xff]
        %v5071 = vld [vmem:[#allocation2 + $0x200] sm:$0xff]
        %v5072 = vld [vmem:[#allocation2 + $0x208] sm:$0xff]
        %v5073 = vld [vmem:[#allocation2 + $0x210] sm:$0xff]
        %v5074 = vld [vmem:[#allocation2 + $0x218] sm:$0xff]
        %v5075 = vld [vmem:[#allocation2 + $0x220] sm:$0xff]
        %v5076 = vld [vmem:[#allocation2 + $0x228] sm:$0xff]
        %v5077 = vld [vmem:[#allocation2 + $0x230] sm:$0xff]
        %v5078 = vld [vmem:[#allocation2 + $0x238] sm:$0xff]
        %v5079 = vpack.c.bf16 %v5009, %v5007
        %v5080 = vpack.c.bf16 %v5010, %v5008
        %v5081 = vpack.c.bf16 %v5013, %v5011
        %v5082 = vpack.c.bf16 %v5014, %v5012
        %v5083 = vpack.c.bf16 %v5017, %v5015
        %v5084 = vpack.c.bf16 %v5018, %v5016
        %v5085 = vpack.c.bf16 %v5021, %v5019
        %v5086 = vpack.c.bf16 %v5022, %v5020
        %v5087 = vpack.c.bf16 %v5025, %v5023
        %v5088 = vpack.c.bf16 %v5026, %v5024
        %v5089 = vpack.c.bf16 %v5029, %v5027
        %v5090 = vpack.c.bf16 %v5030, %v5028
        %v5091 = vpack.c.bf16 %v5033, %v5031
        %v5092 = vpack.c.bf16 %v5034, %v5032
        %v5093 = vpack.c.bf16 %v5037, %v5035
        %v5094 = vpack.c.bf16 %v5038, %v5036
        %v5095 = vpack.c.bf16 %v5041, %v5039
        %v5096 = vpack.c.bf16 %v5042, %v5040
        %v5097 = vpack.c.bf16 %v5045, %v5043
        %v5098 = vpack.c.bf16 %v5046, %v5044
        %v5099 = vpack.c.bf16 %v5049, %v5047
        %v5100 = vpack.c.bf16 %v5050, %v5048
        %v5101 = vpack.c.bf16 %v5053, %v5051
        %v5102 = vpack.c.bf16 %v5054, %v5052
        %v5103 = vpack.c.bf16 %v5057, %v5055
        %v5104 = vpack.c.bf16 %v5058, %v5056
        %v5105 = vpack.c.bf16 %v5061, %v5059
        %v5106 = vpack.c.bf16 %v5062, %v5060
        %v5107 = vpack.c.bf16 %v5065, %v5063
        %v5108 = vpack.c.bf16 %v5066, %v5064
        %v5109 = vpack.c.bf16 %v5069, %v5067
        %v5110 = vpack.c.bf16 %v5070, %v5068
        %v5111 = vpack.c.bf16 %v5073, %v5071
        %v5112 = vpack.c.bf16 %v5074, %v5072
        %v5113 = vpack.c.bf16 %v5077, %v5075
        %v5114 = vpack.c.bf16 %v5078, %v5076
        %s5115 = scalar_lea.vmem %s1, 864
        %v5116 = vld [vmem:[%s5115] sm:$0xf]
        %v5117 = vld [vmem:[%s5115 + $0x4] sm:$0xf]
        %v5118 = vld [vmem:[%s5115 + $0x8] sm:$0xf]
        %v5119 = vld [vmem:[%s5115 + $0xc] sm:$0xf]
        %v5120 = vld [vmem:[%s5115 + $0x10] sm:$0xf]
        %v5121 = vld [vmem:[%s5115 + $0x14] sm:$0xf]
        %v5122 = vld [vmem:[%s5115 + $0x18] sm:$0xf]
        %v5123 = vld [vmem:[%s5115 + $0x1c] sm:$0xf]
        %v5124 = vld [vmem:[%s5115 + $0x20] sm:$0xf]
        %v5125 = vld [vmem:[%s5115 + $0x24] sm:$0xf]
        %v5126 = vld [vmem:[%s5115 + $0x28] sm:$0xf]
        %v5127 = vld [vmem:[%s5115 + $0x2c] sm:$0xf]
        %v5128 = vld [vmem:[%s5115 + $0x30] sm:$0xf]
        %v5129 = vld [vmem:[%s5115 + $0x34] sm:$0xf]
        %v5130 = vld [vmem:[%s5115 + $0x38] sm:$0xf]
        %v5131 = vld [vmem:[%s5115 + $0x3c] sm:$0xf]
        %v5132 = vld [vmem:[%s5115 + $0x40] sm:$0xf]
        %v5133 = vld [vmem:[%s5115 + $0x44] sm:$0xf]
        %v5134 = vld [vmem:[%s5115 + $0x48] sm:$0xf]
        %v5135 = vld [vmem:[%s5115 + $0x4c] sm:$0xf]
        %v5136 = vld [vmem:[%s5115 + $0x50] sm:$0xf]
        %v5137 = vld [vmem:[%s5115 + $0x54] sm:$0xf]
        %v5138 = vld [vmem:[%s5115 + $0x58] sm:$0xf]
        %v5139 = vld [vmem:[%s5115 + $0x5c] sm:$0xf]
        %v5164 = vunpack.c.l.b16 %v5116
        %v5165 = vunpack.c.l.b16 %v5117
        %v5166 = vunpack.c.l.b16 %v5118
        %v5167 = vunpack.c.l.b16 %v5119
        %v5168 = vunpack.c.l.b16 %v5120
        %v5169 = vunpack.c.l.b16 %v5121
        %v5170 = vunpack.c.l.b16 %v5122
        %v5171 = vunpack.c.l.b16 %v5123
        %v5172 = vunpack.c.l.b16 %v5124
        %v5173 = vunpack.c.l.b16 %v5125
        %v5174 = vunpack.c.l.b16 %v5126
        %v5175 = vunpack.c.l.b16 %v5127
        %v5176 = vunpack.c.l.b16 %v5128
        %v5177 = vunpack.c.l.b16 %v5129
        %v5178 = vunpack.c.l.b16 %v5130
        %v5179 = vunpack.c.l.b16 %v5131
        %v5180 = vunpack.c.l.b16 %v5132
        %v5181 = vunpack.c.l.b16 %v5133
        %v5182 = vunpack.c.l.b16 %v5134
        %v5183 = vunpack.c.l.b16 %v5135
        %v5184 = vunpack.c.l.b16 %v5136
        %v5185 = vunpack.c.l.b16 %v5137
        %v5186 = vunpack.c.l.b16 %v5138
        %v5187 = vunpack.c.l.b16 %v5139
        %v5188 = vpack.c.b16 %v5165, %v5164
        %v5189 = vpack.c.b16 %v5167, %v5166
        %v5190 = vpack.c.b16 %v5169, %v5168
        %v5191 = vpack.c.b16 %v5171, %v5170
        %v5192 = vpack.c.b16 %v5173, %v5172
        %v5193 = vpack.c.b16 %v5175, %v5174
        %v5194 = vpack.c.b16 %v5177, %v5176
        %v5195 = vpack.c.b16 %v5179, %v5178
        %v5196 = vpack.c.b16 %v5181, %v5180
        %v5197 = vpack.c.b16 %v5183, %v5182
        %v5198 = vpack.c.b16 %v5185, %v5184
        %v5199 = vpack.c.b16 %v5187, %v5186
        %v5213 = vsel %vm171, %v5080, 0
        %v5216 = vsel %vm171, %v5082, 0
        %v5219 = vsel %vm171, %v5084, 0
        %v5222 = vsel %vm171, %v5086, 0
        %v5225 = vsel %vm171, %v5088, 0
        %v5228 = vsel %vm171, %v5090, 0
        %v5231 = vsel %vm171, %v5092, 0
        %v5234 = vsel %vm171, %v5094, 0
        %v5237 = vsel %vm171, %v5096, 0
        %v5240 = vsel %vm171, %v5098, 0
        %v5243 = vsel %vm171, %v5100, 0
        %v5246 = vsel %vm171, %v5102, 0
        %v5249 = vsel %vm171, %v5104, 0
        %v5252 = vsel %vm171, %v5106, 0
        %v5255 = vsel %vm171, %v5108, 0
        %v5258 = vsel %vm171, %v5110, 0
        %5260 = vmatprep.subr.bf16.mxu0 0
        %5261 = vmatpush1.bf16.msra.mxu0 %v5188
        %5262 = vmatprep.subr.bf16.mxu0 0
        %5263 = vmatpush1.bf16.msra.mxu0 %v5189
        %5264 = vmatprep.subr.bf16.mxu0 0
        %5265 = vmatpush1.bf16.msra.mxu0 %v5190
        %5266 = vmatprep.subr.bf16.mxu0 0
        %5267 = vmatpush1.bf16.msra.mxu0 %v5191
        %5268 = vmatprep.subr.bf16.mxu0 0
        %5269 = vmatpush1.bf16.msra.mxu0 %v5192
        %5270 = vmatprep.subr.bf16.mxu0 0
        %5271 = vmatpush1.bf16.msra.mxu0 %v5193
        %5272 = vmatprep.subr.bf16.mxu0 0
        %5273 = vmatpush1.bf16.msra.mxu0 %v5194
        %5274 = vmatprep.subr.bf16.mxu0 0
        %5275 = vmatpush1.bf16.msra.mxu0 %v5195
        %5276 = vmatprep.subr.bf16.mxu0 0
        %5277 = vmatpush1.bf16.msra.mxu0 %v5196
        %5278 = vmatprep.subr.bf16.mxu0 0
        %5279 = vmatpush1.bf16.msra.mxu0 %v5197
        %5280 = vmatprep.subr.bf16.mxu0 0
        %5281 = vmatpush1.bf16.msra.mxu0 %v5198
        %5282 = vmatprep.subr.bf16.mxu0 0
        %5283 = vmatpush1.bf16.msra.mxu0 %v5199
        %5284 = vmatprep.subr.bf16.mxu0 0
        %5285 = vmatpush1.bf16.msra.mxu0 0
        %5286 = vmatprep.subr.bf16.mxu0 0
        %5287 = vmatpush1.bf16.msra.mxu0 0
        %5288 = vmatprep.subr.bf16.mxu0 0
        %5289 = vmatpush1.bf16.msra.mxu0 0
        %5290 = vmatprep.subr.bf16.mxu0 0
        %5291 = vmatpush1.bf16.msra.mxu0 0
        %5292 = vmatprep.mubr.bf16.mxu0 %v5213
        %5293 = vmatmul.mubr.bf16.gmra.mrb[0].mxu0 %v5079
        %v5294 = vpop.f32.mrb[0].mxu0
        %v5295 = vadd.f32 0.0, %v5294
        %v5296 = vpop.f32.mrb[0].mxu0
        %v5297 = vpop.f32.mrb[0].mxu0
        %v5298 = vadd.f32 0.0, %v5297
        %v5299 = vpop.f32.mrb[0].mxu0
        %5300 = vmatprep.mubr.bf16.mxu0 %v5216
        %5301 = vmatmul.mubr.bf16.gmra.mrb[0].mxu0 %v5081
        %v5302 = vpop.f32.mrb[0].mxu0
        %v5303 = vadd.f32 0.0, %v5302
        %v5304 = vpop.f32.mrb[0].mxu0
        %v5305 = vpop.f32.mrb[0].mxu0
        %v5306 = vadd.f32 0.0, %v5305
        %v5307 = vpop.f32.mrb[0].mxu0
        %5308 = vmatprep.mubr.bf16.mxu0 %v5219
        %5309 = vmatmul.mubr.bf16.gmra.mrb[0].mxu0 %v5083
        %v5310 = vpop.f32.mrb[0].mxu0
        %v5311 = vadd.f32 0.0, %v5310
        %v5312 = vpop.f32.mrb[0].mxu0
        %v5313 = vpop.f32.mrb[0].mxu0
        %v5314 = vadd.f32 0.0, %v5313
        %v5315 = vpop.f32.mrb[0].mxu0
        %5316 = vmatprep.mubr.bf16.mxu0 %v5222
        %5317 = vmatmul.mubr.bf16.gmra.mrb[0].mxu0 %v5085
        %v5318 = vpop.f32.mrb[0].mxu0
        %v5319 = vadd.f32 0.0, %v5318
        %v5320 = vpop.f32.mrb[0].mxu0
        %v5321 = vpop.f32.mrb[0].mxu0
        %v5322 = vadd.f32 0.0, %v5321
        %v5323 = vpop.f32.mrb[0].mxu0
        %5324 = vmatprep.mubr.bf16.mxu0 %v5225
        %5325 = vmatmul.mubr.bf16.gmra.mrb[0].mxu0 %v5087
        %v5326 = vpop.f32.mrb[0].mxu0
        %v5327 = vadd.f32 0.0, %v5326
        %v5328 = vpop.f32.mrb[0].mxu0
        %v5329 = vpop.f32.mrb[0].mxu0
        %v5330 = vadd.f32 0.0, %v5329
        %v5331 = vpop.f32.mrb[0].mxu0
        %5332 = vmatprep.mubr.bf16.mxu0 %v5228
        %5333 = vmatmul.mubr.bf16.gmra.mrb[0].mxu0 %v5089
        %v5334 = vpop.f32.mrb[0].mxu0
        %v5335 = vadd.f32 0.0, %v5334
        %v5336 = vpop.f32.mrb[0].mxu0
        %v5337 = vpop.f32.mrb[0].mxu0
        %v5338 = vadd.f32 0.0, %v5337
        %v5339 = vpop.f32.mrb[0].mxu0
        %5340 = vmatprep.mubr.bf16.mxu0 %v5231
        %5341 = vmatmul.mubr.bf16.gmra.mrb[0].mxu0 %v5091
        %v5342 = vpop.f32.mrb[0].mxu0
        %v5343 = vadd.f32 0.0, %v5342
        %v5344 = vpop.f32.mrb[0].mxu0
        %v5345 = vpop.f32.mrb[0].mxu0
        %v5346 = vadd.f32 0.0, %v5345
        %v5347 = vpop.f32.mrb[0].mxu0
        %5348 = vmatprep.mubr.bf16.mxu0 %v5234
        %5349 = vmatmul.mubr.bf16.gmra.mrb[0].mxu0 %v5093
        %v5350 = vpop.f32.mrb[0].mxu0
        %v5351 = vadd.f32 0.0, %v5350
        %v5352 = vpop.f32.mrb[0].mxu0
        %v5353 = vpop.f32.mrb[0].mxu0
        %v5354 = vadd.f32 0.0, %v5353
        %v5355 = vpop.f32.mrb[0].mxu0
        %5356 = vmatprep.mubr.bf16.mxu0 %v5237
        %5357 = vmatmul.mubr.bf16.gmra.mrb[0].mxu0 %v5095
        %v5358 = vpop.f32.mrb[0].mxu0
        %v5359 = vadd.f32 0.0, %v5358
        %v5360 = vpop.f32.mrb[0].mxu0
        %v5361 = vpop.f32.mrb[0].mxu0
        %v5362 = vadd.f32 0.0, %v5361
        %v5363 = vpop.f32.mrb[0].mxu0
        %5364 = vmatprep.mubr.bf16.mxu0 %v5240
        %5365 = vmatmul.mubr.bf16.gmra.mrb[0].mxu0 %v5097
        %v5366 = vpop.f32.mrb[0].mxu0
        %v5367 = vadd.f32 0.0, %v5366
        %v5368 = vpop.f32.mrb[0].mxu0
        %v5369 = vpop.f32.mrb[0].mxu0
        %v5370 = vadd.f32 0.0, %v5369
        %v5371 = vpop.f32.mrb[0].mxu0
        %5372 = vmatprep.mubr.bf16.mxu0 %v5243
        %5373 = vmatmul.mubr.bf16.gmra.mrb[0].mxu0 %v5099
        %v5374 = vpop.f32.mrb[0].mxu0
        %v5375 = vadd.f32 0.0, %v5374
        %v5376 = vpop.f32.mrb[0].mxu0
        %v5377 = vpop.f32.mrb[0].mxu0
        %v5378 = vadd.f32 0.0, %v5377
        %v5379 = vpop.f32.mrb[0].mxu0
        %5380 = vmatprep.mubr.bf16.mxu0 %v5246
        %5381 = vmatmul.mubr.bf16.gmra.mrb[0].mxu0 %v5101
        %v5382 = vpop.f32.mrb[0].mxu0
        %v5383 = vadd.f32 0.0, %v5382
        %v5384 = vpop.f32.mrb[0].mxu0
        %v5385 = vpop.f32.mrb[0].mxu0
        %v5386 = vadd.f32 0.0, %v5385
        %v5387 = vpop.f32.mrb[0].mxu0
        %5388 = vmatprep.mubr.bf16.mxu0 %v5249
        %5389 = vmatmul.mubr.bf16.gmra.mrb[0].mxu0 %v5103
        %v5390 = vpop.f32.mrb[0].mxu0
        %v5391 = vadd.f32 0.0, %v5390
        %v5392 = vpop.f32.mrb[0].mxu0
        %v5393 = vpop.f32.mrb[0].mxu0
        %v5394 = vadd.f32 0.0, %v5393
        %v5395 = vpop.f32.mrb[0].mxu0
        %5396 = vmatprep.mubr.bf16.mxu0 %v5252
        %5397 = vmatmul.mubr.bf16.gmra.mrb[0].mxu0 %v5105
        %v5398 = vpop.f32.mrb[0].mxu0
        %v5399 = vadd.f32 0.0, %v5398
        %v5400 = vpop.f32.mrb[0].mxu0
        %v5401 = vpop.f32.mrb[0].mxu0
        %v5402 = vadd.f32 0.0, %v5401
        %v5403 = vpop.f32.mrb[0].mxu0
        %5404 = vmatprep.mubr.bf16.mxu0 %v5255
        %5405 = vmatmul.mubr.bf16.gmra.mrb[0].mxu0 %v5107
        %v5406 = vpop.f32.mrb[0].mxu0
        %v5407 = vadd.f32 0.0, %v5406
        %v5408 = vpop.f32.mrb[0].mxu0
        %v5409 = vpop.f32.mrb[0].mxu0
        %v5410 = vadd.f32 0.0, %v5409
        %v5411 = vpop.f32.mrb[0].mxu0
        %5412 = vmatprep.mubr.bf16.mxu0 %v5258
        %5413 = vmatmul.mubr.bf16.gmra.mrb[0].mxu0 %v5109
        %v5414 = vpop.f32.mrb[0].mxu0
        %v5415 = vadd.f32 0.0, %v5414
        %v5416 = vpop.f32.mrb[0].mxu0
        %v5417 = vpop.f32.mrb[0].mxu0
        %v5418 = vadd.f32 0.0, %v5417
        %v5419 = vpop.f32.mrb[0].mxu0
        %5420 = vdwg.mxu0
        %v5422 = vlaneseq
        %v5423 = vshrl.u32 %v5422, 7
        %v5424 = vsub.s32 0, %v5423
        %v5425 = vrot.slane %v5006, %v5424
        %v5427 = vadd.f32 %v5425, %v5295
        %v5428 = vadd.f32 %v5425, %v5298
        %v5429 = vadd.f32 %v5425, %v5303
        %v5430 = vadd.f32 %v5425, %v5306
        %v5431 = vadd.f32 %v5425, %v5311
        %v5432 = vadd.f32 %v5425, %v5314
        %v5433 = vadd.f32 %v5425, %v5319
        %v5434 = vadd.f32 %v5425, %v5322
        %v5435 = vadd.f32 %v5425, %v5327
        %v5436 = vadd.f32 %v5425, %v5330
        %v5437 = vadd.f32 %v5425, %v5335
        %v5438 = vadd.f32 %v5425, %v5338
        %v5439 = vadd.f32 %v5425, %v5343
        %v5440 = vadd.f32 %v5425, %v5346
        %v5441 = vadd.f32 %v5425, %v5351
        %v5442 = vadd.f32 %v5425, %v5354
        %v5443 = vadd.f32 %v5425, %v5359
        %v5444 = vadd.f32 %v5425, %v5362
        %v5445 = vadd.f32 %v5425, %v5367
        %v5446 = vadd.f32 %v5425, %v5370
        %v5447 = vadd.f32 %v5425, %v5375
        %v5448 = vadd.f32 %v5425, %v5378
        %v5449 = vadd.f32 %v5425, %v5383
        %v5450 = vadd.f32 %v5425, %v5386
        %v5451 = vadd.f32 %v5425, %v5391
        %v5452 = vadd.f32 %v5425, %v5394
        %v5453 = vadd.f32 %v5425, %v5399
        %v5454 = vadd.f32 %v5425, %v5402
        %v5455 = vadd.f32 %v5425, %v5407
        %v5456 = vadd.f32 %v5425, %v5410
        %v5457 = vadd.f32 %v5425, %v5415
        %v5458 = vadd.f32 %v5425, %v5418
        %s5459 = scalar_lea.vmem %s1, 960
        %v5460 = vld [vmem:[%s5459] sm:$0xf]
        %v5461 = vld [vmem:[%s5459 + $0x4] sm:$0xf]
        %v5462 = vld [vmem:[%s5459 + $0x8] sm:$0xf]
        %v5463 = vld [vmem:[%s5459 + $0xc] sm:$0xf]
        %v5464 = vld [vmem:[%s5459 + $0x10] sm:$0xf]
        %v5465 = vld [vmem:[%s5459 + $0x14] sm:$0xf]
        %v5466 = vld [vmem:[%s5459 + $0x18] sm:$0xf]
        %v5467 = vld [vmem:[%s5459 + $0x1c] sm:$0xf]
        %v5468 = vld [vmem:[%s5459 + $0x20] sm:$0xf]
        %v5469 = vld [vmem:[%s5459 + $0x24] sm:$0xf]
        %v5470 = vld [vmem:[%s5459 + $0x28] sm:$0xf]
        %v5471 = vld [vmem:[%s5459 + $0x2c] sm:$0xf]
        %v5472 = vld [vmem:[%s5459 + $0x30] sm:$0xf]
        %v5473 = vld [vmem:[%s5459 + $0x34] sm:$0xf]
        %v5474 = vld [vmem:[%s5459 + $0x38] sm:$0xf]
        %v5475 = vld [vmem:[%s5459 + $0x3c] sm:$0xf]
        %v5476 = vld [vmem:[%s5459 + $0x40] sm:$0xf]
        %v5477 = vld [vmem:[%s5459 + $0x44] sm:$0xf]
        %v5478 = vld [vmem:[%s5459 + $0x48] sm:$0xf]
        %v5479 = vld [vmem:[%s5459 + $0x4c] sm:$0xf]
        %v5480 = vld [vmem:[%s5459 + $0x50] sm:$0xf]
        %v5481 = vld [vmem:[%s5459 + $0x54] sm:$0xf]
        %v5482 = vld [vmem:[%s5459 + $0x58] sm:$0xf]
        %v5483 = vld [vmem:[%s5459 + $0x5c] sm:$0xf]
        %v5508 = vunpack.c.l.b16 %v5460
        %v5509 = vunpack.c.l.b16 %v5461
        %v5510 = vunpack.c.l.b16 %v5462
        %v5511 = vunpack.c.l.b16 %v5463
        %v5512 = vunpack.c.l.b16 %v5464
        %v5513 = vunpack.c.l.b16 %v5465
        %v5514 = vunpack.c.l.b16 %v5466
        %v5515 = vunpack.c.l.b16 %v5467
        %v5516 = vunpack.c.l.b16 %v5468
        %v5517 = vunpack.c.l.b16 %v5469
        %v5518 = vunpack.c.l.b16 %v5470
        %v5519 = vunpack.c.l.b16 %v5471
        %v5520 = vunpack.c.l.b16 %v5472
        %v5521 = vunpack.c.l.b16 %v5473
        %v5522 = vunpack.c.l.b16 %v5474
        %v5523 = vunpack.c.l.b16 %v5475
        %v5524 = vunpack.c.l.b16 %v5476
        %v5525 = vunpack.c.l.b16 %v5477
        %v5526 = vunpack.c.l.b16 %v5478
        %v5527 = vunpack.c.l.b16 %v5479
        %v5528 = vunpack.c.l.b16 %v5480
        %v5529 = vunpack.c.l.b16 %v5481
        %v5530 = vunpack.c.l.b16 %v5482
        %v5531 = vunpack.c.l.b16 %v5483
        %v5532 = vpack.c.b16 %v5509, %v5508
        %v5533 = vpack.c.b16 %v5511, %v5510
        %v5534 = vpack.c.b16 %v5513, %v5512
        %v5535 = vpack.c.b16 %v5515, %v5514
        %v5536 = vpack.c.b16 %v5517, %v5516
        %v5537 = vpack.c.b16 %v5519, %v5518
        %v5538 = vpack.c.b16 %v5521, %v5520
        %v5539 = vpack.c.b16 %v5523, %v5522
        %v5540 = vpack.c.b16 %v5525, %v5524
        %v5541 = vpack.c.b16 %v5527, %v5526
        %v5542 = vpack.c.b16 %v5529, %v5528
        %v5543 = vpack.c.b16 %v5531, %v5530
        %v5557 = vsel %vm171, %v5112, 0
        %5559 = vmatprep.subr.bf16.mxu0 0
        %5560 = vmatpush1.bf16.msra.mxu0 %v5532
        %5561 = vmatprep.subr.bf16.mxu0 0
        %5562 = vmatpush1.bf16.msra.mxu0 %v5533
        %5563 = vmatprep.subr.bf16.mxu0 0
        %5564 = vmatpush1.bf16.msra.mxu0 %v5534
        %5565 = vmatprep.subr.bf16.mxu0 0
        %5566 = vmatpush1.bf16.msra.mxu0 %v5535
        %5567 = vmatprep.subr.bf16.mxu0 0
        %5568 = vmatpush1.bf16.msra.mxu0 %v5536
        %5569 = vmatprep.subr.bf16.mxu0 0
        %5570 = vmatpush1.bf16.msra.mxu0 %v5537
        %5571 = vmatprep.subr.bf16.mxu0 0
        %5572 = vmatpush1.bf16.msra.mxu0 %v5538
        %5573 = vmatprep.subr.bf16.mxu0 0
        %5574 = vmatpush1.bf16.msra.mxu0 %v5539
        %5575 = vmatprep.subr.bf16.mxu0 0
        %5576 = vmatpush1.bf16.msra.mxu0 %v5540
        %5577 = vmatprep.subr.bf16.mxu0 0
        %5578 = vmatpush1.bf16.msra.mxu0 %v5541
        %5579 = vmatprep.subr.bf16.mxu0 0
        %5580 = vmatpush1.bf16.msra.mxu0 %v5542
        %5581 = vmatprep.subr.bf16.mxu0 0
        %5582 = vmatpush1.bf16.msra.mxu0 %v5543
        %5583 = vmatprep.subr.bf16.mxu0 0
        %5584 = vmatpush1.bf16.msra.mxu0 0
        %5585 = vmatprep.subr.bf16.mxu0 0
        %5586 = vmatpush1.bf16.msra.mxu0 0
        %5587 = vmatprep.subr.bf16.mxu0 0
        %5588 = vmatpush1.bf16.msra.mxu0 0
        %5589 = vmatprep.subr.bf16.mxu0 0
        %5590 = vmatpush1.bf16.msra.mxu0 0
        %5591 = vmatprep.mubr.bf16.mxu0 %v5216
        %5592 = vmatmul.mubr.bf16.gmra.mrb[0].mxu0 %v5081
        %v5593 = vpop.f32.mrb[0].mxu0
        %v5594 = vadd.f32 0.0, %v5593
        %v5595 = vpop.f32.mrb[0].mxu0
        %v5596 = vpop.f32.mrb[0].mxu0
        %v5597 = vadd.f32 0.0, %v5596
        %v5598 = vpop.f32.mrb[0].mxu0
        %5599 = vmatprep.mubr.bf16.mxu0 %v5219
        %5600 = vmatmul.mubr.bf16.gmra.mrb[0].mxu0 %v5083
        %v5601 = vpop.f32.mrb[0].mxu0
        %v5602 = vadd.f32 0.0, %v5601
        %v5603 = vpop.f32.mrb[0].mxu0
        %v5604 = vpop.f32.mrb[0].mxu0
        %v5605 = vadd.f32 0.0, %v5604
        %v5606 = vpop.f32.mrb[0].mxu0
        %5607 = vmatprep.mubr.bf16.mxu0 %v5222
        %5608 = vmatmul.mubr.bf16.gmra.mrb[0].mxu0 %v5085
        %v5609 = vpop.f32.mrb[0].mxu0
        %v5610 = vadd.f32 0.0, %v5609
        %v5611 = vpop.f32.mrb[0].mxu0
        %v5612 = vpop.f32.mrb[0].mxu0
        %v5613 = vadd.f32 0.0, %v5612
        %v5614 = vpop.f32.mrb[0].mxu0
        %5615 = vmatprep.mubr.bf16.mxu0 %v5225
        %5616 = vmatmul.mubr.bf16.gmra.mrb[0].mxu0 %v5087
        %v5617 = vpop.f32.mrb[0].mxu0
        %v5618 = vadd.f32 0.0, %v5617
        %v5619 = vpop.f32.mrb[0].mxu0
        %v5620 = vpop.f32.mrb[0].mxu0
        %v5621 = vadd.f32 0.0, %v5620
        %v5622 = vpop.f32.mrb[0].mxu0
        %5623 = vmatprep.mubr.bf16.mxu0 %v5228
        %5624 = vmatmul.mubr.bf16.gmra.mrb[0].mxu0 %v5089
        %v5625 = vpop.f32.mrb[0].mxu0
        %v5626 = vadd.f32 0.0, %v5625
        %v5627 = vpop.f32.mrb[0].mxu0
        %v5628 = vpop.f32.mrb[0].mxu0
        %v5629 = vadd.f32 0.0, %v5628
        %v5630 = vpop.f32.mrb[0].mxu0
        %5631 = vmatprep.mubr.bf16.mxu0 %v5231
        %5632 = vmatmul.mubr.bf16.gmra.mrb[0].mxu0 %v5091
        %v5633 = vpop.f32.mrb[0].mxu0
        %v5634 = vadd.f32 0.0, %v5633
        %v5635 = vpop.f32.mrb[0].mxu0
        %v5636 = vpop.f32.mrb[0].mxu0
        %v5637 = vadd.f32 0.0, %v5636
        %v5638 = vpop.f32.mrb[0].mxu0
        %5639 = vmatprep.mubr.bf16.mxu0 %v5234
        %5640 = vmatmul.mubr.bf16.gmra.mrb[0].mxu0 %v5093
        %v5641 = vpop.f32.mrb[0].mxu0
        %v5642 = vadd.f32 0.0, %v5641
        %v5643 = vpop.f32.mrb[0].mxu0
        %v5644 = vpop.f32.mrb[0].mxu0
        %v5645 = vadd.f32 0.0, %v5644
        %v5646 = vpop.f32.mrb[0].mxu0
        %5647 = vmatprep.mubr.bf16.mxu0 %v5237
        %5648 = vmatmul.mubr.bf16.gmra.mrb[0].mxu0 %v5095
        %v5649 = vpop.f32.mrb[0].mxu0
        %v5650 = vadd.f32 0.0, %v5649
        %v5651 = vpop.f32.mrb[0].mxu0
        %v5652 = vpop.f32.mrb[0].mxu0
        %v5653 = vadd.f32 0.0, %v5652
        %v5654 = vpop.f32.mrb[0].mxu0
        %5655 = vmatprep.mubr.bf16.mxu0 %v5240
        %5656 = vmatmul.mubr.bf16.gmra.mrb[0].mxu0 %v5097
        %v5657 = vpop.f32.mrb[0].mxu0
        %v5658 = vadd.f32 0.0, %v5657
        %v5659 = vpop.f32.mrb[0].mxu0
        %v5660 = vpop.f32.mrb[0].mxu0
        %v5661 = vadd.f32 0.0, %v5660
        %v5662 = vpop.f32.mrb[0].mxu0
        %5663 = vmatprep.mubr.bf16.mxu0 %v5243
        %5664 = vmatmul.mubr.bf16.gmra.mrb[0].mxu0 %v5099
        %v5665 = vpop.f32.mrb[0].mxu0
        %v5666 = vadd.f32 0.0, %v5665
        %v5667 = vpop.f32.mrb[0].mxu0
        %v5668 = vpop.f32.mrb[0].mxu0
        %v5669 = vadd.f32 0.0, %v5668
        %v5670 = vpop.f32.mrb[0].mxu0
        %5671 = vmatprep.mubr.bf16.mxu0 %v5246
        %5672 = vmatmul.mubr.bf16.gmra.mrb[0].mxu0 %v5101
        %v5673 = vpop.f32.mrb[0].mxu0
        %v5674 = vadd.f32 0.0, %v5673
        %v5675 = vpop.f32.mrb[0].mxu0
        %v5676 = vpop.f32.mrb[0].mxu0
        %v5677 = vadd.f32 0.0, %v5676
        %v5678 = vpop.f32.mrb[0].mxu0
        %5679 = vmatprep.mubr.bf16.mxu0 %v5249
        %5680 = vmatmul.mubr.bf16.gmra.mrb[0].mxu0 %v5103
        %v5681 = vpop.f32.mrb[0].mxu0
        %v5682 = vadd.f32 0.0, %v5681
        %v5683 = vpop.f32.mrb[0].mxu0
        %v5684 = vpop.f32.mrb[0].mxu0
        %v5685 = vadd.f32 0.0, %v5684
        %v5686 = vpop.f32.mrb[0].mxu0
        %5687 = vmatprep.mubr.bf16.mxu0 %v5252
        %5688 = vmatmul.mubr.bf16.gmra.mrb[0].mxu0 %v5105
        %v5689 = vpop.f32.mrb[0].mxu0
        %v5690 = vadd.f32 0.0, %v5689
        %v5691 = vpop.f32.mrb[0].mxu0
        %v5692 = vpop.f32.mrb[0].mxu0
        %v5693 = vadd.f32 0.0, %v5692
        %v5694 = vpop.f32.mrb[0].mxu0
        %5695 = vmatprep.mubr.bf16.mxu0 %v5255
        %5696 = vmatmul.mubr.bf16.gmra.mrb[0].mxu0 %v5107
        %v5697 = vpop.f32.mrb[0].mxu0
        %v5698 = vadd.f32 0.0, %v5697
        %v5699 = vpop.f32.mrb[0].mxu0
        %v5700 = vpop.f32.mrb[0].mxu0
        %v5701 = vadd.f32 0.0, %v5700
        %v5702 = vpop.f32.mrb[0].mxu0
        %5703 = vmatprep.mubr.bf16.mxu0 %v5258
        %5704 = vmatmul.mubr.bf16.gmra.mrb[0].mxu0 %v5109
        %v5705 = vpop.f32.mrb[0].mxu0
        %v5706 = vadd.f32 0.0, %v5705
        %v5707 = vpop.f32.mrb[0].mxu0
        %v5708 = vpop.f32.mrb[0].mxu0
        %v5709 = vadd.f32 0.0, %v5708
        %v5710 = vpop.f32.mrb[0].mxu0
        %5711 = vmatprep.mubr.bf16.mxu0 %v5557
        %5712 = vmatmul.mubr.bf16.gmra.mrb[0].mxu0 %v5111
        %v5713 = vpop.f32.mrb[0].mxu0
        %v5714 = vadd.f32 0.0, %v5713
        %v5715 = vpop.f32.mrb[0].mxu0
        %v5716 = vpop.f32.mrb[0].mxu0
        %v5717 = vadd.f32 0.0, %v5716
        %v5718 = vpop.f32.mrb[0].mxu0
        %5719 = vdwg.mxu0
        %v5720 = vadd.f32 %v5427, %v5594
        %v5721 = vadd.f32 %v5428, %v5597
        %v5722 = vadd.f32 %v5429, %v5602
        %v5723 = vadd.f32 %v5430, %v5605
        %v5724 = vadd.f32 %v5431, %v5610
        %v5725 = vadd.f32 %v5432, %v5613
        %v5726 = vadd.f32 %v5433, %v5618
        %v5727 = vadd.f32 %v5434, %v5621
        %v5728 = vadd.f32 %v5435, %v5626
        %v5729 = vadd.f32 %v5436, %v5629
        %v5730 = vadd.f32 %v5437, %v5634
        %v5731 = vadd.f32 %v5438, %v5637
        %v5732 = vadd.f32 %v5439, %v5642
        %v5733 = vadd.f32 %v5440, %v5645
        %v5734 = vadd.f32 %v5441, %v5650
        %v5735 = vadd.f32 %v5442, %v5653
        %v5736 = vadd.f32 %v5443, %v5658
        %v5737 = vadd.f32 %v5444, %v5661
        %v5738 = vadd.f32 %v5445, %v5666
        %v5739 = vadd.f32 %v5446, %v5669
        %v5740 = vadd.f32 %v5447, %v5674
        %v5741 = vadd.f32 %v5448, %v5677
        %v5742 = vadd.f32 %v5449, %v5682
        %v5743 = vadd.f32 %v5450, %v5685
        %v5744 = vadd.f32 %v5451, %v5690
        %v5745 = vadd.f32 %v5452, %v5693
        %v5746 = vadd.f32 %v5453, %v5698
        %v5747 = vadd.f32 %v5454, %v5701
        %v5748 = vadd.f32 %v5455, %v5706
        %v5749 = vadd.f32 %v5456, %v5709
        %v5750 = vadd.f32 %v5457, %v5714
        %v5751 = vadd.f32 %v5458, %v5717
        %s5752 = scalar_lea.vmem %s1, 1056
        %v5753 = vld [vmem:[%s5752] sm:$0xf]
        %v5754 = vld [vmem:[%s5752 + $0x4] sm:$0xf]
        %v5755 = vld [vmem:[%s5752 + $0x8] sm:$0xf]
        %v5756 = vld [vmem:[%s5752 + $0xc] sm:$0xf]
        %v5757 = vld [vmem:[%s5752 + $0x10] sm:$0xf]
        %v5758 = vld [vmem:[%s5752 + $0x14] sm:$0xf]
        %v5759 = vld [vmem:[%s5752 + $0x18] sm:$0xf]
        %v5760 = vld [vmem:[%s5752 + $0x1c] sm:$0xf]
        %v5761 = vld [vmem:[%s5752 + $0x20] sm:$0xf]
        %v5762 = vld [vmem:[%s5752 + $0x24] sm:$0xf]
        %v5763 = vld [vmem:[%s5752 + $0x28] sm:$0xf]
        %v5764 = vld [vmem:[%s5752 + $0x2c] sm:$0xf]
        %v5765 = vld [vmem:[%s5752 + $0x30] sm:$0xf]
        %v5766 = vld [vmem:[%s5752 + $0x34] sm:$0xf]
        %v5767 = vld [vmem:[%s5752 + $0x38] sm:$0xf]
        %v5768 = vld [vmem:[%s5752 + $0x3c] sm:$0xf]
        %v5769 = vld [vmem:[%s5752 + $0x40] sm:$0xf]
        %v5770 = vld [vmem:[%s5752 + $0x44] sm:$0xf]
        %v5771 = vld [vmem:[%s5752 + $0x48] sm:$0xf]
        %v5772 = vld [vmem:[%s5752 + $0x4c] sm:$0xf]
        %v5773 = vld [vmem:[%s5752 + $0x50] sm:$0xf]
        %v5774 = vld [vmem:[%s5752 + $0x54] sm:$0xf]
        %v5775 = vld [vmem:[%s5752 + $0x58] sm:$0xf]
        %v5776 = vld [vmem:[%s5752 + $0x5c] sm:$0xf]
        %v5801 = vunpack.c.l.b16 %v5753
        %v5802 = vunpack.c.l.b16 %v5754
        %v5803 = vunpack.c.l.b16 %v5755
        %v5804 = vunpack.c.l.b16 %v5756
        %v5805 = vunpack.c.l.b16 %v5757
        %v5806 = vunpack.c.l.b16 %v5758
        %v5807 = vunpack.c.l.b16 %v5759
        %v5808 = vunpack.c.l.b16 %v5760
        %v5809 = vunpack.c.l.b16 %v5761
        %v5810 = vunpack.c.l.b16 %v5762
        %v5811 = vunpack.c.l.b16 %v5763
        %v5812 = vunpack.c.l.b16 %v5764
        %v5813 = vunpack.c.l.b16 %v5765
        %v5814 = vunpack.c.l.b16 %v5766
        %v5815 = vunpack.c.l.b16 %v5767
        %v5816 = vunpack.c.l.b16 %v5768
        %v5817 = vunpack.c.l.b16 %v5769
        %v5818 = vunpack.c.l.b16 %v5770
        %v5819 = vunpack.c.l.b16 %v5771
        %v5820 = vunpack.c.l.b16 %v5772
        %v5821 = vunpack.c.l.b16 %v5773
        %v5822 = vunpack.c.l.b16 %v5774
        %v5823 = vunpack.c.l.b16 %v5775
        %v5824 = vunpack.c.l.b16 %v5776
        %v5825 = vpack.c.b16 %v5802, %v5801
        %v5826 = vpack.c.b16 %v5804, %v5803
        %v5827 = vpack.c.b16 %v5806, %v5805
        %v5828 = vpack.c.b16 %v5808, %v5807
        %v5829 = vpack.c.b16 %v5810, %v5809
        %v5830 = vpack.c.b16 %v5812, %v5811
        %v5831 = vpack.c.b16 %v5814, %v5813
        %v5832 = vpack.c.b16 %v5816, %v5815
        %v5833 = vpack.c.b16 %v5818, %v5817
        %v5834 = vpack.c.b16 %v5820, %v5819
        %v5835 = vpack.c.b16 %v5822, %v5821
        %v5836 = vpack.c.b16 %v5824, %v5823
        %v5850 = vsel %vm171, %v5114, 0
        %5852 = vmatprep.subr.bf16.mxu0 0
        %5853 = vmatpush1.bf16.msra.mxu0 %v5825
        %5854 = vmatprep.subr.bf16.mxu0 0
        %5855 = vmatpush1.bf16.msra.mxu0 %v5826
        %5856 = vmatprep.subr.bf16.mxu0 0
        %5857 = vmatpush1.bf16.msra.mxu0 %v5827
        %5858 = vmatprep.subr.bf16.mxu0 0
        %5859 = vmatpush1.bf16.msra.mxu0 %v5828
        %5860 = vmatprep.subr.bf16.mxu0 0
        %5861 = vmatpush1.bf16.msra.mxu0 %v5829
        %5862 = vmatprep.subr.bf16.mxu0 0
        %5863 = vmatpush1.bf16.msra.mxu0 %v5830
        %5864 = vmatprep.subr.bf16.mxu0 0
        %5865 = vmatpush1.bf16.msra.mxu0 %v5831
        %5866 = vmatprep.subr.bf16.mxu0 0
        %5867 = vmatpush1.bf16.msra.mxu0 %v5832
        %5868 = vmatprep.subr.bf16.mxu0 0
        %5869 = vmatpush1.bf16.msra.mxu0 %v5833
        %5870 = vmatprep.subr.bf16.mxu0 0
        %5871 = vmatpush1.bf16.msra.mxu0 %v5834
        %5872 = vmatprep.subr.bf16.mxu0 0
        %5873 = vmatpush1.bf16.msra.mxu0 %v5835
        %5874 = vmatprep.subr.bf16.mxu0 0
        %5875 = vmatpush1.bf16.msra.mxu0 %v5836
        %5876 = vmatprep.subr.bf16.mxu0 0
        %5877 = vmatpush1.bf16.msra.mxu0 0
        %5878 = vmatprep.subr.bf16.mxu0 0
        %5879 = vmatpush1.bf16.msra.mxu0 0
        %5880 = vmatprep.subr.bf16.mxu0 0
        %5881 = vmatpush1.bf16.msra.mxu0 0
        %5882 = vmatprep.subr.bf16.mxu0 0
        %5883 = vmatpush1.bf16.msra.mxu0 0
        %5884 = vmatprep.mubr.bf16.mxu0 %v5219
        %5885 = vmatmul.mubr.bf16.gmra.mrb[0].mxu0 %v5083
        %v5886 = vpop.f32.mrb[0].mxu0
        %v5887 = vadd.f32 0.0, %v5886
        %v5888 = vpop.f32.mrb[0].mxu0
        %v5889 = vpop.f32.mrb[0].mxu0
        %v5890 = vadd.f32 0.0, %v5889
        %v5891 = vpop.f32.mrb[0].mxu0
        %5892 = vmatprep.mubr.bf16.mxu0 %v5222
        %5893 = vmatmul.mubr.bf16.gmra.mrb[0].mxu0 %v5085
        %v5894 = vpop.f32.mrb[0].mxu0
        %v5895 = vadd.f32 0.0, %v5894
        %v5896 = vpop.f32.mrb[0].mxu0
        %v5897 = vpop.f32.mrb[0].mxu0
        %v5898 = vadd.f32 0.0, %v5897
        %v5899 = vpop.f32.mrb[0].mxu0
        %5900 = vmatprep.mubr.bf16.mxu0 %v5225
        %5901 = vmatmul.mubr.bf16.gmra.mrb[0].mxu0 %v5087
        %v5902 = vpop.f32.mrb[0].mxu0
        %v5903 = vadd.f32 0.0, %v5902
        %v5904 = vpop.f32.mrb[0].mxu0
        %v5905 = vpop.f32.mrb[0].mxu0
        %v5906 = vadd.f32 0.0, %v5905
        %v5907 = vpop.f32.mrb[0].mxu0
        %5908 = vmatprep.mubr.bf16.mxu0 %v5228
        %5909 = vmatmul.mubr.bf16.gmra.mrb[0].mxu0 %v5089
        %v5910 = vpop.f32.mrb[0].mxu0
        %v5911 = vadd.f32 0.0, %v5910
        %v5912 = vpop.f32.mrb[0].mxu0
        %v5913 = vpop.f32.mrb[0].mxu0
        %v5914 = vadd.f32 0.0, %v5913
        %v5915 = vpop.f32.mrb[0].mxu0
        %5916 = vmatprep.mubr.bf16.mxu0 %v5231
        %5917 = vmatmul.mubr.bf16.gmra.mrb[0].mxu0 %v5091
        %v5918 = vpop.f32.mrb[0].mxu0
        %v5919 = vadd.f32 0.0, %v5918
        %v5920 = vpop.f32.mrb[0].mxu0
        %v5921 = vpop.f32.mrb[0].mxu0
        %v5922 = vadd.f32 0.0, %v5921
        %v5923 = vpop.f32.mrb[0].mxu0
        %5924 = vmatprep.mubr.bf16.mxu0 %v5234
        %5925 = vmatmul.mubr.bf16.gmra.mrb[0].mxu0 %v5093
        %v5926 = vpop.f32.mrb[0].mxu0
        %v5927 = vadd.f32 0.0, %v5926
        %v5928 = vpop.f32.mrb[0].mxu0
        %v5929 = vpop.f32.mrb[0].mxu0
        %v5930 = vadd.f32 0.0, %v5929
        %v5931 = vpop.f32.mrb[0].mxu0
        %5932 = vmatprep.mubr.bf16.mxu0 %v5237
        %5933 = vmatmul.mubr.bf16.gmra.mrb[0].mxu0 %v5095
        %v5934 = vpop.f32.mrb[0].mxu0
        %v5935 = vadd.f32 0.0, %v5934
        %v5936 = vpop.f32.mrb[0].mxu0
        %v5937 = vpop.f32.mrb[0].mxu0
        %v5938 = vadd.f32 0.0, %v5937
        %v5939 = vpop.f32.mrb[0].mxu0
        %5940 = vmatprep.mubr.bf16.mxu0 %v5240
        %5941 = vmatmul.mubr.bf16.gmra.mrb[0].mxu0 %v5097
        %v5942 = vpop.f32.mrb[0].mxu0
        %v5943 = vadd.f32 0.0, %v5942
        %v5944 = vpop.f32.mrb[0].mxu0
        %v5945 = vpop.f32.mrb[0].mxu0
        %v5946 = vadd.f32 0.0, %v5945
        %v5947 = vpop.f32.mrb[0].mxu0
        %5948 = vmatprep.mubr.bf16.mxu0 %v5243
        %5949 = vmatmul.mubr.bf16.gmra.mrb[0].mxu0 %v5099
        %v5950 = vpop.f32.mrb[0].mxu0
        %v5951 = vadd.f32 0.0, %v5950
        %v5952 = vpop.f32.mrb[0].mxu0
        %v5953 = vpop.f32.mrb[0].mxu0
        %v5954 = vadd.f32 0.0, %v5953
        %v5955 = vpop.f32.mrb[0].mxu0
        %5956 = vmatprep.mubr.bf16.mxu0 %v5246
        %5957 = vmatmul.mubr.bf16.gmra.mrb[0].mxu0 %v5101
        %v5958 = vpop.f32.mrb[0].mxu0
        %v5959 = vadd.f32 0.0, %v5958
        %v5960 = vpop.f32.mrb[0].mxu0
        %v5961 = vpop.f32.mrb[0].mxu0
        %v5962 = vadd.f32 0.0, %v5961
        %v5963 = vpop.f32.mrb[0].mxu0
        %5964 = vmatprep.mubr.bf16.mxu0 %v5249
        %5965 = vmatmul.mubr.bf16.gmra.mrb[0].mxu0 %v5103
        %v5966 = vpop.f32.mrb[0].mxu0
        %v5967 = vadd.f32 0.0, %v5966
        %v5968 = vpop.f32.mrb[0].mxu0
        %v5969 = vpop.f32.mrb[0].mxu0
        %v5970 = vadd.f32 0.0, %v5969
        %v5971 = vpop.f32.mrb[0].mxu0
        %5972 = vmatprep.mubr.bf16.mxu0 %v5252
        %5973 = vmatmul.mubr.bf16.gmra.mrb[0].mxu0 %v5105
        %v5974 = vpop.f32.mrb[0].mxu0
        %v5975 = vadd.f32 0.0, %v5974
        %v5976 = vpop.f32.mrb[0].mxu0
        %v5977 = vpop.f32.mrb[0].mxu0
        %v5978 = vadd.f32 0.0, %v5977
        %v5979 = vpop.f32.mrb[0].mxu0
        %5980 = vmatprep.mubr.bf16.mxu0 %v5255
        %5981 = vmatmul.mubr.bf16.gmra.mrb[0].mxu0 %v5107
        %v5982 = vpop.f32.mrb[0].mxu0
        %v5983 = vadd.f32 0.0, %v5982
        %v5984 = vpop.f32.mrb[0].mxu0
        %v5985 = vpop.f32.mrb[0].mxu0
        %v5986 = vadd.f32 0.0, %v5985
        %v5987 = vpop.f32.mrb[0].mxu0
        %5988 = vmatprep.mubr.bf16.mxu0 %v5258
        %5989 = vmatmul.mubr.bf16.gmra.mrb[0].mxu0 %v5109
        %v5990 = vpop.f32.mrb[0].mxu0
        %v5991 = vadd.f32 0.0, %v5990
        %v5992 = vpop.f32.mrb[0].mxu0
        %v5993 = vpop.f32.mrb[0].mxu0
        %v5994 = vadd.f32 0.0, %v5993
        %v5995 = vpop.f32.mrb[0].mxu0
        %5996 = vmatprep.mubr.bf16.mxu0 %v5557
        %5997 = vmatmul.mubr.bf16.gmra.mrb[0].mxu0 %v5111
        %v5998 = vpop.f32.mrb[0].mxu0
        %v5999 = vadd.f32 0.0, %v5998
        %v6000 = vpop.f32.mrb[0].mxu0
        %v6001 = vpop.f32.mrb[0].mxu0
        %v6002 = vadd.f32 0.0, %v6001
        %v6003 = vpop.f32.mrb[0].mxu0
        %6004 = vmatprep.mubr.bf16.mxu0 %v5850
        %6005 = vmatmul.mubr.bf16.gmra.mrb[0].mxu0 %v5113
        %v6006 = vpop.f32.mrb[0].mxu0
        %v6007 = vadd.f32 0.0, %v6006
        %v6008 = vpop.f32.mrb[0].mxu0
        %v6009 = vpop.f32.mrb[0].mxu0
        %v6010 = vadd.f32 0.0, %v6009
        %v6011 = vpop.f32.mrb[0].mxu0
        %6012 = vdwg.mxu0
        %v6013 = vadd.f32 %v5720, %v5887
        %v6014 = vadd.f32 %v5721, %v5890
        %v6015 = vadd.f32 %v5722, %v5895
        %v6016 = vadd.f32 %v5723, %v5898
        %v6017 = vadd.f32 %v5724, %v5903
        %v6018 = vadd.f32 %v5725, %v5906
        %v6019 = vadd.f32 %v5726, %v5911
        %v6020 = vadd.f32 %v5727, %v5914
        %v6021 = vadd.f32 %v5728, %v5919
        %v6022 = vadd.f32 %v5729, %v5922
        %v6023 = vadd.f32 %v5730, %v5927
        %v6024 = vadd.f32 %v5731, %v5930
        %v6025 = vadd.f32 %v5732, %v5935
        %v6026 = vadd.f32 %v5733, %v5938
        %v6027 = vadd.f32 %v5734, %v5943
        %v6028 = vadd.f32 %v5735, %v5946
        %v6029 = vadd.f32 %v5736, %v5951
        %v6030 = vadd.f32 %v5737, %v5954
        %v6031 = vadd.f32 %v5738, %v5959
        %v6032 = vadd.f32 %v5739, %v5962
        %v6033 = vadd.f32 %v5740, %v5967
        %v6034 = vadd.f32 %v5741, %v5970
        %v6035 = vadd.f32 %v5742, %v5975
        %v6036 = vadd.f32 %v5743, %v5978
        %v6037 = vadd.f32 %v5744, %v5983
        %v6038 = vadd.f32 %v5745, %v5986
        %v6039 = vadd.f32 %v5746, %v5991
        %v6040 = vadd.f32 %v5747, %v5994
        %v6041 = vadd.f32 %v5748, %v5999
        %v6042 = vadd.f32 %v5749, %v6002
        %v6043 = vadd.f32 %v5750, %v6007
        %v6044 = vadd.f32 %v5751, %v6010
        %v6045 = vmax.f32 %v6013, 0.0
        %v6046 = vmax.f32 %v6014, 0.0
        %v6047 = vmax.f32 %v6015, 0.0
        %v6048 = vmax.f32 %v6016, 0.0
        %v6049 = vmax.f32 %v6017, 0.0
        %v6050 = vmax.f32 %v6018, 0.0
        %v6051 = vmax.f32 %v6019, 0.0
        %v6052 = vmax.f32 %v6020, 0.0
        %v6053 = vmax.f32 %v6021, 0.0
        %v6054 = vmax.f32 %v6022, 0.0
        %v6055 = vmax.f32 %v6023, 0.0
        %v6056 = vmax.f32 %v6024, 0.0
        %v6057 = vmax.f32 %v6025, 0.0
        %v6058 = vmax.f32 %v6026, 0.0
        %v6059 = vmax.f32 %v6027, 0.0
        %v6060 = vmax.f32 %v6028, 0.0
        %v6061 = vmax.f32 %v6029, 0.0
        %v6062 = vmax.f32 %v6030, 0.0
        %v6063 = vmax.f32 %v6031, 0.0
        %v6064 = vmax.f32 %v6032, 0.0
        %v6065 = vmax.f32 %v6033, 0.0
        %v6066 = vmax.f32 %v6034, 0.0
        %v6067 = vmax.f32 %v6035, 0.0
        %v6068 = vmax.f32 %v6036, 0.0
        %v6069 = vmax.f32 %v6037, 0.0
        %v6070 = vmax.f32 %v6038, 0.0
        %v6071 = vmax.f32 %v6039, 0.0
        %v6072 = vmax.f32 %v6040, 0.0
        %v6073 = vmax.f32 %v6041, 0.0
        %v6074 = vmax.f32 %v6042, 0.0
        %v6075 = vmax.f32 %v6043, 0.0
        %v6076 = vmax.f32 %v6044, 0.0
        %6109 = vrot.lane.b32.xlu0 %v6045, 64
        %v6110 = vpop.permute.xlu0 %6109
        %6111 = vrot.lane.b32.xlu0 %v6046, 64
        %v6112 = vpop.permute.xlu0 %6111
        %6113 = vrot.lane.b32.xlu0 %v6047, 64
        %v6114 = vpop.permute.xlu0 %6113
        %6115 = vrot.lane.b32.xlu0 %v6048, 64
        %v6116 = vpop.permute.xlu0 %6115
        %6117 = vrot.lane.b32.xlu0 %v6049, 64
        %v6118 = vpop.permute.xlu0 %6117
        %6119 = vrot.lane.b32.xlu0 %v6050, 64
        %v6120 = vpop.permute.xlu0 %6119
        %6121 = vrot.lane.b32.xlu0 %v6051, 64
        %v6122 = vpop.permute.xlu0 %6121
        %6123 = vrot.lane.b32.xlu0 %v6052, 64
        %v6124 = vpop.permute.xlu0 %6123
        %6125 = vrot.lane.b32.xlu0 %v6053, 64
        %v6126 = vpop.permute.xlu0 %6125
        %6127 = vrot.lane.b32.xlu0 %v6054, 64
        %v6128 = vpop.permute.xlu0 %6127
        %6129 = vrot.lane.b32.xlu0 %v6055, 64
        %v6130 = vpop.permute.xlu0 %6129
        %6131 = vrot.lane.b32.xlu0 %v6056, 64
        %v6132 = vpop.permute.xlu0 %6131
        %6133 = vrot.lane.b32.xlu0 %v6057, 64
        %v6134 = vpop.permute.xlu0 %6133
        %6135 = vrot.lane.b32.xlu0 %v6058, 64
        %v6136 = vpop.permute.xlu0 %6135
        %6137 = vrot.lane.b32.xlu0 %v6059, 64
        %v6138 = vpop.permute.xlu0 %6137
        %6139 = vrot.lane.b32.xlu0 %v6060, 64
        %v6140 = vpop.permute.xlu0 %6139
        %6141 = vrot.lane.b32.xlu0 %v6061, 64
        %v6142 = vpop.permute.xlu0 %6141
        %6143 = vrot.lane.b32.xlu0 %v6062, 64
        %v6144 = vpop.permute.xlu0 %6143
        %6145 = vrot.lane.b32.xlu0 %v6063, 64
        %v6146 = vpop.permute.xlu0 %6145
        %6147 = vrot.lane.b32.xlu0 %v6064, 64
        %v6148 = vpop.permute.xlu0 %6147
        %6149 = vrot.lane.b32.xlu0 %v6065, 64
        %v6150 = vpop.permute.xlu0 %6149
        %6151 = vrot.lane.b32.xlu0 %v6066, 64
        %v6152 = vpop.permute.xlu0 %6151
        %6153 = vrot.lane.b32.xlu0 %v6067, 64
        %v6154 = vpop.permute.xlu0 %6153
        %6155 = vrot.lane.b32.xlu0 %v6068, 64
        %v6156 = vpop.permute.xlu0 %6155
        %6157 = vrot.lane.b32.xlu0 %v6069, 64
        %v6158 = vpop.permute.xlu0 %6157
        %6159 = vrot.lane.b32.xlu0 %v6070, 64
        %v6160 = vpop.permute.xlu0 %6159
        %6161 = vrot.lane.b32.xlu0 %v6071, 64
        %v6162 = vpop.permute.xlu0 %6161
        %6163 = vrot.lane.b32.xlu0 %v6072, 64
        %v6164 = vpop.permute.xlu0 %6163
        %6165 = vrot.lane.b32.xlu0 %v6073, 64
        %v6166 = vpop.permute.xlu0 %6165
        %6167 = vrot.lane.b32.xlu0 %v6074, 64
        %v6168 = vpop.permute.xlu0 %6167
        %6169 = vrot.lane.b32.xlu0 %v6075, 64
        %v6170 = vpop.permute.xlu0 %6169
        %6171 = vrot.lane.b32.xlu0 %v6076, 64
        %v6172 = vpop.permute.xlu0 %6171
        %6205 = vst.msk [vmem:[%s377] sm:$0xff] %vm378, %v6110
        %6206 = vst.msk [vmem:[%s377 + $0x10] sm:$0xff] %vm378, %v6112
        %6207 = vst.msk [vmem:[%s377 + $0x20] sm:$0xff] %vm378, %v6114
        %6208 = vst.msk [vmem:[%s377 + $0x30] sm:$0xff] %vm378, %v6116
        %6209 = vst.msk [vmem:[%s377 + $0x40] sm:$0xff] %vm378, %v6118
        %6210 = vst.msk [vmem:[%s377 + $0x50] sm:$0xff] %vm378, %v6120
        %6211 = vst.msk [vmem:[%s377 + $0x60] sm:$0xff] %vm378, %v6122
        %6212 = vst.msk [vmem:[%s377 + $0x70] sm:$0xff] %vm378, %v6124
        %6213 = vst.msk [vmem:[%s377 + $0x80] sm:$0xff] %vm378, %v6126
        %6214 = vst.msk [vmem:[%s377 + $0x90] sm:$0xff] %vm378, %v6128
        %6215 = vst.msk [vmem:[%s377 + $0xa0] sm:$0xff] %vm378, %v6130
        %6216 = vst.msk [vmem:[%s377 + $0xb0] sm:$0xff] %vm378, %v6132
        %6217 = vst.msk [vmem:[%s377 + $0xc0] sm:$0xff] %vm378, %v6134
        %6218 = vst.msk [vmem:[%s377 + $0xd0] sm:$0xff] %vm378, %v6136
        %6219 = vst.msk [vmem:[%s377 + $0xe0] sm:$0xff] %vm378, %v6138
        %6220 = vst.msk [vmem:[%s377 + $0xf0] sm:$0xff] %vm378, %v6140
        %6221 = vst.msk [vmem:[%s377 + $0x100] sm:$0xff] %vm378, %v6142
        %6222 = vst.msk [vmem:[%s377 + $0x110] sm:$0xff] %vm378, %v6144
        %6223 = vst.msk [vmem:[%s377 + $0x120] sm:$0xff] %vm378, %v6146
        %6224 = vst.msk [vmem:[%s377 + $0x130] sm:$0xff] %vm378, %v6148
        %6225 = vst.msk [vmem:[%s377 + $0x140] sm:$0xff] %vm378, %v6150
        %6226 = vst.msk [vmem:[%s377 + $0x150] sm:$0xff] %vm378, %v6152
        %6227 = vst.msk [vmem:[%s377 + $0x160] sm:$0xff] %vm378, %v6154
        %6228 = vst.msk [vmem:[%s377 + $0x170] sm:$0xff] %vm378, %v6156
        %6229 = vst.msk [vmem:[%s377 + $0x180] sm:$0xff] %vm378, %v6158
        %6230 = vst.msk [vmem:[%s377 + $0x190] sm:$0xff] %vm378, %v6160
        %6231 = vst.msk [vmem:[%s377 + $0x1a0] sm:$0xff] %vm378, %v6162
        %6232 = vst.msk [vmem:[%s377 + $0x1b0] sm:$0xff] %vm378, %v6164
        %6233 = vst.msk [vmem:[%s377 + $0x1c0] sm:$0xff] %vm378, %v6166
        %6234 = vst.msk [vmem:[%s377 + $0x1d0] sm:$0xff] %vm378, %v6168
        %6235 = vst.msk [vmem:[%s377 + $0x1e0] sm:$0xff] %vm378, %v6170
        %6236 = vst.msk [vmem:[%s377 + $0x1f0] sm:$0xff] %vm378, %v6172
        %v6237 = vrot.slane %v6045, 7
        %v6238 = vrot.slane %v6046, 7
        %v6239 = vsel %vm411, %v6237, %v6238
        %v6240 = vrot.slane %v6047, 7
        %v6241 = vrot.slane %v6048, 7
        %v6242 = vsel %vm411, %v6240, %v6241
        %v6243 = vrot.slane %v6049, 7
        %v6244 = vrot.slane %v6050, 7
        %v6245 = vsel %vm411, %v6243, %v6244
        %v6246 = vrot.slane %v6051, 7
        %v6247 = vrot.slane %v6052, 7
        %v6248 = vsel %vm411, %v6246, %v6247
        %v6249 = vrot.slane %v6053, 7
        %v6250 = vrot.slane %v6054, 7
        %v6251 = vsel %vm411, %v6249, %v6250
        %v6252 = vrot.slane %v6055, 7
        %v6253 = vrot.slane %v6056, 7
        %v6254 = vsel %vm411, %v6252, %v6253
        %v6255 = vrot.slane %v6057, 7
        %v6256 = vrot.slane %v6058, 7
        %v6257 = vsel %vm411, %v6255, %v6256
        %v6258 = vrot.slane %v6059, 7
        %v6259 = vrot.slane %v6060, 7
        %v6260 = vsel %vm411, %v6258, %v6259
        %v6261 = vrot.slane %v6061, 7
        %v6262 = vrot.slane %v6062, 7
        %v6263 = vsel %vm411, %v6261, %v6262
        %v6264 = vrot.slane %v6063, 7
        %v6265 = vrot.slane %v6064, 7
        %v6266 = vsel %vm411, %v6264, %v6265
        %v6267 = vrot.slane %v6065, 7
        %v6268 = vrot.slane %v6066, 7
        %v6269 = vsel %vm411, %v6267, %v6268
        %v6270 = vrot.slane %v6067, 7
        %v6271 = vrot.slane %v6068, 7
        %v6272 = vsel %vm411, %v6270, %v6271
        %v6273 = vrot.slane %v6069, 7
        %v6274 = vrot.slane %v6070, 7
        %v6275 = vsel %vm411, %v6273, %v6274
        %v6276 = vrot.slane %v6071, 7
        %v6277 = vrot.slane %v6072, 7
        %v6278 = vsel %vm411, %v6276, %v6277
        %v6279 = vrot.slane %v6073, 7
        %v6280 = vrot.slane %v6074, 7
        %v6281 = vsel %vm411, %v6279, %v6280
        %v6282 = vrot.slane %v6075, 7
        %v6283 = vrot.slane %v6076, 7
        %v6284 = vsel %vm411, %v6282, %v6283
        %6317 = vst.msk [vmem:[%s377] sm:$0xfe] %vm492, %v6237
        %6318 = vst.msk [vmem:[%s377 + $0x10] sm:$0xff] %vm171, %v6239
        %6319 = vst.msk [vmem:[%s377 + $0x20] sm:$0xfe] %vm492, %v6240
        %6320 = vst.msk [vmem:[%s377 + $0x30] sm:$0xff] %vm171, %v6242
        %6321 = vst.msk [vmem:[%s377 + $0x40] sm:$0xfe] %vm492, %v6243
        %6322 = vst.msk [vmem:[%s377 + $0x50] sm:$0xff] %vm171, %v6245
        %6323 = vst.msk [vmem:[%s377 + $0x60] sm:$0xfe] %vm492, %v6246
        %6324 = vst.msk [vmem:[%s377 + $0x70] sm:$0xff] %vm171, %v6248
        %6325 = vst.msk [vmem:[%s377 + $0x80] sm:$0xfe] %vm492, %v6249
        %6326 = vst.msk [vmem:[%s377 + $0x90] sm:$0xff] %vm171, %v6251
        %6327 = vst.msk [vmem:[%s377 + $0xa0] sm:$0xfe] %vm492, %v6252
        %6328 = vst.msk [vmem:[%s377 + $0xb0] sm:$0xff] %vm171, %v6254
        %6329 = vst.msk [vmem:[%s377 + $0xc0] sm:$0xfe] %vm492, %v6255
        %6330 = vst.msk [vmem:[%s377 + $0xd0] sm:$0xff] %vm171, %v6257
        %6331 = vst.msk [vmem:[%s377 + $0xe0] sm:$0xfe] %vm492, %v6258
        %6332 = vst.msk [vmem:[%s377 + $0xf0] sm:$0xff] %vm171, %v6260
        %6333 = vst.msk [vmem:[%s377 + $0x100] sm:$0xfe] %vm492, %v6261
        %6334 = vst.msk [vmem:[%s377 + $0x110] sm:$0xff] %vm171, %v6263
        %6335 = vst.msk [vmem:[%s377 + $0x120] sm:$0xfe] %vm492, %v6264
        %6336 = vst.msk [vmem:[%s377 + $0x130] sm:$0xff] %vm171, %v6266
        %6337 = vst.msk [vmem:[%s377 + $0x140] sm:$0xfe] %vm492, %v6267
        %6338 = vst.msk [vmem:[%s377 + $0x150] sm:$0xff] %vm171, %v6269
        %6339 = vst.msk [vmem:[%s377 + $0x160] sm:$0xfe] %vm492, %v6270
        %6340 = vst.msk [vmem:[%s377 + $0x170] sm:$0xff] %vm171, %v6272
        %6341 = vst.msk [vmem:[%s377 + $0x180] sm:$0xfe] %vm492, %v6273
        %6342 = vst.msk [vmem:[%s377 + $0x190] sm:$0xff] %vm171, %v6275
        %6343 = vst.msk [vmem:[%s377 + $0x1a0] sm:$0xfe] %vm492, %v6276
        %6344 = vst.msk [vmem:[%s377 + $0x1b0] sm:$0xff] %vm171, %v6278
        %6345 = vst.msk [vmem:[%s377 + $0x1c0] sm:$0xfe] %vm492, %v6279
        %6346 = vst.msk [vmem:[%s377 + $0x1d0] sm:$0xff] %vm171, %v6281
        %6347 = vst.msk [vmem:[%s377 + $0x1e0] sm:$0xfe] %vm492, %v6282
        %6348 = vst.msk [vmem:[%s377 + $0x1f0] sm:$0xff] %vm171, %v6284
        %v6349 = vrot.slane %v6045, 1
        %v6350 = vrot.slane %v6046, 1
        %v6351 = vsel %vm525, %v6349, %v6350
        %v6352 = vrot.slane %v6047, 1
        %v6353 = vrot.slane %v6048, 1
        %v6354 = vsel %vm525, %v6352, %v6353
        %v6355 = vrot.slane %v6049, 1
        %v6356 = vrot.slane %v6050, 1
        %v6357 = vsel %vm525, %v6355, %v6356
        %v6358 = vrot.slane %v6051, 1
        %v6359 = vrot.slane %v6052, 1
        %v6360 = vsel %vm525, %v6358, %v6359
        %v6361 = vrot.slane %v6053, 1
        %v6362 = vrot.slane %v6054, 1
        %v6363 = vsel %vm525, %v6361, %v6362
        %v6364 = vrot.slane %v6055, 1
        %v6365 = vrot.slane %v6056, 1
        %v6366 = vsel %vm525, %v6364, %v6365
        %v6367 = vrot.slane %v6057, 1
        %v6368 = vrot.slane %v6058, 1
        %v6369 = vsel %vm525, %v6367, %v6368
        %v6370 = vrot.slane %v6059, 1
        %v6371 = vrot.slane %v6060, 1
        %v6372 = vsel %vm525, %v6370, %v6371
        %v6373 = vrot.slane %v6061, 1
        %v6374 = vrot.slane %v6062, 1
        %v6375 = vsel %vm525, %v6373, %v6374
        %v6376 = vrot.slane %v6063, 1
        %v6377 = vrot.slane %v6064, 1
        %v6378 = vsel %vm525, %v6376, %v6377
        %v6379 = vrot.slane %v6065, 1
        %v6380 = vrot.slane %v6066, 1
        %v6381 = vsel %vm525, %v6379, %v6380
        %v6382 = vrot.slane %v6067, 1
        %v6383 = vrot.slane %v6068, 1
        %v6384 = vsel %vm525, %v6382, %v6383
        %v6385 = vrot.slane %v6069, 1
        %v6386 = vrot.slane %v6070, 1
        %v6387 = vsel %vm525, %v6385, %v6386
        %v6388 = vrot.slane %v6071, 1
        %v6389 = vrot.slane %v6072, 1
        %v6390 = vsel %vm525, %v6388, %v6389
        %v6391 = vrot.slane %v6073, 1
        %v6392 = vrot.slane %v6074, 1
        %v6393 = vsel %vm525, %v6391, %v6392
        %v6394 = vrot.slane %v6075, 1
        %v6395 = vrot.slane %v6076, 1
        %v6396 = vsel %vm525, %v6394, %v6395
        %6429 = vst.msk [vmem:[%s377 + $0x8] sm:$0xff] %vm171, %v6351
        %6430 = vst.msk [vmem:[%s377 + $0x18] sm:$0x7f] %vm607, %v6350
        %6431 = vst.msk [vmem:[%s377 + $0x28] sm:$0xff] %vm171, %v6354
        %6432 = vst.msk [vmem:[%s377 + $0x38] sm:$0x7f] %vm607, %v6353
        %6433 = vst.msk [vmem:[%s377 + $0x48] sm:$0xff] %vm171, %v6357
        %6434 = vst.msk [vmem:[%s377 + $0x58] sm:$0x7f] %vm607, %v6356
        %6435 = vst.msk [vmem:[%s377 + $0x68] sm:$0xff] %vm171, %v6360
        %6436 = vst.msk [vmem:[%s377 + $0x78] sm:$0x7f] %vm607, %v6359
        %6437 = vst.msk [vmem:[%s377 + $0x88] sm:$0xff] %vm171, %v6363
        %6438 = vst.msk [vmem:[%s377 + $0x98] sm:$0x7f] %vm607, %v6362
        %6439 = vst.msk [vmem:[%s377 + $0xa8] sm:$0xff] %vm171, %v6366
        %6440 = vst.msk [vmem:[%s377 + $0xb8] sm:$0x7f] %vm607, %v6365
        %6441 = vst.msk [vmem:[%s377 + $0xc8] sm:$0xff] %vm171, %v6369
        %6442 = vst.msk [vmem:[%s377 + $0xd8] sm:$0x7f] %vm607, %v6368
        %6443 = vst.msk [vmem:[%s377 + $0xe8] sm:$0xff] %vm171, %v6372
        %6444 = vst.msk [vmem:[%s377 + $0xf8] sm:$0x7f] %vm607, %v6371
        %6445 = vst.msk [vmem:[%s377 + $0x108] sm:$0xff] %vm171, %v6375
        %6446 = vst.msk [vmem:[%s377 + $0x118] sm:$0x7f] %vm607, %v6374
        %6447 = vst.msk [vmem:[%s377 + $0x128] sm:$0xff] %vm171, %v6378
        %6448 = vst.msk [vmem:[%s377 + $0x138] sm:$0x7f] %vm607, %v6377
        %6449 = vst.msk [vmem:[%s377 + $0x148] sm:$0xff] %vm171, %v6381
        %6450 = vst.msk [vmem:[%s377 + $0x158] sm:$0x7f] %vm607, %v6380
        %6451 = vst.msk [vmem:[%s377 + $0x168] sm:$0xff] %vm171, %v6384
        %6452 = vst.msk [vmem:[%s377 + $0x178] sm:$0x7f] %vm607, %v6383
        %6453 = vst.msk [vmem:[%s377 + $0x188] sm:$0xff] %vm171, %v6387
        %6454 = vst.msk [vmem:[%s377 + $0x198] sm:$0x7f] %vm607, %v6386
        %6455 = vst.msk [vmem:[%s377 + $0x1a8] sm:$0xff] %vm171, %v6390
        %6456 = vst.msk [vmem:[%s377 + $0x1b8] sm:$0x7f] %vm607, %v6389
        %6457 = vst.msk [vmem:[%s377 + $0x1c8] sm:$0xff] %vm171, %v6393
        %6458 = vst.msk [vmem:[%s377 + $0x1d8] sm:$0x7f] %vm607, %v6392
        %6459 = vst.msk [vmem:[%s377 + $0x1e8] sm:$0xff] %vm171, %v6396
        %6460 = vst.msk [vmem:[%s377 + $0x1f8] sm:$0x7f] %vm607, %v6395
        %s6461 = scalar_lea.vmem %s2, 4
        %v6462 = vld [vmem:[%s6461] sm:$0x1]
        %v6464 = vlaneseq
        %v6465 = vshrl.u32 %v6464, 7
        %v6466 = vsub.s32 0, %v6465
        %v6467 = vrot.slane %v6462, %v6466
        %v6469 = vadd.f32 %v4589, %v6467
        %v6470 = vadd.f32 %v4590, %v6467
        %v6471 = vadd.f32 %v4591, %v6467
        %v6472 = vadd.f32 %v4592, %v6467
        %v6473 = vadd.f32 %v4593, %v6467
        %v6474 = vadd.f32 %v4594, %v6467
        %v6475 = vadd.f32 %v4595, %v6467
        %v6476 = vadd.f32 %v4596, %v6467
        %v6477 = vadd.f32 %v4597, %v6467
        %v6478 = vadd.f32 %v4598, %v6467
        %v6479 = vadd.f32 %v4599, %v6467
        %v6480 = vadd.f32 %v4600, %v6467
        %v6481 = vadd.f32 %v4601, %v6467
        %v6482 = vadd.f32 %v4602, %v6467
        %v6483 = vadd.f32 %v4603, %v6467
        %v6484 = vadd.f32 %v4604, %v6467
        %v6485 = vadd.f32 %v4605, %v6467
        %v6486 = vadd.f32 %v4606, %v6467
        %v6487 = vadd.f32 %v4607, %v6467
        %v6488 = vadd.f32 %v4608, %v6467
        %v6489 = vadd.f32 %v4609, %v6467
        %v6490 = vadd.f32 %v4610, %v6467
        %v6491 = vadd.f32 %v4611, %v6467
        %v6492 = vadd.f32 %v4612, %v6467
        %v6493 = vadd.f32 %v4613, %v6467
        %v6494 = vadd.f32 %v4614, %v6467
        %v6495 = vadd.f32 %v4615, %v6467
        %v6496 = vadd.f32 %v4616, %v6467
        %v6497 = vadd.f32 %v4617, %v6467
        %v6498 = vadd.f32 %v4618, %v6467
        %v6499 = vadd.f32 %v4619, %v6467
        %v6500 = vadd.f32 %v4620, %v6467
        %v6501 = vld [vmem:[#allocation2] sm:$0xff]
        %v6502 = vld [vmem:[#allocation2 + $0x8] sm:$0xff]
        %v6503 = vld [vmem:[#allocation2 + $0x10] sm:$0xff]
        %v6504 = vld [vmem:[#allocation2 + $0x18] sm:$0xff]
        %v6505 = vld [vmem:[#allocation2 + $0x20] sm:$0xff]
        %v6506 = vld [vmem:[#allocation2 + $0x28] sm:$0xff]
        %v6507 = vld [vmem:[#allocation2 + $0x30] sm:$0xff]
        %v6508 = vld [vmem:[#allocation2 + $0x38] sm:$0xff]
        %v6509 = vld [vmem:[#allocation2 + $0x40] sm:$0xff]
        %v6510 = vld [vmem:[#allocation2 + $0x48] sm:$0xff]
        %v6511 = vld [vmem:[#allocation2 + $0x50] sm:$0xff]
        %v6512 = vld [vmem:[#allocation2 + $0x58] sm:$0xff]
        %v6513 = vld [vmem:[#allocation2 + $0x60] sm:$0xff]
        %v6514 = vld [vmem:[#allocation2 + $0x68] sm:$0xff]
        %v6515 = vld [vmem:[#allocation2 + $0x70] sm:$0xff]
        %v6516 = vld [vmem:[#allocation2 + $0x78] sm:$0xff]
        %v6517 = vld [vmem:[#allocation2 + $0x80] sm:$0xff]
        %v6518 = vld [vmem:[#allocation2 + $0x88] sm:$0xff]
        %v6519 = vld [vmem:[#allocation2 + $0x90] sm:$0xff]
        %v6520 = vld [vmem:[#allocation2 + $0x98] sm:$0xff]
        %v6521 = vld [vmem:[#allocation2 + $0xa0] sm:$0xff]
        %v6522 = vld [vmem:[#allocation2 + $0xa8] sm:$0xff]
        %v6523 = vld [vmem:[#allocation2 + $0xb0] sm:$0xff]
        %v6524 = vld [vmem:[#allocation2 + $0xb8] sm:$0xff]
        %v6525 = vld [vmem:[#allocation2 + $0xc0] sm:$0xff]
        %v6526 = vld [vmem:[#allocation2 + $0xc8] sm:$0xff]
        %v6527 = vld [vmem:[#allocation2 + $0xd0] sm:$0xff]
        %v6528 = vld [vmem:[#allocation2 + $0xd8] sm:$0xff]
        %v6529 = vld [vmem:[#allocation2 + $0xe0] sm:$0xff]
        %v6530 = vld [vmem:[#allocation2 + $0xe8] sm:$0xff]
        %v6531 = vld [vmem:[#allocation2 + $0xf0] sm:$0xff]
        %v6532 = vld [vmem:[#allocation2 + $0xf8] sm:$0xff]
        %v6533 = vld [vmem:[#allocation2 + $0x100] sm:$0xff]
        %v6534 = vld [vmem:[#allocation2 + $0x108] sm:$0xff]
        %v6535 = vld [vmem:[#allocation2 + $0x110] sm:$0xff]
        %v6536 = vld [vmem:[#allocation2 + $0x118] sm:$0xff]
        %v6537 = vld [vmem:[#allocation2 + $0x120] sm:$0xff]
        %v6538 = vld [vmem:[#allocation2 + $0x128] sm:$0xff]
        %v6539 = vld [vmem:[#allocation2 + $0x130] sm:$0xff]
        %v6540 = vld [vmem:[#allocation2 + $0x138] sm:$0xff]
        %v6541 = vld [vmem:[#allocation2 + $0x140] sm:$0xff]
        %v6542 = vld [vmem:[#allocation2 + $0x148] sm:$0xff]
        %v6543 = vld [vmem:[#allocation2 + $0x150] sm:$0xff]
        %v6544 = vld [vmem:[#allocation2 + $0x158] sm:$0xff]
        %v6545 = vld [vmem:[#allocation2 + $0x160] sm:$0xff]
        %v6546 = vld [vmem:[#allocation2 + $0x168] sm:$0xff]
        %v6547 = vld [vmem:[#allocation2 + $0x170] sm:$0xff]
        %v6548 = vld [vmem:[#allocation2 + $0x178] sm:$0xff]
        %v6549 = vld [vmem:[#allocation2 + $0x180] sm:$0xff]
        %v6550 = vld [vmem:[#allocation2 + $0x188] sm:$0xff]
        %v6551 = vld [vmem:[#allocation2 + $0x190] sm:$0xff]
        %v6552 = vld [vmem:[#allocation2 + $0x198] sm:$0xff]
        %v6553 = vld [vmem:[#allocation2 + $0x1a0] sm:$0xff]
        %v6554 = vld [vmem:[#allocation2 + $0x1a8] sm:$0xff]
        %v6555 = vld [vmem:[#allocation2 + $0x1b0] sm:$0xff]
        %v6556 = vld [vmem:[#allocation2 + $0x1b8] sm:$0xff]
        %v6557 = vld [vmem:[#allocation2 + $0x1c0] sm:$0xff]
        %v6558 = vld [vmem:[#allocation2 + $0x1c8] sm:$0xff]
        %v6559 = vld [vmem:[#allocation2 + $0x1d0] sm:$0xff]
        %v6560 = vld [vmem:[#allocation2 + $0x1d8] sm:$0xff]
        %v6561 = vld [vmem:[#allocation2 + $0x1e0] sm:$0xff]
        %v6562 = vld [vmem:[#allocation2 + $0x1e8] sm:$0xff]
        %v6563 = vld [vmem:[#allocation2 + $0x1f0] sm:$0xff]
        %v6564 = vld [vmem:[#allocation2 + $0x1f8] sm:$0xff]
        %v6565 = vld [vmem:[#allocation2 + $0x200] sm:$0xff]
        %v6566 = vld [vmem:[#allocation2 + $0x208] sm:$0xff]
        %v6567 = vld [vmem:[#allocation2 + $0x210] sm:$0xff]
        %v6568 = vld [vmem:[#allocation2 + $0x218] sm:$0xff]
        %v6569 = vld [vmem:[#allocation2 + $0x220] sm:$0xff]
        %v6570 = vld [vmem:[#allocation2 + $0x228] sm:$0xff]
        %v6571 = vld [vmem:[#allocation2 + $0x230] sm:$0xff]
        %v6572 = vld [vmem:[#allocation2 + $0x238] sm:$0xff]
        %v6573 = vpack.c.bf16 %v6503, %v6501
        %v6574 = vpack.c.bf16 %v6504, %v6502
        %v6575 = vpack.c.bf16 %v6507, %v6505
        %v6576 = vpack.c.bf16 %v6508, %v6506
        %v6577 = vpack.c.bf16 %v6511, %v6509
        %v6578 = vpack.c.bf16 %v6512, %v6510
        %v6579 = vpack.c.bf16 %v6515, %v6513
        %v6580 = vpack.c.bf16 %v6516, %v6514
        %v6581 = vpack.c.bf16 %v6519, %v6517
        %v6582 = vpack.c.bf16 %v6520, %v6518
        %v6583 = vpack.c.bf16 %v6523, %v6521
        %v6584 = vpack.c.bf16 %v6524, %v6522
        %v6585 = vpack.c.bf16 %v6527, %v6525
        %v6586 = vpack.c.bf16 %v6528, %v6526
        %v6587 = vpack.c.bf16 %v6531, %v6529
        %v6588 = vpack.c.bf16 %v6532, %v6530
        %v6589 = vpack.c.bf16 %v6535, %v6533
        %v6590 = vpack.c.bf16 %v6536, %v6534
        %v6591 = vpack.c.bf16 %v6539, %v6537
        %v6592 = vpack.c.bf16 %v6540, %v6538
        %v6593 = vpack.c.bf16 %v6543, %v6541
        %v6594 = vpack.c.bf16 %v6544, %v6542
        %v6595 = vpack.c.bf16 %v6547, %v6545
        %v6596 = vpack.c.bf16 %v6548, %v6546
        %v6597 = vpack.c.bf16 %v6551, %v6549
        %v6598 = vpack.c.bf16 %v6552, %v6550
        %v6599 = vpack.c.bf16 %v6555, %v6553
        %v6600 = vpack.c.bf16 %v6556, %v6554
        %v6601 = vpack.c.bf16 %v6559, %v6557
        %v6602 = vpack.c.bf16 %v6560, %v6558
        %v6603 = vpack.c.bf16 %v6563, %v6561
        %v6604 = vpack.c.bf16 %v6564, %v6562
        %v6605 = vpack.c.bf16 %v6567, %v6565
        %v6606 = vpack.c.bf16 %v6568, %v6566
        %v6607 = vpack.c.bf16 %v6571, %v6569
        %v6608 = vpack.c.bf16 %v6572, %v6570
        %s6609 = scalar_lea.vmem %s1, 1152
        %v6610 = vld [vmem:[%s6609] sm:$0xf]
        %v6611 = vld [vmem:[%s6609 + $0x4] sm:$0xf]
        %v6612 = vld [vmem:[%s6609 + $0x8] sm:$0xf]
        %v6613 = vld [vmem:[%s6609 + $0xc] sm:$0xf]
        %v6614 = vld [vmem:[%s6609 + $0x10] sm:$0xf]
        %v6615 = vld [vmem:[%s6609 + $0x14] sm:$0xf]
        %v6616 = vld [vmem:[%s6609 + $0x18] sm:$0xf]
        %v6617 = vld [vmem:[%s6609 + $0x1c] sm:$0xf]
        %v6618 = vld [vmem:[%s6609 + $0x20] sm:$0xf]
        %v6619 = vld [vmem:[%s6609 + $0x24] sm:$0xf]
        %v6620 = vld [vmem:[%s6609 + $0x28] sm:$0xf]
        %v6621 = vld [vmem:[%s6609 + $0x2c] sm:$0xf]
        %v6622 = vld [vmem:[%s6609 + $0x30] sm:$0xf]
        %v6623 = vld [vmem:[%s6609 + $0x34] sm:$0xf]
        %v6624 = vld [vmem:[%s6609 + $0x38] sm:$0xf]
        %v6625 = vld [vmem:[%s6609 + $0x3c] sm:$0xf]
        %v6626 = vld [vmem:[%s6609 + $0x40] sm:$0xf]
        %v6627 = vld [vmem:[%s6609 + $0x44] sm:$0xf]
        %v6628 = vld [vmem:[%s6609 + $0x48] sm:$0xf]
        %v6629 = vld [vmem:[%s6609 + $0x4c] sm:$0xf]
        %v6630 = vld [vmem:[%s6609 + $0x50] sm:$0xf]
        %v6631 = vld [vmem:[%s6609 + $0x54] sm:$0xf]
        %v6632 = vld [vmem:[%s6609 + $0x58] sm:$0xf]
        %v6633 = vld [vmem:[%s6609 + $0x5c] sm:$0xf]
        %v6658 = vunpack.c.l.b16 %v6610
        %v6659 = vunpack.c.l.b16 %v6611
        %v6660 = vunpack.c.l.b16 %v6612
        %v6661 = vunpack.c.l.b16 %v6613
        %v6662 = vunpack.c.l.b16 %v6614
        %v6663 = vunpack.c.l.b16 %v6615
        %v6664 = vunpack.c.l.b16 %v6616
        %v6665 = vunpack.c.l.b16 %v6617
        %v6666 = vunpack.c.l.b16 %v6618
        %v6667 = vunpack.c.l.b16 %v6619
        %v6668 = vunpack.c.l.b16 %v6620
        %v6669 = vunpack.c.l.b16 %v6621
        %v6670 = vunpack.c.l.b16 %v6622
        %v6671 = vunpack.c.l.b16 %v6623
        %v6672 = vunpack.c.l.b16 %v6624
        %v6673 = vunpack.c.l.b16 %v6625
        %v6674 = vunpack.c.l.b16 %v6626
        %v6675 = vunpack.c.l.b16 %v6627
        %v6676 = vunpack.c.l.b16 %v6628
        %v6677 = vunpack.c.l.b16 %v6629
        %v6678 = vunpack.c.l.b16 %v6630
        %v6679 = vunpack.c.l.b16 %v6631
        %v6680 = vunpack.c.l.b16 %v6632
        %v6681 = vunpack.c.l.b16 %v6633
        %v6682 = vpack.c.b16 %v6659, %v6658
        %v6683 = vpack.c.b16 %v6661, %v6660
        %v6684 = vpack.c.b16 %v6663, %v6662
        %v6685 = vpack.c.b16 %v6665, %v6664
        %v6686 = vpack.c.b16 %v6667, %v6666
        %v6687 = vpack.c.b16 %v6669, %v6668
        %v6688 = vpack.c.b16 %v6671, %v6670
        %v6689 = vpack.c.b16 %v6673, %v6672
        %v6690 = vpack.c.b16 %v6675, %v6674
        %v6691 = vpack.c.b16 %v6677, %v6676
        %v6692 = vpack.c.b16 %v6679, %v6678
        %v6693 = vpack.c.b16 %v6681, %v6680
        %v6707 = vsel %vm171, %v6574, 0
        %v6710 = vsel %vm171, %v6576, 0
        %v6713 = vsel %vm171, %v6578, 0
        %v6716 = vsel %vm171, %v6580, 0
        %v6719 = vsel %vm171, %v6582, 0
        %v6722 = vsel %vm171, %v6584, 0
        %v6725 = vsel %vm171, %v6586, 0
        %v6728 = vsel %vm171, %v6588, 0
        %v6731 = vsel %vm171, %v6590, 0
        %v6734 = vsel %vm171, %v6592, 0
        %v6737 = vsel %vm171, %v6594, 0
        %v6740 = vsel %vm171, %v6596, 0
        %v6743 = vsel %vm171, %v6598, 0
        %v6746 = vsel %vm171, %v6600, 0
        %v6749 = vsel %vm171, %v6602, 0
        %v6752 = vsel %vm171, %v6604, 0
        %6754 = vmatprep.subr.bf16.mxu0 0
        %6755 = vmatpush1.bf16.msra.mxu0 %v6682
        %6756 = vmatprep.subr.bf16.mxu0 0
        %6757 = vmatpush1.bf16.msra.mxu0 %v6683
        %6758 = vmatprep.subr.bf16.mxu0 0
        %6759 = vmatpush1.bf16.msra.mxu0 %v6684
        %6760 = vmatprep.subr.bf16.mxu0 0
        %6761 = vmatpush1.bf16.msra.mxu0 %v6685
        %6762 = vmatprep.subr.bf16.mxu0 0
        %6763 = vmatpush1.bf16.msra.mxu0 %v6686
        %6764 = vmatprep.subr.bf16.mxu0 0
        %6765 = vmatpush1.bf16.msra.mxu0 %v6687
        %6766 = vmatprep.subr.bf16.mxu0 0
        %6767 = vmatpush1.bf16.msra.mxu0 %v6688
        %6768 = vmatprep.subr.bf16.mxu0 0
        %6769 = vmatpush1.bf16.msra.mxu0 %v6689
        %6770 = vmatprep.subr.bf16.mxu0 0
        %6771 = vmatpush1.bf16.msra.mxu0 %v6690
        %6772 = vmatprep.subr.bf16.mxu0 0
        %6773 = vmatpush1.bf16.msra.mxu0 %v6691
        %6774 = vmatprep.subr.bf16.mxu0 0
        %6775 = vmatpush1.bf16.msra.mxu0 %v6692
        %6776 = vmatprep.subr.bf16.mxu0 0
        %6777 = vmatpush1.bf16.msra.mxu0 %v6693
        %6778 = vmatprep.subr.bf16.mxu0 0
        %6779 = vmatpush1.bf16.msra.mxu0 0
        %6780 = vmatprep.subr.bf16.mxu0 0
        %6781 = vmatpush1.bf16.msra.mxu0 0
        %6782 = vmatprep.subr.bf16.mxu0 0
        %6783 = vmatpush1.bf16.msra.mxu0 0
        %6784 = vmatprep.subr.bf16.mxu0 0
        %6785 = vmatpush1.bf16.msra.mxu0 0
        %6786 = vmatprep.mubr.bf16.mxu0 %v6707
        %6787 = vmatmul.mubr.bf16.gmra.mrb[0].mxu0 %v6573
        %v6788 = vpop.f32.mrb[0].mxu0
        %v6789 = vadd.f32 0.0, %v6788
        %v6790 = vpop.f32.mrb[0].mxu0
        %v6791 = vpop.f32.mrb[0].mxu0
        %v6792 = vadd.f32 0.0, %v6791
        %v6793 = vpop.f32.mrb[0].mxu0
        %6794 = vmatprep.mubr.bf16.mxu0 %v6710
        %6795 = vmatmul.mubr.bf16.gmra.mrb[0].mxu0 %v6575
        %v6796 = vpop.f32.mrb[0].mxu0
        %v6797 = vadd.f32 0.0, %v6796
        %v6798 = vpop.f32.mrb[0].mxu0
        %v6799 = vpop.f32.mrb[0].mxu0
        %v6800 = vadd.f32 0.0, %v6799
        %v6801 = vpop.f32.mrb[0].mxu0
        %6802 = vmatprep.mubr.bf16.mxu0 %v6713
        %6803 = vmatmul.mubr.bf16.gmra.mrb[0].mxu0 %v6577
        %v6804 = vpop.f32.mrb[0].mxu0
        %v6805 = vadd.f32 0.0, %v6804
        %v6806 = vpop.f32.mrb[0].mxu0
        %v6807 = vpop.f32.mrb[0].mxu0
        %v6808 = vadd.f32 0.0, %v6807
        %v6809 = vpop.f32.mrb[0].mxu0
        %6810 = vmatprep.mubr.bf16.mxu0 %v6716
        %6811 = vmatmul.mubr.bf16.gmra.mrb[0].mxu0 %v6579
        %v6812 = vpop.f32.mrb[0].mxu0
        %v6813 = vadd.f32 0.0, %v6812
        %v6814 = vpop.f32.mrb[0].mxu0
        %v6815 = vpop.f32.mrb[0].mxu0
        %v6816 = vadd.f32 0.0, %v6815
        %v6817 = vpop.f32.mrb[0].mxu0
        %6818 = vmatprep.mubr.bf16.mxu0 %v6719
        %6819 = vmatmul.mubr.bf16.gmra.mrb[0].mxu0 %v6581
        %v6820 = vpop.f32.mrb[0].mxu0
        %v6821 = vadd.f32 0.0, %v6820
        %v6822 = vpop.f32.mrb[0].mxu0
        %v6823 = vpop.f32.mrb[0].mxu0
        %v6824 = vadd.f32 0.0, %v6823
        %v6825 = vpop.f32.mrb[0].mxu0
        %6826 = vmatprep.mubr.bf16.mxu0 %v6722
        %6827 = vmatmul.mubr.bf16.gmra.mrb[0].mxu0 %v6583
        %v6828 = vpop.f32.mrb[0].mxu0
        %v6829 = vadd.f32 0.0, %v6828
        %v6830 = vpop.f32.mrb[0].mxu0
        %v6831 = vpop.f32.mrb[0].mxu0
        %v6832 = vadd.f32 0.0, %v6831
        %v6833 = vpop.f32.mrb[0].mxu0
        %6834 = vmatprep.mubr.bf16.mxu0 %v6725
        %6835 = vmatmul.mubr.bf16.gmra.mrb[0].mxu0 %v6585
        %v6836 = vpop.f32.mrb[0].mxu0
        %v6837 = vadd.f32 0.0, %v6836
        %v6838 = vpop.f32.mrb[0].mxu0
        %v6839 = vpop.f32.mrb[0].mxu0
        %v6840 = vadd.f32 0.0, %v6839
        %v6841 = vpop.f32.mrb[0].mxu0
        %6842 = vmatprep.mubr.bf16.mxu0 %v6728
        %6843 = vmatmul.mubr.bf16.gmra.mrb[0].mxu0 %v6587
        %v6844 = vpop.f32.mrb[0].mxu0
        %v6845 = vadd.f32 0.0, %v6844
        %v6846 = vpop.f32.mrb[0].mxu0
        %v6847 = vpop.f32.mrb[0].mxu0
        %v6848 = vadd.f32 0.0, %v6847
        %v6849 = vpop.f32.mrb[0].mxu0
        %6850 = vmatprep.mubr.bf16.mxu0 %v6731
        %6851 = vmatmul.mubr.bf16.gmra.mrb[0].mxu0 %v6589
        %v6852 = vpop.f32.mrb[0].mxu0
        %v6853 = vadd.f32 0.0, %v6852
        %v6854 = vpop.f32.mrb[0].mxu0
        %v6855 = vpop.f32.mrb[0].mxu0
        %v6856 = vadd.f32 0.0, %v6855
        %v6857 = vpop.f32.mrb[0].mxu0
        %6858 = vmatprep.mubr.bf16.mxu0 %v6734
        %6859 = vmatmul.mubr.bf16.gmra.mrb[0].mxu0 %v6591
        %v6860 = vpop.f32.mrb[0].mxu0
        %v6861 = vadd.f32 0.0, %v6860
        %v6862 = vpop.f32.mrb[0].mxu0
        %v6863 = vpop.f32.mrb[0].mxu0
        %v6864 = vadd.f32 0.0, %v6863
        %v6865 = vpop.f32.mrb[0].mxu0
        %6866 = vmatprep.mubr.bf16.mxu0 %v6737
        %6867 = vmatmul.mubr.bf16.gmra.mrb[0].mxu0 %v6593
        %v6868 = vpop.f32.mrb[0].mxu0
        %v6869 = vadd.f32 0.0, %v6868
        %v6870 = vpop.f32.mrb[0].mxu0
        %v6871 = vpop.f32.mrb[0].mxu0
        %v6872 = vadd.f32 0.0, %v6871
        %v6873 = vpop.f32.mrb[0].mxu0
        %6874 = vmatprep.mubr.bf16.mxu0 %v6740
        %6875 = vmatmul.mubr.bf16.gmra.mrb[0].mxu0 %v6595
        %v6876 = vpop.f32.mrb[0].mxu0
        %v6877 = vadd.f32 0.0, %v6876
        %v6878 = vpop.f32.mrb[0].mxu0
        %v6879 = vpop.f32.mrb[0].mxu0
        %v6880 = vadd.f32 0.0, %v6879
        %v6881 = vpop.f32.mrb[0].mxu0
        %6882 = vmatprep.mubr.bf16.mxu0 %v6743
        %6883 = vmatmul.mubr.bf16.gmra.mrb[0].mxu0 %v6597
        %v6884 = vpop.f32.mrb[0].mxu0
        %v6885 = vadd.f32 0.0, %v6884
        %v6886 = vpop.f32.mrb[0].mxu0
        %v6887 = vpop.f32.mrb[0].mxu0
        %v6888 = vadd.f32 0.0, %v6887
        %v6889 = vpop.f32.mrb[0].mxu0
        %6890 = vmatprep.mubr.bf16.mxu0 %v6746
        %6891 = vmatmul.mubr.bf16.gmra.mrb[0].mxu0 %v6599
        %v6892 = vpop.f32.mrb[0].mxu0
        %v6893 = vadd.f32 0.0, %v6892
        %v6894 = vpop.f32.mrb[0].mxu0
        %v6895 = vpop.f32.mrb[0].mxu0
        %v6896 = vadd.f32 0.0, %v6895
        %v6897 = vpop.f32.mrb[0].mxu0
        %6898 = vmatprep.mubr.bf16.mxu0 %v6749
        %6899 = vmatmul.mubr.bf16.gmra.mrb[0].mxu0 %v6601
        %v6900 = vpop.f32.mrb[0].mxu0
        %v6901 = vadd.f32 0.0, %v6900
        %v6902 = vpop.f32.mrb[0].mxu0
        %v6903 = vpop.f32.mrb[0].mxu0
        %v6904 = vadd.f32 0.0, %v6903
        %v6905 = vpop.f32.mrb[0].mxu0
        %6906 = vmatprep.mubr.bf16.mxu0 %v6752
        %6907 = vmatmul.mubr.bf16.gmra.mrb[0].mxu0 %v6603
        %v6908 = vpop.f32.mrb[0].mxu0
        %v6909 = vadd.f32 0.0, %v6908
        %v6910 = vpop.f32.mrb[0].mxu0
        %v6911 = vpop.f32.mrb[0].mxu0
        %v6912 = vadd.f32 0.0, %v6911
        %v6913 = vpop.f32.mrb[0].mxu0
        %6914 = vdwg.mxu0
        %v6915 = vadd.f32 %v6469, %v6789
        %v6916 = vadd.f32 %v6470, %v6792
        %v6917 = vadd.f32 %v6471, %v6797
        %v6918 = vadd.f32 %v6472, %v6800
        %v6919 = vadd.f32 %v6473, %v6805
        %v6920 = vadd.f32 %v6474, %v6808
        %v6921 = vadd.f32 %v6475, %v6813
        %v6922 = vadd.f32 %v6476, %v6816
        %v6923 = vadd.f32 %v6477, %v6821
        %v6924 = vadd.f32 %v6478, %v6824
        %v6925 = vadd.f32 %v6479, %v6829
        %v6926 = vadd.f32 %v6480, %v6832
        %v6927 = vadd.f32 %v6481, %v6837
        %v6928 = vadd.f32 %v6482, %v6840
        %v6929 = vadd.f32 %v6483, %v6845
        %v6930 = vadd.f32 %v6484, %v6848
        %v6931 = vadd.f32 %v6485, %v6853
        %v6932 = vadd.f32 %v6486, %v6856
        %v6933 = vadd.f32 %v6487, %v6861
        %v6934 = vadd.f32 %v6488, %v6864
        %v6935 = vadd.f32 %v6489, %v6869
        %v6936 = vadd.f32 %v6490, %v6872
        %v6937 = vadd.f32 %v6491, %v6877
        %v6938 = vadd.f32 %v6492, %v6880
        %v6939 = vadd.f32 %v6493, %v6885
        %v6940 = vadd.f32 %v6494, %v6888
        %v6941 = vadd.f32 %v6495, %v6893
        %v6942 = vadd.f32 %v6496, %v6896
        %v6943 = vadd.f32 %v6497, %v6901
        %v6944 = vadd.f32 %v6498, %v6904
        %v6945 = vadd.f32 %v6499, %v6909
        %v6946 = vadd.f32 %v6500, %v6912
        %s6947 = scalar_lea.vmem %s1, 1248
        %v6948 = vld [vmem:[%s6947] sm:$0xf]
        %v6949 = vld [vmem:[%s6947 + $0x4] sm:$0xf]
        %v6950 = vld [vmem:[%s6947 + $0x8] sm:$0xf]
        %v6951 = vld [vmem:[%s6947 + $0xc] sm:$0xf]
        %v6952 = vld [vmem:[%s6947 + $0x10] sm:$0xf]
        %v6953 = vld [vmem:[%s6947 + $0x14] sm:$0xf]
        %v6954 = vld [vmem:[%s6947 + $0x18] sm:$0xf]
        %v6955 = vld [vmem:[%s6947 + $0x1c] sm:$0xf]
        %v6956 = vld [vmem:[%s6947 + $0x20] sm:$0xf]
        %v6957 = vld [vmem:[%s6947 + $0x24] sm:$0xf]
        %v6958 = vld [vmem:[%s6947 + $0x28] sm:$0xf]
        %v6959 = vld [vmem:[%s6947 + $0x2c] sm:$0xf]
        %v6960 = vld [vmem:[%s6947 + $0x30] sm:$0xf]
        %v6961 = vld [vmem:[%s6947 + $0x34] sm:$0xf]
        %v6962 = vld [vmem:[%s6947 + $0x38] sm:$0xf]
        %v6963 = vld [vmem:[%s6947 + $0x3c] sm:$0xf]
        %v6964 = vld [vmem:[%s6947 + $0x40] sm:$0xf]
        %v6965 = vld [vmem:[%s6947 + $0x44] sm:$0xf]
        %v6966 = vld [vmem:[%s6947 + $0x48] sm:$0xf]
        %v6967 = vld [vmem:[%s6947 + $0x4c] sm:$0xf]
        %v6968 = vld [vmem:[%s6947 + $0x50] sm:$0xf]
        %v6969 = vld [vmem:[%s6947 + $0x54] sm:$0xf]
        %v6970 = vld [vmem:[%s6947 + $0x58] sm:$0xf]
        %v6971 = vld [vmem:[%s6947 + $0x5c] sm:$0xf]
        %v6996 = vunpack.c.l.b16 %v6948
        %v6997 = vunpack.c.l.b16 %v6949
        %v6998 = vunpack.c.l.b16 %v6950
        %v6999 = vunpack.c.l.b16 %v6951
        %v7000 = vunpack.c.l.b16 %v6952
        %v7001 = vunpack.c.l.b16 %v6953
        %v7002 = vunpack.c.l.b16 %v6954
        %v7003 = vunpack.c.l.b16 %v6955
        %v7004 = vunpack.c.l.b16 %v6956
        %v7005 = vunpack.c.l.b16 %v6957
        %v7006 = vunpack.c.l.b16 %v6958
        %v7007 = vunpack.c.l.b16 %v6959
        %v7008 = vunpack.c.l.b16 %v6960
        %v7009 = vunpack.c.l.b16 %v6961
        %v7010 = vunpack.c.l.b16 %v6962
        %v7011 = vunpack.c.l.b16 %v6963
        %v7012 = vunpack.c.l.b16 %v6964
        %v7013 = vunpack.c.l.b16 %v6965
        %v7014 = vunpack.c.l.b16 %v6966
        %v7015 = vunpack.c.l.b16 %v6967
        %v7016 = vunpack.c.l.b16 %v6968
        %v7017 = vunpack.c.l.b16 %v6969
        %v7018 = vunpack.c.l.b16 %v6970
        %v7019 = vunpack.c.l.b16 %v6971
        %v7020 = vpack.c.b16 %v6997, %v6996
        %v7021 = vpack.c.b16 %v6999, %v6998
        %v7022 = vpack.c.b16 %v7001, %v7000
        %v7023 = vpack.c.b16 %v7003, %v7002
        %v7024 = vpack.c.b16 %v7005, %v7004
        %v7025 = vpack.c.b16 %v7007, %v7006
        %v7026 = vpack.c.b16 %v7009, %v7008
        %v7027 = vpack.c.b16 %v7011, %v7010
        %v7028 = vpack.c.b16 %v7013, %v7012
        %v7029 = vpack.c.b16 %v7015, %v7014
        %v7030 = vpack.c.b16 %v7017, %v7016
        %v7031 = vpack.c.b16 %v7019, %v7018
        %v7045 = vsel %vm171, %v6606, 0
        %7047 = vmatprep.subr.bf16.mxu0 0
        %7048 = vmatpush1.bf16.msra.mxu0 %v7020
        %7049 = vmatprep.subr.bf16.mxu0 0
        %7050 = vmatpush1.bf16.msra.mxu0 %v7021
        %7051 = vmatprep.subr.bf16.mxu0 0
        %7052 = vmatpush1.bf16.msra.mxu0 %v7022
        %7053 = vmatprep.subr.bf16.mxu0 0
        %7054 = vmatpush1.bf16.msra.mxu0 %v7023
        %7055 = vmatprep.subr.bf16.mxu0 0
        %7056 = vmatpush1.bf16.msra.mxu0 %v7024
        %7057 = vmatprep.subr.bf16.mxu0 0
        %7058 = vmatpush1.bf16.msra.mxu0 %v7025
        %7059 = vmatprep.subr.bf16.mxu0 0
        %7060 = vmatpush1.bf16.msra.mxu0 %v7026
        %7061 = vmatprep.subr.bf16.mxu0 0
        %7062 = vmatpush1.bf16.msra.mxu0 %v7027
        %7063 = vmatprep.subr.bf16.mxu0 0
        %7064 = vmatpush1.bf16.msra.mxu0 %v7028
        %7065 = vmatprep.subr.bf16.mxu0 0
        %7066 = vmatpush1.bf16.msra.mxu0 %v7029
        %7067 = vmatprep.subr.bf16.mxu0 0
        %7068 = vmatpush1.bf16.msra.mxu0 %v7030
        %7069 = vmatprep.subr.bf16.mxu0 0
        %7070 = vmatpush1.bf16.msra.mxu0 %v7031
        %7071 = vmatprep.subr.bf16.mxu0 0
        %7072 = vmatpush1.bf16.msra.mxu0 0
        %7073 = vmatprep.subr.bf16.mxu0 0
        %7074 = vmatpush1.bf16.msra.mxu0 0
        %7075 = vmatprep.subr.bf16.mxu0 0
        %7076 = vmatpush1.bf16.msra.mxu0 0
        %7077 = vmatprep.subr.bf16.mxu0 0
        %7078 = vmatpush1.bf16.msra.mxu0 0
        %7079 = vmatprep.mubr.bf16.mxu0 %v6710
        %7080 = vmatmul.mubr.bf16.gmra.mrb[0].mxu0 %v6575
        %v7081 = vpop.f32.mrb[0].mxu0
        %v7082 = vadd.f32 0.0, %v7081
        %v7083 = vpop.f32.mrb[0].mxu0
        %v7084 = vpop.f32.mrb[0].mxu0
        %v7085 = vadd.f32 0.0, %v7084
        %v7086 = vpop.f32.mrb[0].mxu0
        %7087 = vmatprep.mubr.bf16.mxu0 %v6713
        %7088 = vmatmul.mubr.bf16.gmra.mrb[0].mxu0 %v6577
        %v7089 = vpop.f32.mrb[0].mxu0
        %v7090 = vadd.f32 0.0, %v7089
        %v7091 = vpop.f32.mrb[0].mxu0
        %v7092 = vpop.f32.mrb[0].mxu0
        %v7093 = vadd.f32 0.0, %v7092
        %v7094 = vpop.f32.mrb[0].mxu0
        %7095 = vmatprep.mubr.bf16.mxu0 %v6716
        %7096 = vmatmul.mubr.bf16.gmra.mrb[0].mxu0 %v6579
        %v7097 = vpop.f32.mrb[0].mxu0
        %v7098 = vadd.f32 0.0, %v7097
        %v7099 = vpop.f32.mrb[0].mxu0
        %v7100 = vpop.f32.mrb[0].mxu0
        %v7101 = vadd.f32 0.0, %v7100
        %v7102 = vpop.f32.mrb[0].mxu0
        %7103 = vmatprep.mubr.bf16.mxu0 %v6719
        %7104 = vmatmul.mubr.bf16.gmra.mrb[0].mxu0 %v6581
        %v7105 = vpop.f32.mrb[0].mxu0
        %v7106 = vadd.f32 0.0, %v7105
        %v7107 = vpop.f32.mrb[0].mxu0
        %v7108 = vpop.f32.mrb[0].mxu0
        %v7109 = vadd.f32 0.0, %v7108
        %v7110 = vpop.f32.mrb[0].mxu0
        %7111 = vmatprep.mubr.bf16.mxu0 %v6722
        %7112 = vmatmul.mubr.bf16.gmra.mrb[0].mxu0 %v6583
        %v7113 = vpop.f32.mrb[0].mxu0
        %v7114 = vadd.f32 0.0, %v7113
        %v7115 = vpop.f32.mrb[0].mxu0
        %v7116 = vpop.f32.mrb[0].mxu0
        %v7117 = vadd.f32 0.0, %v7116
        %v7118 = vpop.f32.mrb[0].mxu0
        %7119 = vmatprep.mubr.bf16.mxu0 %v6725
        %7120 = vmatmul.mubr.bf16.gmra.mrb[0].mxu0 %v6585
        %v7121 = vpop.f32.mrb[0].mxu0
        %v7122 = vadd.f32 0.0, %v7121
        %v7123 = vpop.f32.mrb[0].mxu0
        %v7124 = vpop.f32.mrb[0].mxu0
        %v7125 = vadd.f32 0.0, %v7124
        %v7126 = vpop.f32.mrb[0].mxu0
        %7127 = vmatprep.mubr.bf16.mxu0 %v6728
        %7128 = vmatmul.mubr.bf16.gmra.mrb[0].mxu0 %v6587
        %v7129 = vpop.f32.mrb[0].mxu0
        %v7130 = vadd.f32 0.0, %v7129
        %v7131 = vpop.f32.mrb[0].mxu0
        %v7132 = vpop.f32.mrb[0].mxu0
        %v7133 = vadd.f32 0.0, %v7132
        %v7134 = vpop.f32.mrb[0].mxu0
        %7135 = vmatprep.mubr.bf16.mxu0 %v6731
        %7136 = vmatmul.mubr.bf16.gmra.mrb[0].mxu0 %v6589
        %v7137 = vpop.f32.mrb[0].mxu0
        %v7138 = vadd.f32 0.0, %v7137
        %v7139 = vpop.f32.mrb[0].mxu0
        %v7140 = vpop.f32.mrb[0].mxu0
        %v7141 = vadd.f32 0.0, %v7140
        %v7142 = vpop.f32.mrb[0].mxu0
        %7143 = vmatprep.mubr.bf16.mxu0 %v6734
        %7144 = vmatmul.mubr.bf16.gmra.mrb[0].mxu0 %v6591
        %v7145 = vpop.f32.mrb[0].mxu0
        %v7146 = vadd.f32 0.0, %v7145
        %v7147 = vpop.f32.mrb[0].mxu0
        %v7148 = vpop.f32.mrb[0].mxu0
        %v7149 = vadd.f32 0.0, %v7148
        %v7150 = vpop.f32.mrb[0].mxu0
        %7151 = vmatprep.mubr.bf16.mxu0 %v6737
        %7152 = vmatmul.mubr.bf16.gmra.mrb[0].mxu0 %v6593
        %v7153 = vpop.f32.mrb[0].mxu0
        %v7154 = vadd.f32 0.0, %v7153
        %v7155 = vpop.f32.mrb[0].mxu0
        %v7156 = vpop.f32.mrb[0].mxu0
        %v7157 = vadd.f32 0.0, %v7156
        %v7158 = vpop.f32.mrb[0].mxu0
        %7159 = vmatprep.mubr.bf16.mxu0 %v6740
        %7160 = vmatmul.mubr.bf16.gmra.mrb[0].mxu0 %v6595
        %v7161 = vpop.f32.mrb[0].mxu0
        %v7162 = vadd.f32 0.0, %v7161
        %v7163 = vpop.f32.mrb[0].mxu0
        %v7164 = vpop.f32.mrb[0].mxu0
        %v7165 = vadd.f32 0.0, %v7164
        %v7166 = vpop.f32.mrb[0].mxu0
        %7167 = vmatprep.mubr.bf16.mxu0 %v6743
        %7168 = vmatmul.mubr.bf16.gmra.mrb[0].mxu0 %v6597
        %v7169 = vpop.f32.mrb[0].mxu0
        %v7170 = vadd.f32 0.0, %v7169
        %v7171 = vpop.f32.mrb[0].mxu0
        %v7172 = vpop.f32.mrb[0].mxu0
        %v7173 = vadd.f32 0.0, %v7172
        %v7174 = vpop.f32.mrb[0].mxu0
        %7175 = vmatprep.mubr.bf16.mxu0 %v6746
        %7176 = vmatmul.mubr.bf16.gmra.mrb[0].mxu0 %v6599
        %v7177 = vpop.f32.mrb[0].mxu0
        %v7178 = vadd.f32 0.0, %v7177
        %v7179 = vpop.f32.mrb[0].mxu0
        %v7180 = vpop.f32.mrb[0].mxu0
        %v7181 = vadd.f32 0.0, %v7180
        %v7182 = vpop.f32.mrb[0].mxu0
        %7183 = vmatprep.mubr.bf16.mxu0 %v6749
        %7184 = vmatmul.mubr.bf16.gmra.mrb[0].mxu0 %v6601
        %v7185 = vpop.f32.mrb[0].mxu0
        %v7186 = vadd.f32 0.0, %v7185
        %v7187 = vpop.f32.mrb[0].mxu0
        %v7188 = vpop.f32.mrb[0].mxu0
        %v7189 = vadd.f32 0.0, %v7188
        %v7190 = vpop.f32.mrb[0].mxu0
        %7191 = vmatprep.mubr.bf16.mxu0 %v6752
        %7192 = vmatmul.mubr.bf16.gmra.mrb[0].mxu0 %v6603
        %v7193 = vpop.f32.mrb[0].mxu0
        %v7194 = vadd.f32 0.0, %v7193
        %v7195 = vpop.f32.mrb[0].mxu0
        %v7196 = vpop.f32.mrb[0].mxu0
        %v7197 = vadd.f32 0.0, %v7196
        %v7198 = vpop.f32.mrb[0].mxu0
        %7199 = vmatprep.mubr.bf16.mxu0 %v7045
        %7200 = vmatmul.mubr.bf16.gmra.mrb[0].mxu0 %v6605
        %v7201 = vpop.f32.mrb[0].mxu0
        %v7202 = vadd.f32 0.0, %v7201
        %v7203 = vpop.f32.mrb[0].mxu0
        %v7204 = vpop.f32.mrb[0].mxu0
        %v7205 = vadd.f32 0.0, %v7204
        %v7206 = vpop.f32.mrb[0].mxu0
        %7207 = vdwg.mxu0
        %v7208 = vadd.f32 %v6915, %v7082
        %v7209 = vadd.f32 %v6916, %v7085
        %v7210 = vadd.f32 %v6917, %v7090
        %v7211 = vadd.f32 %v6918, %v7093
        %v7212 = vadd.f32 %v6919, %v7098
        %v7213 = vadd.f32 %v6920, %v7101
        %v7214 = vadd.f32 %v6921, %v7106
        %v7215 = vadd.f32 %v6922, %v7109
        %v7216 = vadd.f32 %v6923, %v7114
        %v7217 = vadd.f32 %v6924, %v7117
        %v7218 = vadd.f32 %v6925, %v7122
        %v7219 = vadd.f32 %v6926, %v7125
        %v7220 = vadd.f32 %v6927, %v7130
        %v7221 = vadd.f32 %v6928, %v7133
        %v7222 = vadd.f32 %v6929, %v7138
        %v7223 = vadd.f32 %v6930, %v7141
        %v7224 = vadd.f32 %v6931, %v7146
        %v7225 = vadd.f32 %v6932, %v7149
        %v7226 = vadd.f32 %v6933, %v7154
        %v7227 = vadd.f32 %v6934, %v7157
        %v7228 = vadd.f32 %v6935, %v7162
        %v7229 = vadd.f32 %v6936, %v7165
        %v7230 = vadd.f32 %v6937, %v7170
        %v7231 = vadd.f32 %v6938, %v7173
        %v7232 = vadd.f32 %v6939, %v7178
        %v7233 = vadd.f32 %v6940, %v7181
        %v7234 = vadd.f32 %v6941, %v7186
        %v7235 = vadd.f32 %v6942, %v7189
        %v7236 = vadd.f32 %v6943, %v7194
        %v7237 = vadd.f32 %v6944, %v7197
        %v7238 = vadd.f32 %v6945, %v7202
        %v7239 = vadd.f32 %v6946, %v7205
        %s7240 = scalar_lea.vmem %s1, 1344
        %v7241 = vld [vmem:[%s7240] sm:$0xf]
        %v7242 = vld [vmem:[%s7240 + $0x4] sm:$0xf]
        %v7243 = vld [vmem:[%s7240 + $0x8] sm:$0xf]
        %v7244 = vld [vmem:[%s7240 + $0xc] sm:$0xf]
        %v7245 = vld [vmem:[%s7240 + $0x10] sm:$0xf]
        %v7246 = vld [vmem:[%s7240 + $0x14] sm:$0xf]
        %v7247 = vld [vmem:[%s7240 + $0x18] sm:$0xf]
        %v7248 = vld [vmem:[%s7240 + $0x1c] sm:$0xf]
        %v7249 = vld [vmem:[%s7240 + $0x20] sm:$0xf]
        %v7250 = vld [vmem:[%s7240 + $0x24] sm:$0xf]
        %v7251 = vld [vmem:[%s7240 + $0x28] sm:$0xf]
        %v7252 = vld [vmem:[%s7240 + $0x2c] sm:$0xf]
        %v7253 = vld [vmem:[%s7240 + $0x30] sm:$0xf]
        %v7254 = vld [vmem:[%s7240 + $0x34] sm:$0xf]
        %v7255 = vld [vmem:[%s7240 + $0x38] sm:$0xf]
        %v7256 = vld [vmem:[%s7240 + $0x3c] sm:$0xf]
        %v7257 = vld [vmem:[%s7240 + $0x40] sm:$0xf]
        %v7258 = vld [vmem:[%s7240 + $0x44] sm:$0xf]
        %v7259 = vld [vmem:[%s7240 + $0x48] sm:$0xf]
        %v7260 = vld [vmem:[%s7240 + $0x4c] sm:$0xf]
        %v7261 = vld [vmem:[%s7240 + $0x50] sm:$0xf]
        %v7262 = vld [vmem:[%s7240 + $0x54] sm:$0xf]
        %v7263 = vld [vmem:[%s7240 + $0x58] sm:$0xf]
        %v7264 = vld [vmem:[%s7240 + $0x5c] sm:$0xf]
        %v7289 = vunpack.c.l.b16 %v7241
        %v7290 = vunpack.c.l.b16 %v7242
        %v7291 = vunpack.c.l.b16 %v7243
        %v7292 = vunpack.c.l.b16 %v7244
        %v7293 = vunpack.c.l.b16 %v7245
        %v7294 = vunpack.c.l.b16 %v7246
        %v7295 = vunpack.c.l.b16 %v7247
        %v7296 = vunpack.c.l.b16 %v7248
        %v7297 = vunpack.c.l.b16 %v7249
        %v7298 = vunpack.c.l.b16 %v7250
        %v7299 = vunpack.c.l.b16 %v7251
        %v7300 = vunpack.c.l.b16 %v7252
        %v7301 = vunpack.c.l.b16 %v7253
        %v7302 = vunpack.c.l.b16 %v7254
        %v7303 = vunpack.c.l.b16 %v7255
        %v7304 = vunpack.c.l.b16 %v7256
        %v7305 = vunpack.c.l.b16 %v7257
        %v7306 = vunpack.c.l.b16 %v7258
        %v7307 = vunpack.c.l.b16 %v7259
        %v7308 = vunpack.c.l.b16 %v7260
        %v7309 = vunpack.c.l.b16 %v7261
        %v7310 = vunpack.c.l.b16 %v7262
        %v7311 = vunpack.c.l.b16 %v7263
        %v7312 = vunpack.c.l.b16 %v7264
        %v7313 = vpack.c.b16 %v7290, %v7289
        %v7314 = vpack.c.b16 %v7292, %v7291
        %v7315 = vpack.c.b16 %v7294, %v7293
        %v7316 = vpack.c.b16 %v7296, %v7295
        %v7317 = vpack.c.b16 %v7298, %v7297
        %v7318 = vpack.c.b16 %v7300, %v7299
        %v7319 = vpack.c.b16 %v7302, %v7301
        %v7320 = vpack.c.b16 %v7304, %v7303
        %v7321 = vpack.c.b16 %v7306, %v7305
        %v7322 = vpack.c.b16 %v7308, %v7307
        %v7323 = vpack.c.b16 %v7310, %v7309
        %v7324 = vpack.c.b16 %v7312, %v7311
        %v7338 = vsel %vm171, %v6608, 0
        %7340 = vmatprep.subr.bf16.mxu0 0
        %7341 = vmatpush1.bf16.msra.mxu0 %v7313
        %7342 = vmatprep.subr.bf16.mxu0 0
        %7343 = vmatpush1.bf16.msra.mxu0 %v7314
        %7344 = vmatprep.subr.bf16.mxu0 0
        %7345 = vmatpush1.bf16.msra.mxu0 %v7315
        %7346 = vmatprep.subr.bf16.mxu0 0
        %7347 = vmatpush1.bf16.msra.mxu0 %v7316
        %7348 = vmatprep.subr.bf16.mxu0 0
        %7349 = vmatpush1.bf16.msra.mxu0 %v7317
        %7350 = vmatprep.subr.bf16.mxu0 0
        %7351 = vmatpush1.bf16.msra.mxu0 %v7318
        %7352 = vmatprep.subr.bf16.mxu0 0
        %7353 = vmatpush1.bf16.msra.mxu0 %v7319
        %7354 = vmatprep.subr.bf16.mxu0 0
        %7355 = vmatpush1.bf16.msra.mxu0 %v7320
        %7356 = vmatprep.subr.bf16.mxu0 0
        %7357 = vmatpush1.bf16.msra.mxu0 %v7321
        %7358 = vmatprep.subr.bf16.mxu0 0
        %7359 = vmatpush1.bf16.msra.mxu0 %v7322
        %7360 = vmatprep.subr.bf16.mxu0 0
        %7361 = vmatpush1.bf16.msra.mxu0 %v7323
        %7362 = vmatprep.subr.bf16.mxu0 0
        %7363 = vmatpush1.bf16.msra.mxu0 %v7324
        %7364 = vmatprep.subr.bf16.mxu0 0
        %7365 = vmatpush1.bf16.msra.mxu0 0
        %7366 = vmatprep.subr.bf16.mxu0 0
        %7367 = vmatpush1.bf16.msra.mxu0 0
        %7368 = vmatprep.subr.bf16.mxu0 0
        %7369 = vmatpush1.bf16.msra.mxu0 0
        %7370 = vmatprep.subr.bf16.mxu0 0
        %7371 = vmatpush1.bf16.msra.mxu0 0
        %7372 = vmatprep.mubr.bf16.mxu0 %v6713
        %7373 = vmatmul.mubr.bf16.gmra.mrb[0].mxu0 %v6577
        %v7374 = vpop.f32.mrb[0].mxu0
        %v7375 = vadd.f32 0.0, %v7374
        %v7376 = vpop.f32.mrb[0].mxu0
        %v7377 = vpop.f32.mrb[0].mxu0
        %v7378 = vadd.f32 0.0, %v7377
        %v7379 = vpop.f32.mrb[0].mxu0
        %7380 = vmatprep.mubr.bf16.mxu0 %v6716
        %7381 = vmatmul.mubr.bf16.gmra.mrb[0].mxu0 %v6579
        %v7382 = vpop.f32.mrb[0].mxu0
        %v7383 = vadd.f32 0.0, %v7382
        %v7384 = vpop.f32.mrb[0].mxu0
        %v7385 = vpop.f32.mrb[0].mxu0
        %v7386 = vadd.f32 0.0, %v7385
        %v7387 = vpop.f32.mrb[0].mxu0
        %7388 = vmatprep.mubr.bf16.mxu0 %v6719
        %7389 = vmatmul.mubr.bf16.gmra.mrb[0].mxu0 %v6581
        %v7390 = vpop.f32.mrb[0].mxu0
        %v7391 = vadd.f32 0.0, %v7390
        %v7392 = vpop.f32.mrb[0].mxu0
        %v7393 = vpop.f32.mrb[0].mxu0
        %v7394 = vadd.f32 0.0, %v7393
        %v7395 = vpop.f32.mrb[0].mxu0
        %7396 = vmatprep.mubr.bf16.mxu0 %v6722
        %7397 = vmatmul.mubr.bf16.gmra.mrb[0].mxu0 %v6583
        %v7398 = vpop.f32.mrb[0].mxu0
        %v7399 = vadd.f32 0.0, %v7398
        %v7400 = vpop.f32.mrb[0].mxu0
        %v7401 = vpop.f32.mrb[0].mxu0
        %v7402 = vadd.f32 0.0, %v7401
        %v7403 = vpop.f32.mrb[0].mxu0
        %7404 = vmatprep.mubr.bf16.mxu0 %v6725
        %7405 = vmatmul.mubr.bf16.gmra.mrb[0].mxu0 %v6585
        %v7406 = vpop.f32.mrb[0].mxu0
        %v7407 = vadd.f32 0.0, %v7406
        %v7408 = vpop.f32.mrb[0].mxu0
        %v7409 = vpop.f32.mrb[0].mxu0
        %v7410 = vadd.f32 0.0, %v7409
        %v7411 = vpop.f32.mrb[0].mxu0
        %7412 = vmatprep.mubr.bf16.mxu0 %v6728
        %7413 = vmatmul.mubr.bf16.gmra.mrb[0].mxu0 %v6587
        %v7414 = vpop.f32.mrb[0].mxu0
        %v7415 = vadd.f32 0.0, %v7414
        %v7416 = vpop.f32.mrb[0].mxu0
        %v7417 = vpop.f32.mrb[0].mxu0
        %v7418 = vadd.f32 0.0, %v7417
        %v7419 = vpop.f32.mrb[0].mxu0
        %7420 = vmatprep.mubr.bf16.mxu0 %v6731
        %7421 = vmatmul.mubr.bf16.gmra.mrb[0].mxu0 %v6589
        %v7422 = vpop.f32.mrb[0].mxu0
        %v7423 = vadd.f32 0.0, %v7422
        %v7424 = vpop.f32.mrb[0].mxu0
        %v7425 = vpop.f32.mrb[0].mxu0
        %v7426 = vadd.f32 0.0, %v7425
        %v7427 = vpop.f32.mrb[0].mxu0
        %7428 = vmatprep.mubr.bf16.mxu0 %v6734
        %7429 = vmatmul.mubr.bf16.gmra.mrb[0].mxu0 %v6591
        %v7430 = vpop.f32.mrb[0].mxu0
        %v7431 = vadd.f32 0.0, %v7430
        %v7432 = vpop.f32.mrb[0].mxu0
        %v7433 = vpop.f32.mrb[0].mxu0
        %v7434 = vadd.f32 0.0, %v7433
        %v7435 = vpop.f32.mrb[0].mxu0
        %7436 = vmatprep.mubr.bf16.mxu0 %v6737
        %7437 = vmatmul.mubr.bf16.gmra.mrb[0].mxu0 %v6593
        %v7438 = vpop.f32.mrb[0].mxu0
        %v7439 = vadd.f32 0.0, %v7438
        %v7440 = vpop.f32.mrb[0].mxu0
        %v7441 = vpop.f32.mrb[0].mxu0
        %v7442 = vadd.f32 0.0, %v7441
        %v7443 = vpop.f32.mrb[0].mxu0
        %7444 = vmatprep.mubr.bf16.mxu0 %v6740
        %7445 = vmatmul.mubr.bf16.gmra.mrb[0].mxu0 %v6595
        %v7446 = vpop.f32.mrb[0].mxu0
        %v7447 = vadd.f32 0.0, %v7446
        %v7448 = vpop.f32.mrb[0].mxu0
        %v7449 = vpop.f32.mrb[0].mxu0
        %v7450 = vadd.f32 0.0, %v7449
        %v7451 = vpop.f32.mrb[0].mxu0
        %7452 = vmatprep.mubr.bf16.mxu0 %v6743
        %7453 = vmatmul.mubr.bf16.gmra.mrb[0].mxu0 %v6597
        %v7454 = vpop.f32.mrb[0].mxu0
        %v7455 = vadd.f32 0.0, %v7454
        %v7456 = vpop.f32.mrb[0].mxu0
        %v7457 = vpop.f32.mrb[0].mxu0
        %v7458 = vadd.f32 0.0, %v7457
        %v7459 = vpop.f32.mrb[0].mxu0
        %7460 = vmatprep.mubr.bf16.mxu0 %v6746
        %7461 = vmatmul.mubr.bf16.gmra.mrb[0].mxu0 %v6599
        %v7462 = vpop.f32.mrb[0].mxu0
        %v7463 = vadd.f32 0.0, %v7462
        %v7464 = vpop.f32.mrb[0].mxu0
        %v7465 = vpop.f32.mrb[0].mxu0
        %v7466 = vadd.f32 0.0, %v7465
        %v7467 = vpop.f32.mrb[0].mxu0
        %7468 = vmatprep.mubr.bf16.mxu0 %v6749
        %7469 = vmatmul.mubr.bf16.gmra.mrb[0].mxu0 %v6601
        %v7470 = vpop.f32.mrb[0].mxu0
        %v7471 = vadd.f32 0.0, %v7470
        %v7472 = vpop.f32.mrb[0].mxu0
        %v7473 = vpop.f32.mrb[0].mxu0
        %v7474 = vadd.f32 0.0, %v7473
        %v7475 = vpop.f32.mrb[0].mxu0
        %7476 = vmatprep.mubr.bf16.mxu0 %v6752
        %7477 = vmatmul.mubr.bf16.gmra.mrb[0].mxu0 %v6603
        %v7478 = vpop.f32.mrb[0].mxu0
        %v7479 = vadd.f32 0.0, %v7478
        %v7480 = vpop.f32.mrb[0].mxu0
        %v7481 = vpop.f32.mrb[0].mxu0
        %v7482 = vadd.f32 0.0, %v7481
        %v7483 = vpop.f32.mrb[0].mxu0
        %7484 = vmatprep.mubr.bf16.mxu0 %v7045
        %7485 = vmatmul.mubr.bf16.gmra.mrb[0].mxu0 %v6605
        %v7486 = vpop.f32.mrb[0].mxu0
        %v7487 = vadd.f32 0.0, %v7486
        %v7488 = vpop.f32.mrb[0].mxu0
        %v7489 = vpop.f32.mrb[0].mxu0
        %v7490 = vadd.f32 0.0, %v7489
        %v7491 = vpop.f32.mrb[0].mxu0
        %7492 = vmatprep.mubr.bf16.mxu0 %v7338
        %7493 = vmatmul.mubr.bf16.gmra.mrb[0].mxu0 %v6607
        %v7494 = vpop.f32.mrb[0].mxu0
        %v7495 = vadd.f32 0.0, %v7494
        %v7496 = vpop.f32.mrb[0].mxu0
        %v7497 = vpop.f32.mrb[0].mxu0
        %v7498 = vadd.f32 0.0, %v7497
        %v7499 = vpop.f32.mrb[0].mxu0
        %7500 = vdwg.mxu0
        %v7501 = vadd.f32 %v7208, %v7375
        %v7502 = vadd.f32 %v7209, %v7378
        %v7503 = vadd.f32 %v7210, %v7383
        %v7504 = vadd.f32 %v7211, %v7386
        %v7505 = vadd.f32 %v7212, %v7391
        %v7506 = vadd.f32 %v7213, %v7394
        %v7507 = vadd.f32 %v7214, %v7399
        %v7508 = vadd.f32 %v7215, %v7402
        %v7509 = vadd.f32 %v7216, %v7407
        %v7510 = vadd.f32 %v7217, %v7410
        %v7511 = vadd.f32 %v7218, %v7415
        %v7512 = vadd.f32 %v7219, %v7418
        %v7513 = vadd.f32 %v7220, %v7423
        %v7514 = vadd.f32 %v7221, %v7426
        %v7515 = vadd.f32 %v7222, %v7431
        %v7516 = vadd.f32 %v7223, %v7434
        %v7517 = vadd.f32 %v7224, %v7439
        %v7518 = vadd.f32 %v7225, %v7442
        %v7519 = vadd.f32 %v7226, %v7447
        %v7520 = vadd.f32 %v7227, %v7450
        %v7521 = vadd.f32 %v7228, %v7455
        %v7522 = vadd.f32 %v7229, %v7458
        %v7523 = vadd.f32 %v7230, %v7463
        %v7524 = vadd.f32 %v7231, %v7466
        %v7525 = vadd.f32 %v7232, %v7471
        %v7526 = vadd.f32 %v7233, %v7474
        %v7527 = vadd.f32 %v7234, %v7479
        %v7528 = vadd.f32 %v7235, %v7482
        %v7529 = vadd.f32 %v7236, %v7487
        %v7530 = vadd.f32 %v7237, %v7490
        %v7531 = vadd.f32 %v7238, %v7495
        %v7532 = vadd.f32 %v7239, %v7498
        %7533 = vst.msk [vmem:[%s163] sm:$0xff] %vm171, %v7501
        %7534 = vst.msk [vmem:[%s163 + $0x8] sm:$0xff] %vm171, %v7502
        %7535 = vst.msk [vmem:[%s163 + $0x10] sm:$0xff] %vm171, %v7503
        %7536 = vst.msk [vmem:[%s163 + $0x18] sm:$0xff] %vm171, %v7504
        %7537 = vst.msk [vmem:[%s163 + $0x20] sm:$0xff] %vm171, %v7505
        %7538 = vst.msk [vmem:[%s163 + $0x28] sm:$0xff] %vm171, %v7506
        %7539 = vst.msk [vmem:[%s163 + $0x30] sm:$0xff] %vm171, %v7507
        %7540 = vst.msk [vmem:[%s163 + $0x38] sm:$0xff] %vm171, %v7508
        %7541 = vst.msk [vmem:[%s163 + $0x40] sm:$0xff] %vm171, %v7509
        %7542 = vst.msk [vmem:[%s163 + $0x48] sm:$0xff] %vm171, %v7510
        %7543 = vst.msk [vmem:[%s163 + $0x50] sm:$0xff] %vm171, %v7511
        %7544 = vst.msk [vmem:[%s163 + $0x58] sm:$0xff] %vm171, %v7512
        %7545 = vst.msk [vmem:[%s163 + $0x60] sm:$0xff] %vm171, %v7513
        %7546 = vst.msk [vmem:[%s163 + $0x68] sm:$0xff] %vm171, %v7514
        %7547 = vst.msk [vmem:[%s163 + $0x70] sm:$0xff] %vm171, %v7515
        %7548 = vst.msk [vmem:[%s163 + $0x78] sm:$0xff] %vm171, %v7516
        %7549 = vst.msk [vmem:[%s163 + $0x80] sm:$0xff] %vm171, %v7517
        %7550 = vst.msk [vmem:[%s163 + $0x88] sm:$0xff] %vm171, %v7518
        %7551 = vst.msk [vmem:[%s163 + $0x90] sm:$0xff] %vm171, %v7519
        %7552 = vst.msk [vmem:[%s163 + $0x98] sm:$0xff] %vm171, %v7520
        %7553 = vst.msk [vmem:[%s163 + $0xa0] sm:$0xff] %vm171, %v7521
        %7554 = vst.msk [vmem:[%s163 + $0xa8] sm:$0xff] %vm171, %v7522
        %7555 = vst.msk [vmem:[%s163 + $0xb0] sm:$0xff] %vm171, %v7523
        %7556 = vst.msk [vmem:[%s163 + $0xb8] sm:$0xff] %vm171, %v7524
        %7557 = vst.msk [vmem:[%s163 + $0xc0] sm:$0xff] %vm171, %v7525
        %7558 = vst.msk [vmem:[%s163 + $0xc8] sm:$0xff] %vm171, %v7526
        %7559 = vst.msk [vmem:[%s163 + $0xd0] sm:$0xff] %vm171, %v7527
        %7560 = vst.msk [vmem:[%s163 + $0xd8] sm:$0xff] %vm171, %v7528
        %7561 = vst.msk [vmem:[%s163 + $0xe0] sm:$0xff] %vm171, %v7529
        %7562 = vst.msk [vmem:[%s163 + $0xe8] sm:$0xff] %vm171, %v7530
        %7563 = vst.msk [vmem:[%s163 + $0xf0] sm:$0xff] %vm171, %v7531
        %7564 = vst.msk [vmem:[%s163 + $0xf8] sm:$0xff] %vm171, %v7532
        %s7565 = sand.u32 %s93, 1
        %s7566 = scalar_lea.sflag [#allocation4], %s7565
        %s7567 = sand.u32 %s93, 1
        %s7568 = smul.addr %s7567, 256
        %s7569 = scalar_lea.vmem [#allocation3], %s7568
        // Predicated region
        $region33: #{feature_encoder.1} parent=31 // pred_check
          %p7570 = pneg %p103
        $region34: #{feature_encoder.1} parent=31 // pred_check_branch
          %7572 = sbr.rel (%p7570) target = $region36
        $region35: #{feature_encoder.1} parent=31 // pred_region
          %s7574 = ssub.s32 4096, 4096
          %7575 = vsyncadd %s7566, %s7574
          %s7576 = smul.addr %s17, 32
          %s7577 = smul.addr %s7576, 128
          %s7578 = scalar_lea.hbm %s3, %s7577
          %s7579 = sshll.u32 %s7569, 4
          %s7580 = int_to_ptr.vmem [resolvable:$true] %s7579
          %7585 = dma.vmem_to_hbm [thread:$0]  %s7580, 4096, %s7578, %s7566, 128, 128, 8
        $region36: #{feature_encoder.1} parent=31 // pred_fallthru
          _
      $region32: #{feature_encoder.1} parent=5 // pred_fallthru
        _
      %p7586 = scmp.le.s32.totalorder 2, %s12
      // Predicated region
      $region37: #{feature_encoder.1} parent=5 // pred_check
        %p7587 = pneg %p7586
      $region38: #{feature_encoder.1} parent=5 // pred_check_branch
        %7589 = sbr.rel (%p7587) target = $region40
      $region39: #{feature_encoder.1} parent=5 // pred_region
        %s7590 = ssub.s32 %s12, 2
        // Predicated region
        $region41: #{feature_encoder.1} parent=39 // pred_check
          %p7591 = pneg %p109
        $region42: #{feature_encoder.1} parent=39 // pred_check_branch
          %7593 = sbr.rel (%p7591) target = $region44
        $region43: #{feature_encoder.1} parent=39 // pred_region
          %s7594 = sand.u32 %s94, 1
          %s7595 = scalar_lea.sflag [#allocation4], %s7594
          %s7596 = sand.u32 %s94, 1
          %s7597 = smul.addr %s7596, 256
          %s7598 = scalar_lea.vmem [#allocation3], %s7597
          %7599 = dma.done %s7595, 4096
        $region44: #{feature_encoder.1} parent=39 // pred_fallthru
          _
      $region40: #{feature_encoder.1} parent=5 // pred_fallthru
        _
    $region6: #{feature_encoder.1} parent=1 // loop_footer
      %s16 = sadd.s32 1, %s12
    $region7: #{feature_encoder.1} parent=1 // loop_footer_branch
      %11 = sbr.rel target = $region3
    $region8: #{feature_encoder.1} parent=1 // loop_exit
      _
    %7600 = vsyncpa [#allocation4], 1
    %s7601 = scalar_lea.sflag [#allocation4], 1
    %7602 = vsyncpa %s7601, 1

</llo_original>
